<compile_context>
chip_gen: v7x
topology: tpu7x:2x2x1
jax: 0.10.0
libtpu: 0.0.40
codegen_flags: <defaults>
</compile_context>

<pallas_src>
import functools
import math

import jax
import jax.numpy as jnp
from jax.experimental import pallas as pl
from jax.experimental.pallas import tpu as pltpu


VMEM_LIMIT_BYTES = 48 * 1024 * 1024   # < 64 MiB physical VMEM on v7x, plenty on v5e/v6e


def _round_up(x, m):
    return (x + m - 1) // m * m


# -----------------------------------------------------------------------------
# Kernel 1: [optional per-channel affine+ReLU on the input (previous BN fused)]
#           -> 3x3 valid conv (9 shifted MXU matmuls, accumulated in VMEM)
#           -> + bias -> write y, and accumulate per-channel sum / sum-of-squares
#              (masked to the valid output columns) for the following BatchNorm.
# The activation is kept flat as (rows = H*W, channels) so channels sit on the
# 128-lane axis; "wrap" columns (the 2 right-most) are garbage and are masked
# out of the statistics and cropped later.
# -----------------------------------------------------------------------------
def _conv3x3_bn_stats_kernel(x_ref, w_ref, b_ref, s_ref, t_ref,
                             y_ref, sum_ref, sq_ref,
                             xa_ref, acc_ref,
                             *, h_out, w_in, w_valid_out, pad_rows,
                             apply_in_act):
    n = pl.program_id(0)

    @pl.when(n == 0)
    def _():
        sum_ref[...] = jnp.zeros_like(sum_ref)
        sq_ref[...] = jnp.zeros_like(sq_ref)

    xv = x_ref[0]                                    # (R_in, Cin) f32
    if apply_in_act:                                 # fused BN-affine + ReLU prologue
        xv = jnp.maximum(xv * s_ref[...] + t_ref[...], 0.0)
    xa_ref[...] = xv.astype(jnp.bfloat16)            # bf16 MXU operand

    L = h_out * w_in
    acc_ref[...] = jnp.zeros_like(acc_ref)
    for i in range(3):                               # 9 shifted taps, no im2col in HBM
        for j in range(3):
            off = i * w_in + j
            acc_ref[...] += jnp.dot(xa_ref[off:off + L, :], w_ref[i, j],
                                    preferred_element_type=jnp.float32)

    y = acc_ref[...] + b_ref[...]                    # fused conv bias
    y_ref[0, 0:L, :] = y
    if pad_rows:                                     # zero tail rows so the next conv's
        y_ref[0, L:L + pad_rows, :] = jnp.zeros(     # shifted views never run off the array
            (pad_rows, y.shape[-1]), jnp.float32)

    # BatchNorm statistics fused into the conv epilogue (valid columns only).
    col = jax.lax.broadcasted_iota(jnp.int32, (L, 1), 0) % w_in
    yv = jnp.where(col < w_valid_out, y, 0.0)
    sum_ref[...] += jnp.sum(yv, axis=0, keepdims=True)
    sq_ref[...] += jnp.sum(yv * yv, axis=0, keepdims=True)


def conv3x3_bn_stats(x_flat, h_in, w_in, w_valid_in, w4, bias,
                     in_scale=None, in_shift=None, out_pad_rows=8):
    """x_flat: (N, R_in, Cin) with R_in >= h_in*w_in + 2.
    Returns (y_flat (N, h_out*w_in + out_pad_rows, Cout), ch_sum, ch_sq, h_out, w_valid_out)."""
    N, R_in, Cin = x_flat.shape
    Cout = w4.shape[-1]
    h_out, w_valid_out = h_in - 2, w_valid_in - 2
    L = h_out * w_in
    assert R_in >= h_in * w_in + 2
    R_out = L + out_pad_rows

    apply_in_act = in_scale is not None
    if in_scale is None:
        in_scale = jnp.ones((Cin,), jnp.float32)
        in_shift = jnp.zeros((Cin,), jnp.float32)

    kernel = functools.partial(
        _conv3x3_bn_stats_kernel,
        h_out=h_out, w_in=w_in, w_valid_out=w_valid_out,
        pad_rows=out_pad_rows, apply_in_act=apply_in_act)

    # TODO(synk): for large spatial sizes, tile the output rows (extra grid axis)
    # instead of one whole image per program.
    y, s, sq = pl.pallas_call(
        kernel,
        out_shape=(jax.ShapeDtypeStruct((N, R_out, Cout), jnp.float32),
                   jax.ShapeDtypeStruct((1, Cout), jnp.float32),
                   jax.ShapeDtypeStruct((1, Cout), jnp.float32)),
        grid=(N,),
        in_specs=[
            pl.BlockSpec((1, R_in, Cin), lambda n: (n, 0, 0)),
            pl.BlockSpec((3, 3, Cin, Cout), lambda n: (0, 0, 0, 0)),
            pl.BlockSpec((1, Cout), lambda n: (0, 0)),
            pl.BlockSpec((1, Cin), lambda n: (0, 0)),
            pl.BlockSpec((1, Cin), lambda n: (0, 0)),
        ],
        out_specs=(
            pl.BlockSpec((1, R_out, Cout), lambda n: (n, 0, 0)),
            pl.BlockSpec((1, Cout), lambda n: (0, 0)),
            pl.BlockSpec((1, Cout), lambda n: (0, 0)),
        ),
        scratch_shapes=[pltpu.VMEM((R_in, Cin), jnp.bfloat16),
                        pltpu.VMEM((L, Cout), jnp.float32)],
        compiler_params=pltpu.CompilerParams(
            dimension_semantics=("arbitrary",),           # stats reduce across batch
            vmem_limit_bytes=VMEM_LIMIT_BYTES),
    )(x_flat,
      w4.astype(jnp.bfloat16),
      bias.reshape(1, Cout).astype(jnp.float32),
      in_scale.reshape(1, Cin).astype(jnp.float32),
      in_shift.reshape(1, Cin).astype(jnp.float32))
    return y, s[0], sq[0], h_out, w_valid_out


# -----------------------------------------------------------------------------
# Kernel 2: fused BN-affine + ReLU prologue -> (M, K) @ (K, Nc) matmul + bias.
# Used for the sub-pixel ConvTranspose2d (Nc = 4 * out_channels, lane-dense).
# -----------------------------------------------------------------------------
def _bn_relu_matmul_kernel(a_ref, s_ref, t_ref, w_ref, b_ref, o_ref):
    a = jnp.maximum(a_ref[...] * s_ref[...] + t_ref[...], 0.0)
    o_ref[...] = jnp.dot(a.astype(jnp.bfloat16), w_ref[...],
                         preferred_element_type=jnp.float32) + b_ref[...]


def bn_relu_matmul(a, scale, shift, w, bias, tm=256):
    """relu(a * scale + shift) @ w + bias.  a: (M, K) f32, w: (K, Nc)."""
    M, K = a.shape
    Nc = w.shape[1]
    Mp = _round_up(M, tm)
    if Mp != M:
        a = jnp.pad(a, ((0, Mp - M), (0, 0)))
    # TODO(synk): if K ever exceeds VMEM-friendly sizes, add a K grid axis with a
    # VMEM accumulator; K = middle_channels here so a single full-K block is used.
    out = pl.pallas_call(
        _bn_relu_matmul_kernel,
        out_shape=jax.ShapeDtypeStruct((Mp, Nc), jnp.float32),
        grid=(Mp // tm,),
        in_specs=[
            pl.BlockSpec((tm, K), lambda i: (i, 0)),
            pl.BlockSpec((1, K), lambda i: (0, 0)),
            pl.BlockSpec((1, K), lambda i: (0, 0)),
            pl.BlockSpec((K, Nc), lambda i: (0, 0)),
            pl.BlockSpec((1, Nc), lambda i: (0, 0)),
        ],
        out_specs=pl.BlockSpec((tm, Nc), lambda i: (i, 0)),
        compiler_params=pltpu.CompilerParams(
            dimension_semantics=("parallel",),
            vmem_limit_bytes=VMEM_LIMIT_BYTES),
    )(a,
      scale.reshape(1, K).astype(jnp.float32),
      shift.reshape(1, K).astype(jnp.float32),
      w.astype(jnp.bfloat16),
      bias.reshape(1, Nc).astype(jnp.float32))
    return out[:M]


# -----------------------------------------------------------------------------
# BatchNorm (training-mode batch statistics) -> per-channel scale/shift.
# -----------------------------------------------------------------------------
def _bn_scale_shift(ch_sum, ch_sq, count, gamma, beta, eps=1e-5):
    mean = ch_sum / count
    var = jnp.maximum(ch_sq / count - mean * mean, 0.0)   # clamp (feedback)
    scale = gamma * jax.lax.rsqrt(var + eps)
    shift = beta - mean * scale
    return scale, shift


# -----------------------------------------------------------------------------
# _DecoderBlock forward.
# -----------------------------------------------------------------------------
def decoder_block_forward(params, x_nchw):
    N, Cin, H, W = x_nchw.shape
    Cmid = params['w1'].shape[0]
    Cout = params['wt'].shape[1]

    # NCHW -> NHWC -> flat (N, H*W, C); +8 zero rows so the 9 shifted row-views
    # used by the conv kernel never run past the array.
    x = jnp.transpose(x_nchw, (0, 2, 3, 1)).astype(jnp.float32)
    xf = jnp.pad(x.reshape(N, H * W, Cin), ((0, 0), (0, 8), (0, 0)))

    w1 = jnp.transpose(params['w1'], (2, 3, 1, 0))   # (3, 3, Cin,  Cmid)
    w2 = jnp.transpose(params['w2'], (2, 3, 1, 0))   # (3, 3, Cmid, Cmid)

    # conv1 (+ fused BN1 statistics): one pass over the activation.
    y1, s1, q1, h1, wv1 = conv3x3_bn_stats(xf, H, W, W, w1, params['b1'],
                                           out_pad_rows=8)
    scale1, shift1 = _bn_scale_shift(s1, q1, N * h1 * wv1,
                                     params['g1'], params['be1'])

    # BN1 affine + ReLU fused into conv2 (+ fused BN2 statistics).
    y2, s2, q2, h2, wv2 = conv3x3_bn_stats(y1, h1, W, wv1, w2, params['b2'],
                                           in_scale=scale1, in_shift=shift1,
                                           out_pad_rows=0)
    scale2, shift2 = _bn_scale_shift(s2, q2, N * h2 * wv2,
                                     params['g2'], params['be2'])

    # BN2 affine + ReLU fused into the sub-pixel ConvTranspose2d(k=2, s=2):
    # out[n, 2h+a, 2w+b, co] = relu(bn(y2))[n, h, w, :] @ Wt[:, co, a, b] + bias[co]
    wt = params['wt']                                        # (Cmid, Cout, 2, 2)
    wmat = jnp.transpose(wt, (0, 2, 3, 1)).reshape(Cmid, 4 * Cout)
    bias4 = jnp.tile(params['bt'], 4)
    a = y2.reshape(N * h2 * W, Cmid)
    r = bn_relu_matmul(a, scale2, shift2, wmat, bias4, tm=256)
    r = r.reshape(N, h2, W, 2, 2, Cout)
    r = jnp.transpose(r, (0, 1, 3, 2, 4, 5)).reshape(N, 2 * h2, 2 * W, Cout)
    out = r[:, :, :2 * wv2, :]                               # crop wrap columns
    return jnp.transpose(out, (0, 3, 1, 2))                  # NHWC -> NCHW


# -----------------------------------------------------------------------------
# Deterministic parameter init (PyTorch-style uniform bounds; no checkpoint).
# -----------------------------------------------------------------------------
def build_params(key, in_channels, middle_channels, out_channels):
    ks = jax.random.split(key, 4)

    def conv_init(k, cout, cin, ksz):
        bound = 1.0 / math.sqrt(cin * ksz * ksz)
        kw, kb = jax.random.split(k)
        w = jax.random.uniform(kw, (cout, cin, ksz, ksz), jnp.float32, -bound, bound)
        b = jax.random.uniform(kb, (cout,), jnp.float32, -bound, bound)
        return w, b

    w1, b1 = conv_init(ks[0], middle_channels, in_channels, 3)
    w2, b2 = conv_init(ks[1], middle_channels, middle_channels, 3)
    bound = 1.0 / math.sqrt(out_channels * 2 * 2)
    wt = jax.random.uniform(ks[2], (middle_channels, out_channels, 2, 2),
                            jnp.float32, -bound, bound)
    bt = jax.random.uniform(ks[3], (out_channels,), jnp.float32, -bound, bound)
    ones = jnp.ones((middle_channels,), jnp.float32)
    zeros = jnp.zeros((middle_channels,), jnp.float32)
    return dict(w1=w1, b1=b1, g1=ones, be1=zeros,
                w2=w2, b2=b2, g2=ones, be2=zeros,
                wt=wt, bt=bt)


if __name__ == "__main__":
    in_c, mid_c, out_c = 64, 128, 64
    N, H, W = 2, 16, 16

    key = jax.random.PRNGKey(0)
    pkey, xkey = jax.random.split(key)
    params = build_params(pkey, in_c, mid_c, out_c)
    x = jax.random.normal(xkey, (N, in_c, H, W), jnp.float32)

    fwd = jax.jit(decoder_block_forward)
    out = jax.block_until_ready(fwd(params, x))

    assert out.shape == (N, out_c, 2 * (H - 4), 2 * (W - 4)), out.shape
    assert out.dtype == jnp.float32
    assert bool(jnp.all(jnp.isfinite(out)))
    print("KERNEL_OK")
</pallas_src>

<mosaic_0001>
module attributes {stable_mosaic.version = 11 : i64} {
  func.func @_conv3x3_bn_stats_kernel(%arg0: i32, %arg1: memref<1x264x64xf32, #tpu.memory_space<vmem>>, %arg2: memref<3x3x64x128xbf16, #tpu.memory_space<vmem>>, %arg3: memref<1x128xf32, #tpu.memory_space<vmem>>, %arg4: memref<1x64xf32, #tpu.memory_space<vmem>>, %arg5: memref<1x64xf32, #tpu.memory_space<vmem>>, %arg6: memref<1x232x128xf32, #tpu.memory_space<vmem>>, %arg7: memref<1x128xf32, #tpu.memory_space<vmem>>, %arg8: memref<1x128xf32, #tpu.memory_space<vmem>>, %arg9: memref<264x64xbf16, #tpu.memory_space<vmem>>, %arg10: memref<224x128xf32, #tpu.memory_space<vmem>>) attributes {dimension_semantics = [#tpu.dimension_semantics<arbitrary>], iteration_bounds = array<i64: 2>, scalar_prefetch = 0 : i64, scratch_operands = 2 : i64, tpu.core_type = #tpu.core_type<tc>, window_params = [{transform_indices = @transform_0, window_bounds = array<i64: 1, 264, 64>}, {pipeline_mode = #tpu.pipeline_mode<synchronous>, transform_indices = @transform_1, window_bounds = array<i64: 3, 3, 64, 128>}, {pipeline_mode = #tpu.pipeline_mode<synchronous>, transform_indices = @transform_2, window_bounds = array<i64: 1, 128>}, {pipeline_mode = #tpu.pipeline_mode<synchronous>, transform_indices = @transform_3, window_bounds = array<i64: 1, 64>}, {pipeline_mode = #tpu.pipeline_mode<synchronous>, transform_indices = @transform_4, window_bounds = array<i64: 1, 64>}, {transform_indices = @transform_5, window_bounds = array<i64: 1, 232, 128>}, {pipeline_mode = #tpu.pipeline_mode<synchronous>, transform_indices = @transform_6, window_bounds = array<i64: 1, 128>}, {pipeline_mode = #tpu.pipeline_mode<synchronous>, transform_indices = @transform_7, window_bounds = array<i64: 1, 128>}]} {
    %c0_i32 = arith.constant 0 : i32
    %0 = arith.cmpi eq, %arg0, %c0_i32 : i32
    %1 = arith.extui %0 : i1 to i32
    %c0_i32_0 = arith.constant 0 : i32
    %2 = arith.cmpi ne, %1, %c0_i32_0 : i32
    scf.if %2 {
      %cst_123 = arith.constant 0.000000e+00 : f32
      %117 = vector.broadcast %cst_123 : f32 to vector<1x128xf32>
      %c0_124 = arith.constant 0 : index
      %c0_125 = arith.constant 0 : index
      %118 = vector.load %arg7[%c0_124, %c0_125] : memref<1x128xf32, #tpu.memory_space<vmem>>, vector<1x128xf32>
      tpu.vector_store %arg7[%c0_124, %c0_125], %117 {strides = array<i32>} : memref<1x128xf32, #tpu.memory_space<vmem>>, vector<1x128xf32>,
      %cst_126 = arith.constant 0.000000e+00 : f32
      %119 = vector.broadcast %cst_126 : f32 to vector<1x128xf32>
      %c0_127 = arith.constant 0 : index
      %c0_128 = arith.constant 0 : index
      %120 = vector.load %arg8[%c0_127, %c0_128] : memref<1x128xf32, #tpu.memory_space<vmem>>, vector<1x128xf32>
      tpu.vector_store %arg8[%c0_127, %c0_128], %119 {strides = array<i32>} : memref<1x128xf32, #tpu.memory_space<vmem>>, vector<1x128xf32>,
    } else {
    }
    %c0 = arith.constant 0 : index
    %c0_1 = arith.constant 0 : index
    %c0_2 = arith.constant 0 : index
    %3 = vector.load %arg1[%c0, %c0_1, %c0_2] : memref<1x264x64xf32, #tpu.memory_space<vmem>>, vector<1x264x64xf32>
    %4 = vector.shape_cast %3 : vector<1x264x64xf32> to vector<264x64xf32>
    %5 = arith.truncf %4 : vector<264x64xf32> to vector<264x64xbf16>
    %c0_3 = arith.constant 0 : index
    %c0_4 = arith.constant 0 : index
    %6 = vector.load %arg9[%c0_3, %c0_4] : memref<264x64xbf16, #tpu.memory_space<vmem>>, vector<264x64xbf16>
    tpu.vector_store %arg9[%c0_3, %c0_4], %5 {strides = array<i32>} : memref<264x64xbf16, #tpu.memory_space<vmem>>, vector<264x64xbf16>,
    %cst = arith.constant 0.000000e+00 : f32
    %7 = vector.broadcast %cst : f32 to vector<224x128xf32>
    %c0_5 = arith.constant 0 : index
    %c0_6 = arith.constant 0 : index
    %8 = vector.load %arg10[%c0_5, %c0_6] : memref<224x128xf32, #tpu.memory_space<vmem>>, vector<224x128xf32>
    tpu.vector_store %arg10[%c0_5, %c0_6], %7 {strides = array<i32>} : memref<224x128xf32, #tpu.memory_space<vmem>>, vector<224x128xf32>,
    %c0_7 = arith.constant 0 : index
    %c0_8 = arith.constant 0 : index
    %9 = vector.load %arg10[%c0_7, %c0_8] : memref<224x128xf32, #tpu.memory_space<vmem>>, vector<224x128xf32>
    %c0_9 = arith.constant 0 : index
    %c0_10 = arith.constant 0 : index
    %10 = vector.load %arg9[%c0_9, %c0_10] : memref<264x64xbf16, #tpu.memory_space<vmem>>, vector<224x64xbf16>
    %c0_11 = arith.constant 0 : index
    %c0_12 = arith.constant 0 : index
    %c0_13 = arith.constant 0 : index
    %c0_14 = arith.constant 0 : index
    %11 = vector.load %arg2[%c0_11, %c0_12, %c0_13, %c0_14] : memref<3x3x64x128xbf16, #tpu.memory_space<vmem>>, vector<1x1x64x128xbf16>
    %12 = vector.shape_cast %11 : vector<1x1x64x128xbf16> to vector<64x128xbf16>
    %cst_15 = arith.constant dense<0.000000e+00> : vector<224x128xf32>
    %13 = tpu.matmul %10, %12, %cst_15 {dimension_numbers = #tpu.dot_dimension_numbers<[1], [0], [0], [1], [0, 0, 1, 1], [], []>} : vector<224x64xbf16>, vector<64x128xbf16>, vector<224x128xf32> -> vector<224x128xf32>
    %14 = arith.addf %9, %13 : vector<224x128xf32>
    %c0_16 = arith.constant 0 : index
    %c0_17 = arith.constant 0 : index
    %15 = vector.load %arg10[%c0_16, %c0_17] : memref<224x128xf32, #tpu.memory_space<vmem>>, vector<224x128xf32>
    tpu.vector_store %arg10[%c0_16, %c0_17], %14 {strides = array<i32>} : memref<224x128xf32, #tpu.memory_space<vmem>>, vector<224x128xf32>,
    %c0_18 = arith.constant 0 : index
    %c0_19 = arith.constant 0 : index
    %16 = vector.load %arg10[%c0_18, %c0_19] : memref<224x128xf32, #tpu.memory_space<vmem>>, vector<224x128xf32>
    %c1 = arith.constant 1 : index
    %c0_20 = arith.constant 0 : index
    %17 = vector.load %arg9[%c1, %c0_20] : memref<264x64xbf16, #tpu.memory_space<vmem>>, vector<224x64xbf16>
    %c0_21 = arith.constant 0 : index
    %c1_22 = arith.constant 1 : index
    %c0_23 = arith.constant 0 : index
    %c0_24 = arith.constant 0 : index
    %18 = vector.load %arg2[%c0_21, %c1_22, %c0_23, %c0_24] : memref<3x3x64x128xbf16, #tpu.memory_space<vmem>>, vector<1x1x64x128xbf16>
    %19 = vector.shape_cast %18 : vector<1x1x64x128xbf16> to vector<64x128xbf16>
    %cst_25 = arith.constant dense<0.000000e+00> : vector<224x128xf32>
    %20 = tpu.matmul %17, %19, %cst_25 {dimension_numbers = #tpu.dot_dimension_numbers<[1], [0], [0], [1], [0, 0, 1, 1], [], []>} : vector<224x64xbf16>, vector<64x128xbf16>, vector<224x128xf32> -> vector<224x128xf32>
    %21 = arith.addf %16, %20 : vector<224x128xf32>
    %c0_26 = arith.constant 0 : index
    %c0_27 = arith.constant 0 : index
    %22 = vector.load %arg10[%c0_26, %c0_27] : memref<224x128xf32, #tpu.memory_space<vmem>>, vector<224x128xf32>
    tpu.vector_store %arg10[%c0_26, %c0_27], %21 {strides = array<i32>} : memref<224x128xf32, #tpu.memory_space<vmem>>, vector<224x128xf32>,
    %c0_28 = arith.constant 0 : index
    %c0_29 = arith.constant 0 : index
    %23 = vector.load %arg10[%c0_28, %c0_29] : memref<224x128xf32, #tpu.memory_space<vmem>>, vector<224x128xf32>
    %c2 = arith.constant 2 : index
    %c0_30 = arith.constant 0 : index
    %24 = vector.load %arg9[%c2, %c0_30] : memref<264x64xbf16, #tpu.memory_space<vmem>>, vector<224x64xbf16>
    %c0_31 = arith.constant 0 : index
    %c2_32 = arith.constant 2 : index
    %c0_33 = arith.constant 0 : index
    %c0_34 = arith.constant 0 : index
    %25 = vector.load %arg2[%c0_31, %c2_32, %c0_33, %c0_34] : memref<3x3x64x128xbf16, #tpu.memory_space<vmem>>, vector<1x1x64x128xbf16>
    %26 = vector.shape_cast %25 : vector<1x1x64x128xbf16> to vector<64x128xbf16>
    %cst_35 = arith.constant dense<0.000000e+00> : vector<224x128xf32>
    %27 = tpu.matmul %24, %26, %cst_35 {dimension_numbers = #tpu.dot_dimension_numbers<[1], [0], [0], [1], [0, 0, 1, 1], [], []>} : vector<224x64xbf16>, vector<64x128xbf16>, vector<224x128xf32> -> vector<224x128xf32>
    %28 = arith.addf %23, %27 : vector<224x128xf32>
    %c0_36 = arith.constant 0 : index
    %c0_37 = arith.constant 0 : index
    %29 = vector.load %arg10[%c0_36, %c0_37] : memref<224x128xf32, #tpu.memory_space<vmem>>, vector<224x128xf32>
    tpu.vector_store %arg10[%c0_36, %c0_37], %28 {strides = array<i32>} : memref<224x128xf32, #tpu.memory_space<vmem>>, vector<224x128xf32>,
    %c0_38 = arith.constant 0 : index
    %c0_39 = arith.constant 0 : index
    %30 = vector.load %arg10[%c0_38, %c0_39] : memref<224x128xf32, #tpu.memory_space<vmem>>, vector<224x128xf32>
    %c16 = arith.constant 16 : index
    %c0_40 = arith.constant 0 : index
    %31 = vector.load %arg9[%c16, %c0_40] : memref<264x64xbf16, #tpu.memory_space<vmem>>, vector<224x64xbf16>
    %c1_41 = arith.constant 1 : index
    %c0_42 = arith.constant 0 : index
    %c0_43 = arith.constant 0 : index
    %c0_44 = arith.constant 0 : index
    %32 = vector.load %arg2[%c1_41, %c0_42, %c0_43, %c0_44] : memref<3x3x64x128xbf16, #tpu.memory_space<vmem>>, vector<1x1x64x128xbf16>
    %33 = vector.shape_cast %32 : vector<1x1x64x128xbf16> to vector<64x128xbf16>
    %cst_45 = arith.constant dense<0.000000e+00> : vector<224x128xf32>
    %34 = tpu.matmul %31, %33, %cst_45 {dimension_numbers = #tpu.dot_dimension_numbers<[1], [0], [0], [1], [0, 0, 1, 1], [], []>} : vector<224x64xbf16>, vector<64x128xbf16>, vector<224x128xf32> -> vector<224x128xf32>
    %35 = arith.addf %30, %34 : vector<224x128xf32>
    %c0_46 = arith.constant 0 : index
    %c0_47 = arith.constant 0 : index
    %36 = vector.load %arg10[%c0_46, %c0_47] : memref<224x128xf32, #tpu.memory_space<vmem>>, vector<224x128xf32>
    tpu.vector_store %arg10[%c0_46, %c0_47], %35 {strides = array<i32>} : memref<224x128xf32, #tpu.memory_space<vmem>>, vector<224x128xf32>,
    %c0_48 = arith.constant 0 : index
    %c0_49 = arith.constant 0 : index
    %37 = vector.load %arg10[%c0_48, %c0_49] : memref<224x128xf32, #tpu.memory_space<vmem>>, vector<224x128xf32>
    %c17 = arith.constant 17 : index
    %c0_50 = arith.constant 0 : index
    %38 = vector.load %arg9[%c17, %c0_50] : memref<264x64xbf16, #tpu.memory_space<vmem>>, vector<224x64xbf16>
    %c1_51 = arith.constant 1 : index
    %c1_52 = arith.constant 1 : index
    %c0_53 = arith.constant 0 : index
    %c0_54 = arith.constant 0 : index
    %39 = vector.load %arg2[%c1_51, %c1_52, %c0_53, %c0_54] : memref<3x3x64x128xbf16, #tpu.memory_space<vmem>>, vector<1x1x64x128xbf16>
    %40 = vector.shape_cast %39 : vector<1x1x64x128xbf16> to vector<64x128xbf16>
    %cst_55 = arith.constant dense<0.000000e+00> : vector<224x128xf32>
    %41 = tpu.matmul %38, %40, %cst_55 {dimension_numbers = #tpu.dot_dimension_numbers<[1], [0], [0], [1], [0, 0, 1, 1], [], []>} : vector<224x64xbf16>, vector<64x128xbf16>, vector<224x128xf32> -> vector<224x128xf32>
    %42 = arith.addf %37, %41 : vector<224x128xf32>
    %c0_56 = arith.constant 0 : index
    %c0_57 = arith.constant 0 : index
    %43 = vector.load %arg10[%c0_56, %c0_57] : memref<224x128xf32, #tpu.memory_space<vmem>>, vector<224x128xf32>
    tpu.vector_store %arg10[%c0_56, %c0_57], %42 {strides = array<i32>} : memref<224x128xf32, #tpu.memory_space<vmem>>, vector<224x128xf32>,
    %c0_58 = arith.constant 0 : index
    %c0_59 = arith.constant 0 : index
    %44 = vector.load %arg10[%c0_58, %c0_59] : memref<224x128xf32, #tpu.memory_space<vmem>>, vector<224x128xf32>
    %c18 = arith.constant 18 : index
    %c0_60 = arith.constant 0 : index
    %45 = vector.load %arg9[%c18, %c0_60] : memref<264x64xbf16, #tpu.memory_space<vmem>>, vector<224x64xbf16>
    %c1_61 = arith.constant 1 : index
    %c2_62 = arith.constant 2 : index
    %c0_63 = arith.constant 0 : index
    %c0_64 = arith.constant 0 : index
    %46 = vector.load %arg2[%c1_61, %c2_62, %c0_63, %c0_64] : memref<3x3x64x128xbf16, #tpu.memory_space<vmem>>, vector<1x1x64x128xbf16>
    %47 = vector.shape_cast %46 : vector<1x1x64x128xbf16> to vector<64x128xbf16>
    %cst_65 = arith.constant dense<0.000000e+00> : vector<224x128xf32>
    %48 = tpu.matmul %45, %47, %cst_65 {dimension_numbers = #tpu.dot_dimension_numbers<[1], [0], [0], [1], [0, 0, 1, 1], [], []>} : vector<224x64xbf16>, vector<64x128xbf16>, vector<224x128xf32> -> vector<224x128xf32>
    %49 = arith.addf %44, %48 : vector<224x128xf32>
    %c0_66 = arith.constant 0 : index
    %c0_67 = arith.constant 0 : index
    %50 = vector.load %arg10[%c0_66, %c0_67] : memref<224x128xf32, #tpu.memory_space<vmem>>, vector<224x128xf32>
    tpu.vector_store %arg10[%c0_66, %c0_67], %49 {strides = array<i32>} : memref<224x128xf32, #tpu.memory_space<vmem>>, vector<224x128xf32>,
    %c0_68 = arith.constant 0 : index
    %c0_69 = arith.constant 0 : index
    %51 = vector.load %arg10[%c0_68, %c0_69] : memref<224x128xf32, #tpu.memory_space<vmem>>, vector<224x128xf32>
    %c32 = arith.constant 32 : index
    %c0_70 = arith.constant 0 : index
    %52 = vector.load %arg9[%c32, %c0_70] : memref<264x64xbf16, #tpu.memory_space<vmem>>, vector<224x64xbf16>
    %c2_71 = arith.constant 2 : index
    %c0_72 = arith.constant 0 : index
    %c0_73 = arith.constant 0 : index
    %c0_74 = arith.constant 0 : index
    %53 = vector.load %arg2[%c2_71, %c0_72, %c0_73, %c0_74] : memref<3x3x64x128xbf16, #tpu.memory_space<vmem>>, vector<1x1x64x128xbf16>
    %54 = vector.shape_cast %53 : vector<1x1x64x128xbf16> to vector<64x128xbf16>
    %cst_75 = arith.constant dense<0.000000e+00> : vector<224x128xf32>
    %55 = tpu.matmul %52, %54, %cst_75 {dimension_numbers = #tpu.dot_dimension_numbers<[1], [0], [0], [1], [0, 0, 1, 1], [], []>} : vector<224x64xbf16>, vector<64x128xbf16>, vector<224x128xf32> -> vector<224x128xf32>
    %56 = arith.addf %51, %55 : vector<224x128xf32>
    %c0_76 = arith.constant 0 : index
    %c0_77 = arith.constant 0 : index
    %57 = vector.load %arg10[%c0_76, %c0_77] : memref<224x128xf32, #tpu.memory_space<vmem>>, vector<224x128xf32>
    tpu.vector_store %arg10[%c0_76, %c0_77], %56 {strides = array<i32>} : memref<224x128xf32, #tpu.memory_space<vmem>>, vector<224x128xf32>,
    %c0_78 = arith.constant 0 : index
    %c0_79 = arith.constant 0 : index
    %58 = vector.load %arg10[%c0_78, %c0_79] : memref<224x128xf32, #tpu.memory_space<vmem>>, vector<224x128xf32>
    %c33 = arith.constant 33 : index
    %c0_80 = arith.constant 0 : index
    %59 = vector.load %arg9[%c33, %c0_80] : memref<264x64xbf16, #tpu.memory_space<vmem>>, vector<224x64xbf16>
    %c2_81 = arith.constant 2 : index
    %c1_82 = arith.constant 1 : index
    %c0_83 = arith.constant 0 : index
    %c0_84 = arith.constant 0 : index
    %60 = vector.load %arg2[%c2_81, %c1_82, %c0_83, %c0_84] : memref<3x3x64x128xbf16, #tpu.memory_space<vmem>>, vector<1x1x64x128xbf16>
    %61 = vector.shape_cast %60 : vector<1x1x64x128xbf16> to vector<64x128xbf16>
    %cst_85 = arith.constant dense<0.000000e+00> : vector<224x128xf32>
    %62 = tpu.matmul %59, %61, %cst_85 {dimension_numbers = #tpu.dot_dimension_numbers<[1], [0], [0], [1], [0, 0, 1, 1], [], []>} : vector<224x64xbf16>, vector<64x128xbf16>, vector<224x128xf32> -> vector<224x128xf32>
    %63 = arith.addf %58, %62 : vector<224x128xf32>
    %c0_86 = arith.constant 0 : index
    %c0_87 = arith.constant 0 : index
    %64 = vector.load %arg10[%c0_86, %c0_87] : memref<224x128xf32, #tpu.memory_space<vmem>>, vector<224x128xf32>
    tpu.vector_store %arg10[%c0_86, %c0_87], %63 {strides = array<i32>} : memref<224x128xf32, #tpu.memory_space<vmem>>, vector<224x128xf32>,
    %c0_88 = arith.constant 0 : index
    %c0_89 = arith.constant 0 : index
    %65 = vector.load %arg10[%c0_88, %c0_89] : memref<224x128xf32, #tpu.memory_space<vmem>>, vector<224x128xf32>
    %c34 = arith.constant 34 : index
    %c0_90 = arith.constant 0 : index
    %66 = vector.load %arg9[%c34, %c0_90] : memref<264x64xbf16, #tpu.memory_space<vmem>>, vector<224x64xbf16>
    %c2_91 = arith.constant 2 : index
    %c2_92 = arith.constant 2 : index
    %c0_93 = arith.constant 0 : index
    %c0_94 = arith.constant 0 : index
    %67 = vector.load %arg2[%c2_91, %c2_92, %c0_93, %c0_94] : memref<3x3x64x128xbf16, #tpu.memory_space<vmem>>, vector<1x1x64x128xbf16>
    %68 = vector.shape_cast %67 : vector<1x1x64x128xbf16> to vector<64x128xbf16>
    %cst_95 = arith.constant dense<0.000000e+00> : vector<224x128xf32>
    %69 = tpu.matmul %66, %68, %cst_95 {dimension_numbers = #tpu.dot_dimension_numbers<[1], [0], [0], [1], [0, 0, 1, 1], [], []>} : vector<224x64xbf16>, vector<64x128xbf16>, vector<224x128xf32> -> vector<224x128xf32>
    %70 = arith.addf %65, %69 : vector<224x128xf32>
    %c0_96 = arith.constant 0 : index
    %c0_97 = arith.constant 0 : index
    %71 = vector.load %arg10[%c0_96, %c0_97] : memref<224x128xf32, #tpu.memory_space<vmem>>, vector<224x128xf32>
    tpu.vector_store %arg10[%c0_96, %c0_97], %70 {strides = array<i32>} : memref<224x128xf32, #tpu.memory_space<vmem>>, vector<224x128xf32>,
    %c0_98 = arith.constant 0 : index
    %c0_99 = arith.constant 0 : index
    %72 = vector.load %arg10[%c0_98, %c0_99] : memref<224x128xf32, #tpu.memory_space<vmem>>, vector<224x128xf32>
    %c0_100 = arith.constant 0 : index
    %c0_101 = arith.constant 0 : index
    %73 = vector.load %arg3[%c0_100, %c0_101] : memref<1x128xf32, #tpu.memory_space<vmem>>, vector<1x128xf32>
    %74 = vector.broadcast %73 : vector<1x128xf32> to vector<224x128xf32>
    %75 = arith.addf %72, %74 : vector<224x128xf32>
    %c0_102 = arith.constant 0 : index
    %c0_103 = arith.constant 0 : index
    %c0_104 = arith.constant 0 : index
    %76 = vector.load %arg6[%c0_102, %c0_103, %c0_104] : memref<1x232x128xf32, #tpu.memory_space<vmem>>, vector<1x224x128xf32>
    %77 = vector.shape_cast %76 : vector<1x224x128xf32> to vector<224x128xf32>
    %78 = vector.shape_cast %75 : vector<224x128xf32> to vector<1x224x128xf32>
    tpu.vector_store %arg6[%c0_102, %c0_103, %c0_104], %78 {strides = array<i32>} : memref<1x232x128xf32, #tpu.memory_space<vmem>>, vector<1x224x128xf32>,
    %cst_105 = arith.constant 0.000000e+00 : f32
    %79 = vector.broadcast %cst_105 : f32 to vector<8x128xf32>
    %c0_106 = arith.constant 0 : index
    %c224 = arith.constant 224 : index
    %c0_107 = arith.constant 0 : index
    %80 = vector.load %arg6[%c0_106, %c224, %c0_107] : memref<1x232x128xf32, #tpu.memory_space<vmem>>, vector<1x8x128xf32>
    %81 = vector.shape_cast %80 : vector<1x8x128xf32> to vector<8x128xf32>
    %82 = vector.shape_cast %79 : vector<8x128xf32> to vector<1x8x128xf32>
    tpu.vector_store %arg6[%c0_106, %c224, %c0_107], %82 {strides = array<i32>} : memref<1x232x128xf32, #tpu.memory_space<vmem>>, vector<1x8x128xf32>,
    %83 = tpu.iota {dimensions = array<i32: 0>} : vector<224x1xi32>
    %c16_i32 = arith.constant 16 : i32
    %c0_i32_108 = arith.constant 0 : i32
    %84 = arith.cmpi eq, %c16_i32, %c0_i32_108 : i32
    %c1_i32 = arith.constant 1 : i32
    %85 = arith.select %84, %c1_i32, %c16_i32 : i32
    %86 = vector.broadcast %85 : i32 to vector<224x1xi32>
    %87 = arith.remsi %83, %86 : vector<224x1xi32>
    %c0_i32_109 = arith.constant 0 : i32
    %88 = vector.broadcast %c0_i32_109 : i32 to vector<224x1xi32>
    %89 = arith.cmpi ne, %87, %88 : vector<224x1xi32>
    %c0_i32_110 = arith.constant 0 : i32
    %90 = vector.broadcast %c0_i32_110 : i32 to vector<224x1xi32>
    %91 = arith.cmpi slt, %87, %90 : vector<224x1xi32>
    %c0_i32_111 = arith.constant 0 : i32
    %92 = arith.cmpi slt, %85, %c0_i32_111 : i32
    %93 = vector.broadcast %92 : i1 to vector<224x1xi1>
    %94 = vector.broadcast %93 : vector<224x1xi1> to vector<224x1xi1>
    %95 = arith.xori %91, %94 : vector<224x1xi1>
    %96 = arith.andi %95, %89 : vector<224x1xi1>
    %97 = vector.broadcast %85 : i32 to vector<224x1xi32>
    %98 = arith.addi %87, %97 : vector<224x1xi32>
    %99 = arith.select %96, %98, %87 : vector<224x1xi1>, vector<224x1xi32>
    %c14_i32 = arith.constant 14 : i32
    %100 = vector.broadcast %c14_i32 : i32 to vector<224x1xi32>
    %101 = arith.cmpi slt, %99, %100 : vector<224x1xi32>
    %cst_112 = arith.constant 0.000000e+00 : f32
    %102 = vector.shape_cast %101 : vector<224x1xi1> to vector<224x1xi1>
    %103 = vector.broadcast %102 : vector<224x1xi1> to vector<224x128xi1>
    %104 = vector.broadcast %cst_112 : f32 to vector<224x128xf32>
    %105 = arith.select %103, %75, %104 : vector<224x128xi1>, vector<224x128xf32>
    %c0_113 = arith.constant 0 : index
    %c0_114 = arith.constant 0 : index
    %106 = vector.load %arg7[%c0_113, %c0_114] : memref<1x128xf32, #tpu.memory_space<vmem>>, vector<1x128xf32>
    %cst_115 = arith.constant dense<0.000000e+00> : vector<128xf32>
    %107 = vector.multi_reduction <add>, %105, %cst_115 [0] : vector<224x128xf32> to vector<128xf32>
    %108 = vector.shape_cast %107 : vector<128xf32> to vector<1x128xf32>
    %109 = arith.addf %106, %108 : vector<1x128xf32>
    %c0_116 = arith.constant 0 : index
    %c0_117 = arith.constant 0 : index
    %110 = vector.load %arg7[%c0_116, %c0_117] : memref<1x128xf32, #tpu.memory_space<vmem>>, vector<1x128xf32>
    tpu.vector_store %arg7[%c0_116, %c0_117], %109 {strides = array<i32>} : memref<1x128xf32, #tpu.memory_space<vmem>>, vector<1x128xf32>,
    %c0_118 = arith.constant 0 : index
    %c0_119 = arith.constant 0 : index
    %111 = vector.load %arg8[%c0_118, %c0_119] : memref<1x128xf32, #tpu.memory_space<vmem>>, vector<1x128xf32>
    %112 = arith.mulf %105, %105 : vector<224x128xf32>
    %cst_120 = arith.constant dense<0.000000e+00> : vector<128xf32>
    %113 = vector.multi_reduction <add>, %112, %cst_120 [0] : vector<224x128xf32> to vector<128xf32>
    %114 = vector.shape_cast %113 : vector<128xf32> to vector<1x128xf32>
    %115 = arith.addf %111, %114 : vector<1x128xf32>
    %c0_121 = arith.constant 0 : index
    %c0_122 = arith.constant 0 : index
    %116 = vector.load %arg8[%c0_121, %c0_122] : memref<1x128xf32, #tpu.memory_space<vmem>>, vector<1x128xf32>
    tpu.vector_store %arg8[%c0_121, %c0_122], %115 {strides = array<i32>} : memref<1x128xf32, #tpu.memory_space<vmem>>, vector<1x128xf32>,
    return
  }
  func.func @transform_0(%arg0: i32) -> (i32, i32, i32) {
    %c0_i32 = arith.constant 0 : i32
    %c0_i32_0 = arith.constant 0 : i32
    %c0_i32_1 = arith.constant 0 : i32
    return %arg0, %c0_i32, %c0_i32_0 : i32, i32, i32
  }
  func.func @transform_1(%arg0: i32) -> (i32, i32, i32, i32) {
    %c0_i32 = arith.constant 0 : i32
    %c0_i32_0 = arith.constant 0 : i32
    %c0_i32_1 = arith.constant 0 : i32
    %c0_i32_2 = arith.constant 0 : i32
    %c0_i32_3 = arith.constant 0 : i32
    return %c0_i32, %c0_i32_0, %c0_i32_1, %c0_i32_2 : i32, i32, i32, i32
  }
  func.func @transform_2(%arg0: i32) -> (i32, i32) {
    %c0_i32 = arith.constant 0 : i32
    %c0_i32_0 = arith.constant 0 : i32
    %c0_i32_1 = arith.constant 0 : i32
    return %c0_i32, %c0_i32_0 : i32, i32
  }
  func.func @transform_3(%arg0: i32) -> (i32, i32) {
    %c0_i32 = arith.constant 0 : i32
    %c0_i32_0 = arith.constant 0 : i32
    %c0_i32_1 = arith.constant 0 : i32
    return %c0_i32, %c0_i32_0 : i32, i32
  }
  func.func @transform_4(%arg0: i32) -> (i32, i32) {
    %c0_i32 = arith.constant 0 : i32
    %c0_i32_0 = arith.constant 0 : i32
    %c0_i32_1 = arith.constant 0 : i32
    return %c0_i32, %c0_i32_0 : i32, i32
  }
  func.func @transform_5(%arg0: i32) -> (i32, i32, i32) {
    %c0_i32 = arith.constant 0 : i32
    %c0_i32_0 = arith.constant 0 : i32
    %c0_i32_1 = arith.constant 0 : i32
    return %arg0, %c0_i32, %c0_i32_0 : i32, i32, i32
  }
  func.func @transform_6(%arg0: i32) -> (i32, i32) {
    %c0_i32 = arith.constant 0 : i32
    %c0_i32_0 = arith.constant 0 : i32
    %c0_i32_1 = arith.constant 0 : i32
    return %c0_i32, %c0_i32_0 : i32, i32
  }
  func.func @transform_7(%arg0: i32) -> (i32, i32) {
    %c0_i32 = arith.constant 0 : i32
    %c0_i32_0 = arith.constant 0 : i32
    %c0_i32_1 = arith.constant 0 : i32
    return %c0_i32, %c0_i32_0 : i32, i32
  }
}

module attributes {stable_mosaic.version = 11 : i64} {
  func.func @_conv3x3_bn_stats_kernel(%arg0: i32, %arg1: memref<1x232x128xf32, #tpu.memory_space<vmem>>, %arg2: memref<3x3x128x128xbf16, #tpu.memory_space<vmem>>, %arg3: memref<1x128xf32, #tpu.memory_space<vmem>>, %arg4: memref<1x128xf32, #tpu.memory_space<vmem>>, %arg5: memref<1x128xf32, #tpu.memory_space<vmem>>, %arg6: memref<1x192x128xf32, #tpu.memory_space<vmem>>, %arg7: memref<1x128xf32, #tpu.memory_space<vmem>>, %arg8: memref<1x128xf32, #tpu.memory_space<vmem>>, %arg9: memref<232x128xbf16, #tpu.memory_space<vmem>>, %arg10: memref<192x128xf32, #tpu.memory_space<vmem>>) attributes {dimension_semantics = [#tpu.dimension_semantics<arbitrary>], iteration_bounds = array<i64: 2>, scalar_prefetch = 0 : i64, scratch_operands = 2 : i64, tpu.core_type = #tpu.core_type<tc>, window_params = [{transform_indices = @transform_0, window_bounds = array<i64: 1, 232, 128>}, {pipeline_mode = #tpu.pipeline_mode<synchronous>, transform_indices = @transform_1, window_bounds = array<i64: 3, 3, 128, 128>}, {pipeline_mode = #tpu.pipeline_mode<synchronous>, transform_indices = @transform_2, window_bounds = array<i64: 1, 128>}, {pipeline_mode = #tpu.pipeline_mode<synchronous>, transform_indices = @transform_3, window_bounds = array<i64: 1, 128>}, {pipeline_mode = #tpu.pipeline_mode<synchronous>, transform_indices = @transform_4, window_bounds = array<i64: 1, 128>}, {transform_indices = @transform_5, window_bounds = array<i64: 1, 192, 128>}, {pipeline_mode = #tpu.pipeline_mode<synchronous>, transform_indices = @transform_6, window_bounds = array<i64: 1, 128>}, {pipeline_mode = #tpu.pipeline_mode<synchronous>, transform_indices = @transform_7, window_bounds = array<i64: 1, 128>}]} {
    %c0_i32 = arith.constant 0 : i32
    %0 = arith.cmpi eq, %arg0, %c0_i32 : i32
    %1 = arith.extui %0 : i1 to i32
    %c0_i32_0 = arith.constant 0 : i32
    %2 = arith.cmpi ne, %1, %c0_i32_0 : i32
    scf.if %2 {
      %cst_125 = arith.constant 0.000000e+00 : f32
      %121 = vector.broadcast %cst_125 : f32 to vector<1x128xf32>
      %c0_126 = arith.constant 0 : index
      %c0_127 = arith.constant 0 : index
      %122 = vector.load %arg7[%c0_126, %c0_127] : memref<1x128xf32, #tpu.memory_space<vmem>>, vector<1x128xf32>
      tpu.vector_store %arg7[%c0_126, %c0_127], %121 {strides = array<i32>} : memref<1x128xf32, #tpu.memory_space<vmem>>, vector<1x128xf32>,
      %cst_128 = arith.constant 0.000000e+00 : f32
      %123 = vector.broadcast %cst_128 : f32 to vector<1x128xf32>
      %c0_129 = arith.constant 0 : index
      %c0_130 = arith.constant 0 : index
      %124 = vector.load %arg8[%c0_129, %c0_130] : memref<1x128xf32, #tpu.memory_space<vmem>>, vector<1x128xf32>
      tpu.vector_store %arg8[%c0_129, %c0_130], %123 {strides = array<i32>} : memref<1x128xf32, #tpu.memory_space<vmem>>, vector<1x128xf32>,
    } else {
    }
    %c0 = arith.constant 0 : index
    %c0_1 = arith.constant 0 : index
    %c0_2 = arith.constant 0 : index
    %3 = vector.load %arg1[%c0, %c0_1, %c0_2] : memref<1x232x128xf32, #tpu.memory_space<vmem>>, vector<1x232x128xf32>
    %4 = vector.shape_cast %3 : vector<1x232x128xf32> to vector<232x128xf32>
    %c0_3 = arith.constant 0 : index
    %c0_4 = arith.constant 0 : index
    %5 = vector.load %arg4[%c0_3, %c0_4] : memref<1x128xf32, #tpu.memory_space<vmem>>, vector<1x128xf32>
    %6 = vector.broadcast %5 : vector<1x128xf32> to vector<232x128xf32>
    %7 = arith.mulf %4, %6 : vector<232x128xf32>
    %c0_5 = arith.constant 0 : index
    %c0_6 = arith.constant 0 : index
    %8 = vector.load %arg5[%c0_5, %c0_6] : memref<1x128xf32, #tpu.memory_space<vmem>>, vector<1x128xf32>
    %9 = vector.broadcast %8 : vector<1x128xf32> to vector<232x128xf32>
    %10 = arith.addf %7, %9 : vector<232x128xf32>
    %cst = arith.constant 0.000000e+00 : f32
    %11 = vector.broadcast %cst : f32 to vector<232x128xf32>
    %12 = arith.maximumf %10, %11 : vector<232x128xf32>
    %13 = arith.truncf %12 : vector<232x128xf32> to vector<232x128xbf16>
    %c0_7 = arith.constant 0 : index
    %c0_8 = arith.constant 0 : index
    %14 = vector.load %arg9[%c0_7, %c0_8] : memref<232x128xbf16, #tpu.memory_space<vmem>>, vector<232x128xbf16>
    tpu.vector_store %arg9[%c0_7, %c0_8], %13 {strides = array<i32>} : memref<232x128xbf16, #tpu.memory_space<vmem>>, vector<232x128xbf16>,
    %cst_9 = arith.constant 0.000000e+00 : f32
    %15 = vector.broadcast %cst_9 : f32 to vector<192x128xf32>
    %c0_10 = arith.constant 0 : index
    %c0_11 = arith.constant 0 : index
    %16 = vector.load %arg10[%c0_10, %c0_11] : memref<192x128xf32, #tpu.memory_space<vmem>>, vector<192x128xf32>
    tpu.vector_store %arg10[%c0_10, %c0_11], %15 {strides = array<i32>} : memref<192x128xf32, #tpu.memory_space<vmem>>, vector<192x128xf32>,
    %c0_12 = arith.constant 0 : index
    %c0_13 = arith.constant 0 : index
    %17 = vector.load %arg10[%c0_12, %c0_13] : memref<192x128xf32, #tpu.memory_space<vmem>>, vector<192x128xf32>
    %c0_14 = arith.constant 0 : index
    %c0_15 = arith.constant 0 : index
    %18 = vector.load %arg9[%c0_14, %c0_15] : memref<232x128xbf16, #tpu.memory_space<vmem>>, vector<192x128xbf16>
    %c0_16 = arith.constant 0 : index
    %c0_17 = arith.constant 0 : index
    %c0_18 = arith.constant 0 : index
    %c0_19 = arith.constant 0 : index
    %19 = vector.load %arg2[%c0_16, %c0_17, %c0_18, %c0_19] : memref<3x3x128x128xbf16, #tpu.memory_space<vmem>>, vector<1x1x128x128xbf16>
    %20 = vector.shape_cast %19 : vector<1x1x128x128xbf16> to vector<128x128xbf16>
    %cst_20 = arith.constant dense<0.000000e+00> : vector<192x128xf32>
    %21 = tpu.matmul %18, %20, %cst_20 {dimension_numbers = #tpu.dot_dimension_numbers<[1], [0], [0], [1], [0, 0, 1, 1], [], []>} : vector<192x128xbf16>, vector<128x128xbf16>, vector<192x128xf32> -> vector<192x128xf32>
    %22 = arith.addf %17, %21 : vector<192x128xf32>
    %c0_21 = arith.constant 0 : index
    %c0_22 = arith.constant 0 : index
    %23 = vector.load %arg10[%c0_21, %c0_22] : memref<192x128xf32, #tpu.memory_space<vmem>>, vector<192x128xf32>
    tpu.vector_store %arg10[%c0_21, %c0_22], %22 {strides = array<i32>} : memref<192x128xf32, #tpu.memory_space<vmem>>, vector<192x128xf32>,
    %c0_23 = arith.constant 0 : index
    %c0_24 = arith.constant 0 : index
    %24 = vector.load %arg10[%c0_23, %c0_24] : memref<192x128xf32, #tpu.memory_space<vmem>>, vector<192x128xf32>
    %c1 = arith.constant 1 : index
    %c0_25 = arith.constant 0 : index
    %25 = vector.load %arg9[%c1, %c0_25] : memref<232x128xbf16, #tpu.memory_space<vmem>>, vector<192x128xbf16>
    %c0_26 = arith.constant 0 : index
    %c1_27 = arith.constant 1 : index
    %c0_28 = arith.constant 0 : index
    %c0_29 = arith.constant 0 : index
    %26 = vector.load %arg2[%c0_26, %c1_27, %c0_28, %c0_29] : memref<3x3x128x128xbf16, #tpu.memory_space<vmem>>, vector<1x1x128x128xbf16>
    %27 = vector.shape_cast %26 : vector<1x1x128x128xbf16> to vector<128x128xbf16>
    %cst_30 = arith.constant dense<0.000000e+00> : vector<192x128xf32>
    %28 = tpu.matmul %25, %27, %cst_30 {dimension_numbers = #tpu.dot_dimension_numbers<[1], [0], [0], [1], [0, 0, 1, 1], [], []>} : vector<192x128xbf16>, vector<128x128xbf16>, vector<192x128xf32> -> vector<192x128xf32>
    %29 = arith.addf %24, %28 : vector<192x128xf32>
    %c0_31 = arith.constant 0 : index
    %c0_32 = arith.constant 0 : index
    %30 = vector.load %arg10[%c0_31, %c0_32] : memref<192x128xf32, #tpu.memory_space<vmem>>, vector<192x128xf32>
    tpu.vector_store %arg10[%c0_31, %c0_32], %29 {strides = array<i32>} : memref<192x128xf32, #tpu.memory_space<vmem>>, vector<192x128xf32>,
    %c0_33 = arith.constant 0 : index
    %c0_34 = arith.constant 0 : index
    %31 = vector.load %arg10[%c0_33, %c0_34] : memref<192x128xf32, #tpu.memory_space<vmem>>, vector<192x128xf32>
    %c2 = arith.constant 2 : index
    %c0_35 = arith.constant 0 : index
    %32 = vector.load %arg9[%c2, %c0_35] : memref<232x128xbf16, #tpu.memory_space<vmem>>, vector<192x128xbf16>
    %c0_36 = arith.constant 0 : index
    %c2_37 = arith.constant 2 : index
    %c0_38 = arith.constant 0 : index
    %c0_39 = arith.constant 0 : index
    %33 = vector.load %arg2[%c0_36, %c2_37, %c0_38, %c0_39] : memref<3x3x128x128xbf16, #tpu.memory_space<vmem>>, vector<1x1x128x128xbf16>
    %34 = vector.shape_cast %33 : vector<1x1x128x128xbf16> to vector<128x128xbf16>
    %cst_40 = arith.constant dense<0.000000e+00> : vector<192x128xf32>
    %35 = tpu.matmul %32, %34, %cst_40 {dimension_numbers = #tpu.dot_dimension_numbers<[1], [0], [0], [1], [0, 0, 1, 1], [], []>} : vector<192x128xbf16>, vector<128x128xbf16>, vector<192x128xf32> -> vector<192x128xf32>
    %36 = arith.addf %31, %35 : vector<192x128xf32>
    %c0_41 = arith.constant 0 : index
    %c0_42 = arith.constant 0 : index
    %37 = vector.load %arg10[%c0_41, %c0_42] : memref<192x128xf32, #tpu.memory_space<vmem>>, vector<192x128xf32>
    tpu.vector_store %arg10[%c0_41, %c0_42], %36 {strides = array<i32>} : memref<192x128xf32, #tpu.memory_space<vmem>>, vector<192x128xf32>,
    %c0_43 = arith.constant 0 : index
    %c0_44 = arith.constant 0 : index
    %38 = vector.load %arg10[%c0_43, %c0_44] : memref<192x128xf32, #tpu.memory_space<vmem>>, vector<192x128xf32>
    %c16 = arith.constant 16 : index
    %c0_45 = arith.constant 0 : index
    %39 = vector.load %arg9[%c16, %c0_45] : memref<232x128xbf16, #tpu.memory_space<vmem>>, vector<192x128xbf16>
    %c1_46 = arith.constant 1 : index
    %c0_47 = arith.constant 0 : index
    %c0_48 = arith.constant 0 : index
    %c0_49 = arith.constant 0 : index
    %40 = vector.load %arg2[%c1_46, %c0_47, %c0_48, %c0_49] : memref<3x3x128x128xbf16, #tpu.memory_space<vmem>>, vector<1x1x128x128xbf16>
    %41 = vector.shape_cast %40 : vector<1x1x128x128xbf16> to vector<128x128xbf16>
    %cst_50 = arith.constant dense<0.000000e+00> : vector<192x128xf32>
    %42 = tpu.matmul %39, %41, %cst_50 {dimension_numbers = #tpu.dot_dimension_numbers<[1], [0], [0], [1], [0, 0, 1, 1], [], []>} : vector<192x128xbf16>, vector<128x128xbf16>, vector<192x128xf32> -> vector<192x128xf32>
    %43 = arith.addf %38, %42 : vector<192x128xf32>
    %c0_51 = arith.constant 0 : index
    %c0_52 = arith.constant 0 : index
    %44 = vector.load %arg10[%c0_51, %c0_52] : memref<192x128xf32, #tpu.memory_space<vmem>>, vector<192x128xf32>
    tpu.vector_store %arg10[%c0_51, %c0_52], %43 {strides = array<i32>} : memref<192x128xf32, #tpu.memory_space<vmem>>, vector<192x128xf32>,
    %c0_53 = arith.constant 0 : index
    %c0_54 = arith.constant 0 : index
    %45 = vector.load %arg10[%c0_53, %c0_54] : memref<192x128xf32, #tpu.memory_space<vmem>>, vector<192x128xf32>
    %c17 = arith.constant 17 : index
    %c0_55 = arith.constant 0 : index
    %46 = vector.load %arg9[%c17, %c0_55] : memref<232x128xbf16, #tpu.memory_space<vmem>>, vector<192x128xbf16>
    %c1_56 = arith.constant 1 : index
    %c1_57 = arith.constant 1 : index
    %c0_58 = arith.constant 0 : index
    %c0_59 = arith.constant 0 : index
    %47 = vector.load %arg2[%c1_56, %c1_57, %c0_58, %c0_59] : memref<3x3x128x128xbf16, #tpu.memory_space<vmem>>, vector<1x1x128x128xbf16>
    %48 = vector.shape_cast %47 : vector<1x1x128x128xbf16> to vector<128x128xbf16>
    %cst_60 = arith.constant dense<0.000000e+00> : vector<192x128xf32>
    %49 = tpu.matmul %46, %48, %cst_60 {dimension_numbers = #tpu.dot_dimension_numbers<[1], [0], [0], [1], [0, 0, 1, 1], [], []>} : vector<192x128xbf16>, vector<128x128xbf16>, vector<192x128xf32> -> vector<192x128xf32>
    %50 = arith.addf %45, %49 : vector<192x128xf32>
    %c0_61 = arith.constant 0 : index
    %c0_62 = arith.constant 0 : index
    %51 = vector.load %arg10[%c0_61, %c0_62] : memref<192x128xf32, #tpu.memory_space<vmem>>, vector<192x128xf32>
    tpu.vector_store %arg10[%c0_61, %c0_62], %50 {strides = array<i32>} : memref<192x128xf32, #tpu.memory_space<vmem>>, vector<192x128xf32>,
    %c0_63 = arith.constant 0 : index
    %c0_64 = arith.constant 0 : index
    %52 = vector.load %arg10[%c0_63, %c0_64] : memref<192x128xf32, #tpu.memory_space<vmem>>, vector<192x128xf32>
    %c18 = arith.constant 18 : index
    %c0_65 = arith.constant 0 : index
    %53 = vector.load %arg9[%c18, %c0_65] : memref<232x128xbf16, #tpu.memory_space<vmem>>, vector<192x128xbf16>
    %c1_66 = arith.constant 1 : index
    %c2_67 = arith.constant 2 : index
    %c0_68 = arith.constant 0 : index
    %c0_69 = arith.constant 0 : index
    %54 = vector.load %arg2[%c1_66, %c2_67, %c0_68, %c0_69] : memref<3x3x128x128xbf16, #tpu.memory_space<vmem>>, vector<1x1x128x128xbf16>
    %55 = vector.shape_cast %54 : vector<1x1x128x128xbf16> to vector<128x128xbf16>
    %cst_70 = arith.constant dense<0.000000e+00> : vector<192x128xf32>
    %56 = tpu.matmul %53, %55, %cst_70 {dimension_numbers = #tpu.dot_dimension_numbers<[1], [0], [0], [1], [0, 0, 1, 1], [], []>} : vector<192x128xbf16>, vector<128x128xbf16>, vector<192x128xf32> -> vector<192x128xf32>
    %57 = arith.addf %52, %56 : vector<192x128xf32>
    %c0_71 = arith.constant 0 : index
    %c0_72 = arith.constant 0 : index
    %58 = vector.load %arg10[%c0_71, %c0_72] : memref<192x128xf32, #tpu.memory_space<vmem>>, vector<192x128xf32>
    tpu.vector_store %arg10[%c0_71, %c0_72], %57 {strides = array<i32>} : memref<192x128xf32, #tpu.memory_space<vmem>>, vector<192x128xf32>,
    %c0_73 = arith.constant 0 : index
    %c0_74 = arith.constant 0 : index
    %59 = vector.load %arg10[%c0_73, %c0_74] : memref<192x128xf32, #tpu.memory_space<vmem>>, vector<192x128xf32>
    %c32 = arith.constant 32 : index
    %c0_75 = arith.constant 0 : index
    %60 = vector.load %arg9[%c32, %c0_75] : memref<232x128xbf16, #tpu.memory_space<vmem>>, vector<192x128xbf16>
    %c2_76 = arith.constant 2 : index
    %c0_77 = arith.constant 0 : index
    %c0_78 = arith.constant 0 : index
    %c0_79 = arith.constant 0 : index
    %61 = vector.load %arg2[%c2_76, %c0_77, %c0_78, %c0_79] : memref<3x3x128x128xbf16, #tpu.memory_space<vmem>>, vector<1x1x128x128xbf16>
    %62 = vector.shape_cast %61 : vector<1x1x128x128xbf16> to vector<128x128xbf16>
    %cst_80 = arith.constant dense<0.000000e+00> : vector<192x128xf32>
    %63 = tpu.matmul %60, %62, %cst_80 {dimension_numbers = #tpu.dot_dimension_numbers<[1], [0], [0], [1], [0, 0, 1, 1], [], []>} : vector<192x128xbf16>, vector<128x128xbf16>, vector<192x128xf32> -> vector<192x128xf32>
    %64 = arith.addf %59, %63 : vector<192x128xf32>
    %c0_81 = arith.constant 0 : index
    %c0_82 = arith.constant 0 : index
    %65 = vector.load %arg10[%c0_81, %c0_82] : memref<192x128xf32, #tpu.memory_space<vmem>>, vector<192x128xf32>
    tpu.vector_store %arg10[%c0_81, %c0_82], %64 {strides = array<i32>} : memref<192x128xf32, #tpu.memory_space<vmem>>, vector<192x128xf32>,
    %c0_83 = arith.constant 0 : index
    %c0_84 = arith.constant 0 : index
    %66 = vector.load %arg10[%c0_83, %c0_84] : memref<192x128xf32, #tpu.memory_space<vmem>>, vector<192x128xf32>
    %c33 = arith.constant 33 : index
    %c0_85 = arith.constant 0 : index
    %67 = vector.load %arg9[%c33, %c0_85] : memref<232x128xbf16, #tpu.memory_space<vmem>>, vector<192x128xbf16>
    %c2_86 = arith.constant 2 : index
    %c1_87 = arith.constant 1 : index
    %c0_88 = arith.constant 0 : index
    %c0_89 = arith.constant 0 : index
    %68 = vector.load %arg2[%c2_86, %c1_87, %c0_88, %c0_89] : memref<3x3x128x128xbf16, #tpu.memory_space<vmem>>, vector<1x1x128x128xbf16>
    %69 = vector.shape_cast %68 : vector<1x1x128x128xbf16> to vector<128x128xbf16>
    %cst_90 = arith.constant dense<0.000000e+00> : vector<192x128xf32>
    %70 = tpu.matmul %67, %69, %cst_90 {dimension_numbers = #tpu.dot_dimension_numbers<[1], [0], [0], [1], [0, 0, 1, 1], [], []>} : vector<192x128xbf16>, vector<128x128xbf16>, vector<192x128xf32> -> vector<192x128xf32>
    %71 = arith.addf %66, %70 : vector<192x128xf32>
    %c0_91 = arith.constant 0 : index
    %c0_92 = arith.constant 0 : index
    %72 = vector.load %arg10[%c0_91, %c0_92] : memref<192x128xf32, #tpu.memory_space<vmem>>, vector<192x128xf32>
    tpu.vector_store %arg10[%c0_91, %c0_92], %71 {strides = array<i32>} : memref<192x128xf32, #tpu.memory_space<vmem>>, vector<192x128xf32>,
    %c0_93 = arith.constant 0 : index
    %c0_94 = arith.constant 0 : index
    %73 = vector.load %arg10[%c0_93, %c0_94] : memref<192x128xf32, #tpu.memory_space<vmem>>, vector<192x128xf32>
    %c34 = arith.constant 34 : index
    %c0_95 = arith.constant 0 : index
    %74 = vector.load %arg9[%c34, %c0_95] : memref<232x128xbf16, #tpu.memory_space<vmem>>, vector<192x128xbf16>
    %c2_96 = arith.constant 2 : index
    %c2_97 = arith.constant 2 : index
    %c0_98 = arith.constant 0 : index
    %c0_99 = arith.constant 0 : index
    %75 = vector.load %arg2[%c2_96, %c2_97, %c0_98, %c0_99] : memref<3x3x128x128xbf16, #tpu.memory_space<vmem>>, vector<1x1x128x128xbf16>
    %76 = vector.shape_cast %75 : vector<1x1x128x128xbf16> to vector<128x128xbf16>
    %cst_100 = arith.constant dense<0.000000e+00> : vector<192x128xf32>
    %77 = tpu.matmul %74, %76, %cst_100 {dimension_numbers = #tpu.dot_dimension_numbers<[1], [0], [0], [1], [0, 0, 1, 1], [], []>} : vector<192x128xbf16>, vector<128x128xbf16>, vector<192x128xf32> -> vector<192x128xf32>
    %78 = arith.addf %73, %77 : vector<192x128xf32>
    %c0_101 = arith.constant 0 : index
    %c0_102 = arith.constant 0 : index
    %79 = vector.load %arg10[%c0_101, %c0_102] : memref<192x128xf32, #tpu.memory_space<vmem>>, vector<192x128xf32>
    tpu.vector_store %arg10[%c0_101, %c0_102], %78 {strides = array<i32>} : memref<192x128xf32, #tpu.memory_space<vmem>>, vector<192x128xf32>,
    %c0_103 = arith.constant 0 : index
    %c0_104 = arith.constant 0 : index
    %80 = vector.load %arg10[%c0_103, %c0_104] : memref<192x128xf32, #tpu.memory_space<vmem>>, vector<192x128xf32>
    %c0_105 = arith.constant 0 : index
    %c0_106 = arith.constant 0 : index
    %81 = vector.load %arg3[%c0_105, %c0_106] : memref<1x128xf32, #tpu.memory_space<vmem>>, vector<1x128xf32>
    %82 = vector.broadcast %81 : vector<1x128xf32> to vector<192x128xf32>
    %83 = arith.addf %80, %82 : vector<192x128xf32>
    %c0_107 = arith.constant 0 : index
    %c0_108 = arith.constant 0 : index
    %c0_109 = arith.constant 0 : index
    %84 = vector.load %arg6[%c0_107, %c0_108, %c0_109] : memref<1x192x128xf32, #tpu.memory_space<vmem>>, vector<1x192x128xf32>
    %85 = vector.shape_cast %84 : vector<1x192x128xf32> to vector<192x128xf32>
    %86 = vector.shape_cast %83 : vector<192x128xf32> to vector<1x192x128xf32>
    tpu.vector_store %arg6[%c0_107, %c0_108, %c0_109], %86 {strides = array<i32>} : memref<1x192x128xf32, #tpu.memory_space<vmem>>, vector<1x192x128xf32>,
    %87 = tpu.iota {dimensions = array<i32: 0>} : vector<192x1xi32>
    %c16_i32 = arith.constant 16 : i32
    %c0_i32_110 = arith.constant 0 : i32
    %88 = arith.cmpi eq, %c16_i32, %c0_i32_110 : i32
    %c1_i32 = arith.constant 1 : i32
    %89 = arith.select %88, %c1_i32, %c16_i32 : i32
    %90 = vector.broadcast %89 : i32 to vector<192x1xi32>
    %91 = arith.remsi %87, %90 : vector<192x1xi32>
    %c0_i32_111 = arith.constant 0 : i32
    %92 = vector.broadcast %c0_i32_111 : i32 to vector<192x1xi32>
    %93 = arith.cmpi ne, %91, %92 : vector<192x1xi32>
    %c0_i32_112 = arith.constant 0 : i32
    %94 = vector.broadcast %c0_i32_112 : i32 to vector<192x1xi32>
    %95 = arith.cmpi slt, %91, %94 : vector<192x1xi32>
    %c0_i32_113 = arith.constant 0 : i32
    %96 = arith.cmpi slt, %89, %c0_i32_113 : i32
    %97 = vector.broadcast %96 : i1 to vector<192x1xi1>
    %98 = vector.broadcast %97 : vector<192x1xi1> to vector<192x1xi1>
    %99 = arith.xori %95, %98 : vector<192x1xi1>
    %100 = arith.andi %99, %93 : vector<192x1xi1>
    %101 = vector.broadcast %89 : i32 to vector<192x1xi32>
    %102 = arith.addi %91, %101 : vector<192x1xi32>
    %103 = arith.select %100, %102, %91 : vector<192x1xi1>, vector<192x1xi32>
    %c12_i32 = arith.constant 12 : i32
    %104 = vector.broadcast %c12_i32 : i32 to vector<192x1xi32>
    %105 = arith.cmpi slt, %103, %104 : vector<192x1xi32>
    %cst_114 = arith.constant 0.000000e+00 : f32
    %106 = vector.shape_cast %105 : vector<192x1xi1> to vector<192x1xi1>
    %107 = vector.broadcast %106 : vector<192x1xi1> to vector<192x128xi1>
    %108 = vector.broadcast %cst_114 : f32 to vector<192x128xf32>
    %109 = arith.select %107, %83, %108 : vector<192x128xi1>, vector<192x128xf32>
    %c0_115 = arith.constant 0 : index
    %c0_116 = arith.constant 0 : index
    %110 = vector.load %arg7[%c0_115, %c0_116] : memref<1x128xf32, #tpu.memory_space<vmem>>, vector<1x128xf32>
    %cst_117 = arith.constant dense<0.000000e+00> : vector<128xf32>
    %111 = vector.multi_reduction <add>, %109, %cst_117 [0] : vector<192x128xf32> to vector<128xf32>
    %112 = vector.shape_cast %111 : vector<128xf32> to vector<1x128xf32>
    %113 = arith.addf %110, %112 : vector<1x128xf32>
    %c0_118 = arith.constant 0 : index
    %c0_119 = arith.constant 0 : index
    %114 = vector.load %arg7[%c0_118, %c0_119] : memref<1x128xf32, #tpu.memory_space<vmem>>, vector<1x128xf32>
    tpu.vector_store %arg7[%c0_118, %c0_119], %113 {strides = array<i32>} : memref<1x128xf32, #tpu.memory_space<vmem>>, vector<1x128xf32>,
    %c0_120 = arith.constant 0 : index
    %c0_121 = arith.constant 0 : index
    %115 = vector.load %arg8[%c0_120, %c0_121] : memref<1x128xf32, #tpu.memory_space<vmem>>, vector<1x128xf32>
    %116 = arith.mulf %109, %109 : vector<192x128xf32>
    %cst_122 = arith.constant dense<0.000000e+00> : vector<128xf32>
    %117 = vector.multi_reduction <add>, %116, %cst_122 [0] : vector<192x128xf32> to vector<128xf32>
    %118 = vector.shape_cast %117 : vector<128xf32> to vector<1x128xf32>
    %119 = arith.addf %115, %118 : vector<1x128xf32>
    %c0_123 = arith.constant 0 : index
    %c0_124 = arith.constant 0 : index
    %120 = vector.load %arg8[%c0_123, %c0_124] : memref<1x128xf32, #tpu.memory_space<vmem>>, vector<1x128xf32>
    tpu.vector_store %arg8[%c0_123, %c0_124], %119 {strides = array<i32>} : memref<1x128xf32, #tpu.memory_space<vmem>>, vector<1x128xf32>,
    return
  }
  func.func @transform_0(%arg0: i32) -> (i32, i32, i32) {
    %c0_i32 = arith.constant 0 : i32
    %c0_i32_0 = arith.constant 0 : i32
    %c0_i32_1 = arith.constant 0 : i32
    return %arg0, %c0_i32, %c0_i32_0 : i32, i32, i32
  }
  func.func @transform_1(%arg0: i32) -> (i32, i32, i32, i32) {
    %c0_i32 = arith.constant 0 : i32
    %c0_i32_0 = arith.constant 0 : i32
    %c0_i32_1 = arith.constant 0 : i32
    %c0_i32_2 = arith.constant 0 : i32
    %c0_i32_3 = arith.constant 0 : i32
    return %c0_i32, %c0_i32_0, %c0_i32_1, %c0_i32_2 : i32, i32, i32, i32
  }
  func.func @transform_2(%arg0: i32) -> (i32, i32) {
    %c0_i32 = arith.constant 0 : i32
    %c0_i32_0 = arith.constant 0 : i32
    %c0_i32_1 = arith.constant 0 : i32
    return %c0_i32, %c0_i32_0 : i32, i32
  }
  func.func @transform_3(%arg0: i32) -> (i32, i32) {
    %c0_i32 = arith.constant 0 : i32
    %c0_i32_0 = arith.constant 0 : i32
    %c0_i32_1 = arith.constant 0 : i32
    return %c0_i32, %c0_i32_0 : i32, i32
  }
  func.func @transform_4(%arg0: i32) -> (i32, i32) {
    %c0_i32 = arith.constant 0 : i32
    %c0_i32_0 = arith.constant 0 : i32
    %c0_i32_1 = arith.constant 0 : i32
    return %c0_i32, %c0_i32_0 : i32, i32
  }
  func.func @transform_5(%arg0: i32) -> (i32, i32, i32) {
    %c0_i32 = arith.constant 0 : i32
    %c0_i32_0 = arith.constant 0 : i32
    %c0_i32_1 = arith.constant 0 : i32
    return %arg0, %c0_i32, %c0_i32_0 : i32, i32, i32
  }
  func.func @transform_6(%arg0: i32) -> (i32, i32) {
    %c0_i32 = arith.constant 0 : i32
    %c0_i32_0 = arith.constant 0 : i32
    %c0_i32_1 = arith.constant 0 : i32
    return %c0_i32, %c0_i32_0 : i32, i32
  }
  func.func @transform_7(%arg0: i32) -> (i32, i32) {
    %c0_i32 = arith.constant 0 : i32
    %c0_i32_0 = arith.constant 0 : i32
    %c0_i32_1 = arith.constant 0 : i32
    return %c0_i32, %c0_i32_0 : i32, i32
  }
}

module attributes {stable_mosaic.version = 11 : i64} {
  func.func @_bn_relu_matmul_kernel(%arg0: i32, %arg1: memref<256x128xf32, #tpu.memory_space<vmem>>, %arg2: memref<1x128xf32, #tpu.memory_space<vmem>>, %arg3: memref<1x128xf32, #tpu.memory_space<vmem>>, %arg4: memref<128x256xbf16, #tpu.memory_space<vmem>>, %arg5: memref<1x256xf32, #tpu.memory_space<vmem>>, %arg6: memref<256x256xf32, #tpu.memory_space<vmem>>) attributes {dimension_semantics = [#tpu.dimension_semantics<parallel>], iteration_bounds = array<i64: 2>, scalar_prefetch = 0 : i64, scratch_operands = 0 : i64, tpu.core_type = #tpu.core_type<tc>, window_params = [{transform_indices = @transform_0, window_bounds = array<i64: 256, 128>}, {pipeline_mode = #tpu.pipeline_mode<synchronous>, transform_indices = @transform_1, window_bounds = array<i64: 1, 128>}, {pipeline_mode = #tpu.pipeline_mode<synchronous>, transform_indices = @transform_2, window_bounds = array<i64: 1, 128>}, {pipeline_mode = #tpu.pipeline_mode<synchronous>, transform_indices = @transform_3, window_bounds = array<i64: 128, 256>}, {pipeline_mode = #tpu.pipeline_mode<synchronous>, transform_indices = @transform_4, window_bounds = array<i64: 1, 256>}, {transform_indices = @transform_5, window_bounds = array<i64: 256, 256>}]} {
    %c0 = arith.constant 0 : index
    %c0_0 = arith.constant 0 : index
    %0 = vector.load %arg1[%c0, %c0_0] : memref<256x128xf32, #tpu.memory_space<vmem>>, vector<256x128xf32>
    %c0_1 = arith.constant 0 : index
    %c0_2 = arith.constant 0 : index
    %1 = vector.load %arg2[%c0_1, %c0_2] : memref<1x128xf32, #tpu.memory_space<vmem>>, vector<1x128xf32>
    %2 = vector.broadcast %1 : vector<1x128xf32> to vector<256x128xf32>
    %3 = arith.mulf %0, %2 : vector<256x128xf32>
    %c0_3 = arith.constant 0 : index
    %c0_4 = arith.constant 0 : index
    %4 = vector.load %arg3[%c0_3, %c0_4] : memref<1x128xf32, #tpu.memory_space<vmem>>, vector<1x128xf32>
    %5 = vector.broadcast %4 : vector<1x128xf32> to vector<256x128xf32>
    %6 = arith.addf %3, %5 : vector<256x128xf32>
    %cst = arith.constant 0.000000e+00 : f32
    %7 = vector.broadcast %cst : f32 to vector<256x128xf32>
    %8 = arith.maximumf %6, %7 : vector<256x128xf32>
    %9 = arith.truncf %8 : vector<256x128xf32> to vector<256x128xbf16>
    %c0_5 = arith.constant 0 : index
    %c0_6 = arith.constant 0 : index
    %10 = vector.load %arg4[%c0_5, %c0_6] : memref<128x256xbf16, #tpu.memory_space<vmem>>, vector<128x256xbf16>
    %cst_7 = arith.constant dense<0.000000e+00> : vector<256x256xf32>
    %11 = tpu.matmul %9, %10, %cst_7 {dimension_numbers = #tpu.dot_dimension_numbers<[1], [0], [0], [1], [0, 0, 1, 1], [], []>} : vector<256x128xbf16>, vector<128x256xbf16>, vector<256x256xf32> -> vector<256x256xf32>
    %c0_8 = arith.constant 0 : index
    %c0_9 = arith.constant 0 : index
    %12 = vector.load %arg5[%c0_8, %c0_9] : memref<1x256xf32, #tpu.memory_space<vmem>>, vector<1x256xf32>
    %13 = vector.broadcast %12 : vector<1x256xf32> to vector<256x256xf32>
    %14 = arith.addf %11, %13 : vector<256x256xf32>
    %c0_10 = arith.constant 0 : index
    %c0_11 = arith.constant 0 : index
    %15 = vector.load %arg6[%c0_10, %c0_11] : memref<256x256xf32, #tpu.memory_space<vmem>>, vector<256x256xf32>
    tpu.vector_store %arg6[%c0_10, %c0_11], %14 {strides = array<i32>} : memref<256x256xf32, #tpu.memory_space<vmem>>, vector<256x256xf32>,
    return
  }
  func.func @transform_0(%arg0: i32) -> (i32, i32) {
    %c0_i32 = arith.constant 0 : i32
    %c0_i32_0 = arith.constant 0 : i32
    return %arg0, %c0_i32 : i32, i32
  }
  func.func @transform_1(%arg0: i32) -> (i32, i32) {
    %c0_i32 = arith.constant 0 : i32
    %c0_i32_0 = arith.constant 0 : i32
    %c0_i32_1 = arith.constant 0 : i32
    return %c0_i32, %c0_i32_0 : i32, i32
  }
  func.func @transform_2(%arg0: i32) -> (i32, i32) {
    %c0_i32 = arith.constant 0 : i32
    %c0_i32_0 = arith.constant 0 : i32
    %c0_i32_1 = arith.constant 0 : i32
    return %c0_i32, %c0_i32_0 : i32, i32
  }
  func.func @transform_3(%arg0: i32) -> (i32, i32) {
    %c0_i32 = arith.constant 0 : i32
    %c0_i32_0 = arith.constant 0 : i32
    %c0_i32_1 = arith.constant 0 : i32
    return %c0_i32, %c0_i32_0 : i32, i32
  }
  func.func @transform_4(%arg0: i32) -> (i32, i32) {
    %c0_i32 = arith.constant 0 : i32
    %c0_i32_0 = arith.constant 0 : i32
    %c0_i32_1 = arith.constant 0 : i32
    return %c0_i32, %c0_i32_0 : i32, i32
  }
  func.func @transform_5(%arg0: i32) -> (i32, i32) {
    %c0_i32 = arith.constant 0 : i32
    %c0_i32_0 = arith.constant 0 : i32
    return %arg0, %c0_i32 : i32, i32
  }
}

</mosaic_0001>

<llo_original>
// kernel: tile.9
$region0: #{tile.9}
  %s0 = inlined_call_operand.vmem [shape: f32[4,64], index: 0, kind: input, shape index: {}]
  %s1 = inlined_call_operand.vmem [shape: f32[1,256], index: 1, kind: output, shape index: {}]
  $region1: #{tile.9} parent=0
    #allocation0 [shape = 'u8[8192]{0}', space=vmem, size = 0x2000, scoped, tag = 'scoped mem for output reshape']
    #allocation1 [shape = 'u8[4096]{0}', space=vmem, size = 0x1000, scoped, tag = 'scoped mem for input reshape']
    %s3 = sshllo.u32 0, 4
    %v4 = vld [vmem:[%s0] sm:%s3]
    %5 = vst [vmem:[#allocation1] sm:%s3] %v4
    %s6 = smov 3
    %v7 = vld [vmem:[#allocation1] ss:$2 sm:%s6]
    %vm8 = vcmask 523264
    %9 = vst.msk [vmem:[#allocation0] ss:$8 sm:$0x3] %vm8, %v7
    %s10 = scalar_lea.vmem [#allocation1], 1
    %s11 = smov 3
    %v12 = vld [vmem:[%s10] ss:$2 sm:%s11]
    %13 = vrot.lane.b32.xlu0 %v12, 64
    %v14 = vpop.permute.xlu0 %13
    %vm15 = vcmask 1048064
    %16 = vst.msk [vmem:[#allocation0] ss:$8 sm:$0x3] %vm15, %v14
    %s18 = sshllo.u32 0, 1
    %v20 = vld [vmem:[#allocation0] sm:%s18]
    %s21 = sshllo.u32 0, 1
    %22 = vst [vmem:[%s1] sm:%s21] %v20
    %s23 = scalar_lea.vmem [#allocation0], 8
    %v24 = vld [vmem:[%s23] sm:%s18]
    %s25 = sshllo.u32 0, 1
    %s26 = scalar_lea.vmem %s1, 1
    %27 = vst [vmem:[%s26] sm:%s25] %v24

// kernel: tile.8
$region0: #{tile.8}
  #allocation2 [shape = 's32[1]{0}', space=sflag, size = 0x4, scoped, tag = 'scoped memory for tile.8']
  %s0 = inlined_call_operand.hbm [shape: f32[64], index: 0, kind: input, shape index: {}]
  %s1 = inlined_call_operand.vmem [shape: f32[4,64], index: 1, kind: output, shape index: {}]
  $region1: #{tile.8} parent=0
    #allocation0 [shape = 'u8[512]{0}', space=vmem, size = 0x400, scoped, tag = 'operand span for operand 0']
    #allocation1 [shape = 's32[1]{0}', space=sflag, size = 0x4, scoped, tag = 'scoped memory for tile.8']
    %2 = vsyncpa [#allocation1], 0
    // Predicated region
    $region2: #{tile.8} parent=1 // pred_check
      _
    $region3: #{tile.8} parent=1 // pred_check_branch
      %4 = sbr.rel (0) target = $region5
    $region4: #{tile.8} parent=1 // pred_region
      %s6 = ssub.s32 16, 16
      %7 = vsyncadd [#allocation1], %s6
      %s9 = sshll.u32 [#allocation0], 4
      %s10 = int_to_ptr.vmem [resolvable:$true] %s9
      %12 = dma.hbm_to_vmem [thread:$0]  %s0, 16, %s10, [#allocation1]
    $region5: #{tile.8} parent=1 // pred_fallthru
      _
    // Predicated region
    $region6: #{tile.8} parent=1 // pred_check
      _
    $region7: #{tile.8} parent=1 // pred_check_branch
      %14 = sbr.rel (0) target = $region9
    $region8: #{tile.8} parent=1 // pred_region
      %15 = dma.done [#allocation1], 16
    $region9: #{tile.8} parent=1 // pred_fallthru
      _
    %v16 = vld [vmem:[#allocation0] ss:$0 sm:$0xff]
    %17 = vst [vmem:[%s1] sm:$0xf] %v16
    %18 = vsyncpa [#allocation1], 1

// kernel: decoder_block_forward.5
$region0: #{decoder_block_forward.5}
  #allocation0 [shape = 'u32[]', space=smem, size = 0x4, offset = 0x4, fixed_abs, tag = 'smem constant byte address 0x4 - core index']
  #allocation1 [shape = 'u32[144,128]{1,0:T(1,128)}', space=vmem, size = 0x12000, scoped, tag = 'internal scratch']
  %s0 = inlined_call_operand.vmem [shape: f32[512,128], index: 0, kind: input, shape index: {}]
  %s1 = inlined_call_operand.vmem [shape: f32[1,128], index: 1, kind: input, shape index: {}]
  %s2 = inlined_call_operand.vmem [shape: f32[1,128], index: 2, kind: input, shape index: {}]
  %s3 = inlined_call_operand.vmem [shape: bf16[128,256], index: 3, kind: input, shape index: {}]
  %s4 = inlined_call_operand.vmem [shape: f32[1,256], index: 4, kind: input, shape index: {}]
  %s5 = inlined_call_operand.vmem [shape: f32[512,256], index: 5, kind: output, shape index: {}]
  %s6 = sld [smem:[#allocation0]]
  $region53: #{decoder_block_forward.5} parent=0
    _
  %s8 = ssub.s32 1, %s6
  %s9 = scalar_select 0, %s8, %s6
  loop: start=0, step=1, limit=4
  $region2: #{decoder_block_forward.5} parent=0 // loop_pre_header
    _
  $region3: #{decoder_block_forward.5} parent=0 // loop_header
    %s11 = sphi 0, %s15
    %p12 = scmp.ge.s32.totalorder %s11, 4
    %s21 = sphi 0, %s23
    %s24 = sphi 0, %s21
    %s25 = sphi 0, %s24
    %s41 = sphi 0, %s25
    %s45 = sphi 0, %s45
    %s47 = sphi 0, %s45
    %s48 = sphi 0, %s47
    %s62 = sphi 0, %s48
    %s66 = sphi 0, %s66
    %s68 = sphi 0, %s66
    %s69 = sphi 0, %s68
    %s83 = sphi 0, %s69
    %s87 = sphi 0, %s87
    %s89 = sphi 0, %s87
    %s90 = sphi 0, %s89
    %s104 = sphi 0, %s90
    %s108 = sphi 0, %s108
    %s110 = sphi 0, %s108
    %s111 = sphi 0, %s110
    %s125 = sphi 0, %s111
    %s131 = sphi 0, %s133
    %s134 = sphi 0, %s131
    %s135 = sphi 0, %s134
    %s151 = sphi 0, %s135
  $region4: #{decoder_block_forward.5} parent=0 // loop_header_branch
    %14 = sbr.rel (%p12) target = $region8
  $region5: #{decoder_block_forward.5} parent=0 // loop_body
    %s16 = ssub.s32 %s11, 1
    %s17 = ssub.s32 %s11, 2
    %s18 = sadd.s32 %s11, 1
    %s19 = ssub.s32 %s11, %s18
    %p20 = scmp.eq.s32.totalorder %s19, 0
    %s22 = sadd.s32 %s21, 1
    %s23 = scalar_select %p20, %s21, %s22
    %p26 = pneg %p20
    %p27 = scmp.eq.s32.totalorder %s11, 1
    %p28 = por %p26, %p27
    %p29 = scmp.ne.s32.totalorder %s21, %s24
    %p30 = scmp.eq.s32.totalorder %s11, 0
    %p31 = por %p29, %p30
    %p32 = scmp.ne.s32.totalorder %s21, %s24
    %p33 = scmp.eq.s32.totalorder %s16, 1
    %p34 = por %p32, %p33
    %p35 = scmp.ne.s32.totalorder %s24, %s25
    %p36 = scmp.eq.s32.totalorder %s16, 0
    %p37 = por %p35, %p36
    %p38 = scmp.ne.s32.totalorder %s24, %s25
    %p39 = scmp.eq.s32.totalorder %s17, 1
    %p40 = por %p38, %p39
    %p42 = scmp.ne.s32.totalorder %s25, %s41
    %p43 = scmp.eq.s32.totalorder %s17, 0
    %p44 = por %p42, %p43
    %s46 = sadd.s32 %s45, 1
    %p49 = scmp.eq.s32.totalorder %s11, 1
    %p50 = scmp.ne.s32.totalorder %s45, %s47
    %p51 = scmp.eq.s32.totalorder %s11, 0
    %p52 = por %p50, %p51
    %p53 = scmp.ne.s32.totalorder %s45, %s47
    %p54 = scmp.eq.s32.totalorder %s16, 1
    %p55 = por %p53, %p54
    %p56 = scmp.ne.s32.totalorder %s47, %s48
    %p57 = scmp.eq.s32.totalorder %s16, 0
    %p58 = por %p56, %p57
    %p59 = scmp.ne.s32.totalorder %s47, %s48
    %p60 = scmp.eq.s32.totalorder %s17, 1
    %p61 = por %p59, %p60
    %p63 = scmp.ne.s32.totalorder %s48, %s62
    %p64 = scmp.eq.s32.totalorder %s17, 0
    %p65 = por %p63, %p64
    %s67 = sadd.s32 %s66, 1
    %p70 = scmp.eq.s32.totalorder %s11, 1
    %p71 = scmp.ne.s32.totalorder %s66, %s68
    %p72 = scmp.eq.s32.totalorder %s11, 0
    %p73 = por %p71, %p72
    %p74 = scmp.ne.s32.totalorder %s66, %s68
    %p75 = scmp.eq.s32.totalorder %s16, 1
    %p76 = por %p74, %p75
    %p77 = scmp.ne.s32.totalorder %s68, %s69
    %p78 = scmp.eq.s32.totalorder %s16, 0
    %p79 = por %p77, %p78
    %p80 = scmp.ne.s32.totalorder %s68, %s69
    %p81 = scmp.eq.s32.totalorder %s17, 1
    %p82 = por %p80, %p81
    %p84 = scmp.ne.s32.totalorder %s69, %s83
    %p85 = scmp.eq.s32.totalorder %s17, 0
    %p86 = por %p84, %p85
    %s88 = sadd.s32 %s87, 1
    %p91 = scmp.eq.s32.totalorder %s11, 1
    %p92 = scmp.ne.s32.totalorder %s87, %s89
    %p93 = scmp.eq.s32.totalorder %s11, 0
    %p94 = por %p92, %p93
    %p95 = scmp.ne.s32.totalorder %s87, %s89
    %p96 = scmp.eq.s32.totalorder %s16, 1
    %p97 = por %p95, %p96
    %p98 = scmp.ne.s32.totalorder %s89, %s90
    %p99 = scmp.eq.s32.totalorder %s16, 0
    %p100 = por %p98, %p99
    %p101 = scmp.ne.s32.totalorder %s89, %s90
    %p102 = scmp.eq.s32.totalorder %s17, 1
    %p103 = por %p101, %p102
    %p105 = scmp.ne.s32.totalorder %s90, %s104
    %p106 = scmp.eq.s32.totalorder %s17, 0
    %p107 = por %p105, %p106
    %s109 = sadd.s32 %s108, 1
    %p112 = scmp.eq.s32.totalorder %s11, 1
    %p113 = scmp.ne.s32.totalorder %s108, %s110
    %p114 = scmp.eq.s32.totalorder %s11, 0
    %p115 = por %p113, %p114
    %p116 = scmp.ne.s32.totalorder %s108, %s110
    %p117 = scmp.eq.s32.totalorder %s16, 1
    %p118 = por %p116, %p117
    %p119 = scmp.ne.s32.totalorder %s110, %s111
    %p120 = scmp.eq.s32.totalorder %s16, 0
    %p121 = por %p119, %p120
    %p122 = scmp.ne.s32.totalorder %s110, %s111
    %p123 = scmp.eq.s32.totalorder %s17, 1
    %p124 = por %p122, %p123
    %p126 = scmp.ne.s32.totalorder %s111, %s125
    %p127 = scmp.eq.s32.totalorder %s17, 0
    %p128 = por %p126, %p127
    %s129 = ssub.s32 %s11, %s18
    %p130 = scmp.eq.s32.totalorder %s129, 0
    %s132 = sadd.s32 %s131, 1
    %s133 = scalar_select %p130, %s131, %s132
    %p136 = pneg %p130
    %p137 = scmp.eq.s32.totalorder %s11, 1
    %p138 = por %p136, %p137
    %p139 = scmp.ne.s32.totalorder %s131, %s134
    %p140 = scmp.eq.s32.totalorder %s11, 0
    %p141 = por %p139, %p140
    %p142 = scmp.ne.s32.totalorder %s131, %s134
    %p143 = scmp.eq.s32.totalorder %s16, 1
    %p144 = por %p142, %p143
    %p145 = scmp.ne.s32.totalorder %s134, %s135
    %p146 = scmp.eq.s32.totalorder %s16, 0
    %p147 = por %p145, %p146
    %p148 = scmp.ne.s32.totalorder %s134, %s135
    %p149 = scmp.eq.s32.totalorder %s17, 1
    %p150 = por %p148, %p149
    %p152 = scmp.ne.s32.totalorder %s135, %s151
    %p153 = scmp.eq.s32.totalorder %s17, 0
    %p154 = por %p152, %p153
    %p155 = scmp.le.s32.totalorder 1, %s11
    %p156 = scmp.lt.s32.totalorder %s11, 3
    %p157 = pnand %p155, %p156
    %p158 = pneg %p157
    // Predicated region
    $region9: #{decoder_block_forward.5} parent=5 // pred_check
      _
    $region10: #{decoder_block_forward.5} parent=5 // pred_check_branch
      %160 = sbr.rel (%p157) target = $region12
    $region11: #{decoder_block_forward.5} parent=5 // pred_region
      %s161 = ssub.s32 %s11, 1
      // Predicated region
      $region13: #{decoder_block_forward.5} parent=11 // pred_check
        %p162 = pneg %p58
      $region14: #{decoder_block_forward.5} parent=11 // pred_check_branch
        %164 = sbr.rel (%p162) target = $region16
      $region15: #{decoder_block_forward.5} parent=11 // pred_region
        _
      $region16: #{decoder_block_forward.5} parent=11 // pred_fallthru
        _
      // Predicated region
      $region17: #{decoder_block_forward.5} parent=11 // pred_check
        %p165 = pneg %p79
      $region18: #{decoder_block_forward.5} parent=11 // pred_check_branch
        %167 = sbr.rel (%p165) target = $region20
      $region19: #{decoder_block_forward.5} parent=11 // pred_region
        _
      $region20: #{decoder_block_forward.5} parent=11 // pred_fallthru
        _
      // Predicated region
      $region21: #{decoder_block_forward.5} parent=11 // pred_check
        %p168 = pneg %p100
      $region22: #{decoder_block_forward.5} parent=11 // pred_check_branch
        %170 = sbr.rel (%p168) target = $region24
      $region23: #{decoder_block_forward.5} parent=11 // pred_region
        _
      $region24: #{decoder_block_forward.5} parent=11 // pred_fallthru
        _
      // Predicated region
      $region25: #{decoder_block_forward.5} parent=11 // pred_check
        %p171 = pneg %p121
      $region26: #{decoder_block_forward.5} parent=11 // pred_check_branch
        %173 = sbr.rel (%p171) target = $region28
      $region27: #{decoder_block_forward.5} parent=11 // pred_region
        _
      $region28: #{decoder_block_forward.5} parent=11 // pred_fallthru
        _
    $region12: #{decoder_block_forward.5} parent=5 // pred_fallthru
      _
    %p174 = scmp.lt.s32.totalorder %s11, 2
    // Predicated region
    $region29: #{decoder_block_forward.5} parent=5 // pred_check
      %p175 = pneg %p174
    $region30: #{decoder_block_forward.5} parent=5 // pred_check_branch
      %177 = sbr.rel (%p175) target = $region32
    $region31: #{decoder_block_forward.5} parent=5 // pred_region
      // Predicated region
      $region33: #{decoder_block_forward.5} parent=31 // pred_check
        %p178 = pneg %p31
      $region34: #{decoder_block_forward.5} parent=31 // pred_check_branch
        %180 = sbr.rel (%p178) target = $region36
      $region35: #{decoder_block_forward.5} parent=31 // pred_region
        %s181 = smul.u32 32, %s11
        %p182 = scmp.lt.s32.totalorder %s181, 63
        %s183 = scalar_select %p182, %s181, 63
        %s184 = smul.addr %s183, 8
        %s185 = scalar_lea.vmem %s0, %s184
        %s186 = smul.u32 32, %s11
      $region36: #{decoder_block_forward.5} parent=31 // pred_fallthru
        _
    $region32: #{decoder_block_forward.5} parent=5 // pred_fallthru
      _
    %p187 = scmp.le.s32.totalorder 1, %s11
    %p188 = scmp.lt.s32.totalorder %s11, 3
    %p189 = pnand %p187, %p188
    %p190 = pneg %p189
    // Predicated region
    $region37: #{decoder_block_forward.5} parent=5 // pred_check
      _
    $region38: #{decoder_block_forward.5} parent=5 // pred_check_branch
      %192 = sbr.rel (%p189) target = $region40
    $region39: #{decoder_block_forward.5} parent=5 // pred_region
      %s193 = ssub.s32 %s11, 1
      %s194 = smul.u32 32, %s16
      %p195 = scmp.lt.s32.totalorder %s194, 63
      %s196 = scalar_select %p195, %s194, 63
      %s197 = smul.addr %s196, 8
      %s198 = scalar_lea.vmem %s0, %s197
      %p199 = pneg %p37
      %p200 = pneg %p34
      %p201 = pneg %p58
      %p202 = pneg %p55
      %p203 = pneg %p79
      %p204 = pneg %p76
      %p205 = pneg %p100
      %p206 = pneg %p97
      %p207 = pneg %p121
      %p208 = pneg %p118
      %p209 = pneg %p147
      %p210 = pneg %p144
      %s211 = smul.u32 32, %s16
      %p212 = scmp.lt.s32.totalorder %s211, 63
      %s213 = scalar_select %p212, %s211, 63
      %s214 = smul.addr %s213, 2
      %s215 = smul.addr %s214, 8
      %s216 = scalar_lea.vmem %s5, %s215
      %s217 = smul.u32 32, %s16
      %p218 = scmp.lt.s32.totalorder %s217, 63
      %s219 = scalar_select %p218, %s217, 63
      %s220 = smul.addr %s219, 8
      %s221 = scalar_lea.vmem %s0, %s220
      %s222 = smul.u32 32, %s16
      %s223 = smul.u32 32, %s16
      %p224 = scmp.lt.s32.totalorder %s223, 63
      %s225 = scalar_select %p224, %s223, 63
      %s226 = smul.addr %s225, 2
      %s227 = smul.addr %s226, 8
      %s228 = scalar_lea.vmem %s5, %s227
      %s229 = smul.u32 32, %s16
      %v231 = vld [vmem:[%s221] sm:$0xff]
      %v232 = vld [vmem:[%s221 + $0x8] sm:$0xff]
      %v233 = vld [vmem:[%s221 + $0x10] sm:$0xff]
      %v234 = vld [vmem:[%s221 + $0x18] sm:$0xff]
      %v235 = vld [vmem:[%s221 + $0x20] sm:$0xff]
      %v236 = vld [vmem:[%s221 + $0x28] sm:$0xff]
      %v237 = vld [vmem:[%s221 + $0x30] sm:$0xff]
      %v238 = vld [vmem:[%s221 + $0x38] sm:$0xff]
      %v239 = vld [vmem:[%s221 + $0x40] sm:$0xff]
      %v240 = vld [vmem:[%s221 + $0x48] sm:$0xff]
      %v241 = vld [vmem:[%s221 + $0x50] sm:$0xff]
      %v242 = vld [vmem:[%s221 + $0x58] sm:$0xff]
      %v243 = vld [vmem:[%s221 + $0x60] sm:$0xff]
      %v244 = vld [vmem:[%s221 + $0x68] sm:$0xff]
      %v245 = vld [vmem:[%s221 + $0x70] sm:$0xff]
      %v246 = vld [vmem:[%s221 + $0x78] sm:$0xff]
      %v247 = vld [vmem:[%s221 + $0x80] sm:$0xff]
      %v248 = vld [vmem:[%s221 + $0x88] sm:$0xff]
      %v249 = vld [vmem:[%s221 + $0x90] sm:$0xff]
      %v250 = vld [vmem:[%s221 + $0x98] sm:$0xff]
      %v251 = vld [vmem:[%s221 + $0xa0] sm:$0xff]
      %v252 = vld [vmem:[%s221 + $0xa8] sm:$0xff]
      %v253 = vld [vmem:[%s221 + $0xb0] sm:$0xff]
      %v254 = vld [vmem:[%s221 + $0xb8] sm:$0xff]
      %v255 = vld [vmem:[%s221 + $0xc0] sm:$0xff]
      %v256 = vld [vmem:[%s221 + $0xc8] sm:$0xff]
      %v257 = vld [vmem:[%s221 + $0xd0] sm:$0xff]
      %v258 = vld [vmem:[%s221 + $0xd8] sm:$0xff]
      %v259 = vld [vmem:[%s221 + $0xe0] sm:$0xff]
      %v260 = vld [vmem:[%s221 + $0xe8] sm:$0xff]
      %v261 = vld [vmem:[%s221 + $0xf0] sm:$0xff]
      %v262 = vld [vmem:[%s221 + $0xf8] sm:$0xff]
      %v263 = vld [vmem:[%s1] sm:$0x1]
      %v265 = vlaneseq
      %v266 = vshrl.u32 %v265, 7
      %v267 = vsub.s32 0, %v266
      %v268 = vrot.slane %v263, %v267
      %v270 = vmul.f32 %v231, %v268
      %v271 = vmul.f32 %v232, %v268
      %v272 = vmul.f32 %v233, %v268
      %v273 = vmul.f32 %v234, %v268
      %v274 = vmul.f32 %v235, %v268
      %v275 = vmul.f32 %v236, %v268
      %v276 = vmul.f32 %v237, %v268
      %v277 = vmul.f32 %v238, %v268
      %v278 = vmul.f32 %v239, %v268
      %v279 = vmul.f32 %v240, %v268
      %v280 = vmul.f32 %v241, %v268
      %v281 = vmul.f32 %v242, %v268
      %v282 = vmul.f32 %v243, %v268
      %v283 = vmul.f32 %v244, %v268
      %v284 = vmul.f32 %v245, %v268
      %v285 = vmul.f32 %v246, %v268
      %v286 = vmul.f32 %v247, %v268
      %v287 = vmul.f32 %v248, %v268
      %v288 = vmul.f32 %v249, %v268
      %v289 = vmul.f32 %v250, %v268
      %v290 = vmul.f32 %v251, %v268
      %v291 = vmul.f32 %v252, %v268
      %v292 = vmul.f32 %v253, %v268
      %v293 = vmul.f32 %v254, %v268
      %v294 = vmul.f32 %v255, %v268
      %v295 = vmul.f32 %v256, %v268
      %v296 = vmul.f32 %v257, %v268
      %v297 = vmul.f32 %v258, %v268
      %v298 = vmul.f32 %v259, %v268
      %v299 = vmul.f32 %v260, %v268
      %v300 = vmul.f32 %v261, %v268
      %v301 = vmul.f32 %v262, %v268
      %v302 = vld [vmem:[%s2] sm:$0x1]
      %v304 = vlaneseq
      %v305 = vshrl.u32 %v304, 7
      %v306 = vsub.s32 0, %v305
      %v307 = vrot.slane %v302, %v306
      %v309 = vadd.f32 %v270, %v307
      %v310 = vadd.f32 %v271, %v307
      %v311 = vadd.f32 %v272, %v307
      %v312 = vadd.f32 %v273, %v307
      %v313 = vadd.f32 %v274, %v307
      %v314 = vadd.f32 %v275, %v307
      %v315 = vadd.f32 %v276, %v307
      %v316 = vadd.f32 %v277, %v307
      %v317 = vadd.f32 %v278, %v307
      %v318 = vadd.f32 %v279, %v307
      %v319 = vadd.f32 %v280, %v307
      %v320 = vadd.f32 %v281, %v307
      %v321 = vadd.f32 %v282, %v307
      %v322 = vadd.f32 %v283, %v307
      %v323 = vadd.f32 %v284, %v307
      %v324 = vadd.f32 %v285, %v307
      %v325 = vadd.f32 %v286, %v307
      %v326 = vadd.f32 %v287, %v307
      %v327 = vadd.f32 %v288, %v307
      %v328 = vadd.f32 %v289, %v307
      %v329 = vadd.f32 %v290, %v307
      %v330 = vadd.f32 %v291, %v307
      %v331 = vadd.f32 %v292, %v307
      %v332 = vadd.f32 %v293, %v307
      %v333 = vadd.f32 %v294, %v307
      %v334 = vadd.f32 %v295, %v307
      %v335 = vadd.f32 %v296, %v307
      %v336 = vadd.f32 %v297, %v307
      %v337 = vadd.f32 %v298, %v307
      %v338 = vadd.f32 %v299, %v307
      %v339 = vadd.f32 %v300, %v307
      %v340 = vadd.f32 %v301, %v307
      %v341 = vmax.f32 %v309, 0.0
      %v342 = vmax.f32 %v310, 0.0
      %v343 = vmax.f32 %v311, 0.0
      %v344 = vmax.f32 %v312, 0.0
      %v345 = vmax.f32 %v313, 0.0
      %v346 = vmax.f32 %v314, 0.0
      %v347 = vmax.f32 %v315, 0.0
      %v348 = vmax.f32 %v316, 0.0
      %v349 = vmax.f32 %v317, 0.0
      %v350 = vmax.f32 %v318, 0.0
      %v351 = vmax.f32 %v319, 0.0
      %v352 = vmax.f32 %v320, 0.0
      %v353 = vmax.f32 %v321, 0.0
      %v354 = vmax.f32 %v322, 0.0
      %v355 = vmax.f32 %v323, 0.0
      %v356 = vmax.f32 %v324, 0.0
      %v357 = vmax.f32 %v325, 0.0
      %v358 = vmax.f32 %v326, 0.0
      %v359 = vmax.f32 %v327, 0.0
      %v360 = vmax.f32 %v328, 0.0
      %v361 = vmax.f32 %v329, 0.0
      %v362 = vmax.f32 %v330, 0.0
      %v363 = vmax.f32 %v331, 0.0
      %v364 = vmax.f32 %v332, 0.0
      %v365 = vmax.f32 %v333, 0.0
      %v366 = vmax.f32 %v334, 0.0
      %v367 = vmax.f32 %v335, 0.0
      %v368 = vmax.f32 %v336, 0.0
      %v369 = vmax.f32 %v337, 0.0
      %v370 = vmax.f32 %v338, 0.0
      %v371 = vmax.f32 %v339, 0.0
      %v372 = vmax.f32 %v340, 0.0
      %v373 = vpack.c.bf16 %v342, %v341
      %v374 = vpack.c.bf16 %v344, %v343
      %v375 = vpack.c.bf16 %v346, %v345
      %v376 = vpack.c.bf16 %v348, %v347
      %v377 = vpack.c.bf16 %v350, %v349
      %v378 = vpack.c.bf16 %v352, %v351
      %v379 = vpack.c.bf16 %v354, %v353
      %v380 = vpack.c.bf16 %v356, %v355
      %v381 = vpack.c.bf16 %v358, %v357
      %v382 = vpack.c.bf16 %v360, %v359
      %v383 = vpack.c.bf16 %v362, %v361
      %v384 = vpack.c.bf16 %v364, %v363
      %v385 = vpack.c.bf16 %v366, %v365
      %v386 = vpack.c.bf16 %v368, %v367
      %v387 = vpack.c.bf16 %v370, %v369
      %v388 = vpack.c.bf16 %v372, %v371
      %v389 = vld [vmem:[%s3] sm:$0xff]
      %v390 = vld [vmem:[%s3 + $0x8] sm:$0xff]
      %v391 = vld [vmem:[%s3 + $0x10] sm:$0xff]
      %v392 = vld [vmem:[%s3 + $0x18] sm:$0xff]
      %v393 = vld [vmem:[%s3 + $0x20] sm:$0xff]
      %v394 = vld [vmem:[%s3 + $0x28] sm:$0xff]
      %v395 = vld [vmem:[%s3 + $0x30] sm:$0xff]
      %v396 = vld [vmem:[%s3 + $0x38] sm:$0xff]
      %v397 = vld [vmem:[%s3 + $0x40] sm:$0xff]
      %v398 = vld [vmem:[%s3 + $0x48] sm:$0xff]
      %v399 = vld [vmem:[%s3 + $0x50] sm:$0xff]
      %v400 = vld [vmem:[%s3 + $0x58] sm:$0xff]
      %v401 = vld [vmem:[%s3 + $0x60] sm:$0xff]
      %v402 = vld [vmem:[%s3 + $0x68] sm:$0xff]
      %v403 = vld [vmem:[%s3 + $0x70] sm:$0xff]
      %v404 = vld [vmem:[%s3 + $0x78] sm:$0xff]
      %v405 = vld [vmem:[%s4] sm:$0x3]
      %v407 = vlaneseq
      %v408 = vshrl.u32 %v407, 7
      %v409 = vsub.s32 0, %v408
      %v410 = vrot.slane %v405, %v409
      %v411 = vlaneseq
      %v412 = vshrl.u32 %v411, 7
      %v413 = vsub.s32 1, %v412
      %v414 = vrot.slane %v405, %v413
      %v433 = vunpack.c.l.b16 %v389
      %v434 = vunpack.c.h.b16 %v389
      %v435 = vunpack.c.l.b16 %v390
      %v436 = vunpack.c.h.b16 %v390
      %v437 = vunpack.c.l.b16 %v391
      %v438 = vunpack.c.h.b16 %v391
      %v439 = vunpack.c.l.b16 %v392
      %v440 = vunpack.c.h.b16 %v392
      %v441 = vunpack.c.l.b16 %v393
      %v442 = vunpack.c.h.b16 %v393
      %v443 = vunpack.c.l.b16 %v394
      %v444 = vunpack.c.h.b16 %v394
      %v445 = vunpack.c.l.b16 %v395
      %v446 = vunpack.c.h.b16 %v395
      %v447 = vunpack.c.l.b16 %v396
      %v448 = vunpack.c.h.b16 %v396
      %v449 = vunpack.c.l.b16 %v397
      %v450 = vunpack.c.h.b16 %v397
      %v451 = vunpack.c.l.b16 %v398
      %v452 = vunpack.c.h.b16 %v398
      %v453 = vunpack.c.l.b16 %v399
      %v454 = vunpack.c.h.b16 %v399
      %v455 = vunpack.c.l.b16 %v400
      %v456 = vunpack.c.h.b16 %v400
      %v457 = vunpack.c.l.b16 %v401
      %v458 = vunpack.c.h.b16 %v401
      %v459 = vunpack.c.l.b16 %v402
      %v460 = vunpack.c.h.b16 %v402
      %v461 = vunpack.c.l.b16 %v403
      %v462 = vunpack.c.h.b16 %v403
      %v463 = vunpack.c.l.b16 %v404
      %v464 = vunpack.c.h.b16 %v404
      %v465 = vpack.c.b16 %v435, %v433
      %v466 = vpack.c.b16 %v436, %v434
      %v467 = vpack.c.b16 %v439, %v437
      %v468 = vpack.c.b16 %v440, %v438
      %v469 = vpack.c.b16 %v443, %v441
      %v470 = vpack.c.b16 %v444, %v442
      %v471 = vpack.c.b16 %v447, %v445
      %v472 = vpack.c.b16 %v448, %v446
      %v473 = vpack.c.b16 %v451, %v449
      %v474 = vpack.c.b16 %v452, %v450
      %v475 = vpack.c.b16 %v455, %v453
      %v476 = vpack.c.b16 %v456, %v454
      %v477 = vpack.c.b16 %v459, %v457
      %v478 = vpack.c.b16 %v460, %v458
      %v479 = vpack.c.b16 %v463, %v461
      %v480 = vpack.c.b16 %v464, %v462
      %497 = vmatprep.subr.bf16.mxu0 %v466
      %498 = vmatpush1.bf16.msra.mxu0 %v465
      %499 = vmatprep.subr.bf16.mxu0 %v468
      %500 = vmatpush1.bf16.msra.mxu0 %v467
      %501 = vmatprep.subr.bf16.mxu0 %v470
      %502 = vmatpush1.bf16.msra.mxu0 %v469
      %503 = vmatprep.subr.bf16.mxu0 %v472
      %504 = vmatpush1.bf16.msra.mxu0 %v471
      %505 = vmatprep.subr.bf16.mxu0 %v474
      %506 = vmatpush1.bf16.msra.mxu0 %v473
      %507 = vmatprep.subr.bf16.mxu0 %v476
      %508 = vmatpush1.bf16.msra.mxu0 %v475
      %509 = vmatprep.subr.bf16.mxu0 %v478
      %510 = vmatpush1.bf16.msra.mxu0 %v477
      %511 = vmatprep.subr.bf16.mxu0 %v480
      %512 = vmatpush1.bf16.msra.mxu0 %v479
      %513 = vmatprep.subr.bf16.mxu0 0
      %514 = vmatpush1.bf16.msra.mxu0 0
      %515 = vmatprep.subr.bf16.mxu0 0
      %516 = vmatpush1.bf16.msra.mxu0 0
      %517 = vmatprep.subr.bf16.mxu0 0
      %518 = vmatpush1.bf16.msra.mxu0 0
      %519 = vmatprep.subr.bf16.mxu0 0
      %520 = vmatpush1.bf16.msra.mxu0 0
      %521 = vmatprep.subr.bf16.mxu0 0
      %522 = vmatpush1.bf16.msra.mxu0 0
      %523 = vmatprep.subr.bf16.mxu0 0
      %524 = vmatpush1.bf16.msra.mxu0 0
      %525 = vmatprep.subr.bf16.mxu0 0
      %526 = vmatpush1.bf16.msra.mxu0 0
      %527 = vmatprep.subr.bf16.mxu0 0
      %528 = vmatpush1.bf16.msra.mxu0 0
      %529 = vmatprep.mubr.bf16.mxu0 0
      %530 = vmatmul.mubr.bf16.gmra.mrb[0].mxu0 %v373
      %v531 = vpop.f32.mrb[0].mxu0
      %v532 = vadd.f32 %v410, %v531
      %v533 = vpop.f32.mrb[0].mxu0
      %v534 = vadd.f32 %v414, %v533
      %v535 = vpop.f32.mrb[0].mxu0
      %v536 = vadd.f32 %v410, %v535
      %v537 = vpop.f32.mrb[0].mxu0
      %v538 = vadd.f32 %v414, %v537
      %539 = vmatprep.mubr.bf16.mxu0 0
      %540 = vmatmul.mubr.bf16.gmra.mrb[0].mxu0 %v374
      %v541 = vpop.f32.mrb[0].mxu0
      %v542 = vadd.f32 %v410, %v541
      %v543 = vpop.f32.mrb[0].mxu0
      %v544 = vadd.f32 %v414, %v543
      %v545 = vpop.f32.mrb[0].mxu0
      %v546 = vadd.f32 %v410, %v545
      %v547 = vpop.f32.mrb[0].mxu0
      %v548 = vadd.f32 %v414, %v547
      %549 = vmatprep.mubr.bf16.mxu0 0
      %550 = vmatmul.mubr.bf16.gmra.mrb[0].mxu0 %v375
      %v551 = vpop.f32.mrb[0].mxu0
      %v552 = vadd.f32 %v410, %v551
      %v553 = vpop.f32.mrb[0].mxu0
      %v554 = vadd.f32 %v414, %v553
      %v555 = vpop.f32.mrb[0].mxu0
      %v556 = vadd.f32 %v410, %v555
      %v557 = vpop.f32.mrb[0].mxu0
      %v558 = vadd.f32 %v414, %v557
      %559 = vmatprep.mubr.bf16.mxu0 0
      %560 = vmatmul.mubr.bf16.gmra.mrb[0].mxu0 %v376
      %v561 = vpop.f32.mrb[0].mxu0
      %v562 = vadd.f32 %v410, %v561
      %v563 = vpop.f32.mrb[0].mxu0
      %v564 = vadd.f32 %v414, %v563
      %v565 = vpop.f32.mrb[0].mxu0
      %v566 = vadd.f32 %v410, %v565
      %v567 = vpop.f32.mrb[0].mxu0
      %v568 = vadd.f32 %v414, %v567
      %569 = vmatprep.mubr.bf16.mxu0 0
      %570 = vmatmul.mubr.bf16.gmra.mrb[0].mxu0 %v377
      %v571 = vpop.f32.mrb[0].mxu0
      %v572 = vadd.f32 %v410, %v571
      %v573 = vpop.f32.mrb[0].mxu0
      %v574 = vadd.f32 %v414, %v573
      %v575 = vpop.f32.mrb[0].mxu0
      %v576 = vadd.f32 %v410, %v575
      %v577 = vpop.f32.mrb[0].mxu0
      %v578 = vadd.f32 %v414, %v577
      %579 = vmatprep.mubr.bf16.mxu0 0
      %580 = vmatmul.mubr.bf16.gmra.mrb[0].mxu0 %v378
      %v581 = vpop.f32.mrb[0].mxu0
      %v582 = vadd.f32 %v410, %v581
      %v583 = vpop.f32.mrb[0].mxu0
      %v584 = vadd.f32 %v414, %v583
      %v585 = vpop.f32.mrb[0].mxu0
      %v586 = vadd.f32 %v410, %v585
      %v587 = vpop.f32.mrb[0].mxu0
      %v588 = vadd.f32 %v414, %v587
      %589 = vmatprep.mubr.bf16.mxu0 0
      %590 = vmatmul.mubr.bf16.gmra.mrb[0].mxu0 %v379
      %v591 = vpop.f32.mrb[0].mxu0
      %v592 = vadd.f32 %v410, %v591
      %v593 = vpop.f32.mrb[0].mxu0
      %v594 = vadd.f32 %v414, %v593
      %v595 = vpop.f32.mrb[0].mxu0
      %v596 = vadd.f32 %v410, %v595
      %v597 = vpop.f32.mrb[0].mxu0
      %v598 = vadd.f32 %v414, %v597
      %599 = vmatprep.mubr.bf16.mxu0 0
      %600 = vmatmul.mubr.bf16.gmra.mrb[0].mxu0 %v380
      %v601 = vpop.f32.mrb[0].mxu0
      %v602 = vadd.f32 %v410, %v601
      %v603 = vpop.f32.mrb[0].mxu0
      %v604 = vadd.f32 %v414, %v603
      %v605 = vpop.f32.mrb[0].mxu0
      %v606 = vadd.f32 %v410, %v605
      %v607 = vpop.f32.mrb[0].mxu0
      %v608 = vadd.f32 %v414, %v607
      %609 = vmatprep.mubr.bf16.mxu0 0
      %610 = vmatmul.mubr.bf16.gmra.mrb[0].mxu0 %v381
      %v611 = vpop.f32.mrb[0].mxu0
      %v612 = vadd.f32 %v410, %v611
      %v613 = vpop.f32.mrb[0].mxu0
      %v614 = vadd.f32 %v414, %v613
      %v615 = vpop.f32.mrb[0].mxu0
      %v616 = vadd.f32 %v410, %v615
      %v617 = vpop.f32.mrb[0].mxu0
      %v618 = vadd.f32 %v414, %v617
      %619 = vmatprep.mubr.bf16.mxu0 0
      %620 = vmatmul.mubr.bf16.gmra.mrb[0].mxu0 %v382
      %v621 = vpop.f32.mrb[0].mxu0
      %v622 = vadd.f32 %v410, %v621
      %v623 = vpop.f32.mrb[0].mxu0
      %v624 = vadd.f32 %v414, %v623
      %v625 = vpop.f32.mrb[0].mxu0
      %v626 = vadd.f32 %v410, %v625
      %v627 = vpop.f32.mrb[0].mxu0
      %v628 = vadd.f32 %v414, %v627
      %629 = vmatprep.mubr.bf16.mxu0 0
      %630 = vmatmul.mubr.bf16.gmra.mrb[0].mxu0 %v383
      %v631 = vpop.f32.mrb[0].mxu0
      %v632 = vadd.f32 %v410, %v631
      %v633 = vpop.f32.mrb[0].mxu0
      %v634 = vadd.f32 %v414, %v633
      %v635 = vpop.f32.mrb[0].mxu0
      %v636 = vadd.f32 %v410, %v635
      %v637 = vpop.f32.mrb[0].mxu0
      %v638 = vadd.f32 %v414, %v637
      %639 = vmatprep.mubr.bf16.mxu0 0
      %640 = vmatmul.mubr.bf16.gmra.mrb[0].mxu0 %v384
      %v641 = vpop.f32.mrb[0].mxu0
      %v642 = vadd.f32 %v410, %v641
      %v643 = vpop.f32.mrb[0].mxu0
      %v644 = vadd.f32 %v414, %v643
      %v645 = vpop.f32.mrb[0].mxu0
      %v646 = vadd.f32 %v410, %v645
      %v647 = vpop.f32.mrb[0].mxu0
      %v648 = vadd.f32 %v414, %v647
      %649 = vmatprep.mubr.bf16.mxu0 0
      %650 = vmatmul.mubr.bf16.gmra.mrb[0].mxu0 %v385
      %v651 = vpop.f32.mrb[0].mxu0
      %v652 = vadd.f32 %v410, %v651
      %v653 = vpop.f32.mrb[0].mxu0
      %v654 = vadd.f32 %v414, %v653
      %v655 = vpop.f32.mrb[0].mxu0
      %v656 = vadd.f32 %v410, %v655
      %v657 = vpop.f32.mrb[0].mxu0
      %v658 = vadd.f32 %v414, %v657
      %659 = vmatprep.mubr.bf16.mxu0 0
      %660 = vmatmul.mubr.bf16.gmra.mrb[0].mxu0 %v386
      %v661 = vpop.f32.mrb[0].mxu0
      %v662 = vadd.f32 %v410, %v661
      %v663 = vpop.f32.mrb[0].mxu0
      %v664 = vadd.f32 %v414, %v663
      %v665 = vpop.f32.mrb[0].mxu0
      %v666 = vadd.f32 %v410, %v665
      %v667 = vpop.f32.mrb[0].mxu0
      %v668 = vadd.f32 %v414, %v667
      %669 = vmatprep.mubr.bf16.mxu0 0
      %670 = vmatmul.mubr.bf16.gmra.mrb[0].mxu0 %v387
      %v671 = vpop.f32.mrb[0].mxu0
      %v672 = vadd.f32 %v410, %v671
      %v673 = vpop.f32.mrb[0].mxu0
      %v674 = vadd.f32 %v414, %v673
      %v675 = vpop.f32.mrb[0].mxu0
      %v676 = vadd.f32 %v410, %v675
      %v677 = vpop.f32.mrb[0].mxu0
      %v678 = vadd.f32 %v414, %v677
      %679 = vmatprep.mubr.bf16.mxu0 0
      %680 = vmatmul.mubr.bf16.gmra.mrb[0].mxu0 %v388
      %v681 = vpop.f32.mrb[0].mxu0
      %v682 = vadd.f32 %v410, %v681
      %v683 = vpop.f32.mrb[0].mxu0
      %v684 = vadd.f32 %v414, %v683
      %v685 = vpop.f32.mrb[0].mxu0
      %v686 = vadd.f32 %v410, %v685
      %v687 = vpop.f32.mrb[0].mxu0
      %v688 = vadd.f32 %v414, %v687
      %689 = vdwg.mxu0
      %690 = vst [vmem:[%s228] sm:$0xff] %v532
      %691 = vst [vmem:[%s228 + $0x8] sm:$0xff] %v534
      %692 = vst [vmem:[%s228 + $0x10] sm:$0xff] %v536
      %693 = vst [vmem:[%s228 + $0x18] sm:$0xff] %v538
      %694 = vst [vmem:[%s228 + $0x20] sm:$0xff] %v542
      %695 = vst [vmem:[%s228 + $0x28] sm:$0xff] %v544
      %696 = vst [vmem:[%s228 + $0x30] sm:$0xff] %v546
      %697 = vst [vmem:[%s228 + $0x38] sm:$0xff] %v548
      %698 = vst [vmem:[%s228 + $0x40] sm:$0xff] %v552
      %699 = vst [vmem:[%s228 + $0x48] sm:$0xff] %v554
      %700 = vst [vmem:[%s228 + $0x50] sm:$0xff] %v556
      %701 = vst [vmem:[%s228 + $0x58] sm:$0xff] %v558
      %702 = vst [vmem:[%s228 + $0x60] sm:$0xff] %v562
      %703 = vst [vmem:[%s228 + $0x68] sm:$0xff] %v564
      %704 = vst [vmem:[%s228 + $0x70] sm:$0xff] %v566
      %705 = vst [vmem:[%s228 + $0x78] sm:$0xff] %v568
      %706 = vst [vmem:[%s228 + $0x80] sm:$0xff] %v572
      %707 = vst [vmem:[%s228 + $0x88] sm:$0xff] %v574
      %708 = vst [vmem:[%s228 + $0x90] sm:$0xff] %v576
      %709 = vst [vmem:[%s228 + $0x98] sm:$0xff] %v578
      %710 = vst [vmem:[%s228 + $0xa0] sm:$0xff] %v582
      %711 = vst [vmem:[%s228 + $0xa8] sm:$0xff] %v584
      %712 = vst [vmem:[%s228 + $0xb0] sm:$0xff] %v586
      %713 = vst [vmem:[%s228 + $0xb8] sm:$0xff] %v588
      %714 = vst [vmem:[%s228 + $0xc0] sm:$0xff] %v592
      %715 = vst [vmem:[%s228 + $0xc8] sm:$0xff] %v594
      %716 = vst [vmem:[%s228 + $0xd0] sm:$0xff] %v596
      %717 = vst [vmem:[%s228 + $0xd8] sm:$0xff] %v598
      %718 = vst [vmem:[%s228 + $0xe0] sm:$0xff] %v602
      %719 = vst [vmem:[%s228 + $0xe8] sm:$0xff] %v604
      %720 = vst [vmem:[%s228 + $0xf0] sm:$0xff] %v606
      %721 = vst [vmem:[%s228 + $0xf8] sm:$0xff] %v608
      %722 = vst [vmem:[%s228 + $0x100] sm:$0xff] %v612
      %723 = vst [vmem:[%s228 + $0x108] sm:$0xff] %v614
      %724 = vst [vmem:[%s228 + $0x110] sm:$0xff] %v616
      %725 = vst [vmem:[%s228 + $0x118] sm:$0xff] %v618
      %726 = vst [vmem:[%s228 + $0x120] sm:$0xff] %v622
      %727 = vst [vmem:[%s228 + $0x128] sm:$0xff] %v624
      %728 = vst [vmem:[%s228 + $0x130] sm:$0xff] %v626
      %729 = vst [vmem:[%s228 + $0x138] sm:$0xff] %v628
      %730 = vst [vmem:[%s228 + $0x140] sm:$0xff] %v632
      %731 = vst [vmem:[%s228 + $0x148] sm:$0xff] %v634
      %732 = vst [vmem:[%s228 + $0x150] sm:$0xff] %v636
      %733 = vst [vmem:[%s228 + $0x158] sm:$0xff] %v638
      %734 = vst [vmem:[%s228 + $0x160] sm:$0xff] %v642
      %735 = vst [vmem:[%s228 + $0x168] sm:$0xff] %v644
      %736 = vst [vmem:[%s228 + $0x170] sm:$0xff] %v646
      %737 = vst [vmem:[%s228 + $0x178] sm:$0xff] %v648
      %738 = vst [vmem:[%s228 + $0x180] sm:$0xff] %v652
      %739 = vst [vmem:[%s228 + $0x188] sm:$0xff] %v654
      %740 = vst [vmem:[%s228 + $0x190] sm:$0xff] %v656
      %741 = vst [vmem:[%s228 + $0x198] sm:$0xff] %v658
      %742 = vst [vmem:[%s228 + $0x1a0] sm:$0xff] %v662
      %743 = vst [vmem:[%s228 + $0x1a8] sm:$0xff] %v664
      %744 = vst [vmem:[%s228 + $0x1b0] sm:$0xff] %v666
      %745 = vst [vmem:[%s228 + $0x1b8] sm:$0xff] %v668
      %746 = vst [vmem:[%s228 + $0x1c0] sm:$0xff] %v672
      %747 = vst [vmem:[%s228 + $0x1c8] sm:$0xff] %v674
      %748 = vst [vmem:[%s228 + $0x1d0] sm:$0xff] %v676
      %749 = vst [vmem:[%s228 + $0x1d8] sm:$0xff] %v678
      %750 = vst [vmem:[%s228 + $0x1e0] sm:$0xff] %v682
      %751 = vst [vmem:[%s228 + $0x1e8] sm:$0xff] %v684
      %752 = vst [vmem:[%s228 + $0x1f0] sm:$0xff] %v686
      %753 = vst [vmem:[%s228 + $0x1f8] sm:$0xff] %v688
      %s754 = smul.u32 32, %s16
      %p755 = scmp.lt.s32.totalorder %s754, 63
      %s756 = scalar_select %p755, %s754, 63
      %s757 = smul.addr %s756, 2
      %s758 = smul.addr %s757, 8
      %s759 = scalar_lea.vmem %s5, %s758
      // Predicated region
      $region41: #{decoder_block_forward.5} parent=39 // pred_check
        %p760 = pneg %p144
      $region42: #{decoder_block_forward.5} parent=39 // pred_check_branch
        %762 = sbr.rel (%p760) target = $region44
      $region43: #{decoder_block_forward.5} parent=39 // pred_region
        %s763 = smul.u32 32, %s16
      $region44: #{decoder_block_forward.5} parent=39 // pred_fallthru
        _
    $region40: #{decoder_block_forward.5} parent=5 // pred_fallthru
      _
    %p764 = scmp.le.s32.totalorder 2, %s11
    // Predicated region
    $region45: #{decoder_block_forward.5} parent=5 // pred_check
      %p765 = pneg %p764
    $region46: #{decoder_block_forward.5} parent=5 // pred_check_branch
      %767 = sbr.rel (%p765) target = $region48
    $region47: #{decoder_block_forward.5} parent=5 // pred_region
      %s768 = ssub.s32 %s11, 2
      // Predicated region
      $region49: #{decoder_block_forward.5} parent=47 // pred_check
        %p769 = pneg %p150
      $region50: #{decoder_block_forward.5} parent=47 // pred_check_branch
        %771 = sbr.rel (%p769) target = $region52
      $region51: #{decoder_block_forward.5} parent=47 // pred_region
        %s772 = smul.u32 32, %s17
        %p773 = scmp.lt.s32.totalorder %s772, 63
        %s774 = scalar_select %p773, %s772, 63
        %s775 = smul.addr %s774, 2
        %s776 = smul.addr %s775, 8
        %s777 = scalar_lea.vmem %s5, %s776
      $region52: #{decoder_block_forward.5} parent=47 // pred_fallthru
        _
    $region48: #{decoder_block_forward.5} parent=5 // pred_fallthru
      _
  $region6: #{decoder_block_forward.5} parent=0 // loop_footer
    %s15 = sadd.s32 1, %s11
  $region7: #{decoder_block_forward.5} parent=0 // loop_footer_branch
    %10 = sbr.rel target = $region3
  $region8: #{decoder_block_forward.5} parent=0 // loop_exit
    _

// kernel: decoder_block_forward.4
$region0: #{decoder_block_forward.4}
  #allocation0 [shape = 'u32[]', space=smem, size = 0x4, offset = 0x4, fixed_abs, tag = 'smem constant byte address 0x4 - core index']
  #allocation1 [shape = 'u32[144,128]{1,0:T(1,128)}', space=vmem, size = 0x12000, scoped, tag = 'internal scratch']
  #allocation2 [shape = 'bf16[232,128]{1,0:T(8,128)(2,1)}', space=vmem, size = 0xe800, scoped, tag = 'scratch operand']
  #allocation3 [shape = 'f32[192,128]{1,0:T(8,128)}', space=vmem, size = 0x18000, scoped, tag = 'scratch operand']
  %s0 = inlined_call_operand.vmem [shape: f32[2,232,128], index: 0, kind: input, shape index: {}]
  %s1 = inlined_call_operand.vmem [shape: bf16[3,3,128,128], index: 1, kind: input, shape index: {}]
  %s2 = inlined_call_operand.vmem [shape: f32[1,128], index: 2, kind: input, shape index: {}]
  %s3 = inlined_call_operand.vmem [shape: f32[1,128], index: 3, kind: input, shape index: {}]
  %s4 = inlined_call_operand.vmem [shape: f32[1,128], index: 4, kind: input, shape index: {}]
  %s5 = inlined_call_operand.vmem [shape: f32[2,192,128], index: 5, kind: output, shape index: {0}]
  %s6 = inlined_call_operand.vmem [shape: f32[1,128], index: 6, kind: output, shape index: {1}]
  %s7 = inlined_call_operand.vmem [shape: f32[1,128], index: 7, kind: output, shape index: {2}]
  %8 = xla_tuple %s5, %s6, %s7
  %s9 = sld [smem:[#allocation0]]
  $region73: #{decoder_block_forward.4} parent=0
    _
  %s11 = ssub.s32 1, %s9
  %s12 = scalar_select 0, %s11, %s9
  loop: start=0, step=1, limit=4
  $region2: #{decoder_block_forward.4} parent=0 // loop_pre_header
    _
  $region3: #{decoder_block_forward.4} parent=0 // loop_header
    %s14 = sphi 0, %s18
    %p15 = scmp.ge.s32.totalorder %s14, 4
    %s24 = sphi 0, %s26
    %s27 = sphi 0, %s24
    %s28 = sphi 0, %s27
    %s44 = sphi 0, %s28
    %s48 = sphi 0, %s48
    %s50 = sphi 0, %s48
    %s51 = sphi 0, %s50
    %s65 = sphi 0, %s51
    %s69 = sphi 0, %s69
    %s71 = sphi 0, %s69
    %s72 = sphi 0, %s71
    %s86 = sphi 0, %s72
    %s90 = sphi 0, %s90
    %s92 = sphi 0, %s90
    %s93 = sphi 0, %s92
    %s107 = sphi 0, %s93
    %s111 = sphi 0, %s111
    %s113 = sphi 0, %s111
    %s114 = sphi 0, %s113
    %s128 = sphi 0, %s114
    %s134 = sphi 0, %s136
    %s137 = sphi 0, %s134
    %s138 = sphi 0, %s137
    %s154 = sphi 0, %s138
    %s158 = sphi 0, %s158
    %s160 = sphi 0, %s158
    %s161 = sphi 0, %s160
    %s175 = sphi 0, %s161
    %s179 = sphi 0, %s179
    %s181 = sphi 0, %s179
    %s182 = sphi 0, %s181
    %s196 = sphi 0, %s182
  $region4: #{decoder_block_forward.4} parent=0 // loop_header_branch
    %17 = sbr.rel (%p15) target = $region8
  $region5: #{decoder_block_forward.4} parent=0 // loop_body
    %s19 = ssub.s32 %s14, 1
    %s20 = ssub.s32 %s14, 2
    %s21 = sadd.s32 %s14, 1
    %s22 = ssub.s32 %s14, %s21
    %p23 = scmp.eq.s32.totalorder %s22, 0
    %s25 = sadd.s32 %s24, 1
    %s26 = scalar_select %p23, %s24, %s25
    %p29 = pneg %p23
    %p30 = scmp.eq.s32.totalorder %s14, 1
    %p31 = por %p29, %p30
    %p32 = scmp.ne.s32.totalorder %s24, %s27
    %p33 = scmp.eq.s32.totalorder %s14, 0
    %p34 = por %p32, %p33
    %p35 = scmp.ne.s32.totalorder %s24, %s27
    %p36 = scmp.eq.s32.totalorder %s19, 1
    %p37 = por %p35, %p36
    %p38 = scmp.ne.s32.totalorder %s27, %s28
    %p39 = scmp.eq.s32.totalorder %s19, 0
    %p40 = por %p38, %p39
    %p41 = scmp.ne.s32.totalorder %s27, %s28
    %p42 = scmp.eq.s32.totalorder %s20, 1
    %p43 = por %p41, %p42
    %p45 = scmp.ne.s32.totalorder %s28, %s44
    %p46 = scmp.eq.s32.totalorder %s20, 0
    %p47 = por %p45, %p46
    %s49 = sadd.s32 %s48, 1
    %p52 = scmp.eq.s32.totalorder %s14, 1
    %p53 = scmp.ne.s32.totalorder %s48, %s50
    %p54 = scmp.eq.s32.totalorder %s14, 0
    %p55 = por %p53, %p54
    %p56 = scmp.ne.s32.totalorder %s48, %s50
    %p57 = scmp.eq.s32.totalorder %s19, 1
    %p58 = por %p56, %p57
    %p59 = scmp.ne.s32.totalorder %s50, %s51
    %p60 = scmp.eq.s32.totalorder %s19, 0
    %p61 = por %p59, %p60
    %p62 = scmp.ne.s32.totalorder %s50, %s51
    %p63 = scmp.eq.s32.totalorder %s20, 1
    %p64 = por %p62, %p63
    %p66 = scmp.ne.s32.totalorder %s51, %s65
    %p67 = scmp.eq.s32.totalorder %s20, 0
    %p68 = por %p66, %p67
    %s70 = sadd.s32 %s69, 1
    %p73 = scmp.eq.s32.totalorder %s14, 1
    %p74 = scmp.ne.s32.totalorder %s69, %s71
    %p75 = scmp.eq.s32.totalorder %s14, 0
    %p76 = por %p74, %p75
    %p77 = scmp.ne.s32.totalorder %s69, %s71
    %p78 = scmp.eq.s32.totalorder %s19, 1
    %p79 = por %p77, %p78
    %p80 = scmp.ne.s32.totalorder %s71, %s72
    %p81 = scmp.eq.s32.totalorder %s19, 0
    %p82 = por %p80, %p81
    %p83 = scmp.ne.s32.totalorder %s71, %s72
    %p84 = scmp.eq.s32.totalorder %s20, 1
    %p85 = por %p83, %p84
    %p87 = scmp.ne.s32.totalorder %s72, %s86
    %p88 = scmp.eq.s32.totalorder %s20, 0
    %p89 = por %p87, %p88
    %s91 = sadd.s32 %s90, 1
    %p94 = scmp.eq.s32.totalorder %s14, 1
    %p95 = scmp.ne.s32.totalorder %s90, %s92
    %p96 = scmp.eq.s32.totalorder %s14, 0
    %p97 = por %p95, %p96
    %p98 = scmp.ne.s32.totalorder %s90, %s92
    %p99 = scmp.eq.s32.totalorder %s19, 1
    %p100 = por %p98, %p99
    %p101 = scmp.ne.s32.totalorder %s92, %s93
    %p102 = scmp.eq.s32.totalorder %s19, 0
    %p103 = por %p101, %p102
    %p104 = scmp.ne.s32.totalorder %s92, %s93
    %p105 = scmp.eq.s32.totalorder %s20, 1
    %p106 = por %p104, %p105
    %p108 = scmp.ne.s32.totalorder %s93, %s107
    %p109 = scmp.eq.s32.totalorder %s20, 0
    %p110 = por %p108, %p109
    %s112 = sadd.s32 %s111, 1
    %p115 = scmp.eq.s32.totalorder %s14, 1
    %p116 = scmp.ne.s32.totalorder %s111, %s113
    %p117 = scmp.eq.s32.totalorder %s14, 0
    %p118 = por %p116, %p117
    %p119 = scmp.ne.s32.totalorder %s111, %s113
    %p120 = scmp.eq.s32.totalorder %s19, 1
    %p121 = por %p119, %p120
    %p122 = scmp.ne.s32.totalorder %s113, %s114
    %p123 = scmp.eq.s32.totalorder %s19, 0
    %p124 = por %p122, %p123
    %p125 = scmp.ne.s32.totalorder %s113, %s114
    %p126 = scmp.eq.s32.totalorder %s20, 1
    %p127 = por %p125, %p126
    %p129 = scmp.ne.s32.totalorder %s114, %s128
    %p130 = scmp.eq.s32.totalorder %s20, 0
    %p131 = por %p129, %p130
    %s132 = ssub.s32 %s14, %s21
    %p133 = scmp.eq.s32.totalorder %s132, 0
    %s135 = sadd.s32 %s134, 1
    %s136 = scalar_select %p133, %s134, %s135
    %p139 = pneg %p133
    %p140 = scmp.eq.s32.totalorder %s14, 1
    %p141 = por %p139, %p140
    %p142 = scmp.ne.s32.totalorder %s134, %s137
    %p143 = scmp.eq.s32.totalorder %s14, 0
    %p144 = por %p142, %p143
    %p145 = scmp.ne.s32.totalorder %s134, %s137
    %p146 = scmp.eq.s32.totalorder %s19, 1
    %p147 = por %p145, %p146
    %p148 = scmp.ne.s32.totalorder %s137, %s138
    %p149 = scmp.eq.s32.totalorder %s19, 0
    %p150 = por %p148, %p149
    %p151 = scmp.ne.s32.totalorder %s137, %s138
    %p152 = scmp.eq.s32.totalorder %s20, 1
    %p153 = por %p151, %p152
    %p155 = scmp.ne.s32.totalorder %s138, %s154
    %p156 = scmp.eq.s32.totalorder %s20, 0
    %p157 = por %p155, %p156
    %s159 = sadd.s32 %s158, 1
    %p162 = scmp.eq.s32.totalorder %s14, 1
    %p163 = scmp.ne.s32.totalorder %s158, %s160
    %p164 = scmp.eq.s32.totalorder %s14, 0
    %p165 = por %p163, %p164
    %p166 = scmp.ne.s32.totalorder %s158, %s160
    %p167 = scmp.eq.s32.totalorder %s19, 1
    %p168 = por %p166, %p167
    %p169 = scmp.ne.s32.totalorder %s160, %s161
    %p170 = scmp.eq.s32.totalorder %s19, 0
    %p171 = por %p169, %p170
    %p172 = scmp.ne.s32.totalorder %s160, %s161
    %p173 = scmp.eq.s32.totalorder %s20, 1
    %p174 = por %p172, %p173
    %p176 = scmp.ne.s32.totalorder %s161, %s175
    %p177 = scmp.eq.s32.totalorder %s20, 0
    %p178 = por %p176, %p177
    %s180 = sadd.s32 %s179, 1
    %p183 = scmp.eq.s32.totalorder %s14, 1
    %p184 = scmp.ne.s32.totalorder %s179, %s181
    %p185 = scmp.eq.s32.totalorder %s14, 0
    %p186 = por %p184, %p185
    %p187 = scmp.ne.s32.totalorder %s179, %s181
    %p188 = scmp.eq.s32.totalorder %s19, 1
    %p189 = por %p187, %p188
    %p190 = scmp.ne.s32.totalorder %s181, %s182
    %p191 = scmp.eq.s32.totalorder %s19, 0
    %p192 = por %p190, %p191
    %p193 = scmp.ne.s32.totalorder %s181, %s182
    %p194 = scmp.eq.s32.totalorder %s20, 1
    %p195 = por %p193, %p194
    %p197 = scmp.ne.s32.totalorder %s182, %s196
    %p198 = scmp.eq.s32.totalorder %s20, 0
    %p199 = por %p197, %p198
    %p200 = scmp.le.s32.totalorder 1, %s14
    %p201 = scmp.lt.s32.totalorder %s14, 3
    %p202 = pnand %p200, %p201
    %p203 = pneg %p202
    // Predicated region
    $region9: #{decoder_block_forward.4} parent=5 // pred_check
      _
    $region10: #{decoder_block_forward.4} parent=5 // pred_check_branch
      %205 = sbr.rel (%p202) target = $region12
    $region11: #{decoder_block_forward.4} parent=5 // pred_region
      %s206 = ssub.s32 %s14, 1
      // Predicated region
      $region13: #{decoder_block_forward.4} parent=11 // pred_check
        %p207 = pneg %p61
      $region14: #{decoder_block_forward.4} parent=11 // pred_check_branch
        %209 = sbr.rel (%p207) target = $region16
      $region15: #{decoder_block_forward.4} parent=11 // pred_region
        _
      $region16: #{decoder_block_forward.4} parent=11 // pred_fallthru
        _
      // Predicated region
      $region17: #{decoder_block_forward.4} parent=11 // pred_check
        %p210 = pneg %p82
      $region18: #{decoder_block_forward.4} parent=11 // pred_check_branch
        %212 = sbr.rel (%p210) target = $region20
      $region19: #{decoder_block_forward.4} parent=11 // pred_region
        _
      $region20: #{decoder_block_forward.4} parent=11 // pred_fallthru
        _
      // Predicated region
      $region21: #{decoder_block_forward.4} parent=11 // pred_check
        %p213 = pneg %p103
      $region22: #{decoder_block_forward.4} parent=11 // pred_check_branch
        %215 = sbr.rel (%p213) target = $region24
      $region23: #{decoder_block_forward.4} parent=11 // pred_region
        _
      $region24: #{decoder_block_forward.4} parent=11 // pred_fallthru
        _
      // Predicated region
      $region25: #{decoder_block_forward.4} parent=11 // pred_check
        %p216 = pneg %p124
      $region26: #{decoder_block_forward.4} parent=11 // pred_check_branch
        %218 = sbr.rel (%p216) target = $region28
      $region27: #{decoder_block_forward.4} parent=11 // pred_region
        _
      $region28: #{decoder_block_forward.4} parent=11 // pred_fallthru
        _
    $region12: #{decoder_block_forward.4} parent=5 // pred_fallthru
      _
    %p219 = scmp.lt.s32.totalorder %s14, 2
    // Predicated region
    $region29: #{decoder_block_forward.4} parent=5 // pred_check
      %p220 = pneg %p219
    $region30: #{decoder_block_forward.4} parent=5 // pred_check_branch
      %222 = sbr.rel (%p220) target = $region32
    $region31: #{decoder_block_forward.4} parent=5 // pred_region
      // Predicated region
      $region33: #{decoder_block_forward.4} parent=31 // pred_check
        %p223 = pneg %p34
      $region34: #{decoder_block_forward.4} parent=31 // pred_check_branch
        %225 = sbr.rel (%p223) target = $region36
      $region35: #{decoder_block_forward.4} parent=31 // pred_region
        %p226 = scmp.lt.s32.totalorder %s14, 1
        %s227 = scalar_select %p226, %s14, 1
        %s228 = smul.addr %s227, 29
        %s229 = smul.addr %s228, 8
        %s230 = scalar_lea.vmem %s0, %s229
      $region36: #{decoder_block_forward.4} parent=31 // pred_fallthru
        _
    $region32: #{decoder_block_forward.4} parent=5 // pred_fallthru
      _
    %p231 = scmp.le.s32.totalorder 1, %s14
    %p232 = scmp.lt.s32.totalorder %s14, 3
    %p233 = pnand %p231, %p232
    %p234 = pneg %p233
    // Predicated region
    $region37: #{decoder_block_forward.4} parent=5 // pred_check
      _
    $region38: #{decoder_block_forward.4} parent=5 // pred_check_branch
      %236 = sbr.rel (%p233) target = $region40
    $region39: #{decoder_block_forward.4} parent=5 // pred_region
      %s237 = ssub.s32 %s14, 1
      %p238 = scmp.lt.s32.totalorder %s19, 1
      %s239 = scalar_select %p238, %s19, 1
      %s240 = smul.addr %s239, 29
      %s241 = smul.addr %s240, 8
      %s242 = scalar_lea.vmem %s0, %s241
      %p243 = pneg %p40
      %p244 = pneg %p37
      %p245 = pneg %p61
      %p246 = pneg %p58
      %p247 = pneg %p82
      %p248 = pneg %p79
      %p249 = pneg %p103
      %p250 = pneg %p100
      %p251 = pneg %p124
      %p252 = pneg %p121
      %p253 = pneg %p150
      %p254 = pneg %p147
      %p255 = scmp.lt.s32.totalorder %s19, 1
      %s256 = scalar_select %p255, %s19, 1
      %s257 = smul.addr %s256, 24
      %s258 = smul.addr %s257, 8
      %s259 = scalar_lea.vmem %s5, %s258
      %p260 = pneg %p171
      %p261 = pneg %p168
      %p262 = pneg %p192
      %p263 = pneg %p189
      %p264 = scmp.lt.s32.totalorder %s19, 1
      %s265 = scalar_select %p264, %s19, 1
      %s266 = smul.addr %s265, 29
      %s267 = smul.addr %s266, 8
      %s268 = scalar_lea.vmem %s0, %s267
      %p269 = scmp.lt.s32.totalorder %s19, 1
      %s270 = scalar_select %p269, %s19, 1
      %s271 = smul.addr %s270, 24
      %s272 = smul.addr %s271, 8
      %s273 = scalar_lea.vmem %s5, %s272
      %p275 = scmp.eq.s32.totalorder %s19, 0
      // Predicated region
      $region41: #{decoder_block_forward.4} parent=39 // pred_check
        %p276 = pneg %p275
      $region42: #{decoder_block_forward.4} parent=39 // pred_check_branch
        %278 = sbr.rel (%p276) target = $region44
      $region43: #{decoder_block_forward.4} parent=39 // pred_region
        %279 = vst [vmem:[%s6] sm:$0x1] 0.0
        %280 = vst [vmem:[%s7] sm:$0x1] 0.0
      $region44: #{decoder_block_forward.4} parent=39 // pred_fallthru
        _
      %v281 = vld [vmem:[%s268] sm:$0xff]
      %v282 = vld [vmem:[%s268 + $0x8] sm:$0xff]
      %v283 = vld [vmem:[%s268 + $0x10] sm:$0xff]
      %v284 = vld [vmem:[%s268 + $0x18] sm:$0xff]
      %v285 = vld [vmem:[%s268 + $0x20] sm:$0xff]
      %v286 = vld [vmem:[%s268 + $0x28] sm:$0xff]
      %v287 = vld [vmem:[%s268 + $0x30] sm:$0xff]
      %v288 = vld [vmem:[%s268 + $0x38] sm:$0xff]
      %v289 = vld [vmem:[%s268 + $0x40] sm:$0xff]
      %v290 = vld [vmem:[%s268 + $0x48] sm:$0xff]
      %v291 = vld [vmem:[%s268 + $0x50] sm:$0xff]
      %v292 = vld [vmem:[%s268 + $0x58] sm:$0xff]
      %v293 = vld [vmem:[%s268 + $0x60] sm:$0xff]
      %v294 = vld [vmem:[%s268 + $0x68] sm:$0xff]
      %v295 = vld [vmem:[%s268 + $0x70] sm:$0xff]
      %v296 = vld [vmem:[%s268 + $0x78] sm:$0xff]
      %v297 = vld [vmem:[%s268 + $0x80] sm:$0xff]
      %v298 = vld [vmem:[%s268 + $0x88] sm:$0xff]
      %v299 = vld [vmem:[%s268 + $0x90] sm:$0xff]
      %v300 = vld [vmem:[%s268 + $0x98] sm:$0xff]
      %v301 = vld [vmem:[%s268 + $0xa0] sm:$0xff]
      %v302 = vld [vmem:[%s268 + $0xa8] sm:$0xff]
      %v303 = vld [vmem:[%s268 + $0xb0] sm:$0xff]
      %v304 = vld [vmem:[%s268 + $0xb8] sm:$0xff]
      %v305 = vld [vmem:[%s268 + $0xc0] sm:$0xff]
      %v306 = vld [vmem:[%s268 + $0xc8] sm:$0xff]
      %v307 = vld [vmem:[%s268 + $0xd0] sm:$0xff]
      %v308 = vld [vmem:[%s268 + $0xd8] sm:$0xff]
      %v309 = vld [vmem:[%s268 + $0xe0] sm:$0xff]
      %v310 = vld [vmem:[%s3] sm:$0x1]
      %v312 = vlaneseq
      %v313 = vshrl.u32 %v312, 7
      %v314 = vsub.s32 0, %v313
      %v315 = vrot.slane %v310, %v314
      %v317 = vmul.f32 %v281, %v315
      %v318 = vmul.f32 %v282, %v315
      %v319 = vmul.f32 %v283, %v315
      %v320 = vmul.f32 %v284, %v315
      %v321 = vmul.f32 %v285, %v315
      %v322 = vmul.f32 %v286, %v315
      %v323 = vmul.f32 %v287, %v315
      %v324 = vmul.f32 %v288, %v315
      %v325 = vmul.f32 %v289, %v315
      %v326 = vmul.f32 %v290, %v315
      %v327 = vmul.f32 %v291, %v315
      %v328 = vmul.f32 %v292, %v315
      %v329 = vmul.f32 %v293, %v315
      %v330 = vmul.f32 %v294, %v315
      %v331 = vmul.f32 %v295, %v315
      %v332 = vmul.f32 %v296, %v315
      %v333 = vmul.f32 %v297, %v315
      %v334 = vmul.f32 %v298, %v315
      %v335 = vmul.f32 %v299, %v315
      %v336 = vmul.f32 %v300, %v315
      %v337 = vmul.f32 %v301, %v315
      %v338 = vmul.f32 %v302, %v315
      %v339 = vmul.f32 %v303, %v315
      %v340 = vmul.f32 %v304, %v315
      %v341 = vmul.f32 %v305, %v315
      %v342 = vmul.f32 %v306, %v315
      %v343 = vmul.f32 %v307, %v315
      %v344 = vmul.f32 %v308, %v315
      %v345 = vmul.f32 %v309, %v315
      %v346 = vld [vmem:[%s4] sm:$0x1]
      %v348 = vlaneseq
      %v349 = vshrl.u32 %v348, 7
      %v350 = vsub.s32 0, %v349
      %v351 = vrot.slane %v346, %v350
      %v353 = vadd.f32 %v317, %v351
      %v354 = vadd.f32 %v318, %v351
      %v355 = vadd.f32 %v319, %v351
      %v356 = vadd.f32 %v320, %v351
      %v357 = vadd.f32 %v321, %v351
      %v358 = vadd.f32 %v322, %v351
      %v359 = vadd.f32 %v323, %v351
      %v360 = vadd.f32 %v324, %v351
      %v361 = vadd.f32 %v325, %v351
      %v362 = vadd.f32 %v326, %v351
      %v363 = vadd.f32 %v327, %v351
      %v364 = vadd.f32 %v328, %v351
      %v365 = vadd.f32 %v329, %v351
      %v366 = vadd.f32 %v330, %v351
      %v367 = vadd.f32 %v331, %v351
      %v368 = vadd.f32 %v332, %v351
      %v369 = vadd.f32 %v333, %v351
      %v370 = vadd.f32 %v334, %v351
      %v371 = vadd.f32 %v335, %v351
      %v372 = vadd.f32 %v336, %v351
      %v373 = vadd.f32 %v337, %v351
      %v374 = vadd.f32 %v338, %v351
      %v375 = vadd.f32 %v339, %v351
      %v376 = vadd.f32 %v340, %v351
      %v377 = vadd.f32 %v341, %v351
      %v378 = vadd.f32 %v342, %v351
      %v379 = vadd.f32 %v343, %v351
      %v380 = vadd.f32 %v344, %v351
      %v381 = vadd.f32 %v345, %v351
      %v382 = vmax.f32 %v353, 0.0
      %v383 = vmax.f32 %v354, 0.0
      %v384 = vmax.f32 %v355, 0.0
      %v385 = vmax.f32 %v356, 0.0
      %v386 = vmax.f32 %v357, 0.0
      %v387 = vmax.f32 %v358, 0.0
      %v388 = vmax.f32 %v359, 0.0
      %v389 = vmax.f32 %v360, 0.0
      %v390 = vmax.f32 %v361, 0.0
      %v391 = vmax.f32 %v362, 0.0
      %v392 = vmax.f32 %v363, 0.0
      %v393 = vmax.f32 %v364, 0.0
      %v394 = vmax.f32 %v365, 0.0
      %v395 = vmax.f32 %v366, 0.0
      %v396 = vmax.f32 %v367, 0.0
      %v397 = vmax.f32 %v368, 0.0
      %v398 = vmax.f32 %v369, 0.0
      %v399 = vmax.f32 %v370, 0.0
      %v400 = vmax.f32 %v371, 0.0
      %v401 = vmax.f32 %v372, 0.0
      %v402 = vmax.f32 %v373, 0.0
      %v403 = vmax.f32 %v374, 0.0
      %v404 = vmax.f32 %v375, 0.0
      %v405 = vmax.f32 %v376, 0.0
      %v406 = vmax.f32 %v377, 0.0
      %v407 = vmax.f32 %v378, 0.0
      %v408 = vmax.f32 %v379, 0.0
      %v409 = vmax.f32 %v380, 0.0
      %v410 = vmax.f32 %v381, 0.0
      %v411 = vpack.c.bf16 %v383, %v382
      %v412 = vpack.c.bf16 %v385, %v384
      %v413 = vpack.c.bf16 %v387, %v386
      %v414 = vpack.c.bf16 %v389, %v388
      %v415 = vpack.c.bf16 %v391, %v390
      %v416 = vpack.c.bf16 %v393, %v392
      %v417 = vpack.c.bf16 %v395, %v394
      %v418 = vpack.c.bf16 %v397, %v396
      %v419 = vpack.c.bf16 %v399, %v398
      %v420 = vpack.c.bf16 %v401, %v400
      %v421 = vpack.c.bf16 %v403, %v402
      %v422 = vpack.c.bf16 %v405, %v404
      %v423 = vpack.c.bf16 %v407, %v406
      %v424 = vpack.c.bf16 %v409, %v408
      %v425 = vpack.c.bf16 %v410, %v410
      %v441 = vunpack.c.l.b16 %v411
      %v442 = vunpack.c.h.b16 %v411
      %v443 = vunpack.c.l.b16 %v412
      %v444 = vunpack.c.h.b16 %v412
      %v445 = vunpack.c.l.b16 %v413
      %v446 = vunpack.c.h.b16 %v413
      %v447 = vunpack.c.l.b16 %v414
      %v448 = vunpack.c.h.b16 %v414
      %v449 = vunpack.c.l.b16 %v415
      %v450 = vunpack.c.h.b16 %v415
      %v451 = vunpack.c.l.b16 %v416
      %v452 = vunpack.c.h.b16 %v416
      %v453 = vunpack.c.l.b16 %v417
      %v454 = vunpack.c.h.b16 %v417
      %v455 = vunpack.c.l.b16 %v418
      %v456 = vunpack.c.h.b16 %v418
      %v457 = vunpack.c.l.b16 %v419
      %v458 = vunpack.c.h.b16 %v419
      %v459 = vunpack.c.l.b16 %v420
      %v460 = vunpack.c.h.b16 %v420
      %v461 = vunpack.c.l.b16 %v421
      %v462 = vunpack.c.h.b16 %v421
      %v463 = vunpack.c.l.b16 %v422
      %v464 = vunpack.c.h.b16 %v422
      %v465 = vunpack.c.l.b16 %v423
      %v466 = vunpack.c.h.b16 %v423
      %v467 = vunpack.c.l.b16 %v424
      %v468 = vunpack.c.h.b16 %v424
      %v469 = vunpack.c.l.b16 %v425
      %v470 = vpack.c.b16 %v441, %v441
      %v471 = vpack.c.b16 %v442, %v442
      %v472 = vpack.c.b16 %v443, %v443
      %v473 = vpack.c.b16 %v444, %v444
      %v474 = vpack.c.b16 %v445, %v445
      %v475 = vpack.c.b16 %v446, %v446
      %v476 = vpack.c.b16 %v447, %v447
      %v477 = vpack.c.b16 %v448, %v448
      %v478 = vpack.c.b16 %v449, %v449
      %v479 = vpack.c.b16 %v450, %v450
      %v480 = vpack.c.b16 %v451, %v451
      %v481 = vpack.c.b16 %v452, %v452
      %v482 = vpack.c.b16 %v453, %v453
      %v483 = vpack.c.b16 %v454, %v454
      %v484 = vpack.c.b16 %v455, %v455
      %v485 = vpack.c.b16 %v456, %v456
      %v486 = vpack.c.b16 %v457, %v457
      %v487 = vpack.c.b16 %v458, %v458
      %v488 = vpack.c.b16 %v459, %v459
      %v489 = vpack.c.b16 %v460, %v460
      %v490 = vpack.c.b16 %v461, %v461
      %v491 = vpack.c.b16 %v462, %v462
      %v492 = vpack.c.b16 %v463, %v463
      %v493 = vpack.c.b16 %v464, %v464
      %v494 = vpack.c.b16 %v465, %v465
      %v495 = vpack.c.b16 %v466, %v466
      %v496 = vpack.c.b16 %v467, %v467
      %v497 = vpack.c.b16 %v468, %v468
      %v498 = vpack.c.b16 %v469, %v469
      %528 = vst [vmem:[#allocation2] sm:$0xf] %v470
      %529 = vst [vmem:[#allocation2 + $0x4] sm:$0xf] %v471
      %530 = vst [vmem:[#allocation2 + $0x8] sm:$0xf] %v472
      %531 = vst [vmem:[#allocation2 + $0xc] sm:$0xf] %v473
      %532 = vst [vmem:[#allocation2 + $0x10] sm:$0xf] %v474
      %533 = vst [vmem:[#allocation2 + $0x14] sm:$0xf] %v475
      %534 = vst [vmem:[#allocation2 + $0x18] sm:$0xf] %v476
      %535 = vst [vmem:[#allocation2 + $0x1c] sm:$0xf] %v477
      %536 = vst [vmem:[#allocation2 + $0x20] sm:$0xf] %v478
      %537 = vst [vmem:[#allocation2 + $0x24] sm:$0xf] %v479
      %538 = vst [vmem:[#allocation2 + $0x28] sm:$0xf] %v480
      %539 = vst [vmem:[#allocation2 + $0x2c] sm:$0xf] %v481
      %540 = vst [vmem:[#allocation2 + $0x30] sm:$0xf] %v482
      %541 = vst [vmem:[#allocation2 + $0x34] sm:$0xf] %v483
      %542 = vst [vmem:[#allocation2 + $0x38] sm:$0xf] %v484
      %543 = vst [vmem:[#allocation2 + $0x3c] sm:$0xf] %v485
      %544 = vst [vmem:[#allocation2 + $0x40] sm:$0xf] %v486
      %545 = vst [vmem:[#allocation2 + $0x44] sm:$0xf] %v487
      %546 = vst [vmem:[#allocation2 + $0x48] sm:$0xf] %v488
      %547 = vst [vmem:[#allocation2 + $0x4c] sm:$0xf] %v489
      %548 = vst [vmem:[#allocation2 + $0x50] sm:$0xf] %v490
      %549 = vst [vmem:[#allocation2 + $0x54] sm:$0xf] %v491
      %550 = vst [vmem:[#allocation2 + $0x58] sm:$0xf] %v492
      %551 = vst [vmem:[#allocation2 + $0x5c] sm:$0xf] %v493
      %552 = vst [vmem:[#allocation2 + $0x60] sm:$0xf] %v494
      %553 = vst [vmem:[#allocation2 + $0x64] sm:$0xf] %v495
      %554 = vst [vmem:[#allocation2 + $0x68] sm:$0xf] %v496
      %555 = vst [vmem:[#allocation2 + $0x6c] sm:$0xf] %v497
      %556 = vst [vmem:[#allocation2 + $0x70] sm:$0xf] %v498
      %557 = vst [vmem:[#allocation3] sm:$0xff] 0.0
      %558 = vst [vmem:[#allocation3 + $0x8] sm:$0xff] 0.0
      %559 = vst [vmem:[#allocation3 + $0x10] sm:$0xff] 0.0
      %560 = vst [vmem:[#allocation3 + $0x18] sm:$0xff] 0.0
      %561 = vst [vmem:[#allocation3 + $0x20] sm:$0xff] 0.0
      %562 = vst [vmem:[#allocation3 + $0x28] sm:$0xff] 0.0
      %563 = vst [vmem:[#allocation3 + $0x30] sm:$0xff] 0.0
      %564 = vst [vmem:[#allocation3 + $0x38] sm:$0xff] 0.0
      %565 = vst [vmem:[#allocation3 + $0x40] sm:$0xff] 0.0
      %566 = vst [vmem:[#allocation3 + $0x48] sm:$0xff] 0.0
      %567 = vst [vmem:[#allocation3 + $0x50] sm:$0xff] 0.0
      %568 = vst [vmem:[#allocation3 + $0x58] sm:$0xff] 0.0
      %569 = vst [vmem:[#allocation3 + $0x60] sm:$0xff] 0.0
      %570 = vst [vmem:[#allocation3 + $0x68] sm:$0xff] 0.0
      %571 = vst [vmem:[#allocation3 + $0x70] sm:$0xff] 0.0
      %572 = vst [vmem:[#allocation3 + $0x78] sm:$0xff] 0.0
      %573 = vst [vmem:[#allocation3 + $0x80] sm:$0xff] 0.0
      %574 = vst [vmem:[#allocation3 + $0x88] sm:$0xff] 0.0
      %575 = vst [vmem:[#allocation3 + $0x90] sm:$0xff] 0.0
      %576 = vst [vmem:[#allocation3 + $0x98] sm:$0xff] 0.0
      %577 = vst [vmem:[#allocation3 + $0xa0] sm:$0xff] 0.0
      %578 = vst [vmem:[#allocation3 + $0xa8] sm:$0xff] 0.0
      %579 = vst [vmem:[#allocation3 + $0xb0] sm:$0xff] 0.0
      %580 = vst [vmem:[#allocation3 + $0xb8] sm:$0xff] 0.0
      %v581 = vld [vmem:[#allocation3] sm:$0xff]
      %v582 = vld [vmem:[#allocation3 + $0x8] sm:$0xff]
      %v583 = vld [vmem:[#allocation3 + $0x10] sm:$0xff]
      %v584 = vld [vmem:[#allocation3 + $0x18] sm:$0xff]
      %v585 = vld [vmem:[#allocation3 + $0x20] sm:$0xff]
      %v586 = vld [vmem:[#allocation3 + $0x28] sm:$0xff]
      %v587 = vld [vmem:[#allocation3 + $0x30] sm:$0xff]
      %v588 = vld [vmem:[#allocation3 + $0x38] sm:$0xff]
      %v589 = vld [vmem:[#allocation3 + $0x40] sm:$0xff]
      %v590 = vld [vmem:[#allocation3 + $0x48] sm:$0xff]
      %v591 = vld [vmem:[#allocation3 + $0x50] sm:$0xff]
      %v592 = vld [vmem:[#allocation3 + $0x58] sm:$0xff]
      %v593 = vld [vmem:[#allocation3 + $0x60] sm:$0xff]
      %v594 = vld [vmem:[#allocation3 + $0x68] sm:$0xff]
      %v595 = vld [vmem:[#allocation3 + $0x70] sm:$0xff]
      %v596 = vld [vmem:[#allocation3 + $0x78] sm:$0xff]
      %v597 = vld [vmem:[#allocation3 + $0x80] sm:$0xff]
      %v598 = vld [vmem:[#allocation3 + $0x88] sm:$0xff]
      %v599 = vld [vmem:[#allocation3 + $0x90] sm:$0xff]
      %v600 = vld [vmem:[#allocation3 + $0x98] sm:$0xff]
      %v601 = vld [vmem:[#allocation3 + $0xa0] sm:$0xff]
      %v602 = vld [vmem:[#allocation3 + $0xa8] sm:$0xff]
      %v603 = vld [vmem:[#allocation3 + $0xb0] sm:$0xff]
      %v604 = vld [vmem:[#allocation3 + $0xb8] sm:$0xff]
      %v605 = vld [vmem:[#allocation2] sm:$0xf]
      %v606 = vld [vmem:[#allocation2 + $0x4] sm:$0xf]
      %v607 = vld [vmem:[#allocation2 + $0x8] sm:$0xf]
      %v608 = vld [vmem:[#allocation2 + $0xc] sm:$0xf]
      %v609 = vld [vmem:[#allocation2 + $0x10] sm:$0xf]
      %v610 = vld [vmem:[#allocation2 + $0x14] sm:$0xf]
      %v611 = vld [vmem:[#allocation2 + $0x18] sm:$0xf]
      %v612 = vld [vmem:[#allocation2 + $0x1c] sm:$0xf]
      %v613 = vld [vmem:[#allocation2 + $0x20] sm:$0xf]
      %v614 = vld [vmem:[#allocation2 + $0x24] sm:$0xf]
      %v615 = vld [vmem:[#allocation2 + $0x28] sm:$0xf]
      %v616 = vld [vmem:[#allocation2 + $0x2c] sm:$0xf]
      %v617 = vld [vmem:[#allocation2 + $0x30] sm:$0xf]
      %v618 = vld [vmem:[#allocation2 + $0x34] sm:$0xf]
      %v619 = vld [vmem:[#allocation2 + $0x38] sm:$0xf]
      %v620 = vld [vmem:[#allocation2 + $0x3c] sm:$0xf]
      %v621 = vld [vmem:[#allocation2 + $0x40] sm:$0xf]
      %v622 = vld [vmem:[#allocation2 + $0x44] sm:$0xf]
      %v623 = vld [vmem:[#allocation2 + $0x48] sm:$0xf]
      %v624 = vld [vmem:[#allocation2 + $0x4c] sm:$0xf]
      %v625 = vld [vmem:[#allocation2 + $0x50] sm:$0xf]
      %v626 = vld [vmem:[#allocation2 + $0x54] sm:$0xf]
      %v627 = vld [vmem:[#allocation2 + $0x58] sm:$0xf]
      %v628 = vld [vmem:[#allocation2 + $0x5c] sm:$0xf]
      %v629 = vld [vmem:[%s1] sm:$0xf]
      %v630 = vld [vmem:[%s1 + $0x4] sm:$0xf]
      %v631 = vld [vmem:[%s1 + $0x8] sm:$0xf]
      %v632 = vld [vmem:[%s1 + $0xc] sm:$0xf]
      %v633 = vld [vmem:[%s1 + $0x10] sm:$0xf]
      %v634 = vld [vmem:[%s1 + $0x14] sm:$0xf]
      %v635 = vld [vmem:[%s1 + $0x18] sm:$0xf]
      %v636 = vld [vmem:[%s1 + $0x1c] sm:$0xf]
      %v637 = vld [vmem:[%s1 + $0x20] sm:$0xf]
      %v638 = vld [vmem:[%s1 + $0x24] sm:$0xf]
      %v639 = vld [vmem:[%s1 + $0x28] sm:$0xf]
      %v640 = vld [vmem:[%s1 + $0x2c] sm:$0xf]
      %v641 = vld [vmem:[%s1 + $0x30] sm:$0xf]
      %v642 = vld [vmem:[%s1 + $0x34] sm:$0xf]
      %v643 = vld [vmem:[%s1 + $0x38] sm:$0xf]
      %v644 = vld [vmem:[%s1 + $0x3c] sm:$0xf]
      %v669 = vunpack.c.l.b16 %v605
      %v670 = vunpack.c.l.b16 %v606
      %v671 = vunpack.c.l.b16 %v607
      %v672 = vunpack.c.l.b16 %v608
      %v673 = vunpack.c.l.b16 %v609
      %v674 = vunpack.c.l.b16 %v610
      %v675 = vunpack.c.l.b16 %v611
      %v676 = vunpack.c.l.b16 %v612
      %v677 = vunpack.c.l.b16 %v613
      %v678 = vunpack.c.l.b16 %v614
      %v679 = vunpack.c.l.b16 %v615
      %v680 = vunpack.c.l.b16 %v616
      %v681 = vunpack.c.l.b16 %v617
      %v682 = vunpack.c.l.b16 %v618
      %v683 = vunpack.c.l.b16 %v619
      %v684 = vunpack.c.l.b16 %v620
      %v685 = vunpack.c.l.b16 %v621
      %v686 = vunpack.c.l.b16 %v622
      %v687 = vunpack.c.l.b16 %v623
      %v688 = vunpack.c.l.b16 %v624
      %v689 = vunpack.c.l.b16 %v625
      %v690 = vunpack.c.l.b16 %v626
      %v691 = vunpack.c.l.b16 %v627
      %v692 = vunpack.c.l.b16 %v628
      %v693 = vpack.c.b16 %v670, %v669
      %v694 = vpack.c.b16 %v672, %v671
      %v695 = vpack.c.b16 %v674, %v673
      %v696 = vpack.c.b16 %v676, %v675
      %v697 = vpack.c.b16 %v678, %v677
      %v698 = vpack.c.b16 %v680, %v679
      %v699 = vpack.c.b16 %v682, %v681
      %v700 = vpack.c.b16 %v684, %v683
      %v701 = vpack.c.b16 %v686, %v685
      %v702 = vpack.c.b16 %v688, %v687
      %v703 = vpack.c.b16 %v690, %v689
      %v704 = vpack.c.b16 %v692, %v691
      %v733 = vunpack.c.l.b16 %v629
      %v734 = vunpack.c.l.b16 %v630
      %v735 = vunpack.c.l.b16 %v631
      %v736 = vunpack.c.l.b16 %v632
      %v737 = vunpack.c.l.b16 %v633
      %v738 = vunpack.c.l.b16 %v634
      %v739 = vunpack.c.l.b16 %v635
      %v740 = vunpack.c.l.b16 %v636
      %v741 = vunpack.c.l.b16 %v637
      %v742 = vunpack.c.l.b16 %v638
      %v743 = vunpack.c.l.b16 %v639
      %v744 = vunpack.c.l.b16 %v640
      %v745 = vunpack.c.l.b16 %v641
      %v746 = vunpack.c.l.b16 %v642
      %v747 = vunpack.c.l.b16 %v643
      %v748 = vunpack.c.l.b16 %v644
      %v749 = vpack.c.b16 %v734, %v733
      %v750 = vpack.c.b16 %v736, %v735
      %v751 = vpack.c.b16 %v738, %v737
      %v752 = vpack.c.b16 %v740, %v739
      %v753 = vpack.c.b16 %v742, %v741
      %v754 = vpack.c.b16 %v744, %v743
      %v755 = vpack.c.b16 %v746, %v745
      %v756 = vpack.c.b16 %v748, %v747
      %765 = vmatprep.subr.bf16.mxu0 0
      %766 = vmatpush1.bf16.msra.mxu0 %v749
      %767 = vmatprep.subr.bf16.mxu0 0
      %768 = vmatpush1.bf16.msra.mxu0 %v750
      %769 = vmatprep.subr.bf16.mxu0 0
      %770 = vmatpush1.bf16.msra.mxu0 %v751
      %771 = vmatprep.subr.bf16.mxu0 0
      %772 = vmatpush1.bf16.msra.mxu0 %v752
      %773 = vmatprep.subr.bf16.mxu0 0
      %774 = vmatpush1.bf16.msra.mxu0 %v753
      %775 = vmatprep.subr.bf16.mxu0 0
      %776 = vmatpush1.bf16.msra.mxu0 %v754
      %777 = vmatprep.subr.bf16.mxu0 0
      %778 = vmatpush1.bf16.msra.mxu0 %v755
      %779 = vmatprep.subr.bf16.mxu0 0
      %780 = vmatpush1.bf16.msra.mxu0 %v756
      %781 = vmatprep.subr.bf16.mxu0 0
      %782 = vmatpush1.bf16.msra.mxu0 0
      %783 = vmatprep.subr.bf16.mxu0 0
      %784 = vmatpush1.bf16.msra.mxu0 0
      %785 = vmatprep.subr.bf16.mxu0 0
      %786 = vmatpush1.bf16.msra.mxu0 0
      %787 = vmatprep.subr.bf16.mxu0 0
      %788 = vmatpush1.bf16.msra.mxu0 0
      %789 = vmatprep.subr.bf16.mxu0 0
      %790 = vmatpush1.bf16.msra.mxu0 0
      %791 = vmatprep.subr.bf16.mxu0 0
      %792 = vmatpush1.bf16.msra.mxu0 0
      %793 = vmatprep.subr.bf16.mxu0 0
      %794 = vmatpush1.bf16.msra.mxu0 0
      %795 = vmatprep.subr.bf16.mxu0 0
      %796 = vmatpush1.bf16.msra.mxu0 0
      %797 = vmatprep.mubr.bf16.mxu0 0
      %798 = vmatmul.mubr.bf16.gmra.mrb[0].mxu0 %v693
      %v799 = vpop.f32.mrb[0].mxu0
      %v800 = vadd.f32 0.0, %v799
      %v801 = vpop.f32.mrb[0].mxu0
      %v802 = vpop.f32.mrb[0].mxu0
      %v803 = vadd.f32 0.0, %v802
      %v804 = vpop.f32.mrb[0].mxu0
      %805 = vmatprep.mubr.bf16.mxu0 0
      %806 = vmatmul.mubr.bf16.gmra.mrb[0].mxu0 %v694
      %v807 = vpop.f32.mrb[0].mxu0
      %v808 = vadd.f32 0.0, %v807
      %v809 = vpop.f32.mrb[0].mxu0
      %v810 = vpop.f32.mrb[0].mxu0
      %v811 = vadd.f32 0.0, %v810
      %v812 = vpop.f32.mrb[0].mxu0
      %813 = vmatprep.mubr.bf16.mxu0 0
      %814 = vmatmul.mubr.bf16.gmra.mrb[0].mxu0 %v695
      %v815 = vpop.f32.mrb[0].mxu0
      %v816 = vadd.f32 0.0, %v815
      %v817 = vpop.f32.mrb[0].mxu0
      %v818 = vpop.f32.mrb[0].mxu0
      %v819 = vadd.f32 0.0, %v818
      %v820 = vpop.f32.mrb[0].mxu0
      %821 = vmatprep.mubr.bf16.mxu0 0
      %822 = vmatmul.mubr.bf16.gmra.mrb[0].mxu0 %v696
      %v823 = vpop.f32.mrb[0].mxu0
      %v824 = vadd.f32 0.0, %v823
      %v825 = vpop.f32.mrb[0].mxu0
      %v826 = vpop.f32.mrb[0].mxu0
      %v827 = vadd.f32 0.0, %v826
      %v828 = vpop.f32.mrb[0].mxu0
      %829 = vmatprep.mubr.bf16.mxu0 0
      %830 = vmatmul.mubr.bf16.gmra.mrb[0].mxu0 %v697
      %v831 = vpop.f32.mrb[0].mxu0
      %v832 = vadd.f32 0.0, %v831
      %v833 = vpop.f32.mrb[0].mxu0
      %v834 = vpop.f32.mrb[0].mxu0
      %v835 = vadd.f32 0.0, %v834
      %v836 = vpop.f32.mrb[0].mxu0
      %837 = vmatprep.mubr.bf16.mxu0 0
      %838 = vmatmul.mubr.bf16.gmra.mrb[0].mxu0 %v698
      %v839 = vpop.f32.mrb[0].mxu0
      %v840 = vadd.f32 0.0, %v839
      %v841 = vpop.f32.mrb[0].mxu0
      %v842 = vpop.f32.mrb[0].mxu0
      %v843 = vadd.f32 0.0, %v842
      %v844 = vpop.f32.mrb[0].mxu0
      %845 = vmatprep.mubr.bf16.mxu0 0
      %846 = vmatmul.mubr.bf16.gmra.mrb[0].mxu0 %v699
      %v847 = vpop.f32.mrb[0].mxu0
      %v848 = vadd.f32 0.0, %v847
      %v849 = vpop.f32.mrb[0].mxu0
      %v850 = vpop.f32.mrb[0].mxu0
      %v851 = vadd.f32 0.0, %v850
      %v852 = vpop.f32.mrb[0].mxu0
      %853 = vmatprep.mubr.bf16.mxu0 0
      %854 = vmatmul.mubr.bf16.gmra.mrb[0].mxu0 %v700
      %v855 = vpop.f32.mrb[0].mxu0
      %v856 = vadd.f32 0.0, %v855
      %v857 = vpop.f32.mrb[0].mxu0
      %v858 = vpop.f32.mrb[0].mxu0
      %v859 = vadd.f32 0.0, %v858
      %v860 = vpop.f32.mrb[0].mxu0
      %861 = vmatprep.mubr.bf16.mxu0 0
      %862 = vmatmul.mubr.bf16.gmra.mrb[0].mxu0 %v701
      %v863 = vpop.f32.mrb[0].mxu0
      %v864 = vadd.f32 0.0, %v863
      %v865 = vpop.f32.mrb[0].mxu0
      %v866 = vpop.f32.mrb[0].mxu0
      %v867 = vadd.f32 0.0, %v866
      %v868 = vpop.f32.mrb[0].mxu0
      %869 = vmatprep.mubr.bf16.mxu0 0
      %870 = vmatmul.mubr.bf16.gmra.mrb[0].mxu0 %v702
      %v871 = vpop.f32.mrb[0].mxu0
      %v872 = vadd.f32 0.0, %v871
      %v873 = vpop.f32.mrb[0].mxu0
      %v874 = vpop.f32.mrb[0].mxu0
      %v875 = vadd.f32 0.0, %v874
      %v876 = vpop.f32.mrb[0].mxu0
      %877 = vmatprep.mubr.bf16.mxu0 0
      %878 = vmatmul.mubr.bf16.gmra.mrb[0].mxu0 %v703
      %v879 = vpop.f32.mrb[0].mxu0
      %v880 = vadd.f32 0.0, %v879
      %v881 = vpop.f32.mrb[0].mxu0
      %v882 = vpop.f32.mrb[0].mxu0
      %v883 = vadd.f32 0.0, %v882
      %v884 = vpop.f32.mrb[0].mxu0
      %885 = vmatprep.mubr.bf16.mxu0 0
      %886 = vmatmul.mubr.bf16.gmra.mrb[0].mxu0 %v704
      %v887 = vpop.f32.mrb[0].mxu0
      %v888 = vadd.f32 0.0, %v887
      %v889 = vpop.f32.mrb[0].mxu0
      %v890 = vpop.f32.mrb[0].mxu0
      %v891 = vadd.f32 0.0, %v890
      %v892 = vpop.f32.mrb[0].mxu0
      %893 = vdwg.mxu0
      %v894 = vadd.f32 %v581, %v800
      %v895 = vadd.f32 %v582, %v803
      %v896 = vadd.f32 %v583, %v808
      %v897 = vadd.f32 %v584, %v811
      %v898 = vadd.f32 %v585, %v816
      %v899 = vadd.f32 %v586, %v819
      %v900 = vadd.f32 %v587, %v824
      %v901 = vadd.f32 %v588, %v827
      %v902 = vadd.f32 %v589, %v832
      %v903 = vadd.f32 %v590, %v835
      %v904 = vadd.f32 %v591, %v840
      %v905 = vadd.f32 %v592, %v843
      %v906 = vadd.f32 %v593, %v848
      %v907 = vadd.f32 %v594, %v851
      %v908 = vadd.f32 %v595, %v856
      %v909 = vadd.f32 %v596, %v859
      %v910 = vadd.f32 %v597, %v864
      %v911 = vadd.f32 %v598, %v867
      %v912 = vadd.f32 %v599, %v872
      %v913 = vadd.f32 %v600, %v875
      %v914 = vadd.f32 %v601, %v880
      %v915 = vadd.f32 %v602, %v883
      %v916 = vadd.f32 %v603, %v888
      %v917 = vadd.f32 %v604, %v891
      %918 = vst [vmem:[#allocation3] sm:$0xff] %v894
      %919 = vst [vmem:[#allocation3 + $0x8] sm:$0xff] %v895
      %920 = vst [vmem:[#allocation3 + $0x10] sm:$0xff] %v896
      %921 = vst [vmem:[#allocation3 + $0x18] sm:$0xff] %v897
      %922 = vst [vmem:[#allocation3 + $0x20] sm:$0xff] %v898
      %923 = vst [vmem:[#allocation3 + $0x28] sm:$0xff] %v899
      %924 = vst [vmem:[#allocation3 + $0x30] sm:$0xff] %v900
      %925 = vst [vmem:[#allocation3 + $0x38] sm:$0xff] %v901
      %926 = vst [vmem:[#allocation3 + $0x40] sm:$0xff] %v902
      %927 = vst [vmem:[#allocation3 + $0x48] sm:$0xff] %v903
      %928 = vst [vmem:[#allocation3 + $0x50] sm:$0xff] %v904
      %929 = vst [vmem:[#allocation3 + $0x58] sm:$0xff] %v905
      %930 = vst [vmem:[#allocation3 + $0x60] sm:$0xff] %v906
      %931 = vst [vmem:[#allocation3 + $0x68] sm:$0xff] %v907
      %932 = vst [vmem:[#allocation3 + $0x70] sm:$0xff] %v908
      %933 = vst [vmem:[#allocation3 + $0x78] sm:$0xff] %v909
      %934 = vst [vmem:[#allocation3 + $0x80] sm:$0xff] %v910
      %935 = vst [vmem:[#allocation3 + $0x88] sm:$0xff] %v911
      %936 = vst [vmem:[#allocation3 + $0x90] sm:$0xff] %v912
      %937 = vst [vmem:[#allocation3 + $0x98] sm:$0xff] %v913
      %938 = vst [vmem:[#allocation3 + $0xa0] sm:$0xff] %v914
      %939 = vst [vmem:[#allocation3 + $0xa8] sm:$0xff] %v915
      %940 = vst [vmem:[#allocation3 + $0xb0] sm:$0xff] %v916
      %941 = vst [vmem:[#allocation3 + $0xb8] sm:$0xff] %v917
      %v942 = vld [vmem:[#allocation3] sm:$0xff]
      %v943 = vld [vmem:[#allocation3 + $0x8] sm:$0xff]
      %v944 = vld [vmem:[#allocation3 + $0x10] sm:$0xff]
      %v945 = vld [vmem:[#allocation3 + $0x18] sm:$0xff]
      %v946 = vld [vmem:[#allocation3 + $0x20] sm:$0xff]
      %v947 = vld [vmem:[#allocation3 + $0x28] sm:$0xff]
      %v948 = vld [vmem:[#allocation3 + $0x30] sm:$0xff]
      %v949 = vld [vmem:[#allocation3 + $0x38] sm:$0xff]
      %v950 = vld [vmem:[#allocation3 + $0x40] sm:$0xff]
      %v951 = vld [vmem:[#allocation3 + $0x48] sm:$0xff]
      %v952 = vld [vmem:[#allocation3 + $0x50] sm:$0xff]
      %v953 = vld [vmem:[#allocation3 + $0x58] sm:$0xff]
      %v954 = vld [vmem:[#allocation3 + $0x60] sm:$0xff]
      %v955 = vld [vmem:[#allocation3 + $0x68] sm:$0xff]
      %v956 = vld [vmem:[#allocation3 + $0x70] sm:$0xff]
      %v957 = vld [vmem:[#allocation3 + $0x78] sm:$0xff]
      %v958 = vld [vmem:[#allocation3 + $0x80] sm:$0xff]
      %v959 = vld [vmem:[#allocation3 + $0x88] sm:$0xff]
      %v960 = vld [vmem:[#allocation3 + $0x90] sm:$0xff]
      %v961 = vld [vmem:[#allocation3 + $0x98] sm:$0xff]
      %v962 = vld [vmem:[#allocation3 + $0xa0] sm:$0xff]
      %v963 = vld [vmem:[#allocation3 + $0xa8] sm:$0xff]
      %v964 = vld [vmem:[#allocation3 + $0xb0] sm:$0xff]
      %v965 = vld [vmem:[#allocation3 + $0xb8] sm:$0xff]
      %v966 = vld [vmem:[#allocation2] sm:$0xf]
      %v967 = vld [vmem:[#allocation2 + $0x4] sm:$0xf]
      %v968 = vld [vmem:[#allocation2 + $0x8] sm:$0xf]
      %v969 = vld [vmem:[#allocation2 + $0xc] sm:$0xf]
      %v970 = vld [vmem:[#allocation2 + $0x10] sm:$0xf]
      %v971 = vld [vmem:[#allocation2 + $0x14] sm:$0xf]
      %v972 = vld [vmem:[#allocation2 + $0x18] sm:$0xf]
      %v973 = vld [vmem:[#allocation2 + $0x1c] sm:$0xf]
      %v974 = vld [vmem:[#allocation2 + $0x20] sm:$0xf]
      %v975 = vld [vmem:[#allocation2 + $0x24] sm:$0xf]
      %v976 = vld [vmem:[#allocation2 + $0x28] sm:$0xf]
      %v977 = vld [vmem:[#allocation2 + $0x2c] sm:$0xf]
      %v978 = vld [vmem:[#allocation2 + $0x30] sm:$0xf]
      %v979 = vld [vmem:[#allocation2 + $0x34] sm:$0xf]
      %v980 = vld [vmem:[#allocation2 + $0x38] sm:$0xf]
      %v981 = vld [vmem:[#allocation2 + $0x3c] sm:$0xf]
      %v982 = vld [vmem:[#allocation2 + $0x40] sm:$0xf]
      %v983 = vld [vmem:[#allocation2 + $0x44] sm:$0xf]
      %v984 = vld [vmem:[#allocation2 + $0x48] sm:$0xf]
      %v985 = vld [vmem:[#allocation2 + $0x4c] sm:$0xf]
      %v986 = vld [vmem:[#allocation2 + $0x50] sm:$0xf]
      %v987 = vld [vmem:[#allocation2 + $0x54] sm:$0xf]
      %v988 = vld [vmem:[#allocation2 + $0x58] sm:$0xf]
      %v989 = vld [vmem:[#allocation2 + $0x5c] sm:$0xf]
      %v990 = vld [vmem:[#allocation2 + $0x60] sm:$0x1]
      %s991 = scalar_lea.vmem %s1, 64
      %v992 = vld [vmem:[%s991] sm:$0xf]
      %v993 = vld [vmem:[%s991 + $0x4] sm:$0xf]
      %v994 = vld [vmem:[%s991 + $0x8] sm:$0xf]
      %v995 = vld [vmem:[%s991 + $0xc] sm:$0xf]
      %v996 = vld [vmem:[%s991 + $0x10] sm:$0xf]
      %v997 = vld [vmem:[%s991 + $0x14] sm:$0xf]
      %v998 = vld [vmem:[%s991 + $0x18] sm:$0xf]
      %v999 = vld [vmem:[%s991 + $0x1c] sm:$0xf]
      %v1000 = vld [vmem:[%s991 + $0x20] sm:$0xf]
      %v1001 = vld [vmem:[%s991 + $0x24] sm:$0xf]
      %v1002 = vld [vmem:[%s991 + $0x28] sm:$0xf]
      %v1003 = vld [vmem:[%s991 + $0x2c] sm:$0xf]
      %v1004 = vld [vmem:[%s991 + $0x30] sm:$0xf]
      %v1005 = vld [vmem:[%s991 + $0x34] sm:$0xf]
      %v1006 = vld [vmem:[%s991 + $0x38] sm:$0xf]
      %v1007 = vld [vmem:[%s991 + $0x3c] sm:$0xf]
      %v1033 = vunpack.c.l.b16 %v966
      %v1034 = vunpack.c.l.b16 %v967
      %v1035 = vunpack.c.l.b16 %v968
      %v1036 = vunpack.c.l.b16 %v969
      %v1037 = vunpack.c.l.b16 %v970
      %v1038 = vunpack.c.l.b16 %v971
      %v1039 = vunpack.c.l.b16 %v972
      %v1040 = vunpack.c.l.b16 %v973
      %v1041 = vunpack.c.l.b16 %v974
      %v1042 = vunpack.c.l.b16 %v975
      %v1043 = vunpack.c.l.b16 %v976
      %v1044 = vunpack.c.l.b16 %v977
      %v1045 = vunpack.c.l.b16 %v978
      %v1046 = vunpack.c.l.b16 %v979
      %v1047 = vunpack.c.l.b16 %v980
      %v1048 = vunpack.c.l.b16 %v981
      %v1049 = vunpack.c.l.b16 %v982
      %v1050 = vunpack.c.l.b16 %v983
      %v1051 = vunpack.c.l.b16 %v984
      %v1052 = vunpack.c.l.b16 %v985
      %v1053 = vunpack.c.l.b16 %v986
      %v1054 = vunpack.c.l.b16 %v987
      %v1055 = vunpack.c.l.b16 %v988
      %v1056 = vunpack.c.l.b16 %v989
      %v1057 = vunpack.c.l.b16 %v990
      %v1058 = vpack.c.b16 %v1034, %v1033
      %v1059 = vpack.c.b16 %v1036, %v1035
      %v1060 = vpack.c.b16 %v1038, %v1037
      %v1061 = vpack.c.b16 %v1040, %v1039
      %v1062 = vpack.c.b16 %v1042, %v1041
      %v1063 = vpack.c.b16 %v1044, %v1043
      %v1064 = vpack.c.b16 %v1046, %v1045
      %v1065 = vpack.c.b16 %v1048, %v1047
      %v1066 = vpack.c.b16 %v1050, %v1049
      %v1067 = vpack.c.b16 %v1052, %v1051
      %v1068 = vpack.c.b16 %v1054, %v1053
      %v1069 = vpack.c.b16 %v1056, %v1055
      %v1070 = vpack.c.b16 %v1057, %v1057
      %vm1071 = vsmask.f32 7424
      %v1073 = vshrl.u32 %v1058, 16
      %v1075 = vshll.u32 %v1058, 16
      %v1077 = vrot.slane %v1075, 1
      %v1078 = vor.u32 %v1073, %v1077
      %v1080 = vshll.u32 %v1059, 16
      %v1082 = vrot.slane %v1080, 1
      %v1083 = vsel %vm1071, %v1078, %v1082
      %v1084 = vshrl.u32 %v1059, 16
      %v1086 = vor.u32 %v1084, %v1082
      %v1088 = vshll.u32 %v1060, 16
      %v1090 = vrot.slane %v1088, 1
      %v1091 = vsel %vm1071, %v1086, %v1090
      %v1092 = vshrl.u32 %v1060, 16
      %v1094 = vor.u32 %v1092, %v1090
      %v1096 = vshll.u32 %v1061, 16
      %v1098 = vrot.slane %v1096, 1
      %v1099 = vsel %vm1071, %v1094, %v1098
      %v1100 = vshrl.u32 %v1061, 16
      %v1102 = vor.u32 %v1100, %v1098
      %v1104 = vshll.u32 %v1062, 16
      %v1106 = vrot.slane %v1104, 1
      %v1107 = vsel %vm1071, %v1102, %v1106
      %v1108 = vshrl.u32 %v1062, 16
      %v1110 = vor.u32 %v1108, %v1106
      %v1112 = vshll.u32 %v1063, 16
      %v1114 = vrot.slane %v1112, 1
      %v1115 = vsel %vm1071, %v1110, %v1114
      %v1116 = vshrl.u32 %v1063, 16
      %v1118 = vor.u32 %v1116, %v1114
      %v1120 = vshll.u32 %v1064, 16
      %v1122 = vrot.slane %v1120, 1
      %v1123 = vsel %vm1071, %v1118, %v1122
      %v1124 = vshrl.u32 %v1064, 16
      %v1126 = vor.u32 %v1124, %v1122
      %v1128 = vshll.u32 %v1065, 16
      %v1130 = vrot.slane %v1128, 1
      %v1131 = vsel %vm1071, %v1126, %v1130
      %v1132 = vshrl.u32 %v1065, 16
      %v1134 = vor.u32 %v1132, %v1130
      %v1136 = vshll.u32 %v1066, 16
      %v1138 = vrot.slane %v1136, 1
      %v1139 = vsel %vm1071, %v1134, %v1138
      %v1140 = vshrl.u32 %v1066, 16
      %v1142 = vor.u32 %v1140, %v1138
      %v1144 = vshll.u32 %v1067, 16
      %v1146 = vrot.slane %v1144, 1
      %v1147 = vsel %vm1071, %v1142, %v1146
      %v1148 = vshrl.u32 %v1067, 16
      %v1150 = vor.u32 %v1148, %v1146
      %v1152 = vshll.u32 %v1068, 16
      %v1154 = vrot.slane %v1152, 1
      %v1155 = vsel %vm1071, %v1150, %v1154
      %v1156 = vshrl.u32 %v1068, 16
      %v1158 = vor.u32 %v1156, %v1154
      %v1160 = vshll.u32 %v1069, 16
      %v1162 = vrot.slane %v1160, 1
      %v1163 = vsel %vm1071, %v1158, %v1162
      %v1164 = vshrl.u32 %v1069, 16
      %v1166 = vor.u32 %v1164, %v1162
      %v1168 = vshll.u32 %v1070, 16
      %v1170 = vrot.slane %v1168, 1
      %v1171 = vsel %vm1071, %v1166, %v1170
      %v1200 = vunpack.c.l.b16 %v992
      %v1201 = vunpack.c.l.b16 %v993
      %v1202 = vunpack.c.l.b16 %v994
      %v1203 = vunpack.c.l.b16 %v995
      %v1204 = vunpack.c.l.b16 %v996
      %v1205 = vunpack.c.l.b16 %v997
      %v1206 = vunpack.c.l.b16 %v998
      %v1207 = vunpack.c.l.b16 %v999
      %v1208 = vunpack.c.l.b16 %v1000
      %v1209 = vunpack.c.l.b16 %v1001
      %v1210 = vunpack.c.l.b16 %v1002
      %v1211 = vunpack.c.l.b16 %v1003
      %v1212 = vunpack.c.l.b16 %v1004
      %v1213 = vunpack.c.l.b16 %v1005
      %v1214 = vunpack.c.l.b16 %v1006
      %v1215 = vunpack.c.l.b16 %v1007
      %v1216 = vpack.c.b16 %v1201, %v1200
      %v1217 = vpack.c.b16 %v1203, %v1202
      %v1218 = vpack.c.b16 %v1205, %v1204
      %v1219 = vpack.c.b16 %v1207, %v1206
      %v1220 = vpack.c.b16 %v1209, %v1208
      %v1221 = vpack.c.b16 %v1211, %v1210
      %v1222 = vpack.c.b16 %v1213, %v1212
      %v1223 = vpack.c.b16 %v1215, %v1214
      %1232 = vmatprep.subr.bf16.mxu0 0
      %1233 = vmatpush1.bf16.msra.mxu0 %v1216
      %1234 = vmatprep.subr.bf16.mxu0 0
      %1235 = vmatpush1.bf16.msra.mxu0 %v1217
      %1236 = vmatprep.subr.bf16.mxu0 0
      %1237 = vmatpush1.bf16.msra.mxu0 %v1218
      %1238 = vmatprep.subr.bf16.mxu0 0
      %1239 = vmatpush1.bf16.msra.mxu0 %v1219
      %1240 = vmatprep.subr.bf16.mxu0 0
      %1241 = vmatpush1.bf16.msra.mxu0 %v1220
      %1242 = vmatprep.subr.bf16.mxu0 0
      %1243 = vmatpush1.bf16.msra.mxu0 %v1221
      %1244 = vmatprep.subr.bf16.mxu0 0
      %1245 = vmatpush1.bf16.msra.mxu0 %v1222
      %1246 = vmatprep.subr.bf16.mxu0 0
      %1247 = vmatpush1.bf16.msra.mxu0 %v1223
      %1248 = vmatprep.subr.bf16.mxu0 0
      %1249 = vmatpush1.bf16.msra.mxu0 0
      %1250 = vmatprep.subr.bf16.mxu0 0
      %1251 = vmatpush1.bf16.msra.mxu0 0
      %1252 = vmatprep.subr.bf16.mxu0 0
      %1253 = vmatpush1.bf16.msra.mxu0 0
      %1254 = vmatprep.subr.bf16.mxu0 0
      %1255 = vmatpush1.bf16.msra.mxu0 0
      %1256 = vmatprep.subr.bf16.mxu0 0
      %1257 = vmatpush1.bf16.msra.mxu0 0
      %1258 = vmatprep.subr.bf16.mxu0 0
      %1259 = vmatpush1.bf16.msra.mxu0 0
      %1260 = vmatprep.subr.bf16.mxu0 0
      %1261 = vmatpush1.bf16.msra.mxu0 0
      %1262 = vmatprep.subr.bf16.mxu0 0
      %1263 = vmatpush1.bf16.msra.mxu0 0
      %1264 = vmatprep.mubr.bf16.mxu0 0
      %1265 = vmatmul.mubr.bf16.gmra.mrb[0].mxu0 %v1083
      %v1266 = vpop.f32.mrb[0].mxu0
      %v1267 = vadd.f32 0.0, %v1266
      %v1268 = vpop.f32.mrb[0].mxu0
      %v1269 = vpop.f32.mrb[0].mxu0
      %v1270 = vadd.f32 0.0, %v1269
      %v1271 = vpop.f32.mrb[0].mxu0
      %1272 = vmatprep.mubr.bf16.mxu0 0
      %1273 = vmatmul.mubr.bf16.gmra.mrb[0].mxu0 %v1091
      %v1274 = vpop.f32.mrb[0].mxu0
      %v1275 = vadd.f32 0.0, %v1274
      %v1276 = vpop.f32.mrb[0].mxu0
      %v1277 = vpop.f32.mrb[0].mxu0
      %v1278 = vadd.f32 0.0, %v1277
      %v1279 = vpop.f32.mrb[0].mxu0
      %1280 = vmatprep.mubr.bf16.mxu0 0
      %1281 = vmatmul.mubr.bf16.gmra.mrb[0].mxu0 %v1099
      %v1282 = vpop.f32.mrb[0].mxu0
      %v1283 = vadd.f32 0.0, %v1282
      %v1284 = vpop.f32.mrb[0].mxu0
      %v1285 = vpop.f32.mrb[0].mxu0
      %v1286 = vadd.f32 0.0, %v1285
      %v1287 = vpop.f32.mrb[0].mxu0
      %1288 = vmatprep.mubr.bf16.mxu0 0
      %1289 = vmatmul.mubr.bf16.gmra.mrb[0].mxu0 %v1107
      %v1290 = vpop.f32.mrb[0].mxu0
      %v1291 = vadd.f32 0.0, %v1290
      %v1292 = vpop.f32.mrb[0].mxu0
      %v1293 = vpop.f32.mrb[0].mxu0
      %v1294 = vadd.f32 0.0, %v1293
      %v1295 = vpop.f32.mrb[0].mxu0
      %1296 = vmatprep.mubr.bf16.mxu0 0
      %1297 = vmatmul.mubr.bf16.gmra.mrb[0].mxu0 %v1115
      %v1298 = vpop.f32.mrb[0].mxu0
      %v1299 = vadd.f32 0.0, %v1298
      %v1300 = vpop.f32.mrb[0].mxu0
      %v1301 = vpop.f32.mrb[0].mxu0
      %v1302 = vadd.f32 0.0, %v1301
      %v1303 = vpop.f32.mrb[0].mxu0
      %1304 = vmatprep.mubr.bf16.mxu0 0
      %1305 = vmatmul.mubr.bf16.gmra.mrb[0].mxu0 %v1123
      %v1306 = vpop.f32.mrb[0].mxu0
      %v1307 = vadd.f32 0.0, %v1306
      %v1308 = vpop.f32.mrb[0].mxu0
      %v1309 = vpop.f32.mrb[0].mxu0
      %v1310 = vadd.f32 0.0, %v1309
      %v1311 = vpop.f32.mrb[0].mxu0
      %1312 = vmatprep.mubr.bf16.mxu0 0
      %1313 = vmatmul.mubr.bf16.gmra.mrb[0].mxu0 %v1131
      %v1314 = vpop.f32.mrb[0].mxu0
      %v1315 = vadd.f32 0.0, %v1314
      %v1316 = vpop.f32.mrb[0].mxu0
      %v1317 = vpop.f32.mrb[0].mxu0
      %v1318 = vadd.f32 0.0, %v1317
      %v1319 = vpop.f32.mrb[0].mxu0
      %1320 = vmatprep.mubr.bf16.mxu0 0
      %1321 = vmatmul.mubr.bf16.gmra.mrb[0].mxu0 %v1139
      %v1322 = vpop.f32.mrb[0].mxu0
      %v1323 = vadd.f32 0.0, %v1322
      %v1324 = vpop.f32.mrb[0].mxu0
      %v1325 = vpop.f32.mrb[0].mxu0
      %v1326 = vadd.f32 0.0, %v1325
      %v1327 = vpop.f32.mrb[0].mxu0
      %1328 = vmatprep.mubr.bf16.mxu0 0
      %1329 = vmatmul.mubr.bf16.gmra.mrb[0].mxu0 %v1147
      %v1330 = vpop.f32.mrb[0].mxu0
      %v1331 = vadd.f32 0.0, %v1330
      %v1332 = vpop.f32.mrb[0].mxu0
      %v1333 = vpop.f32.mrb[0].mxu0
      %v1334 = vadd.f32 0.0, %v1333
      %v1335 = vpop.f32.mrb[0].mxu0
      %1336 = vmatprep.mubr.bf16.mxu0 0
      %1337 = vmatmul.mubr.bf16.gmra.mrb[0].mxu0 %v1155
      %v1338 = vpop.f32.mrb[0].mxu0
      %v1339 = vadd.f32 0.0, %v1338
      %v1340 = vpop.f32.mrb[0].mxu0
      %v1341 = vpop.f32.mrb[0].mxu0
      %v1342 = vadd.f32 0.0, %v1341
      %v1343 = vpop.f32.mrb[0].mxu0
      %1344 = vmatprep.mubr.bf16.mxu0 0
      %1345 = vmatmul.mubr.bf16.gmra.mrb[0].mxu0 %v1163
      %v1346 = vpop.f32.mrb[0].mxu0
      %v1347 = vadd.f32 0.0, %v1346
      %v1348 = vpop.f32.mrb[0].mxu0
      %v1349 = vpop.f32.mrb[0].mxu0
      %v1350 = vadd.f32 0.0, %v1349
      %v1351 = vpop.f32.mrb[0].mxu0
      %1352 = vmatprep.mubr.bf16.mxu0 0
      %1353 = vmatmul.mubr.bf16.gmra.mrb[0].mxu0 %v1171
      %v1354 = vpop.f32.mrb[0].mxu0
      %v1355 = vadd.f32 0.0, %v1354
      %v1356 = vpop.f32.mrb[0].mxu0
      %v1357 = vpop.f32.mrb[0].mxu0
      %v1358 = vadd.f32 0.0, %v1357
      %v1359 = vpop.f32.mrb[0].mxu0
      %1360 = vdwg.mxu0
      %v1361 = vadd.f32 %v942, %v1267
      %v1362 = vadd.f32 %v943, %v1270
      %v1363 = vadd.f32 %v944, %v1275
      %v1364 = vadd.f32 %v945, %v1278
      %v1365 = vadd.f32 %v946, %v1283
      %v1366 = vadd.f32 %v947, %v1286
      %v1367 = vadd.f32 %v948, %v1291
      %v1368 = vadd.f32 %v949, %v1294
      %v1369 = vadd.f32 %v950, %v1299
      %v1370 = vadd.f32 %v951, %v1302
      %v1371 = vadd.f32 %v952, %v1307
      %v1372 = vadd.f32 %v953, %v1310
      %v1373 = vadd.f32 %v954, %v1315
      %v1374 = vadd.f32 %v955, %v1318
      %v1375 = vadd.f32 %v956, %v1323
      %v1376 = vadd.f32 %v957, %v1326
      %v1377 = vadd.f32 %v958, %v1331
      %v1378 = vadd.f32 %v959, %v1334
      %v1379 = vadd.f32 %v960, %v1339
      %v1380 = vadd.f32 %v961, %v1342
      %v1381 = vadd.f32 %v962, %v1347
      %v1382 = vadd.f32 %v963, %v1350
      %v1383 = vadd.f32 %v964, %v1355
      %v1384 = vadd.f32 %v965, %v1358
      %1385 = vst [vmem:[#allocation3] sm:$0xff] %v1361
      %1386 = vst [vmem:[#allocation3 + $0x8] sm:$0xff] %v1362
      %1387 = vst [vmem:[#allocation3 + $0x10] sm:$0xff] %v1363
      %1388 = vst [vmem:[#allocation3 + $0x18] sm:$0xff] %v1364
      %1389 = vst [vmem:[#allocation3 + $0x20] sm:$0xff] %v1365
      %1390 = vst [vmem:[#allocation3 + $0x28] sm:$0xff] %v1366
      %1391 = vst [vmem:[#allocation3 + $0x30] sm:$0xff] %v1367
      %1392 = vst [vmem:[#allocation3 + $0x38] sm:$0xff] %v1368
      %1393 = vst [vmem:[#allocation3 + $0x40] sm:$0xff] %v1369
      %1394 = vst [vmem:[#allocation3 + $0x48] sm:$0xff] %v1370
      %1395 = vst [vmem:[#allocation3 + $0x50] sm:$0xff] %v1371
      %1396 = vst [vmem:[#allocation3 + $0x58] sm:$0xff] %v1372
      %1397 = vst [vmem:[#allocation3 + $0x60] sm:$0xff] %v1373
      %1398 = vst [vmem:[#allocation3 + $0x68] sm:$0xff] %v1374
      %1399 = vst [vmem:[#allocation3 + $0x70] sm:$0xff] %v1375
      %1400 = vst [vmem:[#allocation3 + $0x78] sm:$0xff] %v1376
      %1401 = vst [vmem:[#allocation3 + $0x80] sm:$0xff] %v1377
      %1402 = vst [vmem:[#allocation3 + $0x88] sm:$0xff] %v1378
      %1403 = vst [vmem:[#allocation3 + $0x90] sm:$0xff] %v1379
      %1404 = vst [vmem:[#allocation3 + $0x98] sm:$0xff] %v1380
      %1405 = vst [vmem:[#allocation3 + $0xa0] sm:$0xff] %v1381
      %1406 = vst [vmem:[#allocation3 + $0xa8] sm:$0xff] %v1382
      %1407 = vst [vmem:[#allocation3 + $0xb0] sm:$0xff] %v1383
      %1408 = vst [vmem:[#allocation3 + $0xb8] sm:$0xff] %v1384
      %v1409 = vld [vmem:[#allocation3] sm:$0xff]
      %v1410 = vld [vmem:[#allocation3 + $0x8] sm:$0xff]
      %v1411 = vld [vmem:[#allocation3 + $0x10] sm:$0xff]
      %v1412 = vld [vmem:[#allocation3 + $0x18] sm:$0xff]
      %v1413 = vld [vmem:[#allocation3 + $0x20] sm:$0xff]
      %v1414 = vld [vmem:[#allocation3 + $0x28] sm:$0xff]
      %v1415 = vld [vmem:[#allocation3 + $0x30] sm:$0xff]
      %v1416 = vld [vmem:[#allocation3 + $0x38] sm:$0xff]
      %v1417 = vld [vmem:[#allocation3 + $0x40] sm:$0xff]
      %v1418 = vld [vmem:[#allocation3 + $0x48] sm:$0xff]
      %v1419 = vld [vmem:[#allocation3 + $0x50] sm:$0xff]
      %v1420 = vld [vmem:[#allocation3 + $0x58] sm:$0xff]
      %v1421 = vld [vmem:[#allocation3 + $0x60] sm:$0xff]
      %v1422 = vld [vmem:[#allocation3 + $0x68] sm:$0xff]
      %v1423 = vld [vmem:[#allocation3 + $0x70] sm:$0xff]
      %v1424 = vld [vmem:[#allocation3 + $0x78] sm:$0xff]
      %v1425 = vld [vmem:[#allocation3 + $0x80] sm:$0xff]
      %v1426 = vld [vmem:[#allocation3 + $0x88] sm:$0xff]
      %v1427 = vld [vmem:[#allocation3 + $0x90] sm:$0xff]
      %v1428 = vld [vmem:[#allocation3 + $0x98] sm:$0xff]
      %v1429 = vld [vmem:[#allocation3 + $0xa0] sm:$0xff]
      %v1430 = vld [vmem:[#allocation3 + $0xa8] sm:$0xff]
      %v1431 = vld [vmem:[#allocation3 + $0xb0] sm:$0xff]
      %v1432 = vld [vmem:[#allocation3 + $0xb8] sm:$0xff]
      %v1433 = vld [vmem:[#allocation2] sm:$0xe]
      %v1434 = vld [vmem:[#allocation2 + $0x4] sm:$0xf]
      %v1435 = vld [vmem:[#allocation2 + $0x8] sm:$0xf]
      %v1436 = vld [vmem:[#allocation2 + $0xc] sm:$0xf]
      %v1437 = vld [vmem:[#allocation2 + $0x10] sm:$0xf]
      %v1438 = vld [vmem:[#allocation2 + $0x14] sm:$0xf]
      %v1439 = vld [vmem:[#allocation2 + $0x18] sm:$0xf]
      %v1440 = vld [vmem:[#allocation2 + $0x1c] sm:$0xf]
      %v1441 = vld [vmem:[#allocation2 + $0x20] sm:$0xf]
      %v1442 = vld [vmem:[#allocation2 + $0x24] sm:$0xf]
      %v1443 = vld [vmem:[#allocation2 + $0x28] sm:$0xf]
      %v1444 = vld [vmem:[#allocation2 + $0x2c] sm:$0xf]
      %v1445 = vld [vmem:[#allocation2 + $0x30] sm:$0xf]
      %v1446 = vld [vmem:[#allocation2 + $0x34] sm:$0xf]
      %v1447 = vld [vmem:[#allocation2 + $0x38] sm:$0xf]
      %v1448 = vld [vmem:[#allocation2 + $0x3c] sm:$0xf]
      %v1449 = vld [vmem:[#allocation2 + $0x40] sm:$0xf]
      %v1450 = vld [vmem:[#allocation2 + $0x44] sm:$0xf]
      %v1451 = vld [vmem:[#allocation2 + $0x48] sm:$0xf]
      %v1452 = vld [vmem:[#allocation2 + $0x4c] sm:$0xf]
      %v1453 = vld [vmem:[#allocation2 + $0x50] sm:$0xf]
      %v1454 = vld [vmem:[#allocation2 + $0x54] sm:$0xf]
      %v1455 = vld [vmem:[#allocation2 + $0x58] sm:$0xf]
      %v1456 = vld [vmem:[#allocation2 + $0x5c] sm:$0xf]
      %v1457 = vld [vmem:[#allocation2 + $0x60] sm:$0x1]
      %s1458 = scalar_lea.vmem %s1, 128
      %v1459 = vld [vmem:[%s1458] sm:$0xf]
      %v1460 = vld [vmem:[%s1458 + $0x4] sm:$0xf]
      %v1461 = vld [vmem:[%s1458 + $0x8] sm:$0xf]
      %v1462 = vld [vmem:[%s1458 + $0xc] sm:$0xf]
      %v1463 = vld [vmem:[%s1458 + $0x10] sm:$0xf]
      %v1464 = vld [vmem:[%s1458 + $0x14] sm:$0xf]
      %v1465 = vld [vmem:[%s1458 + $0x18] sm:$0xf]
      %v1466 = vld [vmem:[%s1458 + $0x1c] sm:$0xf]
      %v1467 = vld [vmem:[%s1458 + $0x20] sm:$0xf]
      %v1468 = vld [vmem:[%s1458 + $0x24] sm:$0xf]
      %v1469 = vld [vmem:[%s1458 + $0x28] sm:$0xf]
      %v1470 = vld [vmem:[%s1458 + $0x2c] sm:$0xf]
      %v1471 = vld [vmem:[%s1458 + $0x30] sm:$0xf]
      %v1472 = vld [vmem:[%s1458 + $0x34] sm:$0xf]
      %v1473 = vld [vmem:[%s1458 + $0x38] sm:$0xf]
      %v1474 = vld [vmem:[%s1458 + $0x3c] sm:$0xf]
      %v1500 = vunpack.c.l.b16 %v1433
      %v1501 = vunpack.c.l.b16 %v1434
      %v1502 = vunpack.c.l.b16 %v1435
      %v1503 = vunpack.c.l.b16 %v1436
      %v1504 = vunpack.c.l.b16 %v1437
      %v1505 = vunpack.c.l.b16 %v1438
      %v1506 = vunpack.c.l.b16 %v1439
      %v1507 = vunpack.c.l.b16 %v1440
      %v1508 = vunpack.c.l.b16 %v1441
      %v1509 = vunpack.c.l.b16 %v1442
      %v1510 = vunpack.c.l.b16 %v1443
      %v1511 = vunpack.c.l.b16 %v1444
      %v1512 = vunpack.c.l.b16 %v1445
      %v1513 = vunpack.c.l.b16 %v1446
      %v1514 = vunpack.c.l.b16 %v1447
      %v1515 = vunpack.c.l.b16 %v1448
      %v1516 = vunpack.c.l.b16 %v1449
      %v1517 = vunpack.c.l.b16 %v1450
      %v1518 = vunpack.c.l.b16 %v1451
      %v1519 = vunpack.c.l.b16 %v1452
      %v1520 = vunpack.c.l.b16 %v1453
      %v1521 = vunpack.c.l.b16 %v1454
      %v1522 = vunpack.c.l.b16 %v1455
      %v1523 = vunpack.c.l.b16 %v1456
      %v1524 = vunpack.c.l.b16 %v1457
      %v1525 = vpack.c.b16 %v1501, %v1500
      %v1526 = vpack.c.b16 %v1503, %v1502
      %v1527 = vpack.c.b16 %v1505, %v1504
      %v1528 = vpack.c.b16 %v1507, %v1506
      %v1529 = vpack.c.b16 %v1509, %v1508
      %v1530 = vpack.c.b16 %v1511, %v1510
      %v1531 = vpack.c.b16 %v1513, %v1512
      %v1532 = vpack.c.b16 %v1515, %v1514
      %v1533 = vpack.c.b16 %v1517, %v1516
      %v1534 = vpack.c.b16 %v1519, %v1518
      %v1535 = vpack.c.b16 %v1521, %v1520
      %v1536 = vpack.c.b16 %v1523, %v1522
      %v1537 = vpack.c.b16 %v1524, %v1524
      %vm1538 = vcmask 1046528
      %v1539 = vrot.slane %v1525, 1
      %v1540 = vrot.slane %v1526, 1
      %v1541 = vsel %vm1538, %v1539, %v1540
      %v1542 = vrot.slane %v1527, 1
      %v1543 = vsel %vm1538, %v1540, %v1542
      %v1544 = vrot.slane %v1528, 1
      %v1545 = vsel %vm1538, %v1542, %v1544
      %v1546 = vrot.slane %v1529, 1
      %v1547 = vsel %vm1538, %v1544, %v1546
      %v1548 = vrot.slane %v1530, 1
      %v1549 = vsel %vm1538, %v1546, %v1548
      %v1550 = vrot.slane %v1531, 1
      %v1551 = vsel %vm1538, %v1548, %v1550
      %v1552 = vrot.slane %v1532, 1
      %v1553 = vsel %vm1538, %v1550, %v1552
      %v1554 = vrot.slane %v1533, 1
      %v1555 = vsel %vm1538, %v1552, %v1554
      %v1556 = vrot.slane %v1534, 1
      %v1557 = vsel %vm1538, %v1554, %v1556
      %v1558 = vrot.slane %v1535, 1
      %v1559 = vsel %vm1538, %v1556, %v1558
      %v1560 = vrot.slane %v1536, 1
      %v1561 = vsel %vm1538, %v1558, %v1560
      %v1562 = vrot.slane %v1537, 1
      %v1563 = vsel %vm1538, %v1560, %v1562
      %v1592 = vunpack.c.l.b16 %v1459
      %v1593 = vunpack.c.l.b16 %v1460
      %v1594 = vunpack.c.l.b16 %v1461
      %v1595 = vunpack.c.l.b16 %v1462
      %v1596 = vunpack.c.l.b16 %v1463
      %v1597 = vunpack.c.l.b16 %v1464
      %v1598 = vunpack.c.l.b16 %v1465
      %v1599 = vunpack.c.l.b16 %v1466
      %v1600 = vunpack.c.l.b16 %v1467
      %v1601 = vunpack.c.l.b16 %v1468
      %v1602 = vunpack.c.l.b16 %v1469
      %v1603 = vunpack.c.l.b16 %v1470
      %v1604 = vunpack.c.l.b16 %v1471
      %v1605 = vunpack.c.l.b16 %v1472
      %v1606 = vunpack.c.l.b16 %v1473
      %v1607 = vunpack.c.l.b16 %v1474
      %v1608 = vpack.c.b16 %v1593, %v1592
      %v1609 = vpack.c.b16 %v1595, %v1594
      %v1610 = vpack.c.b16 %v1597, %v1596
      %v1611 = vpack.c.b16 %v1599, %v1598
      %v1612 = vpack.c.b16 %v1601, %v1600
      %v1613 = vpack.c.b16 %v1603, %v1602
      %v1614 = vpack.c.b16 %v1605, %v1604
      %v1615 = vpack.c.b16 %v1607, %v1606
      %1624 = vmatprep.subr.bf16.mxu0 0
      %1625 = vmatpush1.bf16.msra.mxu0 %v1608
      %1626 = vmatprep.subr.bf16.mxu0 0
      %1627 = vmatpush1.bf16.msra.mxu0 %v1609
      %1628 = vmatprep.subr.bf16.mxu0 0
      %1629 = vmatpush1.bf16.msra.mxu0 %v1610
      %1630 = vmatprep.subr.bf16.mxu0 0
      %1631 = vmatpush1.bf16.msra.mxu0 %v1611
      %1632 = vmatprep.subr.bf16.mxu0 0
      %1633 = vmatpush1.bf16.msra.mxu0 %v1612
      %1634 = vmatprep.subr.bf16.mxu0 0
      %1635 = vmatpush1.bf16.msra.mxu0 %v1613
      %1636 = vmatprep.subr.bf16.mxu0 0
      %1637 = vmatpush1.bf16.msra.mxu0 %v1614
      %1638 = vmatprep.subr.bf16.mxu0 0
      %1639 = vmatpush1.bf16.msra.mxu0 %v1615
      %1640 = vmatprep.subr.bf16.mxu0 0
      %1641 = vmatpush1.bf16.msra.mxu0 0
      %1642 = vmatprep.subr.bf16.mxu0 0
      %1643 = vmatpush1.bf16.msra.mxu0 0
      %1644 = vmatprep.subr.bf16.mxu0 0
      %1645 = vmatpush1.bf16.msra.mxu0 0
      %1646 = vmatprep.subr.bf16.mxu0 0
      %1647 = vmatpush1.bf16.msra.mxu0 0
      %1648 = vmatprep.subr.bf16.mxu0 0
      %1649 = vmatpush1.bf16.msra.mxu0 0
      %1650 = vmatprep.subr.bf16.mxu0 0
      %1651 = vmatpush1.bf16.msra.mxu0 0
      %1652 = vmatprep.subr.bf16.mxu0 0
      %1653 = vmatpush1.bf16.msra.mxu0 0
      %1654 = vmatprep.subr.bf16.mxu0 0
      %1655 = vmatpush1.bf16.msra.mxu0 0
      %1656 = vmatprep.mubr.bf16.mxu0 0
      %1657 = vmatmul.mubr.bf16.gmra.mrb[0].mxu0 %v1541
      %v1658 = vpop.f32.mrb[0].mxu0
      %v1659 = vadd.f32 0.0, %v1658
      %v1660 = vpop.f32.mrb[0].mxu0
      %v1661 = vpop.f32.mrb[0].mxu0
      %v1662 = vadd.f32 0.0, %v1661
      %v1663 = vpop.f32.mrb[0].mxu0
      %1664 = vmatprep.mubr.bf16.mxu0 0
      %1665 = vmatmul.mubr.bf16.gmra.mrb[0].mxu0 %v1543
      %v1666 = vpop.f32.mrb[0].mxu0
      %v1667 = vadd.f32 0.0, %v1666
      %v1668 = vpop.f32.mrb[0].mxu0
      %v1669 = vpop.f32.mrb[0].mxu0
      %v1670 = vadd.f32 0.0, %v1669
      %v1671 = vpop.f32.mrb[0].mxu0
      %1672 = vmatprep.mubr.bf16.mxu0 0
      %1673 = vmatmul.mubr.bf16.gmra.mrb[0].mxu0 %v1545
      %v1674 = vpop.f32.mrb[0].mxu0
      %v1675 = vadd.f32 0.0, %v1674
      %v1676 = vpop.f32.mrb[0].mxu0
      %v1677 = vpop.f32.mrb[0].mxu0
      %v1678 = vadd.f32 0.0, %v1677
      %v1679 = vpop.f32.mrb[0].mxu0
      %1680 = vmatprep.mubr.bf16.mxu0 0
      %1681 = vmatmul.mubr.bf16.gmra.mrb[0].mxu0 %v1547
      %v1682 = vpop.f32.mrb[0].mxu0
      %v1683 = vadd.f32 0.0, %v1682
      %v1684 = vpop.f32.mrb[0].mxu0
      %v1685 = vpop.f32.mrb[0].mxu0
      %v1686 = vadd.f32 0.0, %v1685
      %v1687 = vpop.f32.mrb[0].mxu0
      %1688 = vmatprep.mubr.bf16.mxu0 0
      %1689 = vmatmul.mubr.bf16.gmra.mrb[0].mxu0 %v1549
      %v1690 = vpop.f32.mrb[0].mxu0
      %v1691 = vadd.f32 0.0, %v1690
      %v1692 = vpop.f32.mrb[0].mxu0
      %v1693 = vpop.f32.mrb[0].mxu0
      %v1694 = vadd.f32 0.0, %v1693
      %v1695 = vpop.f32.mrb[0].mxu0
      %1696 = vmatprep.mubr.bf16.mxu0 0
      %1697 = vmatmul.mubr.bf16.gmra.mrb[0].mxu0 %v1551
      %v1698 = vpop.f32.mrb[0].mxu0
      %v1699 = vadd.f32 0.0, %v1698
      %v1700 = vpop.f32.mrb[0].mxu0
      %v1701 = vpop.f32.mrb[0].mxu0
      %v1702 = vadd.f32 0.0, %v1701
      %v1703 = vpop.f32.mrb[0].mxu0
      %1704 = vmatprep.mubr.bf16.mxu0 0
      %1705 = vmatmul.mubr.bf16.gmra.mrb[0].mxu0 %v1553
      %v1706 = vpop.f32.mrb[0].mxu0
      %v1707 = vadd.f32 0.0, %v1706
      %v1708 = vpop.f32.mrb[0].mxu0
      %v1709 = vpop.f32.mrb[0].mxu0
      %v1710 = vadd.f32 0.0, %v1709
      %v1711 = vpop.f32.mrb[0].mxu0
      %1712 = vmatprep.mubr.bf16.mxu0 0
      %1713 = vmatmul.mubr.bf16.gmra.mrb[0].mxu0 %v1555
      %v1714 = vpop.f32.mrb[0].mxu0
      %v1715 = vadd.f32 0.0, %v1714
      %v1716 = vpop.f32.mrb[0].mxu0
      %v1717 = vpop.f32.mrb[0].mxu0
      %v1718 = vadd.f32 0.0, %v1717
      %v1719 = vpop.f32.mrb[0].mxu0
      %1720 = vmatprep.mubr.bf16.mxu0 0
      %1721 = vmatmul.mubr.bf16.gmra.mrb[0].mxu0 %v1557
      %v1722 = vpop.f32.mrb[0].mxu0
      %v1723 = vadd.f32 0.0, %v1722
      %v1724 = vpop.f32.mrb[0].mxu0
      %v1725 = vpop.f32.mrb[0].mxu0
      %v1726 = vadd.f32 0.0, %v1725
      %v1727 = vpop.f32.mrb[0].mxu0
      %1728 = vmatprep.mubr.bf16.mxu0 0
      %1729 = vmatmul.mubr.bf16.gmra.mrb[0].mxu0 %v1559
      %v1730 = vpop.f32.mrb[0].mxu0
      %v1731 = vadd.f32 0.0, %v1730
      %v1732 = vpop.f32.mrb[0].mxu0
      %v1733 = vpop.f32.mrb[0].mxu0
      %v1734 = vadd.f32 0.0, %v1733
      %v1735 = vpop.f32.mrb[0].mxu0
      %1736 = vmatprep.mubr.bf16.mxu0 0
      %1737 = vmatmul.mubr.bf16.gmra.mrb[0].mxu0 %v1561
      %v1738 = vpop.f32.mrb[0].mxu0
      %v1739 = vadd.f32 0.0, %v1738
      %v1740 = vpop.f32.mrb[0].mxu0
      %v1741 = vpop.f32.mrb[0].mxu0
      %v1742 = vadd.f32 0.0, %v1741
      %v1743 = vpop.f32.mrb[0].mxu0
      %1744 = vmatprep.mubr.bf16.mxu0 0
      %1745 = vmatmul.mubr.bf16.gmra.mrb[0].mxu0 %v1563
      %v1746 = vpop.f32.mrb[0].mxu0
      %v1747 = vadd.f32 0.0, %v1746
      %v1748 = vpop.f32.mrb[0].mxu0
      %v1749 = vpop.f32.mrb[0].mxu0
      %v1750 = vadd.f32 0.0, %v1749
      %v1751 = vpop.f32.mrb[0].mxu0
      %1752 = vdwg.mxu0
      %v1753 = vadd.f32 %v1409, %v1659
      %v1754 = vadd.f32 %v1410, %v1662
      %v1755 = vadd.f32 %v1411, %v1667
      %v1756 = vadd.f32 %v1412, %v1670
      %v1757 = vadd.f32 %v1413, %v1675
      %v1758 = vadd.f32 %v1414, %v1678
      %v1759 = vadd.f32 %v1415, %v1683
      %v1760 = vadd.f32 %v1416, %v1686
      %v1761 = vadd.f32 %v1417, %v1691
      %v1762 = vadd.f32 %v1418, %v1694
      %v1763 = vadd.f32 %v1419, %v1699
      %v1764 = vadd.f32 %v1420, %v1702
      %v1765 = vadd.f32 %v1421, %v1707
      %v1766 = vadd.f32 %v1422, %v1710
      %v1767 = vadd.f32 %v1423, %v1715
      %v1768 = vadd.f32 %v1424, %v1718
      %v1769 = vadd.f32 %v1425, %v1723
      %v1770 = vadd.f32 %v1426, %v1726
      %v1771 = vadd.f32 %v1427, %v1731
      %v1772 = vadd.f32 %v1428, %v1734
      %v1773 = vadd.f32 %v1429, %v1739
      %v1774 = vadd.f32 %v1430, %v1742
      %v1775 = vadd.f32 %v1431, %v1747
      %v1776 = vadd.f32 %v1432, %v1750
      %1777 = vst [vmem:[#allocation3] sm:$0xff] %v1753
      %1778 = vst [vmem:[#allocation3 + $0x8] sm:$0xff] %v1754
      %1779 = vst [vmem:[#allocation3 + $0x10] sm:$0xff] %v1755
      %1780 = vst [vmem:[#allocation3 + $0x18] sm:$0xff] %v1756
      %1781 = vst [vmem:[#allocation3 + $0x20] sm:$0xff] %v1757
      %1782 = vst [vmem:[#allocation3 + $0x28] sm:$0xff] %v1758
      %1783 = vst [vmem:[#allocation3 + $0x30] sm:$0xff] %v1759
      %1784 = vst [vmem:[#allocation3 + $0x38] sm:$0xff] %v1760
      %1785 = vst [vmem:[#allocation3 + $0x40] sm:$0xff] %v1761
      %1786 = vst [vmem:[#allocation3 + $0x48] sm:$0xff] %v1762
      %1787 = vst [vmem:[#allocation3 + $0x50] sm:$0xff] %v1763
      %1788 = vst [vmem:[#allocation3 + $0x58] sm:$0xff] %v1764
      %1789 = vst [vmem:[#allocation3 + $0x60] sm:$0xff] %v1765
      %1790 = vst [vmem:[#allocation3 + $0x68] sm:$0xff] %v1766
      %1791 = vst [vmem:[#allocation3 + $0x70] sm:$0xff] %v1767
      %1792 = vst [vmem:[#allocation3 + $0x78] sm:$0xff] %v1768
      %1793 = vst [vmem:[#allocation3 + $0x80] sm:$0xff] %v1769
      %1794 = vst [vmem:[#allocation3 + $0x88] sm:$0xff] %v1770
      %1795 = vst [vmem:[#allocation3 + $0x90] sm:$0xff] %v1771
      %1796 = vst [vmem:[#allocation3 + $0x98] sm:$0xff] %v1772
      %1797 = vst [vmem:[#allocation3 + $0xa0] sm:$0xff] %v1773
      %1798 = vst [vmem:[#allocation3 + $0xa8] sm:$0xff] %v1774
      %1799 = vst [vmem:[#allocation3 + $0xb0] sm:$0xff] %v1775
      %1800 = vst [vmem:[#allocation3 + $0xb8] sm:$0xff] %v1776
      %v1801 = vld [vmem:[#allocation3] sm:$0xff]
      %v1802 = vld [vmem:[#allocation3 + $0x8] sm:$0xff]
      %v1803 = vld [vmem:[#allocation3 + $0x10] sm:$0xff]
      %v1804 = vld [vmem:[#allocation3 + $0x18] sm:$0xff]
      %v1805 = vld [vmem:[#allocation3 + $0x20] sm:$0xff]
      %v1806 = vld [vmem:[#allocation3 + $0x28] sm:$0xff]
      %v1807 = vld [vmem:[#allocation3 + $0x30] sm:$0xff]
      %v1808 = vld [vmem:[#allocation3 + $0x38] sm:$0xff]
      %v1809 = vld [vmem:[#allocation3 + $0x40] sm:$0xff]
      %v1810 = vld [vmem:[#allocation3 + $0x48] sm:$0xff]
      %v1811 = vld [vmem:[#allocation3 + $0x50] sm:$0xff]
      %v1812 = vld [vmem:[#allocation3 + $0x58] sm:$0xff]
      %v1813 = vld [vmem:[#allocation3 + $0x60] sm:$0xff]
      %v1814 = vld [vmem:[#allocation3 + $0x68] sm:$0xff]
      %v1815 = vld [vmem:[#allocation3 + $0x70] sm:$0xff]
      %v1816 = vld [vmem:[#allocation3 + $0x78] sm:$0xff]
      %v1817 = vld [vmem:[#allocation3 + $0x80] sm:$0xff]
      %v1818 = vld [vmem:[#allocation3 + $0x88] sm:$0xff]
      %v1819 = vld [vmem:[#allocation3 + $0x90] sm:$0xff]
      %v1820 = vld [vmem:[#allocation3 + $0x98] sm:$0xff]
      %v1821 = vld [vmem:[#allocation3 + $0xa0] sm:$0xff]
      %v1822 = vld [vmem:[#allocation3 + $0xa8] sm:$0xff]
      %v1823 = vld [vmem:[#allocation3 + $0xb0] sm:$0xff]
      %v1824 = vld [vmem:[#allocation3 + $0xb8] sm:$0xff]
      %v1825 = vld [vmem:[#allocation2 + $0x8] sm:$0xf]
      %v1826 = vld [vmem:[#allocation2 + $0xc] sm:$0xf]
      %v1827 = vld [vmem:[#allocation2 + $0x10] sm:$0xf]
      %v1828 = vld [vmem:[#allocation2 + $0x14] sm:$0xf]
      %v1829 = vld [vmem:[#allocation2 + $0x18] sm:$0xf]
      %v1830 = vld [vmem:[#allocation2 + $0x1c] sm:$0xf]
      %v1831 = vld [vmem:[#allocation2 + $0x20] sm:$0xf]
      %v1832 = vld [vmem:[#allocation2 + $0x24] sm:$0xf]
      %v1833 = vld [vmem:[#allocation2 + $0x28] sm:$0xf]
      %v1834 = vld [vmem:[#allocation2 + $0x2c] sm:$0xf]
      %v1835 = vld [vmem:[#allocation2 + $0x30] sm:$0xf]
      %v1836 = vld [vmem:[#allocation2 + $0x34] sm:$0xf]
      %v1837 = vld [vmem:[#allocation2 + $0x38] sm:$0xf]
      %v1838 = vld [vmem:[#allocation2 + $0x3c] sm:$0xf]
      %v1839 = vld [vmem:[#allocation2 + $0x40] sm:$0xf]
      %v1840 = vld [vmem:[#allocation2 + $0x44] sm:$0xf]
      %v1841 = vld [vmem:[#allocation2 + $0x48] sm:$0xf]
      %v1842 = vld [vmem:[#allocation2 + $0x4c] sm:$0xf]
      %v1843 = vld [vmem:[#allocation2 + $0x50] sm:$0xf]
      %v1844 = vld [vmem:[#allocation2 + $0x54] sm:$0xf]
      %v1845 = vld [vmem:[#allocation2 + $0x58] sm:$0xf]
      %v1846 = vld [vmem:[#allocation2 + $0x5c] sm:$0xf]
      %v1847 = vld [vmem:[#allocation2 + $0x60] sm:$0xf]
      %v1848 = vld [vmem:[#allocation2 + $0x64] sm:$0xf]
      %s1849 = scalar_lea.vmem %s1, 192
      %v1850 = vld [vmem:[%s1849] sm:$0xf]
      %v1851 = vld [vmem:[%s1849 + $0x4] sm:$0xf]
      %v1852 = vld [vmem:[%s1849 + $0x8] sm:$0xf]
      %v1853 = vld [vmem:[%s1849 + $0xc] sm:$0xf]
      %v1854 = vld [vmem:[%s1849 + $0x10] sm:$0xf]
      %v1855 = vld [vmem:[%s1849 + $0x14] sm:$0xf]
      %v1856 = vld [vmem:[%s1849 + $0x18] sm:$0xf]
      %v1857 = vld [vmem:[%s1849 + $0x1c] sm:$0xf]
      %v1858 = vld [vmem:[%s1849 + $0x20] sm:$0xf]
      %v1859 = vld [vmem:[%s1849 + $0x24] sm:$0xf]
      %v1860 = vld [vmem:[%s1849 + $0x28] sm:$0xf]
      %v1861 = vld [vmem:[%s1849 + $0x2c] sm:$0xf]
      %v1862 = vld [vmem:[%s1849 + $0x30] sm:$0xf]
      %v1863 = vld [vmem:[%s1849 + $0x34] sm:$0xf]
      %v1864 = vld [vmem:[%s1849 + $0x38] sm:$0xf]
      %v1865 = vld [vmem:[%s1849 + $0x3c] sm:$0xf]
      %v1890 = vunpack.c.l.b16 %v1825
      %v1891 = vunpack.c.l.b16 %v1826
      %v1892 = vunpack.c.l.b16 %v1827
      %v1893 = vunpack.c.l.b16 %v1828
      %v1894 = vunpack.c.l.b16 %v1829
      %v1895 = vunpack.c.l.b16 %v1830
      %v1896 = vunpack.c.l.b16 %v1831
      %v1897 = vunpack.c.l.b16 %v1832
      %v1898 = vunpack.c.l.b16 %v1833
      %v1899 = vunpack.c.l.b16 %v1834
      %v1900 = vunpack.c.l.b16 %v1835
      %v1901 = vunpack.c.l.b16 %v1836
      %v1902 = vunpack.c.l.b16 %v1837
      %v1903 = vunpack.c.l.b16 %v1838
      %v1904 = vunpack.c.l.b16 %v1839
      %v1905 = vunpack.c.l.b16 %v1840
      %v1906 = vunpack.c.l.b16 %v1841
      %v1907 = vunpack.c.l.b16 %v1842
      %v1908 = vunpack.c.l.b16 %v1843
      %v1909 = vunpack.c.l.b16 %v1844
      %v1910 = vunpack.c.l.b16 %v1845
      %v1911 = vunpack.c.l.b16 %v1846
      %v1912 = vunpack.c.l.b16 %v1847
      %v1913 = vunpack.c.l.b16 %v1848
      %v1914 = vpack.c.b16 %v1891, %v1890
      %v1915 = vpack.c.b16 %v1893, %v1892
      %v1916 = vpack.c.b16 %v1895, %v1894
      %v1917 = vpack.c.b16 %v1897, %v1896
      %v1918 = vpack.c.b16 %v1899, %v1898
      %v1919 = vpack.c.b16 %v1901, %v1900
      %v1920 = vpack.c.b16 %v1903, %v1902
      %v1921 = vpack.c.b16 %v1905, %v1904
      %v1922 = vpack.c.b16 %v1907, %v1906
      %v1923 = vpack.c.b16 %v1909, %v1908
      %v1924 = vpack.c.b16 %v1911, %v1910
      %v1925 = vpack.c.b16 %v1913, %v1912
      %v1954 = vunpack.c.l.b16 %v1850
      %v1955 = vunpack.c.l.b16 %v1851
      %v1956 = vunpack.c.l.b16 %v1852
      %v1957 = vunpack.c.l.b16 %v1853
      %v1958 = vunpack.c.l.b16 %v1854
      %v1959 = vunpack.c.l.b16 %v1855
      %v1960 = vunpack.c.l.b16 %v1856
      %v1961 = vunpack.c.l.b16 %v1857
      %v1962 = vunpack.c.l.b16 %v1858
      %v1963 = vunpack.c.l.b16 %v1859
      %v1964 = vunpack.c.l.b16 %v1860
      %v1965 = vunpack.c.l.b16 %v1861
      %v1966 = vunpack.c.l.b16 %v1862
      %v1967 = vunpack.c.l.b16 %v1863
      %v1968 = vunpack.c.l.b16 %v1864
      %v1969 = vunpack.c.l.b16 %v1865
      %v1970 = vpack.c.b16 %v1955, %v1954
      %v1971 = vpack.c.b16 %v1957, %v1956
      %v1972 = vpack.c.b16 %v1959, %v1958
      %v1973 = vpack.c.b16 %v1961, %v1960
      %v1974 = vpack.c.b16 %v1963, %v1962
      %v1975 = vpack.c.b16 %v1965, %v1964
      %v1976 = vpack.c.b16 %v1967, %v1966
      %v1977 = vpack.c.b16 %v1969, %v1968
      %1986 = vmatprep.subr.bf16.mxu0 0
      %1987 = vmatpush1.bf16.msra.mxu0 %v1970
      %1988 = vmatprep.subr.bf16.mxu0 0
      %1989 = vmatpush1.bf16.msra.mxu0 %v1971
      %1990 = vmatprep.subr.bf16.mxu0 0
      %1991 = vmatpush1.bf16.msra.mxu0 %v1972
      %1992 = vmatprep.subr.bf16.mxu0 0
      %1993 = vmatpush1.bf16.msra.mxu0 %v1973
      %1994 = vmatprep.subr.bf16.mxu0 0
      %1995 = vmatpush1.bf16.msra.mxu0 %v1974
      %1996 = vmatprep.subr.bf16.mxu0 0
      %1997 = vmatpush1.bf16.msra.mxu0 %v1975
      %1998 = vmatprep.subr.bf16.mxu0 0
      %1999 = vmatpush1.bf16.msra.mxu0 %v1976
      %2000 = vmatprep.subr.bf16.mxu0 0
      %2001 = vmatpush1.bf16.msra.mxu0 %v1977
      %2002 = vmatprep.subr.bf16.mxu0 0
      %2003 = vmatpush1.bf16.msra.mxu0 0
      %2004 = vmatprep.subr.bf16.mxu0 0
      %2005 = vmatpush1.bf16.msra.mxu0 0
      %2006 = vmatprep.subr.bf16.mxu0 0
      %2007 = vmatpush1.bf16.msra.mxu0 0
      %2008 = vmatprep.subr.bf16.mxu0 0
      %2009 = vmatpush1.bf16.msra.mxu0 0
      %2010 = vmatprep.subr.bf16.mxu0 0
      %2011 = vmatpush1.bf16.msra.mxu0 0
      %2012 = vmatprep.subr.bf16.mxu0 0
      %2013 = vmatpush1.bf16.msra.mxu0 0
      %2014 = vmatprep.subr.bf16.mxu0 0
      %2015 = vmatpush1.bf16.msra.mxu0 0
      %2016 = vmatprep.subr.bf16.mxu0 0
      %2017 = vmatpush1.bf16.msra.mxu0 0
      %2018 = vmatprep.mubr.bf16.mxu0 0
      %2019 = vmatmul.mubr.bf16.gmra.mrb[0].mxu0 %v1914
      %v2020 = vpop.f32.mrb[0].mxu0
      %v2021 = vadd.f32 0.0, %v2020
      %v2022 = vpop.f32.mrb[0].mxu0
      %v2023 = vpop.f32.mrb[0].mxu0
      %v2024 = vadd.f32 0.0, %v2023
      %v2025 = vpop.f32.mrb[0].mxu0
      %2026 = vmatprep.mubr.bf16.mxu0 0
      %2027 = vmatmul.mubr.bf16.gmra.mrb[0].mxu0 %v1915
      %v2028 = vpop.f32.mrb[0].mxu0
      %v2029 = vadd.f32 0.0, %v2028
      %v2030 = vpop.f32.mrb[0].mxu0
      %v2031 = vpop.f32.mrb[0].mxu0
      %v2032 = vadd.f32 0.0, %v2031
      %v2033 = vpop.f32.mrb[0].mxu0
      %2034 = vmatprep.mubr.bf16.mxu0 0
      %2035 = vmatmul.mubr.bf16.gmra.mrb[0].mxu0 %v1916
      %v2036 = vpop.f32.mrb[0].mxu0
      %v2037 = vadd.f32 0.0, %v2036
      %v2038 = vpop.f32.mrb[0].mxu0
      %v2039 = vpop.f32.mrb[0].mxu0
      %v2040 = vadd.f32 0.0, %v2039
      %v2041 = vpop.f32.mrb[0].mxu0
      %2042 = vmatprep.mubr.bf16.mxu0 0
      %2043 = vmatmul.mubr.bf16.gmra.mrb[0].mxu0 %v1917
      %v2044 = vpop.f32.mrb[0].mxu0
      %v2045 = vadd.f32 0.0, %v2044
      %v2046 = vpop.f32.mrb[0].mxu0
      %v2047 = vpop.f32.mrb[0].mxu0
      %v2048 = vadd.f32 0.0, %v2047
      %v2049 = vpop.f32.mrb[0].mxu0
      %2050 = vmatprep.mubr.bf16.mxu0 0
      %2051 = vmatmul.mubr.bf16.gmra.mrb[0].mxu0 %v1918
      %v2052 = vpop.f32.mrb[0].mxu0
      %v2053 = vadd.f32 0.0, %v2052
      %v2054 = vpop.f32.mrb[0].mxu0
      %v2055 = vpop.f32.mrb[0].mxu0
      %v2056 = vadd.f32 0.0, %v2055
      %v2057 = vpop.f32.mrb[0].mxu0
      %2058 = vmatprep.mubr.bf16.mxu0 0
      %2059 = vmatmul.mubr.bf16.gmra.mrb[0].mxu0 %v1919
      %v2060 = vpop.f32.mrb[0].mxu0
      %v2061 = vadd.f32 0.0, %v2060
      %v2062 = vpop.f32.mrb[0].mxu0
      %v2063 = vpop.f32.mrb[0].mxu0
      %v2064 = vadd.f32 0.0, %v2063
      %v2065 = vpop.f32.mrb[0].mxu0
      %2066 = vmatprep.mubr.bf16.mxu0 0
      %2067 = vmatmul.mubr.bf16.gmra.mrb[0].mxu0 %v1920
      %v2068 = vpop.f32.mrb[0].mxu0
      %v2069 = vadd.f32 0.0, %v2068
      %v2070 = vpop.f32.mrb[0].mxu0
      %v2071 = vpop.f32.mrb[0].mxu0
      %v2072 = vadd.f32 0.0, %v2071
      %v2073 = vpop.f32.mrb[0].mxu0
      %2074 = vmatprep.mubr.bf16.mxu0 0
      %2075 = vmatmul.mubr.bf16.gmra.mrb[0].mxu0 %v1921
      %v2076 = vpop.f32.mrb[0].mxu0
      %v2077 = vadd.f32 0.0, %v2076
      %v2078 = vpop.f32.mrb[0].mxu0
      %v2079 = vpop.f32.mrb[0].mxu0
      %v2080 = vadd.f32 0.0, %v2079
      %v2081 = vpop.f32.mrb[0].mxu0
      %2082 = vmatprep.mubr.bf16.mxu0 0
      %2083 = vmatmul.mubr.bf16.gmra.mrb[0].mxu0 %v1922
      %v2084 = vpop.f32.mrb[0].mxu0
      %v2085 = vadd.f32 0.0, %v2084
      %v2086 = vpop.f32.mrb[0].mxu0
      %v2087 = vpop.f32.mrb[0].mxu0
      %v2088 = vadd.f32 0.0, %v2087
      %v2089 = vpop.f32.mrb[0].mxu0
      %2090 = vmatprep.mubr.bf16.mxu0 0
      %2091 = vmatmul.mubr.bf16.gmra.mrb[0].mxu0 %v1923
      %v2092 = vpop.f32.mrb[0].mxu0
      %v2093 = vadd.f32 0.0, %v2092
      %v2094 = vpop.f32.mrb[0].mxu0
      %v2095 = vpop.f32.mrb[0].mxu0
      %v2096 = vadd.f32 0.0, %v2095
      %v2097 = vpop.f32.mrb[0].mxu0
      %2098 = vmatprep.mubr.bf16.mxu0 0
      %2099 = vmatmul.mubr.bf16.gmra.mrb[0].mxu0 %v1924
      %v2100 = vpop.f32.mrb[0].mxu0
      %v2101 = vadd.f32 0.0, %v2100
      %v2102 = vpop.f32.mrb[0].mxu0
      %v2103 = vpop.f32.mrb[0].mxu0
      %v2104 = vadd.f32 0.0, %v2103
      %v2105 = vpop.f32.mrb[0].mxu0
      %2106 = vmatprep.mubr.bf16.mxu0 0
      %2107 = vmatmul.mubr.bf16.gmra.mrb[0].mxu0 %v1925
      %v2108 = vpop.f32.mrb[0].mxu0
      %v2109 = vadd.f32 0.0, %v2108
      %v2110 = vpop.f32.mrb[0].mxu0
      %v2111 = vpop.f32.mrb[0].mxu0
      %v2112 = vadd.f32 0.0, %v2111
      %v2113 = vpop.f32.mrb[0].mxu0
      %2114 = vdwg.mxu0
      %v2115 = vadd.f32 %v1801, %v2021
      %v2116 = vadd.f32 %v1802, %v2024
      %v2117 = vadd.f32 %v1803, %v2029
      %v2118 = vadd.f32 %v1804, %v2032
      %v2119 = vadd.f32 %v1805, %v2037
      %v2120 = vadd.f32 %v1806, %v2040
      %v2121 = vadd.f32 %v1807, %v2045
      %v2122 = vadd.f32 %v1808, %v2048
      %v2123 = vadd.f32 %v1809, %v2053
      %v2124 = vadd.f32 %v1810, %v2056
      %v2125 = vadd.f32 %v1811, %v2061
      %v2126 = vadd.f32 %v1812, %v2064
      %v2127 = vadd.f32 %v1813, %v2069
      %v2128 = vadd.f32 %v1814, %v2072
      %v2129 = vadd.f32 %v1815, %v2077
      %v2130 = vadd.f32 %v1816, %v2080
      %v2131 = vadd.f32 %v1817, %v2085
      %v2132 = vadd.f32 %v1818, %v2088
      %v2133 = vadd.f32 %v1819, %v2093
      %v2134 = vadd.f32 %v1820, %v2096
      %v2135 = vadd.f32 %v1821, %v2101
      %v2136 = vadd.f32 %v1822, %v2104
      %v2137 = vadd.f32 %v1823, %v2109
      %v2138 = vadd.f32 %v1824, %v2112
      %2139 = vst [vmem:[#allocation3] sm:$0xff] %v2115
      %2140 = vst [vmem:[#allocation3 + $0x8] sm:$0xff] %v2116
      %2141 = vst [vmem:[#allocation3 + $0x10] sm:$0xff] %v2117
      %2142 = vst [vmem:[#allocation3 + $0x18] sm:$0xff] %v2118
      %2143 = vst [vmem:[#allocation3 + $0x20] sm:$0xff] %v2119
      %2144 = vst [vmem:[#allocation3 + $0x28] sm:$0xff] %v2120
      %2145 = vst [vmem:[#allocation3 + $0x30] sm:$0xff] %v2121
      %2146 = vst [vmem:[#allocation3 + $0x38] sm:$0xff] %v2122
      %2147 = vst [vmem:[#allocation3 + $0x40] sm:$0xff] %v2123
      %2148 = vst [vmem:[#allocation3 + $0x48] sm:$0xff] %v2124
      %2149 = vst [vmem:[#allocation3 + $0x50] sm:$0xff] %v2125
      %2150 = vst [vmem:[#allocation3 + $0x58] sm:$0xff] %v2126
      %2151 = vst [vmem:[#allocation3 + $0x60] sm:$0xff] %v2127
      %2152 = vst [vmem:[#allocation3 + $0x68] sm:$0xff] %v2128
      %2153 = vst [vmem:[#allocation3 + $0x70] sm:$0xff] %v2129
      %2154 = vst [vmem:[#allocation3 + $0x78] sm:$0xff] %v2130
      %2155 = vst [vmem:[#allocation3 + $0x80] sm:$0xff] %v2131
      %2156 = vst [vmem:[#allocation3 + $0x88] sm:$0xff] %v2132
      %2157 = vst [vmem:[#allocation3 + $0x90] sm:$0xff] %v2133
      %2158 = vst [vmem:[#allocation3 + $0x98] sm:$0xff] %v2134
      %2159 = vst [vmem:[#allocation3 + $0xa0] sm:$0xff] %v2135
      %2160 = vst [vmem:[#allocation3 + $0xa8] sm:$0xff] %v2136
      %2161 = vst [vmem:[#allocation3 + $0xb0] sm:$0xff] %v2137
      %2162 = vst [vmem:[#allocation3 + $0xb8] sm:$0xff] %v2138
      %v2163 = vld [vmem:[#allocation3] sm:$0xff]
      %v2164 = vld [vmem:[#allocation3 + $0x8] sm:$0xff]
      %v2165 = vld [vmem:[#allocation3 + $0x10] sm:$0xff]
      %v2166 = vld [vmem:[#allocation3 + $0x18] sm:$0xff]
      %v2167 = vld [vmem:[#allocation3 + $0x20] sm:$0xff]
      %v2168 = vld [vmem:[#allocation3 + $0x28] sm:$0xff]
      %v2169 = vld [vmem:[#allocation3 + $0x30] sm:$0xff]
      %v2170 = vld [vmem:[#allocation3 + $0x38] sm:$0xff]
      %v2171 = vld [vmem:[#allocation3 + $0x40] sm:$0xff]
      %v2172 = vld [vmem:[#allocation3 + $0x48] sm:$0xff]
      %v2173 = vld [vmem:[#allocation3 + $0x50] sm:$0xff]
      %v2174 = vld [vmem:[#allocation3 + $0x58] sm:$0xff]
      %v2175 = vld [vmem:[#allocation3 + $0x60] sm:$0xff]
      %v2176 = vld [vmem:[#allocation3 + $0x68] sm:$0xff]
      %v2177 = vld [vmem:[#allocation3 + $0x70] sm:$0xff]
      %v2178 = vld [vmem:[#allocation3 + $0x78] sm:$0xff]
      %v2179 = vld [vmem:[#allocation3 + $0x80] sm:$0xff]
      %v2180 = vld [vmem:[#allocation3 + $0x88] sm:$0xff]
      %v2181 = vld [vmem:[#allocation3 + $0x90] sm:$0xff]
      %v2182 = vld [vmem:[#allocation3 + $0x98] sm:$0xff]
      %v2183 = vld [vmem:[#allocation3 + $0xa0] sm:$0xff]
      %v2184 = vld [vmem:[#allocation3 + $0xa8] sm:$0xff]
      %v2185 = vld [vmem:[#allocation3 + $0xb0] sm:$0xff]
      %v2186 = vld [vmem:[#allocation3 + $0xb8] sm:$0xff]
      %v2187 = vld [vmem:[#allocation2 + $0x8] sm:$0xf]
      %v2188 = vld [vmem:[#allocation2 + $0xc] sm:$0xf]
      %v2189 = vld [vmem:[#allocation2 + $0x10] sm:$0xf]
      %v2190 = vld [vmem:[#allocation2 + $0x14] sm:$0xf]
      %v2191 = vld [vmem:[#allocation2 + $0x18] sm:$0xf]
      %v2192 = vld [vmem:[#allocation2 + $0x1c] sm:$0xf]
      %v2193 = vld [vmem:[#allocation2 + $0x20] sm:$0xf]
      %v2194 = vld [vmem:[#allocation2 + $0x24] sm:$0xf]
      %v2195 = vld [vmem:[#allocation2 + $0x28] sm:$0xf]
      %v2196 = vld [vmem:[#allocation2 + $0x2c] sm:$0xf]
      %v2197 = vld [vmem:[#allocation2 + $0x30] sm:$0xf]
      %v2198 = vld [vmem:[#allocation2 + $0x34] sm:$0xf]
      %v2199 = vld [vmem:[#allocation2 + $0x38] sm:$0xf]
      %v2200 = vld [vmem:[#allocation2 + $0x3c] sm:$0xf]
      %v2201 = vld [vmem:[#allocation2 + $0x40] sm:$0xf]
      %v2202 = vld [vmem:[#allocation2 + $0x44] sm:$0xf]
      %v2203 = vld [vmem:[#allocation2 + $0x48] sm:$0xf]
      %v2204 = vld [vmem:[#allocation2 + $0x4c] sm:$0xf]
      %v2205 = vld [vmem:[#allocation2 + $0x50] sm:$0xf]
      %v2206 = vld [vmem:[#allocation2 + $0x54] sm:$0xf]
      %v2207 = vld [vmem:[#allocation2 + $0x58] sm:$0xf]
      %v2208 = vld [vmem:[#allocation2 + $0x5c] sm:$0xf]
      %v2209 = vld [vmem:[#allocation2 + $0x60] sm:$0xf]
      %v2210 = vld [vmem:[#allocation2 + $0x64] sm:$0xf]
      %v2211 = vld [vmem:[#allocation2 + $0x68] sm:$0x1]
      %s2212 = scalar_lea.vmem %s1, 256
      %v2213 = vld [vmem:[%s2212] sm:$0xf]
      %v2214 = vld [vmem:[%s2212 + $0x4] sm:$0xf]
      %v2215 = vld [vmem:[%s2212 + $0x8] sm:$0xf]
      %v2216 = vld [vmem:[%s2212 + $0xc] sm:$0xf]
      %v2217 = vld [vmem:[%s2212 + $0x10] sm:$0xf]
      %v2218 = vld [vmem:[%s2212 + $0x14] sm:$0xf]
      %v2219 = vld [vmem:[%s2212 + $0x18] sm:$0xf]
      %v2220 = vld [vmem:[%s2212 + $0x1c] sm:$0xf]
      %v2221 = vld [vmem:[%s2212 + $0x20] sm:$0xf]
      %v2222 = vld [vmem:[%s2212 + $0x24] sm:$0xf]
      %v2223 = vld [vmem:[%s2212 + $0x28] sm:$0xf]
      %v2224 = vld [vmem:[%s2212 + $0x2c] sm:$0xf]
      %v2225 = vld [vmem:[%s2212 + $0x30] sm:$0xf]
      %v2226 = vld [vmem:[%s2212 + $0x34] sm:$0xf]
      %v2227 = vld [vmem:[%s2212 + $0x38] sm:$0xf]
      %v2228 = vld [vmem:[%s2212 + $0x3c] sm:$0xf]
      %v2254 = vunpack.c.l.b16 %v2187
      %v2255 = vunpack.c.l.b16 %v2188
      %v2256 = vunpack.c.l.b16 %v2189
      %v2257 = vunpack.c.l.b16 %v2190
      %v2258 = vunpack.c.l.b16 %v2191
      %v2259 = vunpack.c.l.b16 %v2192
      %v2260 = vunpack.c.l.b16 %v2193
      %v2261 = vunpack.c.l.b16 %v2194
      %v2262 = vunpack.c.l.b16 %v2195
      %v2263 = vunpack.c.l.b16 %v2196
      %v2264 = vunpack.c.l.b16 %v2197
      %v2265 = vunpack.c.l.b16 %v2198
      %v2266 = vunpack.c.l.b16 %v2199
      %v2267 = vunpack.c.l.b16 %v2200
      %v2268 = vunpack.c.l.b16 %v2201
      %v2269 = vunpack.c.l.b16 %v2202
      %v2270 = vunpack.c.l.b16 %v2203
      %v2271 = vunpack.c.l.b16 %v2204
      %v2272 = vunpack.c.l.b16 %v2205
      %v2273 = vunpack.c.l.b16 %v2206
      %v2274 = vunpack.c.l.b16 %v2207
      %v2275 = vunpack.c.l.b16 %v2208
      %v2276 = vunpack.c.l.b16 %v2209
      %v2277 = vunpack.c.l.b16 %v2210
      %v2278 = vunpack.c.l.b16 %v2211
      %v2279 = vpack.c.b16 %v2255, %v2254
      %v2280 = vpack.c.b16 %v2257, %v2256
      %v2281 = vpack.c.b16 %v2259, %v2258
      %v2282 = vpack.c.b16 %v2261, %v2260
      %v2283 = vpack.c.b16 %v2263, %v2262
      %v2284 = vpack.c.b16 %v2265, %v2264
      %v2285 = vpack.c.b16 %v2267, %v2266
      %v2286 = vpack.c.b16 %v2269, %v2268
      %v2287 = vpack.c.b16 %v2271, %v2270
      %v2288 = vpack.c.b16 %v2273, %v2272
      %v2289 = vpack.c.b16 %v2275, %v2274
      %v2290 = vpack.c.b16 %v2277, %v2276
      %v2291 = vpack.c.b16 %v2278, %v2278
      %v2293 = vshrl.u32 %v2279, 16
      %v2295 = vshll.u32 %v2279, 16
      %v2297 = vrot.slane %v2295, 1
      %v2298 = vor.u32 %v2293, %v2297
      %v2300 = vshll.u32 %v2280, 16
      %v2302 = vrot.slane %v2300, 1
      %v2303 = vsel %vm1071, %v2298, %v2302
      %v2304 = vshrl.u32 %v2280, 16
      %v2306 = vor.u32 %v2304, %v2302
      %v2308 = vshll.u32 %v2281, 16
      %v2310 = vrot.slane %v2308, 1
      %v2311 = vsel %vm1071, %v2306, %v2310
      %v2312 = vshrl.u32 %v2281, 16
      %v2314 = vor.u32 %v2312, %v2310
      %v2316 = vshll.u32 %v2282, 16
      %v2318 = vrot.slane %v2316, 1
      %v2319 = vsel %vm1071, %v2314, %v2318
      %v2320 = vshrl.u32 %v2282, 16
      %v2322 = vor.u32 %v2320, %v2318
      %v2324 = vshll.u32 %v2283, 16
      %v2326 = vrot.slane %v2324, 1
      %v2327 = vsel %vm1071, %v2322, %v2326
      %v2328 = vshrl.u32 %v2283, 16
      %v2330 = vor.u32 %v2328, %v2326
      %v2332 = vshll.u32 %v2284, 16
      %v2334 = vrot.slane %v2332, 1
      %v2335 = vsel %vm1071, %v2330, %v2334
      %v2336 = vshrl.u32 %v2284, 16
      %v2338 = vor.u32 %v2336, %v2334
      %v2340 = vshll.u32 %v2285, 16
      %v2342 = vrot.slane %v2340, 1
      %v2343 = vsel %vm1071, %v2338, %v2342
      %v2344 = vshrl.u32 %v2285, 16
      %v2346 = vor.u32 %v2344, %v2342
      %v2348 = vshll.u32 %v2286, 16
      %v2350 = vrot.slane %v2348, 1
      %v2351 = vsel %vm1071, %v2346, %v2350
      %v2352 = vshrl.u32 %v2286, 16
      %v2354 = vor.u32 %v2352, %v2350
      %v2356 = vshll.u32 %v2287, 16
      %v2358 = vrot.slane %v2356, 1
      %v2359 = vsel %vm1071, %v2354, %v2358
      %v2360 = vshrl.u32 %v2287, 16
      %v2362 = vor.u32 %v2360, %v2358
      %v2364 = vshll.u32 %v2288, 16
      %v2366 = vrot.slane %v2364, 1
      %v2367 = vsel %vm1071, %v2362, %v2366
      %v2368 = vshrl.u32 %v2288, 16
      %v2370 = vor.u32 %v2368, %v2366
      %v2372 = vshll.u32 %v2289, 16
      %v2374 = vrot.slane %v2372, 1
      %v2375 = vsel %vm1071, %v2370, %v2374
      %v2376 = vshrl.u32 %v2289, 16
      %v2378 = vor.u32 %v2376, %v2374
      %v2380 = vshll.u32 %v2290, 16
      %v2382 = vrot.slane %v2380, 1
      %v2383 = vsel %vm1071, %v2378, %v2382
      %v2384 = vshrl.u32 %v2290, 16
      %v2386 = vor.u32 %v2384, %v2382
      %v2388 = vshll.u32 %v2291, 16
      %v2390 = vrot.slane %v2388, 1
      %v2391 = vsel %vm1071, %v2386, %v2390
      %v2420 = vunpack.c.l.b16 %v2213
      %v2421 = vunpack.c.l.b16 %v2214
      %v2422 = vunpack.c.l.b16 %v2215
      %v2423 = vunpack.c.l.b16 %v2216
      %v2424 = vunpack.c.l.b16 %v2217
      %v2425 = vunpack.c.l.b16 %v2218
      %v2426 = vunpack.c.l.b16 %v2219
      %v2427 = vunpack.c.l.b16 %v2220
      %v2428 = vunpack.c.l.b16 %v2221
      %v2429 = vunpack.c.l.b16 %v2222
      %v2430 = vunpack.c.l.b16 %v2223
      %v2431 = vunpack.c.l.b16 %v2224
      %v2432 = vunpack.c.l.b16 %v2225
      %v2433 = vunpack.c.l.b16 %v2226
      %v2434 = vunpack.c.l.b16 %v2227
      %v2435 = vunpack.c.l.b16 %v2228
      %v2436 = vpack.c.b16 %v2421, %v2420
      %v2437 = vpack.c.b16 %v2423, %v2422
      %v2438 = vpack.c.b16 %v2425, %v2424
      %v2439 = vpack.c.b16 %v2427, %v2426
      %v2440 = vpack.c.b16 %v2429, %v2428
      %v2441 = vpack.c.b16 %v2431, %v2430
      %v2442 = vpack.c.b16 %v2433, %v2432
      %v2443 = vpack.c.b16 %v2435, %v2434
      %2452 = vmatprep.subr.bf16.mxu0 0
      %2453 = vmatpush1.bf16.msra.mxu0 %v2436
      %2454 = vmatprep.subr.bf16.mxu0 0
      %2455 = vmatpush1.bf16.msra.mxu0 %v2437
      %2456 = vmatprep.subr.bf16.mxu0 0
      %2457 = vmatpush1.bf16.msra.mxu0 %v2438
      %2458 = vmatprep.subr.bf16.mxu0 0
      %2459 = vmatpush1.bf16.msra.mxu0 %v2439
      %2460 = vmatprep.subr.bf16.mxu0 0
      %2461 = vmatpush1.bf16.msra.mxu0 %v2440
      %2462 = vmatprep.subr.bf16.mxu0 0
      %2463 = vmatpush1.bf16.msra.mxu0 %v2441
      %2464 = vmatprep.subr.bf16.mxu0 0
      %2465 = vmatpush1.bf16.msra.mxu0 %v2442
      %2466 = vmatprep.subr.bf16.mxu0 0
      %2467 = vmatpush1.bf16.msra.mxu0 %v2443
      %2468 = vmatprep.subr.bf16.mxu0 0
      %2469 = vmatpush1.bf16.msra.mxu0 0
      %2470 = vmatprep.subr.bf16.mxu0 0
      %2471 = vmatpush1.bf16.msra.mxu0 0
      %2472 = vmatprep.subr.bf16.mxu0 0
      %2473 = vmatpush1.bf16.msra.mxu0 0
      %2474 = vmatprep.subr.bf16.mxu0 0
      %2475 = vmatpush1.bf16.msra.mxu0 0
      %2476 = vmatprep.subr.bf16.mxu0 0
      %2477 = vmatpush1.bf16.msra.mxu0 0
      %2478 = vmatprep.subr.bf16.mxu0 0
      %2479 = vmatpush1.bf16.msra.mxu0 0
      %2480 = vmatprep.subr.bf16.mxu0 0
      %2481 = vmatpush1.bf16.msra.mxu0 0
      %2482 = vmatprep.subr.bf16.mxu0 0
      %2483 = vmatpush1.bf16.msra.mxu0 0
      %2484 = vmatprep.mubr.bf16.mxu0 0
      %2485 = vmatmul.mubr.bf16.gmra.mrb[0].mxu0 %v2303
      %v2486 = vpop.f32.mrb[0].mxu0
      %v2487 = vadd.f32 0.0, %v2486
      %v2488 = vpop.f32.mrb[0].mxu0
      %v2489 = vpop.f32.mrb[0].mxu0
      %v2490 = vadd.f32 0.0, %v2489
      %v2491 = vpop.f32.mrb[0].mxu0
      %2492 = vmatprep.mubr.bf16.mxu0 0
      %2493 = vmatmul.mubr.bf16.gmra.mrb[0].mxu0 %v2311
      %v2494 = vpop.f32.mrb[0].mxu0
      %v2495 = vadd.f32 0.0, %v2494
      %v2496 = vpop.f32.mrb[0].mxu0
      %v2497 = vpop.f32.mrb[0].mxu0
      %v2498 = vadd.f32 0.0, %v2497
      %v2499 = vpop.f32.mrb[0].mxu0
      %2500 = vmatprep.mubr.bf16.mxu0 0
      %2501 = vmatmul.mubr.bf16.gmra.mrb[0].mxu0 %v2319
      %v2502 = vpop.f32.mrb[0].mxu0
      %v2503 = vadd.f32 0.0, %v2502
      %v2504 = vpop.f32.mrb[0].mxu0
      %v2505 = vpop.f32.mrb[0].mxu0
      %v2506 = vadd.f32 0.0, %v2505
      %v2507 = vpop.f32.mrb[0].mxu0
      %2508 = vmatprep.mubr.bf16.mxu0 0
      %2509 = vmatmul.mubr.bf16.gmra.mrb[0].mxu0 %v2327
      %v2510 = vpop.f32.mrb[0].mxu0
      %v2511 = vadd.f32 0.0, %v2510
      %v2512 = vpop.f32.mrb[0].mxu0
      %v2513 = vpop.f32.mrb[0].mxu0
      %v2514 = vadd.f32 0.0, %v2513
      %v2515 = vpop.f32.mrb[0].mxu0
      %2516 = vmatprep.mubr.bf16.mxu0 0
      %2517 = vmatmul.mubr.bf16.gmra.mrb[0].mxu0 %v2335
      %v2518 = vpop.f32.mrb[0].mxu0
      %v2519 = vadd.f32 0.0, %v2518
      %v2520 = vpop.f32.mrb[0].mxu0
      %v2521 = vpop.f32.mrb[0].mxu0
      %v2522 = vadd.f32 0.0, %v2521
      %v2523 = vpop.f32.mrb[0].mxu0
      %2524 = vmatprep.mubr.bf16.mxu0 0
      %2525 = vmatmul.mubr.bf16.gmra.mrb[0].mxu0 %v2343
      %v2526 = vpop.f32.mrb[0].mxu0
      %v2527 = vadd.f32 0.0, %v2526
      %v2528 = vpop.f32.mrb[0].mxu0
      %v2529 = vpop.f32.mrb[0].mxu0
      %v2530 = vadd.f32 0.0, %v2529
      %v2531 = vpop.f32.mrb[0].mxu0
      %2532 = vmatprep.mubr.bf16.mxu0 0
      %2533 = vmatmul.mubr.bf16.gmra.mrb[0].mxu0 %v2351
      %v2534 = vpop.f32.mrb[0].mxu0
      %v2535 = vadd.f32 0.0, %v2534
      %v2536 = vpop.f32.mrb[0].mxu0
      %v2537 = vpop.f32.mrb[0].mxu0
      %v2538 = vadd.f32 0.0, %v2537
      %v2539 = vpop.f32.mrb[0].mxu0
      %2540 = vmatprep.mubr.bf16.mxu0 0
      %2541 = vmatmul.mubr.bf16.gmra.mrb[0].mxu0 %v2359
      %v2542 = vpop.f32.mrb[0].mxu0
      %v2543 = vadd.f32 0.0, %v2542
      %v2544 = vpop.f32.mrb[0].mxu0
      %v2545 = vpop.f32.mrb[0].mxu0
      %v2546 = vadd.f32 0.0, %v2545
      %v2547 = vpop.f32.mrb[0].mxu0
      %2548 = vmatprep.mubr.bf16.mxu0 0
      %2549 = vmatmul.mubr.bf16.gmra.mrb[0].mxu0 %v2367
      %v2550 = vpop.f32.mrb[0].mxu0
      %v2551 = vadd.f32 0.0, %v2550
      %v2552 = vpop.f32.mrb[0].mxu0
      %v2553 = vpop.f32.mrb[0].mxu0
      %v2554 = vadd.f32 0.0, %v2553
      %v2555 = vpop.f32.mrb[0].mxu0
      %2556 = vmatprep.mubr.bf16.mxu0 0
      %2557 = vmatmul.mubr.bf16.gmra.mrb[0].mxu0 %v2375
      %v2558 = vpop.f32.mrb[0].mxu0
      %v2559 = vadd.f32 0.0, %v2558
      %v2560 = vpop.f32.mrb[0].mxu0
      %v2561 = vpop.f32.mrb[0].mxu0
      %v2562 = vadd.f32 0.0, %v2561
      %v2563 = vpop.f32.mrb[0].mxu0
      %2564 = vmatprep.mubr.bf16.mxu0 0
      %2565 = vmatmul.mubr.bf16.gmra.mrb[0].mxu0 %v2383
      %v2566 = vpop.f32.mrb[0].mxu0
      %v2567 = vadd.f32 0.0, %v2566
      %v2568 = vpop.f32.mrb[0].mxu0
      %v2569 = vpop.f32.mrb[0].mxu0
      %v2570 = vadd.f32 0.0, %v2569
      %v2571 = vpop.f32.mrb[0].mxu0
      %2572 = vmatprep.mubr.bf16.mxu0 0
      %2573 = vmatmul.mubr.bf16.gmra.mrb[0].mxu0 %v2391
      %v2574 = vpop.f32.mrb[0].mxu0
      %v2575 = vadd.f32 0.0, %v2574
      %v2576 = vpop.f32.mrb[0].mxu0
      %v2577 = vpop.f32.mrb[0].mxu0
      %v2578 = vadd.f32 0.0, %v2577
      %v2579 = vpop.f32.mrb[0].mxu0
      %2580 = vdwg.mxu0
      %v2581 = vadd.f32 %v2163, %v2487
      %v2582 = vadd.f32 %v2164, %v2490
      %v2583 = vadd.f32 %v2165, %v2495
      %v2584 = vadd.f32 %v2166, %v2498
      %v2585 = vadd.f32 %v2167, %v2503
      %v2586 = vadd.f32 %v2168, %v2506
      %v2587 = vadd.f32 %v2169, %v2511
      %v2588 = vadd.f32 %v2170, %v2514
      %v2589 = vadd.f32 %v2171, %v2519
      %v2590 = vadd.f32 %v2172, %v2522
      %v2591 = vadd.f32 %v2173, %v2527
      %v2592 = vadd.f32 %v2174, %v2530
      %v2593 = vadd.f32 %v2175, %v2535
      %v2594 = vadd.f32 %v2176, %v2538
      %v2595 = vadd.f32 %v2177, %v2543
      %v2596 = vadd.f32 %v2178, %v2546
      %v2597 = vadd.f32 %v2179, %v2551
      %v2598 = vadd.f32 %v2180, %v2554
      %v2599 = vadd.f32 %v2181, %v2559
      %v2600 = vadd.f32 %v2182, %v2562
      %v2601 = vadd.f32 %v2183, %v2567
      %v2602 = vadd.f32 %v2184, %v2570
      %v2603 = vadd.f32 %v2185, %v2575
      %v2604 = vadd.f32 %v2186, %v2578
      %2605 = vst [vmem:[#allocation3] sm:$0xff] %v2581
      %2606 = vst [vmem:[#allocation3 + $0x8] sm:$0xff] %v2582
      %2607 = vst [vmem:[#allocation3 + $0x10] sm:$0xff] %v2583
      %2608 = vst [vmem:[#allocation3 + $0x18] sm:$0xff] %v2584
      %2609 = vst [vmem:[#allocation3 + $0x20] sm:$0xff] %v2585
      %2610 = vst [vmem:[#allocation3 + $0x28] sm:$0xff] %v2586
      %2611 = vst [vmem:[#allocation3 + $0x30] sm:$0xff] %v2587
      %2612 = vst [vmem:[#allocation3 + $0x38] sm:$0xff] %v2588
      %2613 = vst [vmem:[#allocation3 + $0x40] sm:$0xff] %v2589
      %2614 = vst [vmem:[#allocation3 + $0x48] sm:$0xff] %v2590
      %2615 = vst [vmem:[#allocation3 + $0x50] sm:$0xff] %v2591
      %2616 = vst [vmem:[#allocation3 + $0x58] sm:$0xff] %v2592
      %2617 = vst [vmem:[#allocation3 + $0x60] sm:$0xff] %v2593
      %2618 = vst [vmem:[#allocation3 + $0x68] sm:$0xff] %v2594
      %2619 = vst [vmem:[#allocation3 + $0x70] sm:$0xff] %v2595
      %2620 = vst [vmem:[#allocation3 + $0x78] sm:$0xff] %v2596
      %2621 = vst [vmem:[#allocation3 + $0x80] sm:$0xff] %v2597
      %2622 = vst [vmem:[#allocation3 + $0x88] sm:$0xff] %v2598
      %2623 = vst [vmem:[#allocation3 + $0x90] sm:$0xff] %v2599
      %2624 = vst [vmem:[#allocation3 + $0x98] sm:$0xff] %v2600
      %2625 = vst [vmem:[#allocation3 + $0xa0] sm:$0xff] %v2601
      %2626 = vst [vmem:[#allocation3 + $0xa8] sm:$0xff] %v2602
      %2627 = vst [vmem:[#allocation3 + $0xb0] sm:$0xff] %v2603
      %2628 = vst [vmem:[#allocation3 + $0xb8] sm:$0xff] %v2604
      %v2629 = vld [vmem:[#allocation3] sm:$0xff]
      %v2630 = vld [vmem:[#allocation3 + $0x8] sm:$0xff]
      %v2631 = vld [vmem:[#allocation3 + $0x10] sm:$0xff]
      %v2632 = vld [vmem:[#allocation3 + $0x18] sm:$0xff]
      %v2633 = vld [vmem:[#allocation3 + $0x20] sm:$0xff]
      %v2634 = vld [vmem:[#allocation3 + $0x28] sm:$0xff]
      %v2635 = vld [vmem:[#allocation3 + $0x30] sm:$0xff]
      %v2636 = vld [vmem:[#allocation3 + $0x38] sm:$0xff]
      %v2637 = vld [vmem:[#allocation3 + $0x40] sm:$0xff]
      %v2638 = vld [vmem:[#allocation3 + $0x48] sm:$0xff]
      %v2639 = vld [vmem:[#allocation3 + $0x50] sm:$0xff]
      %v2640 = vld [vmem:[#allocation3 + $0x58] sm:$0xff]
      %v2641 = vld [vmem:[#allocation3 + $0x60] sm:$0xff]
      %v2642 = vld [vmem:[#allocation3 + $0x68] sm:$0xff]
      %v2643 = vld [vmem:[#allocation3 + $0x70] sm:$0xff]
      %v2644 = vld [vmem:[#allocation3 + $0x78] sm:$0xff]
      %v2645 = vld [vmem:[#allocation3 + $0x80] sm:$0xff]
      %v2646 = vld [vmem:[#allocation3 + $0x88] sm:$0xff]
      %v2647 = vld [vmem:[#allocation3 + $0x90] sm:$0xff]
      %v2648 = vld [vmem:[#allocation3 + $0x98] sm:$0xff]
      %v2649 = vld [vmem:[#allocation3 + $0xa0] sm:$0xff]
      %v2650 = vld [vmem:[#allocation3 + $0xa8] sm:$0xff]
      %v2651 = vld [vmem:[#allocation3 + $0xb0] sm:$0xff]
      %v2652 = vld [vmem:[#allocation3 + $0xb8] sm:$0xff]
      %v2653 = vld [vmem:[#allocation2 + $0x8] sm:$0xe]
      %v2654 = vld [vmem:[#allocation2 + $0xc] sm:$0xf]
      %v2655 = vld [vmem:[#allocation2 + $0x10] sm:$0xf]
      %v2656 = vld [vmem:[#allocation2 + $0x14] sm:$0xf]
      %v2657 = vld [vmem:[#allocation2 + $0x18] sm:$0xf]
      %v2658 = vld [vmem:[#allocation2 + $0x1c] sm:$0xf]
      %v2659 = vld [vmem:[#allocation2 + $0x20] sm:$0xf]
      %v2660 = vld [vmem:[#allocation2 + $0x24] sm:$0xf]
      %v2661 = vld [vmem:[#allocation2 + $0x28] sm:$0xf]
      %v2662 = vld [vmem:[#allocation2 + $0x2c] sm:$0xf]
      %v2663 = vld [vmem:[#allocation2 + $0x30] sm:$0xf]
      %v2664 = vld [vmem:[#allocation2 + $0x34] sm:$0xf]
      %v2665 = vld [vmem:[#allocation2 + $0x38] sm:$0xf]
      %v2666 = vld [vmem:[#allocation2 + $0x3c] sm:$0xf]
      %v2667 = vld [vmem:[#allocation2 + $0x40] sm:$0xf]
      %v2668 = vld [vmem:[#allocation2 + $0x44] sm:$0xf]
      %v2669 = vld [vmem:[#allocation2 + $0x48] sm:$0xf]
      %v2670 = vld [vmem:[#allocation2 + $0x4c] sm:$0xf]
      %v2671 = vld [vmem:[#allocation2 + $0x50] sm:$0xf]
      %v2672 = vld [vmem:[#allocation2 + $0x54] sm:$0xf]
      %v2673 = vld [vmem:[#allocation2 + $0x58] sm:$0xf]
      %v2674 = vld [vmem:[#allocation2 + $0x5c] sm:$0xf]
      %v2675 = vld [vmem:[#allocation2 + $0x60] sm:$0xf]
      %v2676 = vld [vmem:[#allocation2 + $0x64] sm:$0xf]
      %v2677 = vld [vmem:[#allocation2 + $0x68] sm:$0x1]
      %s2678 = scalar_lea.vmem %s1, 320
      %v2679 = vld [vmem:[%s2678] sm:$0xf]
      %v2680 = vld [vmem:[%s2678 + $0x4] sm:$0xf]
      %v2681 = vld [vmem:[%s2678 + $0x8] sm:$0xf]
      %v2682 = vld [vmem:[%s2678 + $0xc] sm:$0xf]
      %v2683 = vld [vmem:[%s2678 + $0x10] sm:$0xf]
      %v2684 = vld [vmem:[%s2678 + $0x14] sm:$0xf]
      %v2685 = vld [vmem:[%s2678 + $0x18] sm:$0xf]
      %v2686 = vld [vmem:[%s2678 + $0x1c] sm:$0xf]
      %v2687 = vld [vmem:[%s2678 + $0x20] sm:$0xf]
      %v2688 = vld [vmem:[%s2678 + $0x24] sm:$0xf]
      %v2689 = vld [vmem:[%s2678 + $0x28] sm:$0xf]
      %v2690 = vld [vmem:[%s2678 + $0x2c] sm:$0xf]
      %v2691 = vld [vmem:[%s2678 + $0x30] sm:$0xf]
      %v2692 = vld [vmem:[%s2678 + $0x34] sm:$0xf]
      %v2693 = vld [vmem:[%s2678 + $0x38] sm:$0xf]
      %v2694 = vld [vmem:[%s2678 + $0x3c] sm:$0xf]
      %v2720 = vunpack.c.l.b16 %v2653
      %v2721 = vunpack.c.l.b16 %v2654
      %v2722 = vunpack.c.l.b16 %v2655
      %v2723 = vunpack.c.l.b16 %v2656
      %v2724 = vunpack.c.l.b16 %v2657
      %v2725 = vunpack.c.l.b16 %v2658
      %v2726 = vunpack.c.l.b16 %v2659
      %v2727 = vunpack.c.l.b16 %v2660
      %v2728 = vunpack.c.l.b16 %v2661
      %v2729 = vunpack.c.l.b16 %v2662
      %v2730 = vunpack.c.l.b16 %v2663
      %v2731 = vunpack.c.l.b16 %v2664
      %v2732 = vunpack.c.l.b16 %v2665
      %v2733 = vunpack.c.l.b16 %v2666
      %v2734 = vunpack.c.l.b16 %v2667
      %v2735 = vunpack.c.l.b16 %v2668
      %v2736 = vunpack.c.l.b16 %v2669
      %v2737 = vunpack.c.l.b16 %v2670
      %v2738 = vunpack.c.l.b16 %v2671
      %v2739 = vunpack.c.l.b16 %v2672
      %v2740 = vunpack.c.l.b16 %v2673
      %v2741 = vunpack.c.l.b16 %v2674
      %v2742 = vunpack.c.l.b16 %v2675
      %v2743 = vunpack.c.l.b16 %v2676
      %v2744 = vunpack.c.l.b16 %v2677
      %v2745 = vpack.c.b16 %v2721, %v2720
      %v2746 = vpack.c.b16 %v2723, %v2722
      %v2747 = vpack.c.b16 %v2725, %v2724
      %v2748 = vpack.c.b16 %v2727, %v2726
      %v2749 = vpack.c.b16 %v2729, %v2728
      %v2750 = vpack.c.b16 %v2731, %v2730
      %v2751 = vpack.c.b16 %v2733, %v2732
      %v2752 = vpack.c.b16 %v2735, %v2734
      %v2753 = vpack.c.b16 %v2737, %v2736
      %v2754 = vpack.c.b16 %v2739, %v2738
      %v2755 = vpack.c.b16 %v2741, %v2740
      %v2756 = vpack.c.b16 %v2743, %v2742
      %v2757 = vpack.c.b16 %v2744, %v2744
      %v2758 = vrot.slane %v2745, 1
      %v2759 = vrot.slane %v2746, 1
      %v2760 = vsel %vm1538, %v2758, %v2759
      %v2761 = vrot.slane %v2747, 1
      %v2762 = vsel %vm1538, %v2759, %v2761
      %v2763 = vrot.slane %v2748, 1
      %v2764 = vsel %vm1538, %v2761, %v2763
      %v2765 = vrot.slane %v2749, 1
      %v2766 = vsel %vm1538, %v2763, %v2765
      %v2767 = vrot.slane %v2750, 1
      %v2768 = vsel %vm1538, %v2765, %v2767
      %v2769 = vrot.slane %v2751, 1
      %v2770 = vsel %vm1538, %v2767, %v2769
      %v2771 = vrot.slane %v2752, 1
      %v2772 = vsel %vm1538, %v2769, %v2771
      %v2773 = vrot.slane %v2753, 1
      %v2774 = vsel %vm1538, %v2771, %v2773
      %v2775 = vrot.slane %v2754, 1
      %v2776 = vsel %vm1538, %v2773, %v2775
      %v2777 = vrot.slane %v2755, 1
      %v2778 = vsel %vm1538, %v2775, %v2777
      %v2779 = vrot.slane %v2756, 1
      %v2780 = vsel %vm1538, %v2777, %v2779
      %v2781 = vrot.slane %v2757, 1
      %v2782 = vsel %vm1538, %v2779, %v2781
      %v2811 = vunpack.c.l.b16 %v2679
      %v2812 = vunpack.c.l.b16 %v2680
      %v2813 = vunpack.c.l.b16 %v2681
      %v2814 = vunpack.c.l.b16 %v2682
      %v2815 = vunpack.c.l.b16 %v2683
      %v2816 = vunpack.c.l.b16 %v2684
      %v2817 = vunpack.c.l.b16 %v2685
      %v2818 = vunpack.c.l.b16 %v2686
      %v2819 = vunpack.c.l.b16 %v2687
      %v2820 = vunpack.c.l.b16 %v2688
      %v2821 = vunpack.c.l.b16 %v2689
      %v2822 = vunpack.c.l.b16 %v2690
      %v2823 = vunpack.c.l.b16 %v2691
      %v2824 = vunpack.c.l.b16 %v2692
      %v2825 = vunpack.c.l.b16 %v2693
      %v2826 = vunpack.c.l.b16 %v2694
      %v2827 = vpack.c.b16 %v2812, %v2811
      %v2828 = vpack.c.b16 %v2814, %v2813
      %v2829 = vpack.c.b16 %v2816, %v2815
      %v2830 = vpack.c.b16 %v2818, %v2817
      %v2831 = vpack.c.b16 %v2820, %v2819
      %v2832 = vpack.c.b16 %v2822, %v2821
      %v2833 = vpack.c.b16 %v2824, %v2823
      %v2834 = vpack.c.b16 %v2826, %v2825
      %2843 = vmatprep.subr.bf16.mxu0 0
      %2844 = vmatpush1.bf16.msra.mxu0 %v2827
      %2845 = vmatprep.subr.bf16.mxu0 0
      %2846 = vmatpush1.bf16.msra.mxu0 %v2828
      %2847 = vmatprep.subr.bf16.mxu0 0
      %2848 = vmatpush1.bf16.msra.mxu0 %v2829
      %2849 = vmatprep.subr.bf16.mxu0 0
      %2850 = vmatpush1.bf16.msra.mxu0 %v2830
      %2851 = vmatprep.subr.bf16.mxu0 0
      %2852 = vmatpush1.bf16.msra.mxu0 %v2831
      %2853 = vmatprep.subr.bf16.mxu0 0
      %2854 = vmatpush1.bf16.msra.mxu0 %v2832
      %2855 = vmatprep.subr.bf16.mxu0 0
      %2856 = vmatpush1.bf16.msra.mxu0 %v2833
      %2857 = vmatprep.subr.bf16.mxu0 0
      %2858 = vmatpush1.bf16.msra.mxu0 %v2834
      %2859 = vmatprep.subr.bf16.mxu0 0
      %2860 = vmatpush1.bf16.msra.mxu0 0
      %2861 = vmatprep.subr.bf16.mxu0 0
      %2862 = vmatpush1.bf16.msra.mxu0 0
      %2863 = vmatprep.subr.bf16.mxu0 0
      %2864 = vmatpush1.bf16.msra.mxu0 0
      %2865 = vmatprep.subr.bf16.mxu0 0
      %2866 = vmatpush1.bf16.msra.mxu0 0
      %2867 = vmatprep.subr.bf16.mxu0 0
      %2868 = vmatpush1.bf16.msra.mxu0 0
      %2869 = vmatprep.subr.bf16.mxu0 0
      %2870 = vmatpush1.bf16.msra.mxu0 0
      %2871 = vmatprep.subr.bf16.mxu0 0
      %2872 = vmatpush1.bf16.msra.mxu0 0
      %2873 = vmatprep.subr.bf16.mxu0 0
      %2874 = vmatpush1.bf16.msra.mxu0 0
      %2875 = vmatprep.mubr.bf16.mxu0 0
      %2876 = vmatmul.mubr.bf16.gmra.mrb[0].mxu0 %v2760
      %v2877 = vpop.f32.mrb[0].mxu0
      %v2878 = vadd.f32 0.0, %v2877
      %v2879 = vpop.f32.mrb[0].mxu0
      %v2880 = vpop.f32.mrb[0].mxu0
      %v2881 = vadd.f32 0.0, %v2880
      %v2882 = vpop.f32.mrb[0].mxu0
      %2883 = vmatprep.mubr.bf16.mxu0 0
      %2884 = vmatmul.mubr.bf16.gmra.mrb[0].mxu0 %v2762
      %v2885 = vpop.f32.mrb[0].mxu0
      %v2886 = vadd.f32 0.0, %v2885
      %v2887 = vpop.f32.mrb[0].mxu0
      %v2888 = vpop.f32.mrb[0].mxu0
      %v2889 = vadd.f32 0.0, %v2888
      %v2890 = vpop.f32.mrb[0].mxu0
      %2891 = vmatprep.mubr.bf16.mxu0 0
      %2892 = vmatmul.mubr.bf16.gmra.mrb[0].mxu0 %v2764
      %v2893 = vpop.f32.mrb[0].mxu0
      %v2894 = vadd.f32 0.0, %v2893
      %v2895 = vpop.f32.mrb[0].mxu0
      %v2896 = vpop.f32.mrb[0].mxu0
      %v2897 = vadd.f32 0.0, %v2896
      %v2898 = vpop.f32.mrb[0].mxu0
      %2899 = vmatprep.mubr.bf16.mxu0 0
      %2900 = vmatmul.mubr.bf16.gmra.mrb[0].mxu0 %v2766
      %v2901 = vpop.f32.mrb[0].mxu0
      %v2902 = vadd.f32 0.0, %v2901
      %v2903 = vpop.f32.mrb[0].mxu0
      %v2904 = vpop.f32.mrb[0].mxu0
      %v2905 = vadd.f32 0.0, %v2904
      %v2906 = vpop.f32.mrb[0].mxu0
      %2907 = vmatprep.mubr.bf16.mxu0 0
      %2908 = vmatmul.mubr.bf16.gmra.mrb[0].mxu0 %v2768
      %v2909 = vpop.f32.mrb[0].mxu0
      %v2910 = vadd.f32 0.0, %v2909
      %v2911 = vpop.f32.mrb[0].mxu0
      %v2912 = vpop.f32.mrb[0].mxu0
      %v2913 = vadd.f32 0.0, %v2912
      %v2914 = vpop.f32.mrb[0].mxu0
      %2915 = vmatprep.mubr.bf16.mxu0 0
      %2916 = vmatmul.mubr.bf16.gmra.mrb[0].mxu0 %v2770
      %v2917 = vpop.f32.mrb[0].mxu0
      %v2918 = vadd.f32 0.0, %v2917
      %v2919 = vpop.f32.mrb[0].mxu0
      %v2920 = vpop.f32.mrb[0].mxu0
      %v2921 = vadd.f32 0.0, %v2920
      %v2922 = vpop.f32.mrb[0].mxu0
      %2923 = vmatprep.mubr.bf16.mxu0 0
      %2924 = vmatmul.mubr.bf16.gmra.mrb[0].mxu0 %v2772
      %v2925 = vpop.f32.mrb[0].mxu0
      %v2926 = vadd.f32 0.0, %v2925
      %v2927 = vpop.f32.mrb[0].mxu0
      %v2928 = vpop.f32.mrb[0].mxu0
      %v2929 = vadd.f32 0.0, %v2928
      %v2930 = vpop.f32.mrb[0].mxu0
      %2931 = vmatprep.mubr.bf16.mxu0 0
      %2932 = vmatmul.mubr.bf16.gmra.mrb[0].mxu0 %v2774
      %v2933 = vpop.f32.mrb[0].mxu0
      %v2934 = vadd.f32 0.0, %v2933
      %v2935 = vpop.f32.mrb[0].mxu0
      %v2936 = vpop.f32.mrb[0].mxu0
      %v2937 = vadd.f32 0.0, %v2936
      %v2938 = vpop.f32.mrb[0].mxu0
      %2939 = vmatprep.mubr.bf16.mxu0 0
      %2940 = vmatmul.mubr.bf16.gmra.mrb[0].mxu0 %v2776
      %v2941 = vpop.f32.mrb[0].mxu0
      %v2942 = vadd.f32 0.0, %v2941
      %v2943 = vpop.f32.mrb[0].mxu0
      %v2944 = vpop.f32.mrb[0].mxu0
      %v2945 = vadd.f32 0.0, %v2944
      %v2946 = vpop.f32.mrb[0].mxu0
      %2947 = vmatprep.mubr.bf16.mxu0 0
      %2948 = vmatmul.mubr.bf16.gmra.mrb[0].mxu0 %v2778
      %v2949 = vpop.f32.mrb[0].mxu0
      %v2950 = vadd.f32 0.0, %v2949
      %v2951 = vpop.f32.mrb[0].mxu0
      %v2952 = vpop.f32.mrb[0].mxu0
      %v2953 = vadd.f32 0.0, %v2952
      %v2954 = vpop.f32.mrb[0].mxu0
      %2955 = vmatprep.mubr.bf16.mxu0 0
      %2956 = vmatmul.mubr.bf16.gmra.mrb[0].mxu0 %v2780
      %v2957 = vpop.f32.mrb[0].mxu0
      %v2958 = vadd.f32 0.0, %v2957
      %v2959 = vpop.f32.mrb[0].mxu0
      %v2960 = vpop.f32.mrb[0].mxu0
      %v2961 = vadd.f32 0.0, %v2960
      %v2962 = vpop.f32.mrb[0].mxu0
      %2963 = vmatprep.mubr.bf16.mxu0 0
      %2964 = vmatmul.mubr.bf16.gmra.mrb[0].mxu0 %v2782
      %v2965 = vpop.f32.mrb[0].mxu0
      %v2966 = vadd.f32 0.0, %v2965
      %v2967 = vpop.f32.mrb[0].mxu0
      %v2968 = vpop.f32.mrb[0].mxu0
      %v2969 = vadd.f32 0.0, %v2968
      %v2970 = vpop.f32.mrb[0].mxu0
      %2971 = vdwg.mxu0
      %v2972 = vadd.f32 %v2629, %v2878
      %v2973 = vadd.f32 %v2630, %v2881
      %v2974 = vadd.f32 %v2631, %v2886
      %v2975 = vadd.f32 %v2632, %v2889
      %v2976 = vadd.f32 %v2633, %v2894
      %v2977 = vadd.f32 %v2634, %v2897
      %v2978 = vadd.f32 %v2635, %v2902
      %v2979 = vadd.f32 %v2636, %v2905
      %v2980 = vadd.f32 %v2637, %v2910
      %v2981 = vadd.f32 %v2638, %v2913
      %v2982 = vadd.f32 %v2639, %v2918
      %v2983 = vadd.f32 %v2640, %v2921
      %v2984 = vadd.f32 %v2641, %v2926
      %v2985 = vadd.f32 %v2642, %v2929
      %v2986 = vadd.f32 %v2643, %v2934
      %v2987 = vadd.f32 %v2644, %v2937
      %v2988 = vadd.f32 %v2645, %v2942
      %v2989 = vadd.f32 %v2646, %v2945
      %v2990 = vadd.f32 %v2647, %v2950
      %v2991 = vadd.f32 %v2648, %v2953
      %v2992 = vadd.f32 %v2649, %v2958
      %v2993 = vadd.f32 %v2650, %v2961
      %v2994 = vadd.f32 %v2651, %v2966
      %v2995 = vadd.f32 %v2652, %v2969
      %2996 = vst [vmem:[#allocation3] sm:$0xff] %v2972
      %2997 = vst [vmem:[#allocation3 + $0x8] sm:$0xff] %v2973
      %2998 = vst [vmem:[#allocation3 + $0x10] sm:$0xff] %v2974
      %2999 = vst [vmem:[#allocation3 + $0x18] sm:$0xff] %v2975
      %3000 = vst [vmem:[#allocation3 + $0x20] sm:$0xff] %v2976
      %3001 = vst [vmem:[#allocation3 + $0x28] sm:$0xff] %v2977
      %3002 = vst [vmem:[#allocation3 + $0x30] sm:$0xff] %v2978
      %3003 = vst [vmem:[#allocation3 + $0x38] sm:$0xff] %v2979
      %3004 = vst [vmem:[#allocation3 + $0x40] sm:$0xff] %v2980
      %3005 = vst [vmem:[#allocation3 + $0x48] sm:$0xff] %v2981
      %3006 = vst [vmem:[#allocation3 + $0x50] sm:$0xff] %v2982
      %3007 = vst [vmem:[#allocation3 + $0x58] sm:$0xff] %v2983
      %3008 = vst [vmem:[#allocation3 + $0x60] sm:$0xff] %v2984
      %3009 = vst [vmem:[#allocation3 + $0x68] sm:$0xff] %v2985
      %3010 = vst [vmem:[#allocation3 + $0x70] sm:$0xff] %v2986
      %3011 = vst [vmem:[#allocation3 + $0x78] sm:$0xff] %v2987
      %3012 = vst [vmem:[#allocation3 + $0x80] sm:$0xff] %v2988
      %3013 = vst [vmem:[#allocation3 + $0x88] sm:$0xff] %v2989
      %3014 = vst [vmem:[#allocation3 + $0x90] sm:$0xff] %v2990
      %3015 = vst [vmem:[#allocation3 + $0x98] sm:$0xff] %v2991
      %3016 = vst [vmem:[#allocation3 + $0xa0] sm:$0xff] %v2992
      %3017 = vst [vmem:[#allocation3 + $0xa8] sm:$0xff] %v2993
      %3018 = vst [vmem:[#allocation3 + $0xb0] sm:$0xff] %v2994
      %3019 = vst [vmem:[#allocation3 + $0xb8] sm:$0xff] %v2995
      %v3020 = vld [vmem:[#allocation3] sm:$0xff]
      %v3021 = vld [vmem:[#allocation3 + $0x8] sm:$0xff]
      %v3022 = vld [vmem:[#allocation3 + $0x10] sm:$0xff]
      %v3023 = vld [vmem:[#allocation3 + $0x18] sm:$0xff]
      %v3024 = vld [vmem:[#allocation3 + $0x20] sm:$0xff]
      %v3025 = vld [vmem:[#allocation3 + $0x28] sm:$0xff]
      %v3026 = vld [vmem:[#allocation3 + $0x30] sm:$0xff]
      %v3027 = vld [vmem:[#allocation3 + $0x38] sm:$0xff]
      %v3028 = vld [vmem:[#allocation3 + $0x40] sm:$0xff]
      %v3029 = vld [vmem:[#allocation3 + $0x48] sm:$0xff]
      %v3030 = vld [vmem:[#allocation3 + $0x50] sm:$0xff]
      %v3031 = vld [vmem:[#allocation3 + $0x58] sm:$0xff]
      %v3032 = vld [vmem:[#allocation3 + $0x60] sm:$0xff]
      %v3033 = vld [vmem:[#allocation3 + $0x68] sm:$0xff]
      %v3034 = vld [vmem:[#allocation3 + $0x70] sm:$0xff]
      %v3035 = vld [vmem:[#allocation3 + $0x78] sm:$0xff]
      %v3036 = vld [vmem:[#allocation3 + $0x80] sm:$0xff]
      %v3037 = vld [vmem:[#allocation3 + $0x88] sm:$0xff]
      %v3038 = vld [vmem:[#allocation3 + $0x90] sm:$0xff]
      %v3039 = vld [vmem:[#allocation3 + $0x98] sm:$0xff]
      %v3040 = vld [vmem:[#allocation3 + $0xa0] sm:$0xff]
      %v3041 = vld [vmem:[#allocation3 + $0xa8] sm:$0xff]
      %v3042 = vld [vmem:[#allocation3 + $0xb0] sm:$0xff]
      %v3043 = vld [vmem:[#allocation3 + $0xb8] sm:$0xff]
      %v3044 = vld [vmem:[#allocation2 + $0x10] sm:$0xf]
      %v3045 = vld [vmem:[#allocation2 + $0x14] sm:$0xf]
      %v3046 = vld [vmem:[#allocation2 + $0x18] sm:$0xf]
      %v3047 = vld [vmem:[#allocation2 + $0x1c] sm:$0xf]
      %v3048 = vld [vmem:[#allocation2 + $0x20] sm:$0xf]
      %v3049 = vld [vmem:[#allocation2 + $0x24] sm:$0xf]
      %v3050 = vld [vmem:[#allocation2 + $0x28] sm:$0xf]
      %v3051 = vld [vmem:[#allocation2 + $0x2c] sm:$0xf]
      %v3052 = vld [vmem:[#allocation2 + $0x30] sm:$0xf]
      %v3053 = vld [vmem:[#allocation2 + $0x34] sm:$0xf]
      %v3054 = vld [vmem:[#allocation2 + $0x38] sm:$0xf]
      %v3055 = vld [vmem:[#allocation2 + $0x3c] sm:$0xf]
      %v3056 = vld [vmem:[#allocation2 + $0x40] sm:$0xf]
      %v3057 = vld [vmem:[#allocation2 + $0x44] sm:$0xf]
      %v3058 = vld [vmem:[#allocation2 + $0x48] sm:$0xf]
      %v3059 = vld [vmem:[#allocation2 + $0x4c] sm:$0xf]
      %v3060 = vld [vmem:[#allocation2 + $0x50] sm:$0xf]
      %v3061 = vld [vmem:[#allocation2 + $0x54] sm:$0xf]
      %v3062 = vld [vmem:[#allocation2 + $0x58] sm:$0xf]
      %v3063 = vld [vmem:[#allocation2 + $0x5c] sm:$0xf]
      %v3064 = vld [vmem:[#allocation2 + $0x60] sm:$0xf]
      %v3065 = vld [vmem:[#allocation2 + $0x64] sm:$0xf]
      %v3066 = vld [vmem:[#allocation2 + $0x68] sm:$0xf]
      %v3067 = vld [vmem:[#allocation2 + $0x6c] sm:$0xf]
      %s3068 = scalar_lea.vmem %s1, 384
      %v3069 = vld [vmem:[%s3068] sm:$0xf]
      %v3070 = vld [vmem:[%s3068 + $0x4] sm:$0xf]
      %v3071 = vld [vmem:[%s3068 + $0x8] sm:$0xf]
      %v3072 = vld [vmem:[%s3068 + $0xc] sm:$0xf]
      %v3073 = vld [vmem:[%s3068 + $0x10] sm:$0xf]
      %v3074 = vld [vmem:[%s3068 + $0x14] sm:$0xf]
      %v3075 = vld [vmem:[%s3068 + $0x18] sm:$0xf]
      %v3076 = vld [vmem:[%s3068 + $0x1c] sm:$0xf]
      %v3077 = vld [vmem:[%s3068 + $0x20] sm:$0xf]
      %v3078 = vld [vmem:[%s3068 + $0x24] sm:$0xf]
      %v3079 = vld [vmem:[%s3068 + $0x28] sm:$0xf]
      %v3080 = vld [vmem:[%s3068 + $0x2c] sm:$0xf]
      %v3081 = vld [vmem:[%s3068 + $0x30] sm:$0xf]
      %v3082 = vld [vmem:[%s3068 + $0x34] sm:$0xf]
      %v3083 = vld [vmem:[%s3068 + $0x38] sm:$0xf]
      %v3084 = vld [vmem:[%s3068 + $0x3c] sm:$0xf]
      %v3109 = vunpack.c.l.b16 %v3044
      %v3110 = vunpack.c.l.b16 %v3045
      %v3111 = vunpack.c.l.b16 %v3046
      %v3112 = vunpack.c.l.b16 %v3047
      %v3113 = vunpack.c.l.b16 %v3048
      %v3114 = vunpack.c.l.b16 %v3049
      %v3115 = vunpack.c.l.b16 %v3050
      %v3116 = vunpack.c.l.b16 %v3051
      %v3117 = vunpack.c.l.b16 %v3052
      %v3118 = vunpack.c.l.b16 %v3053
      %v3119 = vunpack.c.l.b16 %v3054
      %v3120 = vunpack.c.l.b16 %v3055
      %v3121 = vunpack.c.l.b16 %v3056
      %v3122 = vunpack.c.l.b16 %v3057
      %v3123 = vunpack.c.l.b16 %v3058
      %v3124 = vunpack.c.l.b16 %v3059
      %v3125 = vunpack.c.l.b16 %v3060
      %v3126 = vunpack.c.l.b16 %v3061
      %v3127 = vunpack.c.l.b16 %v3062
      %v3128 = vunpack.c.l.b16 %v3063
      %v3129 = vunpack.c.l.b16 %v3064
      %v3130 = vunpack.c.l.b16 %v3065
      %v3131 = vunpack.c.l.b16 %v3066
      %v3132 = vunpack.c.l.b16 %v3067
      %v3133 = vpack.c.b16 %v3110, %v3109
      %v3134 = vpack.c.b16 %v3112, %v3111
      %v3135 = vpack.c.b16 %v3114, %v3113
      %v3136 = vpack.c.b16 %v3116, %v3115
      %v3137 = vpack.c.b16 %v3118, %v3117
      %v3138 = vpack.c.b16 %v3120, %v3119
      %v3139 = vpack.c.b16 %v3122, %v3121
      %v3140 = vpack.c.b16 %v3124, %v3123
      %v3141 = vpack.c.b16 %v3126, %v3125
      %v3142 = vpack.c.b16 %v3128, %v3127
      %v3143 = vpack.c.b16 %v3130, %v3129
      %v3144 = vpack.c.b16 %v3132, %v3131
      %v3173 = vunpack.c.l.b16 %v3069
      %v3174 = vunpack.c.l.b16 %v3070
      %v3175 = vunpack.c.l.b16 %v3071
      %v3176 = vunpack.c.l.b16 %v3072
      %v3177 = vunpack.c.l.b16 %v3073
      %v3178 = vunpack.c.l.b16 %v3074
      %v3179 = vunpack.c.l.b16 %v3075
      %v3180 = vunpack.c.l.b16 %v3076
      %v3181 = vunpack.c.l.b16 %v3077
      %v3182 = vunpack.c.l.b16 %v3078
      %v3183 = vunpack.c.l.b16 %v3079
      %v3184 = vunpack.c.l.b16 %v3080
      %v3185 = vunpack.c.l.b16 %v3081
      %v3186 = vunpack.c.l.b16 %v3082
      %v3187 = vunpack.c.l.b16 %v3083
      %v3188 = vunpack.c.l.b16 %v3084
      %v3189 = vpack.c.b16 %v3174, %v3173
      %v3190 = vpack.c.b16 %v3176, %v3175
      %v3191 = vpack.c.b16 %v3178, %v3177
      %v3192 = vpack.c.b16 %v3180, %v3179
      %v3193 = vpack.c.b16 %v3182, %v3181
      %v3194 = vpack.c.b16 %v3184, %v3183
      %v3195 = vpack.c.b16 %v3186, %v3185
      %v3196 = vpack.c.b16 %v3188, %v3187
      %3205 = vmatprep.subr.bf16.mxu0 0
      %3206 = vmatpush1.bf16.msra.mxu0 %v3189
      %3207 = vmatprep.subr.bf16.mxu0 0
      %3208 = vmatpush1.bf16.msra.mxu0 %v3190
      %3209 = vmatprep.subr.bf16.mxu0 0
      %3210 = vmatpush1.bf16.msra.mxu0 %v3191
      %3211 = vmatprep.subr.bf16.mxu0 0
      %3212 = vmatpush1.bf16.msra.mxu0 %v3192
      %3213 = vmatprep.subr.bf16.mxu0 0
      %3214 = vmatpush1.bf16.msra.mxu0 %v3193
      %3215 = vmatprep.subr.bf16.mxu0 0
      %3216 = vmatpush1.bf16.msra.mxu0 %v3194
      %3217 = vmatprep.subr.bf16.mxu0 0
      %3218 = vmatpush1.bf16.msra.mxu0 %v3195
      %3219 = vmatprep.subr.bf16.mxu0 0
      %3220 = vmatpush1.bf16.msra.mxu0 %v3196
      %3221 = vmatprep.subr.bf16.mxu0 0
      %3222 = vmatpush1.bf16.msra.mxu0 0
      %3223 = vmatprep.subr.bf16.mxu0 0
      %3224 = vmatpush1.bf16.msra.mxu0 0
      %3225 = vmatprep.subr.bf16.mxu0 0
      %3226 = vmatpush1.bf16.msra.mxu0 0
      %3227 = vmatprep.subr.bf16.mxu0 0
      %3228 = vmatpush1.bf16.msra.mxu0 0
      %3229 = vmatprep.subr.bf16.mxu0 0
      %3230 = vmatpush1.bf16.msra.mxu0 0
      %3231 = vmatprep.subr.bf16.mxu0 0
      %3232 = vmatpush1.bf16.msra.mxu0 0
      %3233 = vmatprep.subr.bf16.mxu0 0
      %3234 = vmatpush1.bf16.msra.mxu0 0
      %3235 = vmatprep.subr.bf16.mxu0 0
      %3236 = vmatpush1.bf16.msra.mxu0 0
      %3237 = vmatprep.mubr.bf16.mxu0 0
      %3238 = vmatmul.mubr.bf16.gmra.mrb[0].mxu0 %v3133
      %v3239 = vpop.f32.mrb[0].mxu0
      %v3240 = vadd.f32 0.0, %v3239
      %v3241 = vpop.f32.mrb[0].mxu0
      %v3242 = vpop.f32.mrb[0].mxu0
      %v3243 = vadd.f32 0.0, %v3242
      %v3244 = vpop.f32.mrb[0].mxu0
      %3245 = vmatprep.mubr.bf16.mxu0 0
      %3246 = vmatmul.mubr.bf16.gmra.mrb[0].mxu0 %v3134
      %v3247 = vpop.f32.mrb[0].mxu0
      %v3248 = vadd.f32 0.0, %v3247
      %v3249 = vpop.f32.mrb[0].mxu0
      %v3250 = vpop.f32.mrb[0].mxu0
      %v3251 = vadd.f32 0.0, %v3250
      %v3252 = vpop.f32.mrb[0].mxu0
      %3253 = vmatprep.mubr.bf16.mxu0 0
      %3254 = vmatmul.mubr.bf16.gmra.mrb[0].mxu0 %v3135
      %v3255 = vpop.f32.mrb[0].mxu0
      %v3256 = vadd.f32 0.0, %v3255
      %v3257 = vpop.f32.mrb[0].mxu0
      %v3258 = vpop.f32.mrb[0].mxu0
      %v3259 = vadd.f32 0.0, %v3258
      %v3260 = vpop.f32.mrb[0].mxu0
      %3261 = vmatprep.mubr.bf16.mxu0 0
      %3262 = vmatmul.mubr.bf16.gmra.mrb[0].mxu0 %v3136
      %v3263 = vpop.f32.mrb[0].mxu0
      %v3264 = vadd.f32 0.0, %v3263
      %v3265 = vpop.f32.mrb[0].mxu0
      %v3266 = vpop.f32.mrb[0].mxu0
      %v3267 = vadd.f32 0.0, %v3266
      %v3268 = vpop.f32.mrb[0].mxu0
      %3269 = vmatprep.mubr.bf16.mxu0 0
      %3270 = vmatmul.mubr.bf16.gmra.mrb[0].mxu0 %v3137
      %v3271 = vpop.f32.mrb[0].mxu0
      %v3272 = vadd.f32 0.0, %v3271
      %v3273 = vpop.f32.mrb[0].mxu0
      %v3274 = vpop.f32.mrb[0].mxu0
      %v3275 = vadd.f32 0.0, %v3274
      %v3276 = vpop.f32.mrb[0].mxu0
      %3277 = vmatprep.mubr.bf16.mxu0 0
      %3278 = vmatmul.mubr.bf16.gmra.mrb[0].mxu0 %v3138
      %v3279 = vpop.f32.mrb[0].mxu0
      %v3280 = vadd.f32 0.0, %v3279
      %v3281 = vpop.f32.mrb[0].mxu0
      %v3282 = vpop.f32.mrb[0].mxu0
      %v3283 = vadd.f32 0.0, %v3282
      %v3284 = vpop.f32.mrb[0].mxu0
      %3285 = vmatprep.mubr.bf16.mxu0 0
      %3286 = vmatmul.mubr.bf16.gmra.mrb[0].mxu0 %v3139
      %v3287 = vpop.f32.mrb[0].mxu0
      %v3288 = vadd.f32 0.0, %v3287
      %v3289 = vpop.f32.mrb[0].mxu0
      %v3290 = vpop.f32.mrb[0].mxu0
      %v3291 = vadd.f32 0.0, %v3290
      %v3292 = vpop.f32.mrb[0].mxu0
      %3293 = vmatprep.mubr.bf16.mxu0 0
      %3294 = vmatmul.mubr.bf16.gmra.mrb[0].mxu0 %v3140
      %v3295 = vpop.f32.mrb[0].mxu0
      %v3296 = vadd.f32 0.0, %v3295
      %v3297 = vpop.f32.mrb[0].mxu0
      %v3298 = vpop.f32.mrb[0].mxu0
      %v3299 = vadd.f32 0.0, %v3298
      %v3300 = vpop.f32.mrb[0].mxu0
      %3301 = vmatprep.mubr.bf16.mxu0 0
      %3302 = vmatmul.mubr.bf16.gmra.mrb[0].mxu0 %v3141
      %v3303 = vpop.f32.mrb[0].mxu0
      %v3304 = vadd.f32 0.0, %v3303
      %v3305 = vpop.f32.mrb[0].mxu0
      %v3306 = vpop.f32.mrb[0].mxu0
      %v3307 = vadd.f32 0.0, %v3306
      %v3308 = vpop.f32.mrb[0].mxu0
      %3309 = vmatprep.mubr.bf16.mxu0 0
      %3310 = vmatmul.mubr.bf16.gmra.mrb[0].mxu0 %v3142
      %v3311 = vpop.f32.mrb[0].mxu0
      %v3312 = vadd.f32 0.0, %v3311
      %v3313 = vpop.f32.mrb[0].mxu0
      %v3314 = vpop.f32.mrb[0].mxu0
      %v3315 = vadd.f32 0.0, %v3314
      %v3316 = vpop.f32.mrb[0].mxu0
      %3317 = vmatprep.mubr.bf16.mxu0 0
      %3318 = vmatmul.mubr.bf16.gmra.mrb[0].mxu0 %v3143
      %v3319 = vpop.f32.mrb[0].mxu0
      %v3320 = vadd.f32 0.0, %v3319
      %v3321 = vpop.f32.mrb[0].mxu0
      %v3322 = vpop.f32.mrb[0].mxu0
      %v3323 = vadd.f32 0.0, %v3322
      %v3324 = vpop.f32.mrb[0].mxu0
      %3325 = vmatprep.mubr.bf16.mxu0 0
      %3326 = vmatmul.mubr.bf16.gmra.mrb[0].mxu0 %v3144
      %v3327 = vpop.f32.mrb[0].mxu0
      %v3328 = vadd.f32 0.0, %v3327
      %v3329 = vpop.f32.mrb[0].mxu0
      %v3330 = vpop.f32.mrb[0].mxu0
      %v3331 = vadd.f32 0.0, %v3330
      %v3332 = vpop.f32.mrb[0].mxu0
      %3333 = vdwg.mxu0
      %v3334 = vadd.f32 %v3020, %v3240
      %v3335 = vadd.f32 %v3021, %v3243
      %v3336 = vadd.f32 %v3022, %v3248
      %v3337 = vadd.f32 %v3023, %v3251
      %v3338 = vadd.f32 %v3024, %v3256
      %v3339 = vadd.f32 %v3025, %v3259
      %v3340 = vadd.f32 %v3026, %v3264
      %v3341 = vadd.f32 %v3027, %v3267
      %v3342 = vadd.f32 %v3028, %v3272
      %v3343 = vadd.f32 %v3029, %v3275
      %v3344 = vadd.f32 %v3030, %v3280
      %v3345 = vadd.f32 %v3031, %v3283
      %v3346 = vadd.f32 %v3032, %v3288
      %v3347 = vadd.f32 %v3033, %v3291
      %v3348 = vadd.f32 %v3034, %v3296
      %v3349 = vadd.f32 %v3035, %v3299
      %v3350 = vadd.f32 %v3036, %v3304
      %v3351 = vadd.f32 %v3037, %v3307
      %v3352 = vadd.f32 %v3038, %v3312
      %v3353 = vadd.f32 %v3039, %v3315
      %v3354 = vadd.f32 %v3040, %v3320
      %v3355 = vadd.f32 %v3041, %v3323
      %v3356 = vadd.f32 %v3042, %v3328
      %v3357 = vadd.f32 %v3043, %v3331
      %3358 = vst [vmem:[#allocation3] sm:$0xff] %v3334
      %3359 = vst [vmem:[#allocation3 + $0x8] sm:$0xff] %v3335
      %3360 = vst [vmem:[#allocation3 + $0x10] sm:$0xff] %v3336
      %3361 = vst [vmem:[#allocation3 + $0x18] sm:$0xff] %v3337
      %3362 = vst [vmem:[#allocation3 + $0x20] sm:$0xff] %v3338
      %3363 = vst [vmem:[#allocation3 + $0x28] sm:$0xff] %v3339
      %3364 = vst [vmem:[#allocation3 + $0x30] sm:$0xff] %v3340
      %3365 = vst [vmem:[#allocation3 + $0x38] sm:$0xff] %v3341
      %3366 = vst [vmem:[#allocation3 + $0x40] sm:$0xff] %v3342
      %3367 = vst [vmem:[#allocation3 + $0x48] sm:$0xff] %v3343
      %3368 = vst [vmem:[#allocation3 + $0x50] sm:$0xff] %v3344
      %3369 = vst [vmem:[#allocation3 + $0x58] sm:$0xff] %v3345
      %3370 = vst [vmem:[#allocation3 + $0x60] sm:$0xff] %v3346
      %3371 = vst [vmem:[#allocation3 + $0x68] sm:$0xff] %v3347
      %3372 = vst [vmem:[#allocation3 + $0x70] sm:$0xff] %v3348
      %3373 = vst [vmem:[#allocation3 + $0x78] sm:$0xff] %v3349
      %3374 = vst [vmem:[#allocation3 + $0x80] sm:$0xff] %v3350
      %3375 = vst [vmem:[#allocation3 + $0x88] sm:$0xff] %v3351
      %3376 = vst [vmem:[#allocation3 + $0x90] sm:$0xff] %v3352
      %3377 = vst [vmem:[#allocation3 + $0x98] sm:$0xff] %v3353
      %3378 = vst [vmem:[#allocation3 + $0xa0] sm:$0xff] %v3354
      %3379 = vst [vmem:[#allocation3 + $0xa8] sm:$0xff] %v3355
      %3380 = vst [vmem:[#allocation3 + $0xb0] sm:$0xff] %v3356
      %3381 = vst [vmem:[#allocation3 + $0xb8] sm:$0xff] %v3357
      %v3382 = vld [vmem:[#allocation3] sm:$0xff]
      %v3383 = vld [vmem:[#allocation3 + $0x8] sm:$0xff]
      %v3384 = vld [vmem:[#allocation3 + $0x10] sm:$0xff]
      %v3385 = vld [vmem:[#allocation3 + $0x18] sm:$0xff]
      %v3386 = vld [vmem:[#allocation3 + $0x20] sm:$0xff]
      %v3387 = vld [vmem:[#allocation3 + $0x28] sm:$0xff]
      %v3388 = vld [vmem:[#allocation3 + $0x30] sm:$0xff]
      %v3389 = vld [vmem:[#allocation3 + $0x38] sm:$0xff]
      %v3390 = vld [vmem:[#allocation3 + $0x40] sm:$0xff]
      %v3391 = vld [vmem:[#allocation3 + $0x48] sm:$0xff]
      %v3392 = vld [vmem:[#allocation3 + $0x50] sm:$0xff]
      %v3393 = vld [vmem:[#allocation3 + $0x58] sm:$0xff]
      %v3394 = vld [vmem:[#allocation3 + $0x60] sm:$0xff]
      %v3395 = vld [vmem:[#allocation3 + $0x68] sm:$0xff]
      %v3396 = vld [vmem:[#allocation3 + $0x70] sm:$0xff]
      %v3397 = vld [vmem:[#allocation3 + $0x78] sm:$0xff]
      %v3398 = vld [vmem:[#allocation3 + $0x80] sm:$0xff]
      %v3399 = vld [vmem:[#allocation3 + $0x88] sm:$0xff]
      %v3400 = vld [vmem:[#allocation3 + $0x90] sm:$0xff]
      %v3401 = vld [vmem:[#allocation3 + $0x98] sm:$0xff]
      %v3402 = vld [vmem:[#allocation3 + $0xa0] sm:$0xff]
      %v3403 = vld [vmem:[#allocation3 + $0xa8] sm:$0xff]
      %v3404 = vld [vmem:[#allocation3 + $0xb0] sm:$0xff]
      %v3405 = vld [vmem:[#allocation3 + $0xb8] sm:$0xff]
      %v3406 = vld [vmem:[#allocation2 + $0x10] sm:$0xf]
      %v3407 = vld [vmem:[#allocation2 + $0x14] sm:$0xf]
      %v3408 = vld [vmem:[#allocation2 + $0x18] sm:$0xf]
      %v3409 = vld [vmem:[#allocation2 + $0x1c] sm:$0xf]
      %v3410 = vld [vmem:[#allocation2 + $0x20] sm:$0xf]
      %v3411 = vld [vmem:[#allocation2 + $0x24] sm:$0xf]
      %v3412 = vld [vmem:[#allocation2 + $0x28] sm:$0xf]
      %v3413 = vld [vmem:[#allocation2 + $0x2c] sm:$0xf]
      %v3414 = vld [vmem:[#allocation2 + $0x30] sm:$0xf]
      %v3415 = vld [vmem:[#allocation2 + $0x34] sm:$0xf]
      %v3416 = vld [vmem:[#allocation2 + $0x38] sm:$0xf]
      %v3417 = vld [vmem:[#allocation2 + $0x3c] sm:$0xf]
      %v3418 = vld [vmem:[#allocation2 + $0x40] sm:$0xf]
      %v3419 = vld [vmem:[#allocation2 + $0x44] sm:$0xf]
      %v3420 = vld [vmem:[#allocation2 + $0x48] sm:$0xf]
      %v3421 = vld [vmem:[#allocation2 + $0x4c] sm:$0xf]
      %v3422 = vld [vmem:[#allocation2 + $0x50] sm:$0xf]
      %v3423 = vld [vmem:[#allocation2 + $0x54] sm:$0xf]
      %v3424 = vld [vmem:[#allocation2 + $0x58] sm:$0xf]
      %v3425 = vld [vmem:[#allocation2 + $0x5c] sm:$0xf]
      %v3426 = vld [vmem:[#allocation2 + $0x60] sm:$0xf]
      %v3427 = vld [vmem:[#allocation2 + $0x64] sm:$0xf]
      %v3428 = vld [vmem:[#allocation2 + $0x68] sm:$0xf]
      %v3429 = vld [vmem:[#allocation2 + $0x6c] sm:$0xf]
      %v3430 = vld [vmem:[#allocation2 + $0x70] sm:$0x1]
      %s3431 = scalar_lea.vmem %s1, 448
      %v3432 = vld [vmem:[%s3431] sm:$0xf]
      %v3433 = vld [vmem:[%s3431 + $0x4] sm:$0xf]
      %v3434 = vld [vmem:[%s3431 + $0x8] sm:$0xf]
      %v3435 = vld [vmem:[%s3431 + $0xc] sm:$0xf]
      %v3436 = vld [vmem:[%s3431 + $0x10] sm:$0xf]
      %v3437 = vld [vmem:[%s3431 + $0x14] sm:$0xf]
      %v3438 = vld [vmem:[%s3431 + $0x18] sm:$0xf]
      %v3439 = vld [vmem:[%s3431 + $0x1c] sm:$0xf]
      %v3440 = vld [vmem:[%s3431 + $0x20] sm:$0xf]
      %v3441 = vld [vmem:[%s3431 + $0x24] sm:$0xf]
      %v3442 = vld [vmem:[%s3431 + $0x28] sm:$0xf]
      %v3443 = vld [vmem:[%s3431 + $0x2c] sm:$0xf]
      %v3444 = vld [vmem:[%s3431 + $0x30] sm:$0xf]
      %v3445 = vld [vmem:[%s3431 + $0x34] sm:$0xf]
      %v3446 = vld [vmem:[%s3431 + $0x38] sm:$0xf]
      %v3447 = vld [vmem:[%s3431 + $0x3c] sm:$0xf]
      %v3473 = vunpack.c.l.b16 %v3406
      %v3474 = vunpack.c.l.b16 %v3407
      %v3475 = vunpack.c.l.b16 %v3408
      %v3476 = vunpack.c.l.b16 %v3409
      %v3477 = vunpack.c.l.b16 %v3410
      %v3478 = vunpack.c.l.b16 %v3411
      %v3479 = vunpack.c.l.b16 %v3412
      %v3480 = vunpack.c.l.b16 %v3413
      %v3481 = vunpack.c.l.b16 %v3414
      %v3482 = vunpack.c.l.b16 %v3415
      %v3483 = vunpack.c.l.b16 %v3416
      %v3484 = vunpack.c.l.b16 %v3417
      %v3485 = vunpack.c.l.b16 %v3418
      %v3486 = vunpack.c.l.b16 %v3419
      %v3487 = vunpack.c.l.b16 %v3420
      %v3488 = vunpack.c.l.b16 %v3421
      %v3489 = vunpack.c.l.b16 %v3422
      %v3490 = vunpack.c.l.b16 %v3423
      %v3491 = vunpack.c.l.b16 %v3424
      %v3492 = vunpack.c.l.b16 %v3425
      %v3493 = vunpack.c.l.b16 %v3426
      %v3494 = vunpack.c.l.b16 %v3427
      %v3495 = vunpack.c.l.b16 %v3428
      %v3496 = vunpack.c.l.b16 %v3429
      %v3497 = vunpack.c.l.b16 %v3430
      %v3498 = vpack.c.b16 %v3474, %v3473
      %v3499 = vpack.c.b16 %v3476, %v3475
      %v3500 = vpack.c.b16 %v3478, %v3477
      %v3501 = vpack.c.b16 %v3480, %v3479
      %v3502 = vpack.c.b16 %v3482, %v3481
      %v3503 = vpack.c.b16 %v3484, %v3483
      %v3504 = vpack.c.b16 %v3486, %v3485
      %v3505 = vpack.c.b16 %v3488, %v3487
      %v3506 = vpack.c.b16 %v3490, %v3489
      %v3507 = vpack.c.b16 %v3492, %v3491
      %v3508 = vpack.c.b16 %v3494, %v3493
      %v3509 = vpack.c.b16 %v3496, %v3495
      %v3510 = vpack.c.b16 %v3497, %v3497
      %v3512 = vshrl.u32 %v3498, 16
      %v3514 = vshll.u32 %v3498, 16
      %v3516 = vrot.slane %v3514, 1
      %v3517 = vor.u32 %v3512, %v3516
      %v3519 = vshll.u32 %v3499, 16
      %v3521 = vrot.slane %v3519, 1
      %v3522 = vsel %vm1071, %v3517, %v3521
      %v3523 = vshrl.u32 %v3499, 16
      %v3525 = vor.u32 %v3523, %v3521
      %v3527 = vshll.u32 %v3500, 16
      %v3529 = vrot.slane %v3527, 1
      %v3530 = vsel %vm1071, %v3525, %v3529
      %v3531 = vshrl.u32 %v3500, 16
      %v3533 = vor.u32 %v3531, %v3529
      %v3535 = vshll.u32 %v3501, 16
      %v3537 = vrot.slane %v3535, 1
      %v3538 = vsel %vm1071, %v3533, %v3537
      %v3539 = vshrl.u32 %v3501, 16
      %v3541 = vor.u32 %v3539, %v3537
      %v3543 = vshll.u32 %v3502, 16
      %v3545 = vrot.slane %v3543, 1
      %v3546 = vsel %vm1071, %v3541, %v3545
      %v3547 = vshrl.u32 %v3502, 16
      %v3549 = vor.u32 %v3547, %v3545
      %v3551 = vshll.u32 %v3503, 16
      %v3553 = vrot.slane %v3551, 1
      %v3554 = vsel %vm1071, %v3549, %v3553
      %v3555 = vshrl.u32 %v3503, 16
      %v3557 = vor.u32 %v3555, %v3553
      %v3559 = vshll.u32 %v3504, 16
      %v3561 = vrot.slane %v3559, 1
      %v3562 = vsel %vm1071, %v3557, %v3561
      %v3563 = vshrl.u32 %v3504, 16
      %v3565 = vor.u32 %v3563, %v3561
      %v3567 = vshll.u32 %v3505, 16
      %v3569 = vrot.slane %v3567, 1
      %v3570 = vsel %vm1071, %v3565, %v3569
      %v3571 = vshrl.u32 %v3505, 16
      %v3573 = vor.u32 %v3571, %v3569
      %v3575 = vshll.u32 %v3506, 16
      %v3577 = vrot.slane %v3575, 1
      %v3578 = vsel %vm1071, %v3573, %v3577
      %v3579 = vshrl.u32 %v3506, 16
      %v3581 = vor.u32 %v3579, %v3577
      %v3583 = vshll.u32 %v3507, 16
      %v3585 = vrot.slane %v3583, 1
      %v3586 = vsel %vm1071, %v3581, %v3585
      %v3587 = vshrl.u32 %v3507, 16
      %v3589 = vor.u32 %v3587, %v3585
      %v3591 = vshll.u32 %v3508, 16
      %v3593 = vrot.slane %v3591, 1
      %v3594 = vsel %vm1071, %v3589, %v3593
      %v3595 = vshrl.u32 %v3508, 16
      %v3597 = vor.u32 %v3595, %v3593
      %v3599 = vshll.u32 %v3509, 16
      %v3601 = vrot.slane %v3599, 1
      %v3602 = vsel %vm1071, %v3597, %v3601
      %v3603 = vshrl.u32 %v3509, 16
      %v3605 = vor.u32 %v3603, %v3601
      %v3607 = vshll.u32 %v3510, 16
      %v3609 = vrot.slane %v3607, 1
      %v3610 = vsel %vm1071, %v3605, %v3609
      %v3639 = vunpack.c.l.b16 %v3432
      %v3640 = vunpack.c.l.b16 %v3433
      %v3641 = vunpack.c.l.b16 %v3434
      %v3642 = vunpack.c.l.b16 %v3435
      %v3643 = vunpack.c.l.b16 %v3436
      %v3644 = vunpack.c.l.b16 %v3437
      %v3645 = vunpack.c.l.b16 %v3438
      %v3646 = vunpack.c.l.b16 %v3439
      %v3647 = vunpack.c.l.b16 %v3440
      %v3648 = vunpack.c.l.b16 %v3441
      %v3649 = vunpack.c.l.b16 %v3442
      %v3650 = vunpack.c.l.b16 %v3443
      %v3651 = vunpack.c.l.b16 %v3444
      %v3652 = vunpack.c.l.b16 %v3445
      %v3653 = vunpack.c.l.b16 %v3446
      %v3654 = vunpack.c.l.b16 %v3447
      %v3655 = vpack.c.b16 %v3640, %v3639
      %v3656 = vpack.c.b16 %v3642, %v3641
      %v3657 = vpack.c.b16 %v3644, %v3643
      %v3658 = vpack.c.b16 %v3646, %v3645
      %v3659 = vpack.c.b16 %v3648, %v3647
      %v3660 = vpack.c.b16 %v3650, %v3649
      %v3661 = vpack.c.b16 %v3652, %v3651
      %v3662 = vpack.c.b16 %v3654, %v3653
      %3671 = vmatprep.subr.bf16.mxu0 0
      %3672 = vmatpush1.bf16.msra.mxu0 %v3655
      %3673 = vmatprep.subr.bf16.mxu0 0
      %3674 = vmatpush1.bf16.msra.mxu0 %v3656
      %3675 = vmatprep.subr.bf16.mxu0 0
      %3676 = vmatpush1.bf16.msra.mxu0 %v3657
      %3677 = vmatprep.subr.bf16.mxu0 0
      %3678 = vmatpush1.bf16.msra.mxu0 %v3658
      %3679 = vmatprep.subr.bf16.mxu0 0
      %3680 = vmatpush1.bf16.msra.mxu0 %v3659
      %3681 = vmatprep.subr.bf16.mxu0 0
      %3682 = vmatpush1.bf16.msra.mxu0 %v3660
      %3683 = vmatprep.subr.bf16.mxu0 0
      %3684 = vmatpush1.bf16.msra.mxu0 %v3661
      %3685 = vmatprep.subr.bf16.mxu0 0
      %3686 = vmatpush1.bf16.msra.mxu0 %v3662
      %3687 = vmatprep.subr.bf16.mxu0 0
      %3688 = vmatpush1.bf16.msra.mxu0 0
      %3689 = vmatprep.subr.bf16.mxu0 0
      %3690 = vmatpush1.bf16.msra.mxu0 0
      %3691 = vmatprep.subr.bf16.mxu0 0
      %3692 = vmatpush1.bf16.msra.mxu0 0
      %3693 = vmatprep.subr.bf16.mxu0 0
      %3694 = vmatpush1.bf16.msra.mxu0 0
      %3695 = vmatprep.subr.bf16.mxu0 0
      %3696 = vmatpush1.bf16.msra.mxu0 0
      %3697 = vmatprep.subr.bf16.mxu0 0
      %3698 = vmatpush1.bf16.msra.mxu0 0
      %3699 = vmatprep.subr.bf16.mxu0 0
      %3700 = vmatpush1.bf16.msra.mxu0 0
      %3701 = vmatprep.subr.bf16.mxu0 0
      %3702 = vmatpush1.bf16.msra.mxu0 0
      %3703 = vmatprep.mubr.bf16.mxu0 0
      %3704 = vmatmul.mubr.bf16.gmra.mrb[0].mxu0 %v3522
      %v3705 = vpop.f32.mrb[0].mxu0
      %v3706 = vadd.f32 0.0, %v3705
      %v3707 = vpop.f32.mrb[0].mxu0
      %v3708 = vpop.f32.mrb[0].mxu0
      %v3709 = vadd.f32 0.0, %v3708
      %v3710 = vpop.f32.mrb[0].mxu0
      %3711 = vmatprep.mubr.bf16.mxu0 0
      %3712 = vmatmul.mubr.bf16.gmra.mrb[0].mxu0 %v3530
      %v3713 = vpop.f32.mrb[0].mxu0
      %v3714 = vadd.f32 0.0, %v3713
      %v3715 = vpop.f32.mrb[0].mxu0
      %v3716 = vpop.f32.mrb[0].mxu0
      %v3717 = vadd.f32 0.0, %v3716
      %v3718 = vpop.f32.mrb[0].mxu0
      %3719 = vmatprep.mubr.bf16.mxu0 0
      %3720 = vmatmul.mubr.bf16.gmra.mrb[0].mxu0 %v3538
      %v3721 = vpop.f32.mrb[0].mxu0
      %v3722 = vadd.f32 0.0, %v3721
      %v3723 = vpop.f32.mrb[0].mxu0
      %v3724 = vpop.f32.mrb[0].mxu0
      %v3725 = vadd.f32 0.0, %v3724
      %v3726 = vpop.f32.mrb[0].mxu0
      %3727 = vmatprep.mubr.bf16.mxu0 0
      %3728 = vmatmul.mubr.bf16.gmra.mrb[0].mxu0 %v3546
      %v3729 = vpop.f32.mrb[0].mxu0
      %v3730 = vadd.f32 0.0, %v3729
      %v3731 = vpop.f32.mrb[0].mxu0
      %v3732 = vpop.f32.mrb[0].mxu0
      %v3733 = vadd.f32 0.0, %v3732
      %v3734 = vpop.f32.mrb[0].mxu0
      %3735 = vmatprep.mubr.bf16.mxu0 0
      %3736 = vmatmul.mubr.bf16.gmra.mrb[0].mxu0 %v3554
      %v3737 = vpop.f32.mrb[0].mxu0
      %v3738 = vadd.f32 0.0, %v3737
      %v3739 = vpop.f32.mrb[0].mxu0
      %v3740 = vpop.f32.mrb[0].mxu0
      %v3741 = vadd.f32 0.0, %v3740
      %v3742 = vpop.f32.mrb[0].mxu0
      %3743 = vmatprep.mubr.bf16.mxu0 0
      %3744 = vmatmul.mubr.bf16.gmra.mrb[0].mxu0 %v3562
      %v3745 = vpop.f32.mrb[0].mxu0
      %v3746 = vadd.f32 0.0, %v3745
      %v3747 = vpop.f32.mrb[0].mxu0
      %v3748 = vpop.f32.mrb[0].mxu0
      %v3749 = vadd.f32 0.0, %v3748
      %v3750 = vpop.f32.mrb[0].mxu0
      %3751 = vmatprep.mubr.bf16.mxu0 0
      %3752 = vmatmul.mubr.bf16.gmra.mrb[0].mxu0 %v3570
      %v3753 = vpop.f32.mrb[0].mxu0
      %v3754 = vadd.f32 0.0, %v3753
      %v3755 = vpop.f32.mrb[0].mxu0
      %v3756 = vpop.f32.mrb[0].mxu0
      %v3757 = vadd.f32 0.0, %v3756
      %v3758 = vpop.f32.mrb[0].mxu0
      %3759 = vmatprep.mubr.bf16.mxu0 0
      %3760 = vmatmul.mubr.bf16.gmra.mrb[0].mxu0 %v3578
      %v3761 = vpop.f32.mrb[0].mxu0
      %v3762 = vadd.f32 0.0, %v3761
      %v3763 = vpop.f32.mrb[0].mxu0
      %v3764 = vpop.f32.mrb[0].mxu0
      %v3765 = vadd.f32 0.0, %v3764
      %v3766 = vpop.f32.mrb[0].mxu0
      %3767 = vmatprep.mubr.bf16.mxu0 0
      %3768 = vmatmul.mubr.bf16.gmra.mrb[0].mxu0 %v3586
      %v3769 = vpop.f32.mrb[0].mxu0
      %v3770 = vadd.f32 0.0, %v3769
      %v3771 = vpop.f32.mrb[0].mxu0
      %v3772 = vpop.f32.mrb[0].mxu0
      %v3773 = vadd.f32 0.0, %v3772
      %v3774 = vpop.f32.mrb[0].mxu0
      %3775 = vmatprep.mubr.bf16.mxu0 0
      %3776 = vmatmul.mubr.bf16.gmra.mrb[0].mxu0 %v3594
      %v3777 = vpop.f32.mrb[0].mxu0
      %v3778 = vadd.f32 0.0, %v3777
      %v3779 = vpop.f32.mrb[0].mxu0
      %v3780 = vpop.f32.mrb[0].mxu0
      %v3781 = vadd.f32 0.0, %v3780
      %v3782 = vpop.f32.mrb[0].mxu0
      %3783 = vmatprep.mubr.bf16.mxu0 0
      %3784 = vmatmul.mubr.bf16.gmra.mrb[0].mxu0 %v3602
      %v3785 = vpop.f32.mrb[0].mxu0
      %v3786 = vadd.f32 0.0, %v3785
      %v3787 = vpop.f32.mrb[0].mxu0
      %v3788 = vpop.f32.mrb[0].mxu0
      %v3789 = vadd.f32 0.0, %v3788
      %v3790 = vpop.f32.mrb[0].mxu0
      %3791 = vmatprep.mubr.bf16.mxu0 0
      %3792 = vmatmul.mubr.bf16.gmra.mrb[0].mxu0 %v3610
      %v3793 = vpop.f32.mrb[0].mxu0
      %v3794 = vadd.f32 0.0, %v3793
      %v3795 = vpop.f32.mrb[0].mxu0
      %v3796 = vpop.f32.mrb[0].mxu0
      %v3797 = vadd.f32 0.0, %v3796
      %v3798 = vpop.f32.mrb[0].mxu0
      %3799 = vdwg.mxu0
      %v3800 = vadd.f32 %v3382, %v3706
      %v3801 = vadd.f32 %v3383, %v3709
      %v3802 = vadd.f32 %v3384, %v3714
      %v3803 = vadd.f32 %v3385, %v3717
      %v3804 = vadd.f32 %v3386, %v3722
      %v3805 = vadd.f32 %v3387, %v3725
      %v3806 = vadd.f32 %v3388, %v3730
      %v3807 = vadd.f32 %v3389, %v3733
      %v3808 = vadd.f32 %v3390, %v3738
      %v3809 = vadd.f32 %v3391, %v3741
      %v3810 = vadd.f32 %v3392, %v3746
      %v3811 = vadd.f32 %v3393, %v3749
      %v3812 = vadd.f32 %v3394, %v3754
      %v3813 = vadd.f32 %v3395, %v3757
      %v3814 = vadd.f32 %v3396, %v3762
      %v3815 = vadd.f32 %v3397, %v3765
      %v3816 = vadd.f32 %v3398, %v3770
      %v3817 = vadd.f32 %v3399, %v3773
      %v3818 = vadd.f32 %v3400, %v3778
      %v3819 = vadd.f32 %v3401, %v3781
      %v3820 = vadd.f32 %v3402, %v3786
      %v3821 = vadd.f32 %v3403, %v3789
      %v3822 = vadd.f32 %v3404, %v3794
      %v3823 = vadd.f32 %v3405, %v3797
      %3824 = vst [vmem:[#allocation3] sm:$0xff] %v3800
      %3825 = vst [vmem:[#allocation3 + $0x8] sm:$0xff] %v3801
      %3826 = vst [vmem:[#allocation3 + $0x10] sm:$0xff] %v3802
      %3827 = vst [vmem:[#allocation3 + $0x18] sm:$0xff] %v3803
      %3828 = vst [vmem:[#allocation3 + $0x20] sm:$0xff] %v3804
      %3829 = vst [vmem:[#allocation3 + $0x28] sm:$0xff] %v3805
      %3830 = vst [vmem:[#allocation3 + $0x30] sm:$0xff] %v3806
      %3831 = vst [vmem:[#allocation3 + $0x38] sm:$0xff] %v3807
      %3832 = vst [vmem:[#allocation3 + $0x40] sm:$0xff] %v3808
      %3833 = vst [vmem:[#allocation3 + $0x48] sm:$0xff] %v3809
      %3834 = vst [vmem:[#allocation3 + $0x50] sm:$0xff] %v3810
      %3835 = vst [vmem:[#allocation3 + $0x58] sm:$0xff] %v3811
      %3836 = vst [vmem:[#allocation3 + $0x60] sm:$0xff] %v3812
      %3837 = vst [vmem:[#allocation3 + $0x68] sm:$0xff] %v3813
      %3838 = vst [vmem:[#allocation3 + $0x70] sm:$0xff] %v3814
      %3839 = vst [vmem:[#allocation3 + $0x78] sm:$0xff] %v3815
      %3840 = vst [vmem:[#allocation3 + $0x80] sm:$0xff] %v3816
      %3841 = vst [vmem:[#allocation3 + $0x88] sm:$0xff] %v3817
      %3842 = vst [vmem:[#allocation3 + $0x90] sm:$0xff] %v3818
      %3843 = vst [vmem:[#allocation3 + $0x98] sm:$0xff] %v3819
      %3844 = vst [vmem:[#allocation3 + $0xa0] sm:$0xff] %v3820
      %3845 = vst [vmem:[#allocation3 + $0xa8] sm:$0xff] %v3821
      %3846 = vst [vmem:[#allocation3 + $0xb0] sm:$0xff] %v3822
      %3847 = vst [vmem:[#allocation3 + $0xb8] sm:$0xff] %v3823
      %v3848 = vld [vmem:[#allocation3] sm:$0xff]
      %v3849 = vld [vmem:[#allocation3 + $0x8] sm:$0xff]
      %v3850 = vld [vmem:[#allocation3 + $0x10] sm:$0xff]
      %v3851 = vld [vmem:[#allocation3 + $0x18] sm:$0xff]
      %v3852 = vld [vmem:[#allocation3 + $0x20] sm:$0xff]
      %v3853 = vld [vmem:[#allocation3 + $0x28] sm:$0xff]
      %v3854 = vld [vmem:[#allocation3 + $0x30] sm:$0xff]
      %v3855 = vld [vmem:[#allocation3 + $0x38] sm:$0xff]
      %v3856 = vld [vmem:[#allocation3 + $0x40] sm:$0xff]
      %v3857 = vld [vmem:[#allocation3 + $0x48] sm:$0xff]
      %v3858 = vld [vmem:[#allocation3 + $0x50] sm:$0xff]
      %v3859 = vld [vmem:[#allocation3 + $0x58] sm:$0xff]
      %v3860 = vld [vmem:[#allocation3 + $0x60] sm:$0xff]
      %v3861 = vld [vmem:[#allocation3 + $0x68] sm:$0xff]
      %v3862 = vld [vmem:[#allocation3 + $0x70] sm:$0xff]
      %v3863 = vld [vmem:[#allocation3 + $0x78] sm:$0xff]
      %v3864 = vld [vmem:[#allocation3 + $0x80] sm:$0xff]
      %v3865 = vld [vmem:[#allocation3 + $0x88] sm:$0xff]
      %v3866 = vld [vmem:[#allocation3 + $0x90] sm:$0xff]
      %v3867 = vld [vmem:[#allocation3 + $0x98] sm:$0xff]
      %v3868 = vld [vmem:[#allocation3 + $0xa0] sm:$0xff]
      %v3869 = vld [vmem:[#allocation3 + $0xa8] sm:$0xff]
      %v3870 = vld [vmem:[#allocation3 + $0xb0] sm:$0xff]
      %v3871 = vld [vmem:[#allocation3 + $0xb8] sm:$0xff]
      %v3872 = vld [vmem:[#allocation2 + $0x10] sm:$0xe]
      %v3873 = vld [vmem:[#allocation2 + $0x14] sm:$0xf]
      %v3874 = vld [vmem:[#allocation2 + $0x18] sm:$0xf]
      %v3875 = vld [vmem:[#allocation2 + $0x1c] sm:$0xf]
      %v3876 = vld [vmem:[#allocation2 + $0x20] sm:$0xf]
      %v3877 = vld [vmem:[#allocation2 + $0x24] sm:$0xf]
      %v3878 = vld [vmem:[#allocation2 + $0x28] sm:$0xf]
      %v3879 = vld [vmem:[#allocation2 + $0x2c] sm:$0xf]
      %v3880 = vld [vmem:[#allocation2 + $0x30] sm:$0xf]
      %v3881 = vld [vmem:[#allocation2 + $0x34] sm:$0xf]
      %v3882 = vld [vmem:[#allocation2 + $0x38] sm:$0xf]
      %v3883 = vld [vmem:[#allocation2 + $0x3c] sm:$0xf]
      %v3884 = vld [vmem:[#allocation2 + $0x40] sm:$0xf]
      %v3885 = vld [vmem:[#allocation2 + $0x44] sm:$0xf]
      %v3886 = vld [vmem:[#allocation2 + $0x48] sm:$0xf]
      %v3887 = vld [vmem:[#allocation2 + $0x4c] sm:$0xf]
      %v3888 = vld [vmem:[#allocation2 + $0x50] sm:$0xf]
      %v3889 = vld [vmem:[#allocation2 + $0x54] sm:$0xf]
      %v3890 = vld [vmem:[#allocation2 + $0x58] sm:$0xf]
      %v3891 = vld [vmem:[#allocation2 + $0x5c] sm:$0xf]
      %v3892 = vld [vmem:[#allocation2 + $0x60] sm:$0xf]
      %v3893 = vld [vmem:[#allocation2 + $0x64] sm:$0xf]
      %v3894 = vld [vmem:[#allocation2 + $0x68] sm:$0xf]
      %v3895 = vld [vmem:[#allocation2 + $0x6c] sm:$0xf]
      %v3896 = vld [vmem:[#allocation2 + $0x70] sm:$0x1]
      %s3897 = scalar_lea.vmem %s1, 512
      %v3898 = vld [vmem:[%s3897] sm:$0xf]
      %v3899 = vld [vmem:[%s3897 + $0x4] sm:$0xf]
      %v3900 = vld [vmem:[%s3897 + $0x8] sm:$0xf]
      %v3901 = vld [vmem:[%s3897 + $0xc] sm:$0xf]
      %v3902 = vld [vmem:[%s3897 + $0x10] sm:$0xf]
      %v3903 = vld [vmem:[%s3897 + $0x14] sm:$0xf]
      %v3904 = vld [vmem:[%s3897 + $0x18] sm:$0xf]
      %v3905 = vld [vmem:[%s3897 + $0x1c] sm:$0xf]
      %v3906 = vld [vmem:[%s3897 + $0x20] sm:$0xf]
      %v3907 = vld [vmem:[%s3897 + $0x24] sm:$0xf]
      %v3908 = vld [vmem:[%s3897 + $0x28] sm:$0xf]
      %v3909 = vld [vmem:[%s3897 + $0x2c] sm:$0xf]
      %v3910 = vld [vmem:[%s3897 + $0x30] sm:$0xf]
      %v3911 = vld [vmem:[%s3897 + $0x34] sm:$0xf]
      %v3912 = vld [vmem:[%s3897 + $0x38] sm:$0xf]
      %v3913 = vld [vmem:[%s3897 + $0x3c] sm:$0xf]
      %v3939 = vunpack.c.l.b16 %v3872
      %v3940 = vunpack.c.l.b16 %v3873
      %v3941 = vunpack.c.l.b16 %v3874
      %v3942 = vunpack.c.l.b16 %v3875
      %v3943 = vunpack.c.l.b16 %v3876
      %v3944 = vunpack.c.l.b16 %v3877
      %v3945 = vunpack.c.l.b16 %v3878
      %v3946 = vunpack.c.l.b16 %v3879
      %v3947 = vunpack.c.l.b16 %v3880
      %v3948 = vunpack.c.l.b16 %v3881
      %v3949 = vunpack.c.l.b16 %v3882
      %v3950 = vunpack.c.l.b16 %v3883
      %v3951 = vunpack.c.l.b16 %v3884
      %v3952 = vunpack.c.l.b16 %v3885
      %v3953 = vunpack.c.l.b16 %v3886
      %v3954 = vunpack.c.l.b16 %v3887
      %v3955 = vunpack.c.l.b16 %v3888
      %v3956 = vunpack.c.l.b16 %v3889
      %v3957 = vunpack.c.l.b16 %v3890
      %v3958 = vunpack.c.l.b16 %v3891
      %v3959 = vunpack.c.l.b16 %v3892
      %v3960 = vunpack.c.l.b16 %v3893
      %v3961 = vunpack.c.l.b16 %v3894
      %v3962 = vunpack.c.l.b16 %v3895
      %v3963 = vunpack.c.l.b16 %v3896
      %v3964 = vpack.c.b16 %v3940, %v3939
      %v3965 = vpack.c.b16 %v3942, %v3941
      %v3966 = vpack.c.b16 %v3944, %v3943
      %v3967 = vpack.c.b16 %v3946, %v3945
      %v3968 = vpack.c.b16 %v3948, %v3947
      %v3969 = vpack.c.b16 %v3950, %v3949
      %v3970 = vpack.c.b16 %v3952, %v3951
      %v3971 = vpack.c.b16 %v3954, %v3953
      %v3972 = vpack.c.b16 %v3956, %v3955
      %v3973 = vpack.c.b16 %v3958, %v3957
      %v3974 = vpack.c.b16 %v3960, %v3959
      %v3975 = vpack.c.b16 %v3962, %v3961
      %v3976 = vpack.c.b16 %v3963, %v3963
      %v3977 = vrot.slane %v3964, 1
      %v3978 = vrot.slane %v3965, 1
      %v3979 = vsel %vm1538, %v3977, %v3978
      %v3980 = vrot.slane %v3966, 1
      %v3981 = vsel %vm1538, %v3978, %v3980
      %v3982 = vrot.slane %v3967, 1
      %v3983 = vsel %vm1538, %v3980, %v3982
      %v3984 = vrot.slane %v3968, 1
      %v3985 = vsel %vm1538, %v3982, %v3984
      %v3986 = vrot.slane %v3969, 1
      %v3987 = vsel %vm1538, %v3984, %v3986
      %v3988 = vrot.slane %v3970, 1
      %v3989 = vsel %vm1538, %v3986, %v3988
      %v3990 = vrot.slane %v3971, 1
      %v3991 = vsel %vm1538, %v3988, %v3990
      %v3992 = vrot.slane %v3972, 1
      %v3993 = vsel %vm1538, %v3990, %v3992
      %v3994 = vrot.slane %v3973, 1
      %v3995 = vsel %vm1538, %v3992, %v3994
      %v3996 = vrot.slane %v3974, 1
      %v3997 = vsel %vm1538, %v3994, %v3996
      %v3998 = vrot.slane %v3975, 1
      %v3999 = vsel %vm1538, %v3996, %v3998
      %v4000 = vrot.slane %v3976, 1
      %v4001 = vsel %vm1538, %v3998, %v4000
      %v4030 = vunpack.c.l.b16 %v3898
      %v4031 = vunpack.c.l.b16 %v3899
      %v4032 = vunpack.c.l.b16 %v3900
      %v4033 = vunpack.c.l.b16 %v3901
      %v4034 = vunpack.c.l.b16 %v3902
      %v4035 = vunpack.c.l.b16 %v3903
      %v4036 = vunpack.c.l.b16 %v3904
      %v4037 = vunpack.c.l.b16 %v3905
      %v4038 = vunpack.c.l.b16 %v3906
      %v4039 = vunpack.c.l.b16 %v3907
      %v4040 = vunpack.c.l.b16 %v3908
      %v4041 = vunpack.c.l.b16 %v3909
      %v4042 = vunpack.c.l.b16 %v3910
      %v4043 = vunpack.c.l.b16 %v3911
      %v4044 = vunpack.c.l.b16 %v3912
      %v4045 = vunpack.c.l.b16 %v3913
      %v4046 = vpack.c.b16 %v4031, %v4030
      %v4047 = vpack.c.b16 %v4033, %v4032
      %v4048 = vpack.c.b16 %v4035, %v4034
      %v4049 = vpack.c.b16 %v4037, %v4036
      %v4050 = vpack.c.b16 %v4039, %v4038
      %v4051 = vpack.c.b16 %v4041, %v4040
      %v4052 = vpack.c.b16 %v4043, %v4042
      %v4053 = vpack.c.b16 %v4045, %v4044
      %4062 = vmatprep.subr.bf16.mxu0 0
      %4063 = vmatpush1.bf16.msra.mxu0 %v4046
      %4064 = vmatprep.subr.bf16.mxu0 0
      %4065 = vmatpush1.bf16.msra.mxu0 %v4047
      %4066 = vmatprep.subr.bf16.mxu0 0
      %4067 = vmatpush1.bf16.msra.mxu0 %v4048
      %4068 = vmatprep.subr.bf16.mxu0 0
      %4069 = vmatpush1.bf16.msra.mxu0 %v4049
      %4070 = vmatprep.subr.bf16.mxu0 0
      %4071 = vmatpush1.bf16.msra.mxu0 %v4050
      %4072 = vmatprep.subr.bf16.mxu0 0
      %4073 = vmatpush1.bf16.msra.mxu0 %v4051
      %4074 = vmatprep.subr.bf16.mxu0 0
      %4075 = vmatpush1.bf16.msra.mxu0 %v4052
      %4076 = vmatprep.subr.bf16.mxu0 0
      %4077 = vmatpush1.bf16.msra.mxu0 %v4053
      %4078 = vmatprep.subr.bf16.mxu0 0
      %4079 = vmatpush1.bf16.msra.mxu0 0
      %4080 = vmatprep.subr.bf16.mxu0 0
      %4081 = vmatpush1.bf16.msra.mxu0 0
      %4082 = vmatprep.subr.bf16.mxu0 0
      %4083 = vmatpush1.bf16.msra.mxu0 0
      %4084 = vmatprep.subr.bf16.mxu0 0
      %4085 = vmatpush1.bf16.msra.mxu0 0
      %4086 = vmatprep.subr.bf16.mxu0 0
      %4087 = vmatpush1.bf16.msra.mxu0 0
      %4088 = vmatprep.subr.bf16.mxu0 0
      %4089 = vmatpush1.bf16.msra.mxu0 0
      %4090 = vmatprep.subr.bf16.mxu0 0
      %4091 = vmatpush1.bf16.msra.mxu0 0
      %4092 = vmatprep.subr.bf16.mxu0 0
      %4093 = vmatpush1.bf16.msra.mxu0 0
      %4094 = vmatprep.mubr.bf16.mxu0 0
      %4095 = vmatmul.mubr.bf16.gmra.mrb[0].mxu0 %v3979
      %v4096 = vpop.f32.mrb[0].mxu0
      %v4097 = vadd.f32 0.0, %v4096
      %v4098 = vpop.f32.mrb[0].mxu0
      %v4099 = vpop.f32.mrb[0].mxu0
      %v4100 = vadd.f32 0.0, %v4099
      %v4101 = vpop.f32.mrb[0].mxu0
      %4102 = vmatprep.mubr.bf16.mxu0 0
      %4103 = vmatmul.mubr.bf16.gmra.mrb[0].mxu0 %v3981
      %v4104 = vpop.f32.mrb[0].mxu0
      %v4105 = vadd.f32 0.0, %v4104
      %v4106 = vpop.f32.mrb[0].mxu0
      %v4107 = vpop.f32.mrb[0].mxu0
      %v4108 = vadd.f32 0.0, %v4107
      %v4109 = vpop.f32.mrb[0].mxu0
      %4110 = vmatprep.mubr.bf16.mxu0 0
      %4111 = vmatmul.mubr.bf16.gmra.mrb[0].mxu0 %v3983
      %v4112 = vpop.f32.mrb[0].mxu0
      %v4113 = vadd.f32 0.0, %v4112
      %v4114 = vpop.f32.mrb[0].mxu0
      %v4115 = vpop.f32.mrb[0].mxu0
      %v4116 = vadd.f32 0.0, %v4115
      %v4117 = vpop.f32.mrb[0].mxu0
      %4118 = vmatprep.mubr.bf16.mxu0 0
      %4119 = vmatmul.mubr.bf16.gmra.mrb[0].mxu0 %v3985
      %v4120 = vpop.f32.mrb[0].mxu0
      %v4121 = vadd.f32 0.0, %v4120
      %v4122 = vpop.f32.mrb[0].mxu0
      %v4123 = vpop.f32.mrb[0].mxu0
      %v4124 = vadd.f32 0.0, %v4123
      %v4125 = vpop.f32.mrb[0].mxu0
      %4126 = vmatprep.mubr.bf16.mxu0 0
      %4127 = vmatmul.mubr.bf16.gmra.mrb[0].mxu0 %v3987
      %v4128 = vpop.f32.mrb[0].mxu0
      %v4129 = vadd.f32 0.0, %v4128
      %v4130 = vpop.f32.mrb[0].mxu0
      %v4131 = vpop.f32.mrb[0].mxu0
      %v4132 = vadd.f32 0.0, %v4131
      %v4133 = vpop.f32.mrb[0].mxu0
      %4134 = vmatprep.mubr.bf16.mxu0 0
      %4135 = vmatmul.mubr.bf16.gmra.mrb[0].mxu0 %v3989
      %v4136 = vpop.f32.mrb[0].mxu0
      %v4137 = vadd.f32 0.0, %v4136
      %v4138 = vpop.f32.mrb[0].mxu0
      %v4139 = vpop.f32.mrb[0].mxu0
      %v4140 = vadd.f32 0.0, %v4139
      %v4141 = vpop.f32.mrb[0].mxu0
      %4142 = vmatprep.mubr.bf16.mxu0 0
      %4143 = vmatmul.mubr.bf16.gmra.mrb[0].mxu0 %v3991
      %v4144 = vpop.f32.mrb[0].mxu0
      %v4145 = vadd.f32 0.0, %v4144
      %v4146 = vpop.f32.mrb[0].mxu0
      %v4147 = vpop.f32.mrb[0].mxu0
      %v4148 = vadd.f32 0.0, %v4147
      %v4149 = vpop.f32.mrb[0].mxu0
      %4150 = vmatprep.mubr.bf16.mxu0 0
      %4151 = vmatmul.mubr.bf16.gmra.mrb[0].mxu0 %v3993
      %v4152 = vpop.f32.mrb[0].mxu0
      %v4153 = vadd.f32 0.0, %v4152
      %v4154 = vpop.f32.mrb[0].mxu0
      %v4155 = vpop.f32.mrb[0].mxu0
      %v4156 = vadd.f32 0.0, %v4155
      %v4157 = vpop.f32.mrb[0].mxu0
      %4158 = vmatprep.mubr.bf16.mxu0 0
      %4159 = vmatmul.mubr.bf16.gmra.mrb[0].mxu0 %v3995
      %v4160 = vpop.f32.mrb[0].mxu0
      %v4161 = vadd.f32 0.0, %v4160
      %v4162 = vpop.f32.mrb[0].mxu0
      %v4163 = vpop.f32.mrb[0].mxu0
      %v4164 = vadd.f32 0.0, %v4163
      %v4165 = vpop.f32.mrb[0].mxu0
      %4166 = vmatprep.mubr.bf16.mxu0 0
      %4167 = vmatmul.mubr.bf16.gmra.mrb[0].mxu0 %v3997
      %v4168 = vpop.f32.mrb[0].mxu0
      %v4169 = vadd.f32 0.0, %v4168
      %v4170 = vpop.f32.mrb[0].mxu0
      %v4171 = vpop.f32.mrb[0].mxu0
      %v4172 = vadd.f32 0.0, %v4171
      %v4173 = vpop.f32.mrb[0].mxu0
      %4174 = vmatprep.mubr.bf16.mxu0 0
      %4175 = vmatmul.mubr.bf16.gmra.mrb[0].mxu0 %v3999
      %v4176 = vpop.f32.mrb[0].mxu0
      %v4177 = vadd.f32 0.0, %v4176
      %v4178 = vpop.f32.mrb[0].mxu0
      %v4179 = vpop.f32.mrb[0].mxu0
      %v4180 = vadd.f32 0.0, %v4179
      %v4181 = vpop.f32.mrb[0].mxu0
      %4182 = vmatprep.mubr.bf16.mxu0 0
      %4183 = vmatmul.mubr.bf16.gmra.mrb[0].mxu0 %v4001
      %v4184 = vpop.f32.mrb[0].mxu0
      %v4185 = vadd.f32 0.0, %v4184
      %v4186 = vpop.f32.mrb[0].mxu0
      %v4187 = vpop.f32.mrb[0].mxu0
      %v4188 = vadd.f32 0.0, %v4187
      %v4189 = vpop.f32.mrb[0].mxu0
      %4190 = vdwg.mxu0
      %v4191 = vadd.f32 %v3848, %v4097
      %v4192 = vadd.f32 %v3849, %v4100
      %v4193 = vadd.f32 %v3850, %v4105
      %v4194 = vadd.f32 %v3851, %v4108
      %v4195 = vadd.f32 %v3852, %v4113
      %v4196 = vadd.f32 %v3853, %v4116
      %v4197 = vadd.f32 %v3854, %v4121
      %v4198 = vadd.f32 %v3855, %v4124
      %v4199 = vadd.f32 %v3856, %v4129
      %v4200 = vadd.f32 %v3857, %v4132
      %v4201 = vadd.f32 %v3858, %v4137
      %v4202 = vadd.f32 %v3859, %v4140
      %v4203 = vadd.f32 %v3860, %v4145
      %v4204 = vadd.f32 %v3861, %v4148
      %v4205 = vadd.f32 %v3862, %v4153
      %v4206 = vadd.f32 %v3863, %v4156
      %v4207 = vadd.f32 %v3864, %v4161
      %v4208 = vadd.f32 %v3865, %v4164
      %v4209 = vadd.f32 %v3866, %v4169
      %v4210 = vadd.f32 %v3867, %v4172
      %v4211 = vadd.f32 %v3868, %v4177
      %v4212 = vadd.f32 %v3869, %v4180
      %v4213 = vadd.f32 %v3870, %v4185
      %v4214 = vadd.f32 %v3871, %v4188
      %4215 = vst [vmem:[#allocation3] sm:$0xff] %v4191
      %4216 = vst [vmem:[#allocation3 + $0x8] sm:$0xff] %v4192
      %4217 = vst [vmem:[#allocation3 + $0x10] sm:$0xff] %v4193
      %4218 = vst [vmem:[#allocation3 + $0x18] sm:$0xff] %v4194
      %4219 = vst [vmem:[#allocation3 + $0x20] sm:$0xff] %v4195
      %4220 = vst [vmem:[#allocation3 + $0x28] sm:$0xff] %v4196
      %4221 = vst [vmem:[#allocation3 + $0x30] sm:$0xff] %v4197
      %4222 = vst [vmem:[#allocation3 + $0x38] sm:$0xff] %v4198
      %4223 = vst [vmem:[#allocation3 + $0x40] sm:$0xff] %v4199
      %4224 = vst [vmem:[#allocation3 + $0x48] sm:$0xff] %v4200
      %4225 = vst [vmem:[#allocation3 + $0x50] sm:$0xff] %v4201
      %4226 = vst [vmem:[#allocation3 + $0x58] sm:$0xff] %v4202
      %4227 = vst [vmem:[#allocation3 + $0x60] sm:$0xff] %v4203
      %4228 = vst [vmem:[#allocation3 + $0x68] sm:$0xff] %v4204
      %4229 = vst [vmem:[#allocation3 + $0x70] sm:$0xff] %v4205
      %4230 = vst [vmem:[#allocation3 + $0x78] sm:$0xff] %v4206
      %4231 = vst [vmem:[#allocation3 + $0x80] sm:$0xff] %v4207
      %4232 = vst [vmem:[#allocation3 + $0x88] sm:$0xff] %v4208
      %4233 = vst [vmem:[#allocation3 + $0x90] sm:$0xff] %v4209
      %4234 = vst [vmem:[#allocation3 + $0x98] sm:$0xff] %v4210
      %4235 = vst [vmem:[#allocation3 + $0xa0] sm:$0xff] %v4211
      %4236 = vst [vmem:[#allocation3 + $0xa8] sm:$0xff] %v4212
      %4237 = vst [vmem:[#allocation3 + $0xb0] sm:$0xff] %v4213
      %4238 = vst [vmem:[#allocation3 + $0xb8] sm:$0xff] %v4214
      %v4239 = vld [vmem:[#allocation3] sm:$0xff]
      %v4240 = vld [vmem:[#allocation3 + $0x8] sm:$0xff]
      %v4241 = vld [vmem:[#allocation3 + $0x10] sm:$0xff]
      %v4242 = vld [vmem:[#allocation3 + $0x18] sm:$0xff]
      %v4243 = vld [vmem:[#allocation3 + $0x20] sm:$0xff]
      %v4244 = vld [vmem:[#allocation3 + $0x28] sm:$0xff]
      %v4245 = vld [vmem:[#allocation3 + $0x30] sm:$0xff]
      %v4246 = vld [vmem:[#allocation3 + $0x38] sm:$0xff]
      %v4247 = vld [vmem:[#allocation3 + $0x40] sm:$0xff]
      %v4248 = vld [vmem:[#allocation3 + $0x48] sm:$0xff]
      %v4249 = vld [vmem:[#allocation3 + $0x50] sm:$0xff]
      %v4250 = vld [vmem:[#allocation3 + $0x58] sm:$0xff]
      %v4251 = vld [vmem:[#allocation3 + $0x60] sm:$0xff]
      %v4252 = vld [vmem:[#allocation3 + $0x68] sm:$0xff]
      %v4253 = vld [vmem:[#allocation3 + $0x70] sm:$0xff]
      %v4254 = vld [vmem:[#allocation3 + $0x78] sm:$0xff]
      %v4255 = vld [vmem:[#allocation3 + $0x80] sm:$0xff]
      %v4256 = vld [vmem:[#allocation3 + $0x88] sm:$0xff]
      %v4257 = vld [vmem:[#allocation3 + $0x90] sm:$0xff]
      %v4258 = vld [vmem:[#allocation3 + $0x98] sm:$0xff]
      %v4259 = vld [vmem:[#allocation3 + $0xa0] sm:$0xff]
      %v4260 = vld [vmem:[#allocation3 + $0xa8] sm:$0xff]
      %v4261 = vld [vmem:[#allocation3 + $0xb0] sm:$0xff]
      %v4262 = vld [vmem:[#allocation3 + $0xb8] sm:$0xff]
      %v4263 = vld [vmem:[%s2] sm:$0x1]
      %v4265 = vlaneseq
      %v4266 = vshrl.u32 %v4265, 7
      %v4267 = vsub.s32 0, %v4266
      %v4268 = vrot.slane %v4263, %v4267
      %v4270 = vadd.f32 %v4239, %v4268
      %v4271 = vadd.f32 %v4240, %v4268
      %v4272 = vadd.f32 %v4241, %v4268
      %v4273 = vadd.f32 %v4242, %v4268
      %v4274 = vadd.f32 %v4243, %v4268
      %v4275 = vadd.f32 %v4244, %v4268
      %v4276 = vadd.f32 %v4245, %v4268
      %v4277 = vadd.f32 %v4246, %v4268
      %v4278 = vadd.f32 %v4247, %v4268
      %v4279 = vadd.f32 %v4248, %v4268
      %v4280 = vadd.f32 %v4249, %v4268
      %v4281 = vadd.f32 %v4250, %v4268
      %v4282 = vadd.f32 %v4251, %v4268
      %v4283 = vadd.f32 %v4252, %v4268
      %v4284 = vadd.f32 %v4253, %v4268
      %v4285 = vadd.f32 %v4254, %v4268
      %v4286 = vadd.f32 %v4255, %v4268
      %v4287 = vadd.f32 %v4256, %v4268
      %v4288 = vadd.f32 %v4257, %v4268
      %v4289 = vadd.f32 %v4258, %v4268
      %v4290 = vadd.f32 %v4259, %v4268
      %v4291 = vadd.f32 %v4260, %v4268
      %v4292 = vadd.f32 %v4261, %v4268
      %v4293 = vadd.f32 %v4262, %v4268
      %4294 = vst [vmem:[%s273] sm:$0xff] %v4270
      %4295 = vst [vmem:[%s273 + $0x8] sm:$0xff] %v4271
      %4296 = vst [vmem:[%s273 + $0x10] sm:$0xff] %v4272
      %4297 = vst [vmem:[%s273 + $0x18] sm:$0xff] %v4273
      %4298 = vst [vmem:[%s273 + $0x20] sm:$0xff] %v4274
      %4299 = vst [vmem:[%s273 + $0x28] sm:$0xff] %v4275
      %4300 = vst [vmem:[%s273 + $0x30] sm:$0xff] %v4276
      %4301 = vst [vmem:[%s273 + $0x38] sm:$0xff] %v4277
      %4302 = vst [vmem:[%s273 + $0x40] sm:$0xff] %v4278
      %4303 = vst [vmem:[%s273 + $0x48] sm:$0xff] %v4279
      %4304 = vst [vmem:[%s273 + $0x50] sm:$0xff] %v4280
      %4305 = vst [vmem:[%s273 + $0x58] sm:$0xff] %v4281
      %4306 = vst [vmem:[%s273 + $0x60] sm:$0xff] %v4282
      %4307 = vst [vmem:[%s273 + $0x68] sm:$0xff] %v4283
      %4308 = vst [vmem:[%s273 + $0x70] sm:$0xff] %v4284
      %4309 = vst [vmem:[%s273 + $0x78] sm:$0xff] %v4285
      %4310 = vst [vmem:[%s273 + $0x80] sm:$0xff] %v4286
      %4311 = vst [vmem:[%s273 + $0x88] sm:$0xff] %v4287
      %4312 = vst [vmem:[%s273 + $0x90] sm:$0xff] %v4288
      %4313 = vst [vmem:[%s273 + $0x98] sm:$0xff] %v4289
      %4314 = vst [vmem:[%s273 + $0xa0] sm:$0xff] %v4290
      %4315 = vst [vmem:[%s273 + $0xa8] sm:$0xff] %v4291
      %4316 = vst [vmem:[%s273 + $0xb0] sm:$0xff] %v4292
      %4317 = vst [vmem:[%s273 + $0xb8] sm:$0xff] %v4293
      %v4318 = vlaneseq
      %v4319 = vshrl.u32 %v4318, 7
      %v4320 = vadd.s32 %v4319, 8
      %v4321 = vadd.s32 %v4319, 16
      %v4322 = vadd.s32 %v4319, 24
      %v4323 = vadd.s32 %v4319, 32
      %v4324 = vadd.s32 %v4319, 40
      %v4325 = vadd.s32 %v4319, 48
      %v4326 = vadd.s32 %v4319, 56
      %v4327 = vadd.s32 %v4319, 64
      %v4328 = vadd.s32 %v4319, 72
      %v4329 = vadd.s32 %v4319, 80
      %v4330 = vadd.s32 %v4319, 88
      %v4331 = vadd.s32 %v4319, 96
      %v4332 = vadd.s32 %v4319, 104
      %v4333 = vadd.s32 %v4319, 112
      %v4334 = vadd.s32 %v4319, 120
      %v4335 = vadd.s32 %v4319, 128
      %v4336 = vadd.s32 %v4319, 136
      %v4337 = vadd.s32 %v4319, 144
      %v4338 = vadd.s32 %v4319, 152
      %v4339 = vadd.s32 %v4319, 160
      %v4340 = vadd.s32 %v4319, 168
      %v4341 = vadd.s32 %v4319, 176
      %v4342 = vadd.s32 %v4319, 184
      %vm4343 = vcmp.lt.s32.totalorder %v4319, 0
      %v4344 = vsub.s32 0, %v4319
      %v4345 = vsel %vm4343, %v4344, %v4319
      %v4346 = vshrl.u32 %v4345, 4
      %v4347 = vand.u32 %v4345, 15
      %v4348 = vsub.s32 0, %v4347
      %v4349 = vsel %vm4343, %v4348, %v4347
      %vm4350 = vcmp.lt.s32.totalorder %v4320, 0
      %v4351 = vsub.s32 0, %v4320
      %v4352 = vsel %vm4350, %v4351, %v4320
      %v4353 = vshrl.u32 %v4352, 4
      %v4354 = vand.u32 %v4352, 15
      %v4355 = vsub.s32 0, %v4354
      %v4356 = vsel %vm4350, %v4355, %v4354
      %vm4357 = vcmp.lt.s32.totalorder %v4321, 0
      %v4358 = vsub.s32 0, %v4321
      %v4359 = vsel %vm4357, %v4358, %v4321
      %v4360 = vshrl.u32 %v4359, 4
      %v4361 = vand.u32 %v4359, 15
      %v4362 = vsub.s32 0, %v4361
      %v4363 = vsel %vm4357, %v4362, %v4361
      %vm4364 = vcmp.lt.s32.totalorder %v4322, 0
      %v4365 = vsub.s32 0, %v4322
      %v4366 = vsel %vm4364, %v4365, %v4322
      %v4367 = vshrl.u32 %v4366, 4
      %v4368 = vand.u32 %v4366, 15
      %v4369 = vsub.s32 0, %v4368
      %v4370 = vsel %vm4364, %v4369, %v4368
      %vm4371 = vcmp.lt.s32.totalorder %v4323, 0
      %v4372 = vsub.s32 0, %v4323
      %v4373 = vsel %vm4371, %v4372, %v4323
      %v4374 = vshrl.u32 %v4373, 4
      %v4375 = vand.u32 %v4373, 15
      %v4376 = vsub.s32 0, %v4375
      %v4377 = vsel %vm4371, %v4376, %v4375
      %vm4378 = vcmp.lt.s32.totalorder %v4324, 0
      %v4379 = vsub.s32 0, %v4324
      %v4380 = vsel %vm4378, %v4379, %v4324
      %v4381 = vshrl.u32 %v4380, 4
      %v4382 = vand.u32 %v4380, 15
      %v4383 = vsub.s32 0, %v4382
      %v4384 = vsel %vm4378, %v4383, %v4382
      %vm4385 = vcmp.lt.s32.totalorder %v4325, 0
      %v4386 = vsub.s32 0, %v4325
      %v4387 = vsel %vm4385, %v4386, %v4325
      %v4388 = vshrl.u32 %v4387, 4
      %v4389 = vand.u32 %v4387, 15
      %v4390 = vsub.s32 0, %v4389
      %v4391 = vsel %vm4385, %v4390, %v4389
      %vm4392 = vcmp.lt.s32.totalorder %v4326, 0
      %v4393 = vsub.s32 0, %v4326
      %v4394 = vsel %vm4392, %v4393, %v4326
      %v4395 = vshrl.u32 %v4394, 4
      %v4396 = vand.u32 %v4394, 15
      %v4397 = vsub.s32 0, %v4396
      %v4398 = vsel %vm4392, %v4397, %v4396
      %vm4399 = vcmp.lt.s32.totalorder %v4327, 0
      %v4400 = vsub.s32 0, %v4327
      %v4401 = vsel %vm4399, %v4400, %v4327
      %v4402 = vshrl.u32 %v4401, 4
      %v4403 = vand.u32 %v4401, 15
      %v4404 = vsub.s32 0, %v4403
      %v4405 = vsel %vm4399, %v4404, %v4403
      %vm4406 = vcmp.lt.s32.totalorder %v4328, 0
      %v4407 = vsub.s32 0, %v4328
      %v4408 = vsel %vm4406, %v4407, %v4328
      %v4409 = vshrl.u32 %v4408, 4
      %v4410 = vand.u32 %v4408, 15
      %v4411 = vsub.s32 0, %v4410
      %v4412 = vsel %vm4406, %v4411, %v4410
      %vm4413 = vcmp.lt.s32.totalorder %v4329, 0
      %v4414 = vsub.s32 0, %v4329
      %v4415 = vsel %vm4413, %v4414, %v4329
      %v4416 = vshrl.u32 %v4415, 4
      %v4417 = vand.u32 %v4415, 15
      %v4418 = vsub.s32 0, %v4417
      %v4419 = vsel %vm4413, %v4418, %v4417
      %vm4420 = vcmp.lt.s32.totalorder %v4330, 0
      %v4421 = vsub.s32 0, %v4330
      %v4422 = vsel %vm4420, %v4421, %v4330
      %v4423 = vshrl.u32 %v4422, 4
      %v4424 = vand.u32 %v4422, 15
      %v4425 = vsub.s32 0, %v4424
      %v4426 = vsel %vm4420, %v4425, %v4424
      %vm4427 = vcmp.lt.s32.totalorder %v4331, 0
      %v4428 = vsub.s32 0, %v4331
      %v4429 = vsel %vm4427, %v4428, %v4331
      %v4430 = vshrl.u32 %v4429, 4
      %v4431 = vand.u32 %v4429, 15
      %v4432 = vsub.s32 0, %v4431
      %v4433 = vsel %vm4427, %v4432, %v4431
      %vm4434 = vcmp.lt.s32.totalorder %v4332, 0
      %v4435 = vsub.s32 0, %v4332
      %v4436 = vsel %vm4434, %v4435, %v4332
      %v4437 = vshrl.u32 %v4436, 4
      %v4438 = vand.u32 %v4436, 15
      %v4439 = vsub.s32 0, %v4438
      %v4440 = vsel %vm4434, %v4439, %v4438
      %vm4441 = vcmp.lt.s32.totalorder %v4333, 0
      %v4442 = vsub.s32 0, %v4333
      %v4443 = vsel %vm4441, %v4442, %v4333
      %v4444 = vshrl.u32 %v4443, 4
      %v4445 = vand.u32 %v4443, 15
      %v4446 = vsub.s32 0, %v4445
      %v4447 = vsel %vm4441, %v4446, %v4445
      %vm4448 = vcmp.lt.s32.totalorder %v4334, 0
      %v4449 = vsub.s32 0, %v4334
      %v4450 = vsel %vm4448, %v4449, %v4334
      %v4451 = vshrl.u32 %v4450, 4
      %v4452 = vand.u32 %v4450, 15
      %v4453 = vsub.s32 0, %v4452
      %v4454 = vsel %vm4448, %v4453, %v4452
      %vm4455 = vcmp.lt.s32.totalorder %v4335, 0
      %v4456 = vsub.s32 0, %v4335
      %v4457 = vsel %vm4455, %v4456, %v4335
      %v4458 = vshrl.u32 %v4457, 4
      %v4459 = vand.u32 %v4457, 15
      %v4460 = vsub.s32 0, %v4459
      %v4461 = vsel %vm4455, %v4460, %v4459
      %vm4462 = vcmp.lt.s32.totalorder %v4336, 0
      %v4463 = vsub.s32 0, %v4336
      %v4464 = vsel %vm4462, %v4463, %v4336
      %v4465 = vshrl.u32 %v4464, 4
      %v4466 = vand.u32 %v4464, 15
      %v4467 = vsub.s32 0, %v4466
      %v4468 = vsel %vm4462, %v4467, %v4466
      %vm4469 = vcmp.lt.s32.totalorder %v4337, 0
      %v4470 = vsub.s32 0, %v4337
      %v4471 = vsel %vm4469, %v4470, %v4337
      %v4472 = vshrl.u32 %v4471, 4
      %v4473 = vand.u32 %v4471, 15
      %v4474 = vsub.s32 0, %v4473
      %v4475 = vsel %vm4469, %v4474, %v4473
      %vm4476 = vcmp.lt.s32.totalorder %v4338, 0
      %v4477 = vsub.s32 0, %v4338
      %v4478 = vsel %vm4476, %v4477, %v4338
      %v4479 = vshrl.u32 %v4478, 4
      %v4480 = vand.u32 %v4478, 15
      %v4481 = vsub.s32 0, %v4480
      %v4482 = vsel %vm4476, %v4481, %v4480
      %vm4483 = vcmp.lt.s32.totalorder %v4339, 0
      %v4484 = vsub.s32 0, %v4339
      %v4485 = vsel %vm4483, %v4484, %v4339
      %v4486 = vshrl.u32 %v4485, 4
      %v4487 = vand.u32 %v4485, 15
      %v4488 = vsub.s32 0, %v4487
      %v4489 = vsel %vm4483, %v4488, %v4487
      %vm4490 = vcmp.lt.s32.totalorder %v4340, 0
      %v4491 = vsub.s32 0, %v4340
      %v4492 = vsel %vm4490, %v4491, %v4340
      %v4493 = vshrl.u32 %v4492, 4
      %v4494 = vand.u32 %v4492, 15
      %v4495 = vsub.s32 0, %v4494
      %v4496 = vsel %vm4490, %v4495, %v4494
      %vm4497 = vcmp.lt.s32.totalorder %v4341, 0
      %v4498 = vsub.s32 0, %v4341
      %v4499 = vsel %vm4497, %v4498, %v4341
      %v4500 = vshrl.u32 %v4499, 4
      %v4501 = vand.u32 %v4499, 15
      %v4502 = vsub.s32 0, %v4501
      %v4503 = vsel %vm4497, %v4502, %v4501
      %vm4504 = vcmp.lt.s32.totalorder %v4342, 0
      %v4505 = vsub.s32 0, %v4342
      %v4506 = vsel %vm4504, %v4505, %v4342
      %v4507 = vshrl.u32 %v4506, 4
      %v4508 = vand.u32 %v4506, 15
      %v4509 = vsub.s32 0, %v4508
      %v4510 = vsel %vm4504, %v4509, %v4508
      %vm4511 = vcmp.ne.s32.totalorder %v4349, 0
      %vm4512 = vcmp.ne.s32.totalorder %v4356, 0
      %vm4513 = vcmp.ne.s32.totalorder %v4363, 0
      %vm4514 = vcmp.ne.s32.totalorder %v4370, 0
      %vm4515 = vcmp.ne.s32.totalorder %v4377, 0
      %vm4516 = vcmp.ne.s32.totalorder %v4384, 0
      %vm4517 = vcmp.ne.s32.totalorder %v4391, 0
      %vm4518 = vcmp.ne.s32.totalorder %v4398, 0
      %vm4519 = vcmp.ne.s32.totalorder %v4405, 0
      %vm4520 = vcmp.ne.s32.totalorder %v4412, 0
      %vm4521 = vcmp.ne.s32.totalorder %v4419, 0
      %vm4522 = vcmp.ne.s32.totalorder %v4426, 0
      %vm4523 = vcmp.ne.s32.totalorder %v4433, 0
      %vm4524 = vcmp.ne.s32.totalorder %v4440, 0
      %vm4525 = vcmp.ne.s32.totalorder %v4447, 0
      %vm4526 = vcmp.ne.s32.totalorder %v4454, 0
      %vm4527 = vcmp.ne.s32.totalorder %v4461, 0
      %vm4528 = vcmp.ne.s32.totalorder %v4468, 0
      %vm4529 = vcmp.ne.s32.totalorder %v4475, 0
      %vm4530 = vcmp.ne.s32.totalorder %v4482, 0
      %vm4531 = vcmp.ne.s32.totalorder %v4489, 0
      %vm4532 = vcmp.ne.s32.totalorder %v4496, 0
      %vm4533 = vcmp.ne.s32.totalorder %v4503, 0
      %vm4534 = vcmp.ne.s32.totalorder %v4510, 0
      %vm4535 = vcmp.lt.s32.totalorder %v4349, 0
      %vm4536 = vcmp.lt.s32.totalorder %v4356, 0
      %vm4537 = vcmp.lt.s32.totalorder %v4363, 0
      %vm4538 = vcmp.lt.s32.totalorder %v4370, 0
      %vm4539 = vcmp.lt.s32.totalorder %v4377, 0
      %vm4540 = vcmp.lt.s32.totalorder %v4384, 0
      %vm4541 = vcmp.lt.s32.totalorder %v4391, 0
      %vm4542 = vcmp.lt.s32.totalorder %v4398, 0
      %vm4543 = vcmp.lt.s32.totalorder %v4405, 0
      %vm4544 = vcmp.lt.s32.totalorder %v4412, 0
      %vm4545 = vcmp.lt.s32.totalorder %v4419, 0
      %vm4546 = vcmp.lt.s32.totalorder %v4426, 0
      %vm4547 = vcmp.lt.s32.totalorder %v4433, 0
      %vm4548 = vcmp.lt.s32.totalorder %v4440, 0
      %vm4549 = vcmp.lt.s32.totalorder %v4447, 0
      %vm4550 = vcmp.lt.s32.totalorder %v4454, 0
      %vm4551 = vcmp.lt.s32.totalorder %v4461, 0
      %vm4552 = vcmp.lt.s32.totalorder %v4468, 0
      %vm4553 = vcmp.lt.s32.totalorder %v4475, 0
      %vm4554 = vcmp.lt.s32.totalorder %v4482, 0
      %vm4555 = vcmp.lt.s32.totalorder %v4489, 0
      %vm4556 = vcmp.lt.s32.totalorder %v4496, 0
      %vm4557 = vcmp.lt.s32.totalorder %v4503, 0
      %vm4558 = vcmp.lt.s32.totalorder %v4510, 0
      %vm4559 = vmand %vm4535, %vm4511
      %vm4560 = vmand %vm4536, %vm4512
      %vm4561 = vmand %vm4537, %vm4513
      %vm4562 = vmand %vm4538, %vm4514
      %vm4563 = vmand %vm4539, %vm4515
      %vm4564 = vmand %vm4540, %vm4516
      %vm4565 = vmand %vm4541, %vm4517
      %vm4566 = vmand %vm4542, %vm4518
      %vm4567 = vmand %vm4543, %vm4519
      %vm4568 = vmand %vm4544, %vm4520
      %vm4569 = vmand %vm4545, %vm4521
      %vm4570 = vmand %vm4546, %vm4522
      %vm4571 = vmand %vm4547, %vm4523
      %vm4572 = vmand %vm4548, %vm4524
      %vm4573 = vmand %vm4549, %vm4525
      %vm4574 = vmand %vm4550, %vm4526
      %vm4575 = vmand %vm4551, %vm4527
      %vm4576 = vmand %vm4552, %vm4528
      %vm4577 = vmand %vm4553, %vm4529
      %vm4578 = vmand %vm4554, %vm4530
      %vm4579 = vmand %vm4555, %vm4531
      %vm4580 = vmand %vm4556, %vm4532
      %vm4581 = vmand %vm4557, %vm4533
      %vm4582 = vmand %vm4558, %vm4534
      %v4583 = vadd.s32 %v4349, 16
      %v4584 = vadd.s32 %v4356, 16
      %v4585 = vadd.s32 %v4363, 16
      %v4586 = vadd.s32 %v4370, 16
      %v4587 = vadd.s32 %v4377, 16
      %v4588 = vadd.s32 %v4384, 16
      %v4589 = vadd.s32 %v4391, 16
      %v4590 = vadd.s32 %v4398, 16
      %v4591 = vadd.s32 %v4405, 16
      %v4592 = vadd.s32 %v4412, 16
      %v4593 = vadd.s32 %v4419, 16
      %v4594 = vadd.s32 %v4426, 16
      %v4595 = vadd.s32 %v4433, 16
      %v4596 = vadd.s32 %v4440, 16
      %v4597 = vadd.s32 %v4447, 16
      %v4598 = vadd.s32 %v4454, 16
      %v4599 = vadd.s32 %v4461, 16
      %v4600 = vadd.s32 %v4468, 16
      %v4601 = vadd.s32 %v4475, 16
      %v4602 = vadd.s32 %v4482, 16
      %v4603 = vadd.s32 %v4489, 16
      %v4604 = vadd.s32 %v4496, 16
      %v4605 = vadd.s32 %v4503, 16
      %v4606 = vadd.s32 %v4510, 16
      %v4607 = vsel %vm4559, %v4583, %v4349
      %v4608 = vsel %vm4560, %v4584, %v4356
      %v4609 = vsel %vm4561, %v4585, %v4363
      %v4610 = vsel %vm4562, %v4586, %v4370
      %v4611 = vsel %vm4563, %v4587, %v4377
      %v4612 = vsel %vm4564, %v4588, %v4384
      %v4613 = vsel %vm4565, %v4589, %v4391
      %v4614 = vsel %vm4566, %v4590, %v4398
      %v4615 = vsel %vm4567, %v4591, %v4405
      %v4616 = vsel %vm4568, %v4592, %v4412
      %v4617 = vsel %vm4569, %v4593, %v4419
      %v4618 = vsel %vm4570, %v4594, %v4426
      %v4619 = vsel %vm4571, %v4595, %v4433
      %v4620 = vsel %vm4572, %v4596, %v4440
      %v4621 = vsel %vm4573, %v4597, %v4447
      %v4622 = vsel %vm4574, %v4598, %v4454
      %v4623 = vsel %vm4575, %v4599, %v4461
      %v4624 = vsel %vm4576, %v4600, %v4468
      %v4625 = vsel %vm4577, %v4601, %v4475
      %v4626 = vsel %vm4578, %v4602, %v4482
      %v4627 = vsel %vm4579, %v4603, %v4489
      %v4628 = vsel %vm4580, %v4604, %v4496
      %v4629 = vsel %vm4581, %v4605, %v4503
      %v4630 = vsel %vm4582, %v4606, %v4510
      %vm4631 = vcmp.lt.s32.totalorder %v4607, 12
      %vm4632 = vcmp.lt.s32.totalorder %v4608, 12
      %vm4633 = vcmp.lt.s32.totalorder %v4609, 12
      %vm4634 = vcmp.lt.s32.totalorder %v4610, 12
      %vm4635 = vcmp.lt.s32.totalorder %v4611, 12
      %vm4636 = vcmp.lt.s32.totalorder %v4612, 12
      %vm4637 = vcmp.lt.s32.totalorder %v4613, 12
      %vm4638 = vcmp.lt.s32.totalorder %v4614, 12
      %vm4639 = vcmp.lt.s32.totalorder %v4615, 12
      %vm4640 = vcmp.lt.s32.totalorder %v4616, 12
      %vm4641 = vcmp.lt.s32.totalorder %v4617, 12
      %vm4642 = vcmp.lt.s32.totalorder %v4618, 12
      %vm4643 = vcmp.lt.s32.totalorder %v4619, 12
      %vm4644 = vcmp.lt.s32.totalorder %v4620, 12
      %vm4645 = vcmp.lt.s32.totalorder %v4621, 12
      %vm4646 = vcmp.lt.s32.totalorder %v4622, 12
      %vm4647 = vcmp.lt.s32.totalorder %v4623, 12
      %vm4648 = vcmp.lt.s32.totalorder %v4624, 12
      %vm4649 = vcmp.lt.s32.totalorder %v4625, 12
      %vm4650 = vcmp.lt.s32.totalorder %v4626, 12
      %vm4651 = vcmp.lt.s32.totalorder %v4627, 12
      %vm4652 = vcmp.lt.s32.totalorder %v4628, 12
      %vm4653 = vcmp.lt.s32.totalorder %v4629, 12
      %vm4654 = vcmp.lt.s32.totalorder %v4630, 12
      %v4655 = vsel %vm4631, 1, 0
      %v4656 = vsel %vm4632, 1, 0
      %v4657 = vsel %vm4633, 1, 0
      %v4658 = vsel %vm4634, 1, 0
      %v4659 = vsel %vm4635, 1, 0
      %v4660 = vsel %vm4636, 1, 0
      %v4661 = vsel %vm4637, 1, 0
      %v4662 = vsel %vm4638, 1, 0
      %v4663 = vsel %vm4639, 1, 0
      %v4664 = vsel %vm4640, 1, 0
      %v4665 = vsel %vm4641, 1, 0
      %v4666 = vsel %vm4642, 1, 0
      %v4667 = vsel %vm4643, 1, 0
      %v4668 = vsel %vm4644, 1, 0
      %v4669 = vsel %vm4645, 1, 0
      %v4670 = vsel %vm4646, 1, 0
      %v4671 = vsel %vm4647, 1, 0
      %v4672 = vsel %vm4648, 1, 0
      %v4673 = vsel %vm4649, 1, 0
      %v4674 = vsel %vm4650, 1, 0
      %v4675 = vsel %vm4651, 1, 0
      %v4676 = vsel %vm4652, 1, 0
      %v4677 = vsel %vm4653, 1, 0
      %v4678 = vsel %vm4654, 1, 0
      %vm4679 = vcmp.eq.s32.totalorder %v4655, 1
      %vm4680 = vcmp.eq.s32.totalorder %v4656, 1
      %vm4681 = vcmp.eq.s32.totalorder %v4657, 1
      %vm4682 = vcmp.eq.s32.totalorder %v4658, 1
      %vm4683 = vcmp.eq.s32.totalorder %v4659, 1
      %vm4684 = vcmp.eq.s32.totalorder %v4660, 1
      %vm4685 = vcmp.eq.s32.totalorder %v4661, 1
      %vm4686 = vcmp.eq.s32.totalorder %v4662, 1
      %vm4687 = vcmp.eq.s32.totalorder %v4663, 1
      %vm4688 = vcmp.eq.s32.totalorder %v4664, 1
      %vm4689 = vcmp.eq.s32.totalorder %v4665, 1
      %vm4690 = vcmp.eq.s32.totalorder %v4666, 1
      %vm4691 = vcmp.eq.s32.totalorder %v4667, 1
      %vm4692 = vcmp.eq.s32.totalorder %v4668, 1
      %vm4693 = vcmp.eq.s32.totalorder %v4669, 1
      %vm4694 = vcmp.eq.s32.totalorder %v4670, 1
      %vm4695 = vcmp.eq.s32.totalorder %v4671, 1
      %vm4696 = vcmp.eq.s32.totalorder %v4672, 1
      %vm4697 = vcmp.eq.s32.totalorder %v4673, 1
      %vm4698 = vcmp.eq.s32.totalorder %v4674, 1
      %vm4699 = vcmp.eq.s32.totalorder %v4675, 1
      %vm4700 = vcmp.eq.s32.totalorder %v4676, 1
      %vm4701 = vcmp.eq.s32.totalorder %v4677, 1
      %vm4702 = vcmp.eq.s32.totalorder %v4678, 1
      %v4703 = vsel %vm4679, %v4270, 0.0
      %v4704 = vsel %vm4680, %v4271, 0.0
      %v4705 = vsel %vm4681, %v4272, 0.0
      %v4706 = vsel %vm4682, %v4273, 0.0
      %v4707 = vsel %vm4683, %v4274, 0.0
      %v4708 = vsel %vm4684, %v4275, 0.0
      %v4709 = vsel %vm4685, %v4276, 0.0
      %v4710 = vsel %vm4686, %v4277, 0.0
      %v4711 = vsel %vm4687, %v4278, 0.0
      %v4712 = vsel %vm4688, %v4279, 0.0
      %v4713 = vsel %vm4689, %v4280, 0.0
      %v4714 = vsel %vm4690, %v4281, 0.0
      %v4715 = vsel %vm4691, %v4282, 0.0
      %v4716 = vsel %vm4692, %v4283, 0.0
      %v4717 = vsel %vm4693, %v4284, 0.0
      %v4718 = vsel %vm4694, %v4285, 0.0
      %v4719 = vsel %vm4695, %v4286, 0.0
      %v4720 = vsel %vm4696, %v4287, 0.0
      %v4721 = vsel %vm4697, %v4288, 0.0
      %v4722 = vsel %vm4698, %v4289, 0.0
      %v4723 = vsel %vm4699, %v4290, 0.0
      %v4724 = vsel %vm4700, %v4291, 0.0
      %v4725 = vsel %vm4701, %v4292, 0.0
      %v4726 = vsel %vm4702, %v4293, 0.0
      %v4727 = vld [vmem:[%s6] sm:$0x1]
      %v4728 = vadd.f32 %v4703, %v4704
      %v4729 = vadd.f32 %v4728, %v4705
      %v4730 = vadd.f32 %v4729, %v4706
      %v4731 = vadd.f32 %v4730, %v4707
      %v4732 = vadd.f32 %v4731, %v4708
      %v4733 = vadd.f32 %v4732, %v4709
      %v4734 = vadd.f32 %v4733, %v4710
      %v4735 = vadd.f32 %v4734, %v4711
      %v4736 = vadd.f32 %v4735, %v4712
      %v4737 = vadd.f32 %v4736, %v4713
      %v4738 = vadd.f32 %v4737, %v4714
      %v4739 = vadd.f32 %v4738, %v4715
      %v4740 = vadd.f32 %v4739, %v4716
      %v4741 = vadd.f32 %v4740, %v4717
      %v4742 = vadd.f32 %v4741, %v4718
      %v4743 = vadd.f32 %v4742, %v4719
      %v4744 = vadd.f32 %v4743, %v4720
      %v4745 = vadd.f32 %v4744, %v4721
      %v4746 = vadd.f32 %v4745, %v4722
      %v4747 = vadd.f32 %v4746, %v4723
      %v4748 = vadd.f32 %v4747, %v4724
      %v4749 = vadd.f32 %v4748, %v4725
      %v4750 = vadd.f32 %v4749, %v4726
      %v4751 = vrot.slane %v4750, 4
      %v4752 = vadd.f32 %v4750, %v4751
      %v4753 = vrot.slane %v4752, 2
      %v4754 = vadd.f32 %v4752, %v4753
      %v4755 = vrot.slane %v4754, 1
      %v4756 = vadd.f32 %v4754, %v4755
      %v4757 = vadd.f32 %v4727, %v4756
      %4758 = vst [vmem:[%s6] sm:$0x1] %v4757
      %v4759 = vld [vmem:[%s7] sm:$0x1]
      %v4760 = vmul.f32 %v4703, %v4703
      %v4761 = vmul.f32 %v4704, %v4704
      %v4762 = vmul.f32 %v4705, %v4705
      %v4763 = vmul.f32 %v4706, %v4706
      %v4764 = vmul.f32 %v4707, %v4707
      %v4765 = vmul.f32 %v4708, %v4708
      %v4766 = vmul.f32 %v4709, %v4709
      %v4767 = vmul.f32 %v4710, %v4710
      %v4768 = vmul.f32 %v4711, %v4711
      %v4769 = vmul.f32 %v4712, %v4712
      %v4770 = vmul.f32 %v4713, %v4713
      %v4771 = vmul.f32 %v4714, %v4714
      %v4772 = vmul.f32 %v4715, %v4715
      %v4773 = vmul.f32 %v4716, %v4716
      %v4774 = vmul.f32 %v4717, %v4717
      %v4775 = vmul.f32 %v4718, %v4718
      %v4776 = vmul.f32 %v4719, %v4719
      %v4777 = vmul.f32 %v4720, %v4720
      %v4778 = vmul.f32 %v4721, %v4721
      %v4779 = vmul.f32 %v4722, %v4722
      %v4780 = vmul.f32 %v4723, %v4723
      %v4781 = vmul.f32 %v4724, %v4724
      %v4782 = vmul.f32 %v4725, %v4725
      %v4783 = vmul.f32 %v4726, %v4726
      %v4784 = vadd.f32 %v4760, %v4761
      %v4785 = vadd.f32 %v4784, %v4762
      %v4786 = vadd.f32 %v4785, %v4763
      %v4787 = vadd.f32 %v4786, %v4764
      %v4788 = vadd.f32 %v4787, %v4765
      %v4789 = vadd.f32 %v4788, %v4766
      %v4790 = vadd.f32 %v4789, %v4767
      %v4791 = vadd.f32 %v4790, %v4768
      %v4792 = vadd.f32 %v4791, %v4769
      %v4793 = vadd.f32 %v4792, %v4770
      %v4794 = vadd.f32 %v4793, %v4771
      %v4795 = vadd.f32 %v4794, %v4772
      %v4796 = vadd.f32 %v4795, %v4773
      %v4797 = vadd.f32 %v4796, %v4774
      %v4798 = vadd.f32 %v4797, %v4775
      %v4799 = vadd.f32 %v4798, %v4776
      %v4800 = vadd.f32 %v4799, %v4777
      %v4801 = vadd.f32 %v4800, %v4778
      %v4802 = vadd.f32 %v4801, %v4779
      %v4803 = vadd.f32 %v4802, %v4780
      %v4804 = vadd.f32 %v4803, %v4781
      %v4805 = vadd.f32 %v4804, %v4782
      %v4806 = vadd.f32 %v4805, %v4783
      %v4807 = vrot.slane %v4806, 4
      %v4808 = vadd.f32 %v4806, %v4807
      %v4809 = vrot.slane %v4808, 2
      %v4810 = vadd.f32 %v4808, %v4809
      %v4811 = vrot.slane %v4810, 1
      %v4812 = vadd.f32 %v4810, %v4811
      %v4813 = vadd.f32 %v4759, %v4812
      %4814 = vst [vmem:[%s7] sm:$0x1] %v4813
      %p4815 = scmp.lt.s32.totalorder %s19, 1
      %s4816 = scalar_select %p4815, %s19, 1
      %s4817 = smul.addr %s4816, 24
      %s4818 = smul.addr %s4817, 8
      %s4819 = scalar_lea.vmem %s5, %s4818
      // Predicated region
      $region45: #{decoder_block_forward.4} parent=39 // pred_check
        %p4820 = pneg %p147
      $region46: #{decoder_block_forward.4} parent=39 // pred_check_branch
        %4822 = sbr.rel (%p4820) target = $region48
      $region47: #{decoder_block_forward.4} parent=39 // pred_region
        _
      $region48: #{decoder_block_forward.4} parent=39 // pred_fallthru
        _
      // Predicated region
      $region49: #{decoder_block_forward.4} parent=39 // pred_check
        %p4823 = pneg %p168
      $region50: #{decoder_block_forward.4} parent=39 // pred_check_branch
        %4825 = sbr.rel (%p4823) target = $region52
      $region51: #{decoder_block_forward.4} parent=39 // pred_region
        _
      $region52: #{decoder_block_forward.4} parent=39 // pred_fallthru
        _
      // Predicated region
      $region53: #{decoder_block_forward.4} parent=39 // pred_check
        %p4826 = pneg %p189
      $region54: #{decoder_block_forward.4} parent=39 // pred_check_branch
        %4828 = sbr.rel (%p4826) target = $region56
      $region55: #{decoder_block_forward.4} parent=39 // pred_region
        _
      $region56: #{decoder_block_forward.4} parent=39 // pred_fallthru
        _
      // Predicated region
      $region57: #{decoder_block_forward.4} parent=39 // pred_check
        %p4829 = pneg %p168
      $region58: #{decoder_block_forward.4} parent=39 // pred_check_branch
        %4831 = sbr.rel (%p4829) target = $region60
      $region59: #{decoder_block_forward.4} parent=39 // pred_region
        _
      $region60: #{decoder_block_forward.4} parent=39 // pred_fallthru
        _
      // Predicated region
      $region61: #{decoder_block_forward.4} parent=39 // pred_check
        %p4832 = pneg %p189
      $region62: #{decoder_block_forward.4} parent=39 // pred_check_branch
        %4834 = sbr.rel (%p4832) target = $region64
      $region63: #{decoder_block_forward.4} parent=39 // pred_region
        _
      $region64: #{decoder_block_forward.4} parent=39 // pred_fallthru
        _
    $region40: #{decoder_block_forward.4} parent=5 // pred_fallthru
      _
    %p4835 = scmp.le.s32.totalorder 2, %s14
    // Predicated region
    $region65: #{decoder_block_forward.4} parent=5 // pred_check
      %p4836 = pneg %p4835
    $region66: #{decoder_block_forward.4} parent=5 // pred_check_branch
      %4838 = sbr.rel (%p4836) target = $region68
    $region67: #{decoder_block_forward.4} parent=5 // pred_region
      %s4839 = ssub.s32 %s14, 2
      // Predicated region
      $region69: #{decoder_block_forward.4} parent=67 // pred_check
        %p4840 = pneg %p153
      $region70: #{decoder_block_forward.4} parent=67 // pred_check_branch
        %4842 = sbr.rel (%p4840) target = $region72
      $region71: #{decoder_block_forward.4} parent=67 // pred_region
        %p4843 = scmp.lt.s32.totalorder %s20, 1
        %s4844 = scalar_select %p4843, %s20, 1
        %s4845 = smul.addr %s4844, 24
        %s4846 = smul.addr %s4845, 8
        %s4847 = scalar_lea.vmem %s5, %s4846
      $region72: #{decoder_block_forward.4} parent=67 // pred_fallthru
        _
    $region68: #{decoder_block_forward.4} parent=5 // pred_fallthru
      _
  $region6: #{decoder_block_forward.4} parent=0 // loop_footer
    %s18 = sadd.s32 1, %s14
  $region7: #{decoder_block_forward.4} parent=0 // loop_footer_branch
    %13 = sbr.rel target = $region3
  $region8: #{decoder_block_forward.4} parent=0 // loop_exit
    _

// kernel: decoder_block_forward.3
$region0: #{decoder_block_forward.3}
  #allocation0 [shape = 'u32[]', space=smem, size = 0x4, offset = 0x4, fixed_abs, tag = 'smem constant byte address 0x4 - core index']
  #allocation1 [shape = 'u32[144,128]{1,0:T(1,128)}', space=vmem, size = 0x12000, scoped, tag = 'internal scratch']
  #allocation2 [shape = 'bf16[264,64]{1,0:T(8,128)(2,1)}', space=vmem, size = 0x10800, scoped, tag = 'scratch operand']
  #allocation3 [shape = 'f32[224,128]{1,0:T(8,128)}', space=vmem, size = 0x1c000, scoped, tag = 'scratch operand']
  %s0 = inlined_call_operand.vmem [shape: f32[2,264,64], index: 0, kind: input, shape index: {}]
  %s1 = inlined_call_operand.vmem [shape: bf16[3,3,64,128], index: 1, kind: input, shape index: {}]
  %s2 = inlined_call_operand.vmem [shape: f32[1,128], index: 2, kind: input, shape index: {}]
  %s3 = inlined_call_operand.vmem [shape: f32[1,64], index: 3, kind: input, shape index: {}]
  %s4 = inlined_call_operand.vmem [shape: f32[1,64], index: 4, kind: input, shape index: {}]
  %s5 = inlined_call_operand.vmem [shape: f32[2,232,128], index: 5, kind: output, shape index: {0}]
  %s6 = inlined_call_operand.vmem [shape: f32[1,128], index: 6, kind: output, shape index: {1}]
  %s7 = inlined_call_operand.vmem [shape: f32[1,128], index: 7, kind: output, shape index: {2}]
  %8 = xla_tuple %s5, %s6, %s7
  %s9 = sld [smem:[#allocation0]]
  $region73: #{decoder_block_forward.3} parent=0
    _
  %s11 = ssub.s32 1, %s9
  %s12 = scalar_select 0, %s11, %s9
  loop: start=0, step=1, limit=4
  $region2: #{decoder_block_forward.3} parent=0 // loop_pre_header
    _
  $region3: #{decoder_block_forward.3} parent=0 // loop_header
    %s14 = sphi 0, %s18
    %p15 = scmp.ge.s32.totalorder %s14, 4
    %s24 = sphi 0, %s26
    %s27 = sphi 0, %s24
    %s28 = sphi 0, %s27
    %s44 = sphi 0, %s28
    %s48 = sphi 0, %s48
    %s50 = sphi 0, %s48
    %s51 = sphi 0, %s50
    %s65 = sphi 0, %s51
    %s69 = sphi 0, %s69
    %s71 = sphi 0, %s69
    %s72 = sphi 0, %s71
    %s86 = sphi 0, %s72
    %s90 = sphi 0, %s90
    %s92 = sphi 0, %s90
    %s93 = sphi 0, %s92
    %s107 = sphi 0, %s93
    %s111 = sphi 0, %s111
    %s113 = sphi 0, %s111
    %s114 = sphi 0, %s113
    %s128 = sphi 0, %s114
    %s134 = sphi 0, %s136
    %s137 = sphi 0, %s134
    %s138 = sphi 0, %s137
    %s154 = sphi 0, %s138
    %s158 = sphi 0, %s158
    %s160 = sphi 0, %s158
    %s161 = sphi 0, %s160
    %s175 = sphi 0, %s161
    %s179 = sphi 0, %s179
    %s181 = sphi 0, %s179
    %s182 = sphi 0, %s181
    %s196 = sphi 0, %s182
  $region4: #{decoder_block_forward.3} parent=0 // loop_header_branch
    %17 = sbr.rel (%p15) target = $region8
  $region5: #{decoder_block_forward.3} parent=0 // loop_body
    %s19 = ssub.s32 %s14, 1
    %s20 = ssub.s32 %s14, 2
    %s21 = sadd.s32 %s14, 1
    %s22 = ssub.s32 %s14, %s21
    %p23 = scmp.eq.s32.totalorder %s22, 0
    %s25 = sadd.s32 %s24, 1
    %s26 = scalar_select %p23, %s24, %s25
    %p29 = pneg %p23
    %p30 = scmp.eq.s32.totalorder %s14, 1
    %p31 = por %p29, %p30
    %p32 = scmp.ne.s32.totalorder %s24, %s27
    %p33 = scmp.eq.s32.totalorder %s14, 0
    %p34 = por %p32, %p33
    %p35 = scmp.ne.s32.totalorder %s24, %s27
    %p36 = scmp.eq.s32.totalorder %s19, 1
    %p37 = por %p35, %p36
    %p38 = scmp.ne.s32.totalorder %s27, %s28
    %p39 = scmp.eq.s32.totalorder %s19, 0
    %p40 = por %p38, %p39
    %p41 = scmp.ne.s32.totalorder %s27, %s28
    %p42 = scmp.eq.s32.totalorder %s20, 1
    %p43 = por %p41, %p42
    %p45 = scmp.ne.s32.totalorder %s28, %s44
    %p46 = scmp.eq.s32.totalorder %s20, 0
    %p47 = por %p45, %p46
    %s49 = sadd.s32 %s48, 1
    %p52 = scmp.eq.s32.totalorder %s14, 1
    %p53 = scmp.ne.s32.totalorder %s48, %s50
    %p54 = scmp.eq.s32.totalorder %s14, 0
    %p55 = por %p53, %p54
    %p56 = scmp.ne.s32.totalorder %s48, %s50
    %p57 = scmp.eq.s32.totalorder %s19, 1
    %p58 = por %p56, %p57
    %p59 = scmp.ne.s32.totalorder %s50, %s51
    %p60 = scmp.eq.s32.totalorder %s19, 0
    %p61 = por %p59, %p60
    %p62 = scmp.ne.s32.totalorder %s50, %s51
    %p63 = scmp.eq.s32.totalorder %s20, 1
    %p64 = por %p62, %p63
    %p66 = scmp.ne.s32.totalorder %s51, %s65
    %p67 = scmp.eq.s32.totalorder %s20, 0
    %p68 = por %p66, %p67
    %s70 = sadd.s32 %s69, 1
    %p73 = scmp.eq.s32.totalorder %s14, 1
    %p74 = scmp.ne.s32.totalorder %s69, %s71
    %p75 = scmp.eq.s32.totalorder %s14, 0
    %p76 = por %p74, %p75
    %p77 = scmp.ne.s32.totalorder %s69, %s71
    %p78 = scmp.eq.s32.totalorder %s19, 1
    %p79 = por %p77, %p78
    %p80 = scmp.ne.s32.totalorder %s71, %s72
    %p81 = scmp.eq.s32.totalorder %s19, 0
    %p82 = por %p80, %p81
    %p83 = scmp.ne.s32.totalorder %s71, %s72
    %p84 = scmp.eq.s32.totalorder %s20, 1
    %p85 = por %p83, %p84
    %p87 = scmp.ne.s32.totalorder %s72, %s86
    %p88 = scmp.eq.s32.totalorder %s20, 0
    %p89 = por %p87, %p88
    %s91 = sadd.s32 %s90, 1
    %p94 = scmp.eq.s32.totalorder %s14, 1
    %p95 = scmp.ne.s32.totalorder %s90, %s92
    %p96 = scmp.eq.s32.totalorder %s14, 0
    %p97 = por %p95, %p96
    %p98 = scmp.ne.s32.totalorder %s90, %s92
    %p99 = scmp.eq.s32.totalorder %s19, 1
    %p100 = por %p98, %p99
    %p101 = scmp.ne.s32.totalorder %s92, %s93
    %p102 = scmp.eq.s32.totalorder %s19, 0
    %p103 = por %p101, %p102
    %p104 = scmp.ne.s32.totalorder %s92, %s93
    %p105 = scmp.eq.s32.totalorder %s20, 1
    %p106 = por %p104, %p105
    %p108 = scmp.ne.s32.totalorder %s93, %s107
    %p109 = scmp.eq.s32.totalorder %s20, 0
    %p110 = por %p108, %p109
    %s112 = sadd.s32 %s111, 1
    %p115 = scmp.eq.s32.totalorder %s14, 1
    %p116 = scmp.ne.s32.totalorder %s111, %s113
    %p117 = scmp.eq.s32.totalorder %s14, 0
    %p118 = por %p116, %p117
    %p119 = scmp.ne.s32.totalorder %s111, %s113
    %p120 = scmp.eq.s32.totalorder %s19, 1
    %p121 = por %p119, %p120
    %p122 = scmp.ne.s32.totalorder %s113, %s114
    %p123 = scmp.eq.s32.totalorder %s19, 0
    %p124 = por %p122, %p123
    %p125 = scmp.ne.s32.totalorder %s113, %s114
    %p126 = scmp.eq.s32.totalorder %s20, 1
    %p127 = por %p125, %p126
    %p129 = scmp.ne.s32.totalorder %s114, %s128
    %p130 = scmp.eq.s32.totalorder %s20, 0
    %p131 = por %p129, %p130
    %s132 = ssub.s32 %s14, %s21
    %p133 = scmp.eq.s32.totalorder %s132, 0
    %s135 = sadd.s32 %s134, 1
    %s136 = scalar_select %p133, %s134, %s135
    %p139 = pneg %p133
    %p140 = scmp.eq.s32.totalorder %s14, 1
    %p141 = por %p139, %p140
    %p142 = scmp.ne.s32.totalorder %s134, %s137
    %p143 = scmp.eq.s32.totalorder %s14, 0
    %p144 = por %p142, %p143
    %p145 = scmp.ne.s32.totalorder %s134, %s137
    %p146 = scmp.eq.s32.totalorder %s19, 1
    %p147 = por %p145, %p146
    %p148 = scmp.ne.s32.totalorder %s137, %s138
    %p149 = scmp.eq.s32.totalorder %s19, 0
    %p150 = por %p148, %p149
    %p151 = scmp.ne.s32.totalorder %s137, %s138
    %p152 = scmp.eq.s32.totalorder %s20, 1
    %p153 = por %p151, %p152
    %p155 = scmp.ne.s32.totalorder %s138, %s154
    %p156 = scmp.eq.s32.totalorder %s20, 0
    %p157 = por %p155, %p156
    %s159 = sadd.s32 %s158, 1
    %p162 = scmp.eq.s32.totalorder %s14, 1
    %p163 = scmp.ne.s32.totalorder %s158, %s160
    %p164 = scmp.eq.s32.totalorder %s14, 0
    %p165 = por %p163, %p164
    %p166 = scmp.ne.s32.totalorder %s158, %s160
    %p167 = scmp.eq.s32.totalorder %s19, 1
    %p168 = por %p166, %p167
    %p169 = scmp.ne.s32.totalorder %s160, %s161
    %p170 = scmp.eq.s32.totalorder %s19, 0
    %p171 = por %p169, %p170
    %p172 = scmp.ne.s32.totalorder %s160, %s161
    %p173 = scmp.eq.s32.totalorder %s20, 1
    %p174 = por %p172, %p173
    %p176 = scmp.ne.s32.totalorder %s161, %s175
    %p177 = scmp.eq.s32.totalorder %s20, 0
    %p178 = por %p176, %p177
    %s180 = sadd.s32 %s179, 1
    %p183 = scmp.eq.s32.totalorder %s14, 1
    %p184 = scmp.ne.s32.totalorder %s179, %s181
    %p185 = scmp.eq.s32.totalorder %s14, 0
    %p186 = por %p184, %p185
    %p187 = scmp.ne.s32.totalorder %s179, %s181
    %p188 = scmp.eq.s32.totalorder %s19, 1
    %p189 = por %p187, %p188
    %p190 = scmp.ne.s32.totalorder %s181, %s182
    %p191 = scmp.eq.s32.totalorder %s19, 0
    %p192 = por %p190, %p191
    %p193 = scmp.ne.s32.totalorder %s181, %s182
    %p194 = scmp.eq.s32.totalorder %s20, 1
    %p195 = por %p193, %p194
    %p197 = scmp.ne.s32.totalorder %s182, %s196
    %p198 = scmp.eq.s32.totalorder %s20, 0
    %p199 = por %p197, %p198
    %p200 = scmp.le.s32.totalorder 1, %s14
    %p201 = scmp.lt.s32.totalorder %s14, 3
    %p202 = pnand %p200, %p201
    %p203 = pneg %p202
    // Predicated region
    $region9: #{decoder_block_forward.3} parent=5 // pred_check
      _
    $region10: #{decoder_block_forward.3} parent=5 // pred_check_branch
      %205 = sbr.rel (%p202) target = $region12
    $region11: #{decoder_block_forward.3} parent=5 // pred_region
      %s206 = ssub.s32 %s14, 1
      // Predicated region
      $region13: #{decoder_block_forward.3} parent=11 // pred_check
        %p207 = pneg %p61
      $region14: #{decoder_block_forward.3} parent=11 // pred_check_branch
        %209 = sbr.rel (%p207) target = $region16
      $region15: #{decoder_block_forward.3} parent=11 // pred_region
        _
      $region16: #{decoder_block_forward.3} parent=11 // pred_fallthru
        _
      // Predicated region
      $region17: #{decoder_block_forward.3} parent=11 // pred_check
        %p210 = pneg %p82
      $region18: #{decoder_block_forward.3} parent=11 // pred_check_branch
        %212 = sbr.rel (%p210) target = $region20
      $region19: #{decoder_block_forward.3} parent=11 // pred_region
        _
      $region20: #{decoder_block_forward.3} parent=11 // pred_fallthru
        _
      // Predicated region
      $region21: #{decoder_block_forward.3} parent=11 // pred_check
        %p213 = pneg %p103
      $region22: #{decoder_block_forward.3} parent=11 // pred_check_branch
        %215 = sbr.rel (%p213) target = $region24
      $region23: #{decoder_block_forward.3} parent=11 // pred_region
        _
      $region24: #{decoder_block_forward.3} parent=11 // pred_fallthru
        _
      // Predicated region
      $region25: #{decoder_block_forward.3} parent=11 // pred_check
        %p216 = pneg %p124
      $region26: #{decoder_block_forward.3} parent=11 // pred_check_branch
        %218 = sbr.rel (%p216) target = $region28
      $region27: #{decoder_block_forward.3} parent=11 // pred_region
        _
      $region28: #{decoder_block_forward.3} parent=11 // pred_fallthru
        _
    $region12: #{decoder_block_forward.3} parent=5 // pred_fallthru
      _
    %p219 = scmp.lt.s32.totalorder %s14, 2
    // Predicated region
    $region29: #{decoder_block_forward.3} parent=5 // pred_check
      %p220 = pneg %p219
    $region30: #{decoder_block_forward.3} parent=5 // pred_check_branch
      %222 = sbr.rel (%p220) target = $region32
    $region31: #{decoder_block_forward.3} parent=5 // pred_region
      // Predicated region
      $region33: #{decoder_block_forward.3} parent=31 // pred_check
        %p223 = pneg %p34
      $region34: #{decoder_block_forward.3} parent=31 // pred_check_branch
        %225 = sbr.rel (%p223) target = $region36
      $region35: #{decoder_block_forward.3} parent=31 // pred_region
        %p226 = scmp.lt.s32.totalorder %s14, 1
        %s227 = scalar_select %p226, %s14, 1
        %s228 = smul.addr %s227, 33
        %s229 = smul.addr %s228, 8
        %s230 = scalar_lea.vmem %s0, %s229
      $region36: #{decoder_block_forward.3} parent=31 // pred_fallthru
        _
    $region32: #{decoder_block_forward.3} parent=5 // pred_fallthru
      _
    %p231 = scmp.le.s32.totalorder 1, %s14
    %p232 = scmp.lt.s32.totalorder %s14, 3
    %p233 = pnand %p231, %p232
    %p234 = pneg %p233
    // Predicated region
    $region37: #{decoder_block_forward.3} parent=5 // pred_check
      _
    $region38: #{decoder_block_forward.3} parent=5 // pred_check_branch
      %236 = sbr.rel (%p233) target = $region40
    $region39: #{decoder_block_forward.3} parent=5 // pred_region
      %s237 = ssub.s32 %s14, 1
      %p238 = scmp.lt.s32.totalorder %s19, 1
      %s239 = scalar_select %p238, %s19, 1
      %s240 = smul.addr %s239, 33
      %s241 = smul.addr %s240, 8
      %s242 = scalar_lea.vmem %s0, %s241
      %p243 = pneg %p40
      %p244 = pneg %p37
      %p245 = pneg %p61
      %p246 = pneg %p58
      %p247 = pneg %p82
      %p248 = pneg %p79
      %p249 = pneg %p103
      %p250 = pneg %p100
      %p251 = pneg %p124
      %p252 = pneg %p121
      %p253 = pneg %p150
      %p254 = pneg %p147
      %p255 = scmp.lt.s32.totalorder %s19, 1
      %s256 = scalar_select %p255, %s19, 1
      %s257 = smul.addr %s256, 29
      %s258 = smul.addr %s257, 8
      %s259 = scalar_lea.vmem %s5, %s258
      %p260 = pneg %p171
      %p261 = pneg %p168
      %p262 = pneg %p192
      %p263 = pneg %p189
      %p264 = scmp.lt.s32.totalorder %s19, 1
      %s265 = scalar_select %p264, %s19, 1
      %s266 = smul.addr %s265, 33
      %s267 = smul.addr %s266, 8
      %s268 = scalar_lea.vmem %s0, %s267
      %p269 = scmp.lt.s32.totalorder %s19, 1
      %s270 = scalar_select %p269, %s19, 1
      %s271 = smul.addr %s270, 29
      %s272 = smul.addr %s271, 8
      %s273 = scalar_lea.vmem %s5, %s272
      %p275 = scmp.eq.s32.totalorder %s19, 0
      // Predicated region
      $region41: #{decoder_block_forward.3} parent=39 // pred_check
        %p276 = pneg %p275
      $region42: #{decoder_block_forward.3} parent=39 // pred_check_branch
        %278 = sbr.rel (%p276) target = $region44
      $region43: #{decoder_block_forward.3} parent=39 // pred_region
        %279 = vst [vmem:[%s6] sm:$0x1] 0.0
        %280 = vst [vmem:[%s7] sm:$0x1] 0.0
      $region44: #{decoder_block_forward.3} parent=39 // pred_fallthru
        _
      %v281 = vld [vmem:[%s268] sm:$0xff]
      %v282 = vld [vmem:[%s268 + $0x8] sm:$0xff]
      %v283 = vld [vmem:[%s268 + $0x10] sm:$0xff]
      %v284 = vld [vmem:[%s268 + $0x18] sm:$0xff]
      %v285 = vld [vmem:[%s268 + $0x20] sm:$0xff]
      %v286 = vld [vmem:[%s268 + $0x28] sm:$0xff]
      %v287 = vld [vmem:[%s268 + $0x30] sm:$0xff]
      %v288 = vld [vmem:[%s268 + $0x38] sm:$0xff]
      %v289 = vld [vmem:[%s268 + $0x40] sm:$0xff]
      %v290 = vld [vmem:[%s268 + $0x48] sm:$0xff]
      %v291 = vld [vmem:[%s268 + $0x50] sm:$0xff]
      %v292 = vld [vmem:[%s268 + $0x58] sm:$0xff]
      %v293 = vld [vmem:[%s268 + $0x60] sm:$0xff]
      %v294 = vld [vmem:[%s268 + $0x68] sm:$0xff]
      %v295 = vld [vmem:[%s268 + $0x70] sm:$0xff]
      %v296 = vld [vmem:[%s268 + $0x78] sm:$0xff]
      %v297 = vld [vmem:[%s268 + $0x80] sm:$0xff]
      %v298 = vld [vmem:[%s268 + $0x88] sm:$0xff]
      %v299 = vld [vmem:[%s268 + $0x90] sm:$0xff]
      %v300 = vld [vmem:[%s268 + $0x98] sm:$0xff]
      %v301 = vld [vmem:[%s268 + $0xa0] sm:$0xff]
      %v302 = vld [vmem:[%s268 + $0xa8] sm:$0xff]
      %v303 = vld [vmem:[%s268 + $0xb0] sm:$0xff]
      %v304 = vld [vmem:[%s268 + $0xb8] sm:$0xff]
      %v305 = vld [vmem:[%s268 + $0xc0] sm:$0xff]
      %v306 = vld [vmem:[%s268 + $0xc8] sm:$0xff]
      %v307 = vld [vmem:[%s268 + $0xd0] sm:$0xff]
      %v308 = vld [vmem:[%s268 + $0xd8] sm:$0xff]
      %v309 = vld [vmem:[%s268 + $0xe0] sm:$0xff]
      %v310 = vld [vmem:[%s268 + $0xe8] sm:$0xff]
      %v311 = vld [vmem:[%s268 + $0xf0] sm:$0xff]
      %v312 = vld [vmem:[%s268 + $0xf8] sm:$0xff]
      %v313 = vld [vmem:[%s268 + $0x100] sm:$0xff]
      %v314 = vpack.c.bf16 %v282, %v281
      %v315 = vpack.c.bf16 %v284, %v283
      %v316 = vpack.c.bf16 %v286, %v285
      %v317 = vpack.c.bf16 %v288, %v287
      %v318 = vpack.c.bf16 %v290, %v289
      %v319 = vpack.c.bf16 %v292, %v291
      %v320 = vpack.c.bf16 %v294, %v293
      %v321 = vpack.c.bf16 %v296, %v295
      %v322 = vpack.c.bf16 %v298, %v297
      %v323 = vpack.c.bf16 %v300, %v299
      %v324 = vpack.c.bf16 %v302, %v301
      %v325 = vpack.c.bf16 %v304, %v303
      %v326 = vpack.c.bf16 %v306, %v305
      %v327 = vpack.c.bf16 %v308, %v307
      %v328 = vpack.c.bf16 %v310, %v309
      %v329 = vpack.c.bf16 %v312, %v311
      %v330 = vpack.c.bf16 %v313, %v313
      %v348 = vunpack.c.l.b16 %v314
      %v349 = vunpack.c.h.b16 %v314
      %v350 = vunpack.c.l.b16 %v315
      %v351 = vunpack.c.h.b16 %v315
      %v352 = vunpack.c.l.b16 %v316
      %v353 = vunpack.c.h.b16 %v316
      %v354 = vunpack.c.l.b16 %v317
      %v355 = vunpack.c.h.b16 %v317
      %v356 = vunpack.c.l.b16 %v318
      %v357 = vunpack.c.h.b16 %v318
      %v358 = vunpack.c.l.b16 %v319
      %v359 = vunpack.c.h.b16 %v319
      %v360 = vunpack.c.l.b16 %v320
      %v361 = vunpack.c.h.b16 %v320
      %v362 = vunpack.c.l.b16 %v321
      %v363 = vunpack.c.h.b16 %v321
      %v364 = vunpack.c.l.b16 %v322
      %v365 = vunpack.c.h.b16 %v322
      %v366 = vunpack.c.l.b16 %v323
      %v367 = vunpack.c.h.b16 %v323
      %v368 = vunpack.c.l.b16 %v324
      %v369 = vunpack.c.h.b16 %v324
      %v370 = vunpack.c.l.b16 %v325
      %v371 = vunpack.c.h.b16 %v325
      %v372 = vunpack.c.l.b16 %v326
      %v373 = vunpack.c.h.b16 %v326
      %v374 = vunpack.c.l.b16 %v327
      %v375 = vunpack.c.h.b16 %v327
      %v376 = vunpack.c.l.b16 %v328
      %v377 = vunpack.c.h.b16 %v328
      %v378 = vunpack.c.l.b16 %v329
      %v379 = vunpack.c.h.b16 %v329
      %v380 = vunpack.c.l.b16 %v330
      %v381 = vpack.c.b16 %v348, %v348
      %v382 = vpack.c.b16 %v349, %v349
      %v383 = vpack.c.b16 %v350, %v350
      %v384 = vpack.c.b16 %v351, %v351
      %v385 = vpack.c.b16 %v352, %v352
      %v386 = vpack.c.b16 %v353, %v353
      %v387 = vpack.c.b16 %v354, %v354
      %v388 = vpack.c.b16 %v355, %v355
      %v389 = vpack.c.b16 %v356, %v356
      %v390 = vpack.c.b16 %v357, %v357
      %v391 = vpack.c.b16 %v358, %v358
      %v392 = vpack.c.b16 %v359, %v359
      %v393 = vpack.c.b16 %v360, %v360
      %v394 = vpack.c.b16 %v361, %v361
      %v395 = vpack.c.b16 %v362, %v362
      %v396 = vpack.c.b16 %v363, %v363
      %v397 = vpack.c.b16 %v364, %v364
      %v398 = vpack.c.b16 %v365, %v365
      %v399 = vpack.c.b16 %v366, %v366
      %v400 = vpack.c.b16 %v367, %v367
      %v401 = vpack.c.b16 %v368, %v368
      %v402 = vpack.c.b16 %v369, %v369
      %v403 = vpack.c.b16 %v370, %v370
      %v404 = vpack.c.b16 %v371, %v371
      %v405 = vpack.c.b16 %v372, %v372
      %v406 = vpack.c.b16 %v373, %v373
      %v407 = vpack.c.b16 %v374, %v374
      %v408 = vpack.c.b16 %v375, %v375
      %v409 = vpack.c.b16 %v376, %v376
      %v410 = vpack.c.b16 %v377, %v377
      %v411 = vpack.c.b16 %v378, %v378
      %v412 = vpack.c.b16 %v379, %v379
      %v413 = vpack.c.b16 %v380, %v380
      %vm447 = vcmask 519168
      %448 = vst.msk [vmem:[#allocation2] sm:$0xf] %vm447, %v381
      %449 = vst.msk [vmem:[#allocation2 + $0x4] sm:$0xf] %vm447, %v382
      %450 = vst.msk [vmem:[#allocation2 + $0x8] sm:$0xf] %vm447, %v383
      %451 = vst.msk [vmem:[#allocation2 + $0xc] sm:$0xf] %vm447, %v384
      %452 = vst.msk [vmem:[#allocation2 + $0x10] sm:$0xf] %vm447, %v385
      %453 = vst.msk [vmem:[#allocation2 + $0x14] sm:$0xf] %vm447, %v386
      %454 = vst.msk [vmem:[#allocation2 + $0x18] sm:$0xf] %vm447, %v387
      %455 = vst.msk [vmem:[#allocation2 + $0x1c] sm:$0xf] %vm447, %v388
      %456 = vst.msk [vmem:[#allocation2 + $0x20] sm:$0xf] %vm447, %v389
      %457 = vst.msk [vmem:[#allocation2 + $0x24] sm:$0xf] %vm447, %v390
      %458 = vst.msk [vmem:[#allocation2 + $0x28] sm:$0xf] %vm447, %v391
      %459 = vst.msk [vmem:[#allocation2 + $0x2c] sm:$0xf] %vm447, %v392
      %460 = vst.msk [vmem:[#allocation2 + $0x30] sm:$0xf] %vm447, %v393
      %461 = vst.msk [vmem:[#allocation2 + $0x34] sm:$0xf] %vm447, %v394
      %462 = vst.msk [vmem:[#allocation2 + $0x38] sm:$0xf] %vm447, %v395
      %463 = vst.msk [vmem:[#allocation2 + $0x3c] sm:$0xf] %vm447, %v396
      %464 = vst.msk [vmem:[#allocation2 + $0x40] sm:$0xf] %vm447, %v397
      %465 = vst.msk [vmem:[#allocation2 + $0x44] sm:$0xf] %vm447, %v398
      %466 = vst.msk [vmem:[#allocation2 + $0x48] sm:$0xf] %vm447, %v399
      %467 = vst.msk [vmem:[#allocation2 + $0x4c] sm:$0xf] %vm447, %v400
      %468 = vst.msk [vmem:[#allocation2 + $0x50] sm:$0xf] %vm447, %v401
      %469 = vst.msk [vmem:[#allocation2 + $0x54] sm:$0xf] %vm447, %v402
      %470 = vst.msk [vmem:[#allocation2 + $0x58] sm:$0xf] %vm447, %v403
      %471 = vst.msk [vmem:[#allocation2 + $0x5c] sm:$0xf] %vm447, %v404
      %472 = vst.msk [vmem:[#allocation2 + $0x60] sm:$0xf] %vm447, %v405
      %473 = vst.msk [vmem:[#allocation2 + $0x64] sm:$0xf] %vm447, %v406
      %474 = vst.msk [vmem:[#allocation2 + $0x68] sm:$0xf] %vm447, %v407
      %475 = vst.msk [vmem:[#allocation2 + $0x6c] sm:$0xf] %vm447, %v408
      %476 = vst.msk [vmem:[#allocation2 + $0x70] sm:$0xf] %vm447, %v409
      %477 = vst.msk [vmem:[#allocation2 + $0x74] sm:$0xf] %vm447, %v410
      %478 = vst.msk [vmem:[#allocation2 + $0x78] sm:$0xf] %vm447, %v411
      %479 = vst.msk [vmem:[#allocation2 + $0x7c] sm:$0xf] %vm447, %v412
      %480 = vst.msk [vmem:[#allocation2 + $0x80] sm:$0xf] %vm447, %v413
      %481 = vst [vmem:[#allocation3] sm:$0xff] 0.0
      %482 = vst [vmem:[#allocation3 + $0x8] sm:$0xff] 0.0
      %483 = vst [vmem:[#allocation3 + $0x10] sm:$0xff] 0.0
      %484 = vst [vmem:[#allocation3 + $0x18] sm:$0xff] 0.0
      %485 = vst [vmem:[#allocation3 + $0x20] sm:$0xff] 0.0
      %486 = vst [vmem:[#allocation3 + $0x28] sm:$0xff] 0.0
      %487 = vst [vmem:[#allocation3 + $0x30] sm:$0xff] 0.0
      %488 = vst [vmem:[#allocation3 + $0x38] sm:$0xff] 0.0
      %489 = vst [vmem:[#allocation3 + $0x40] sm:$0xff] 0.0
      %490 = vst [vmem:[#allocation3 + $0x48] sm:$0xff] 0.0
      %491 = vst [vmem:[#allocation3 + $0x50] sm:$0xff] 0.0
      %492 = vst [vmem:[#allocation3 + $0x58] sm:$0xff] 0.0
      %493 = vst [vmem:[#allocation3 + $0x60] sm:$0xff] 0.0
      %494 = vst [vmem:[#allocation3 + $0x68] sm:$0xff] 0.0
      %495 = vst [vmem:[#allocation3 + $0x70] sm:$0xff] 0.0
      %496 = vst [vmem:[#allocation3 + $0x78] sm:$0xff] 0.0
      %497 = vst [vmem:[#allocation3 + $0x80] sm:$0xff] 0.0
      %498 = vst [vmem:[#allocation3 + $0x88] sm:$0xff] 0.0
      %499 = vst [vmem:[#allocation3 + $0x90] sm:$0xff] 0.0
      %500 = vst [vmem:[#allocation3 + $0x98] sm:$0xff] 0.0
      %501 = vst [vmem:[#allocation3 + $0xa0] sm:$0xff] 0.0
      %502 = vst [vmem:[#allocation3 + $0xa8] sm:$0xff] 0.0
      %503 = vst [vmem:[#allocation3 + $0xb0] sm:$0xff] 0.0
      %504 = vst [vmem:[#allocation3 + $0xb8] sm:$0xff] 0.0
      %505 = vst [vmem:[#allocation3 + $0xc0] sm:$0xff] 0.0
      %506 = vst [vmem:[#allocation3 + $0xc8] sm:$0xff] 0.0
      %507 = vst [vmem:[#allocation3 + $0xd0] sm:$0xff] 0.0
      %508 = vst [vmem:[#allocation3 + $0xd8] sm:$0xff] 0.0
      %v509 = vld [vmem:[#allocation3] sm:$0xff]
      %v510 = vld [vmem:[#allocation3 + $0x8] sm:$0xff]
      %v511 = vld [vmem:[#allocation3 + $0x10] sm:$0xff]
      %v512 = vld [vmem:[#allocation3 + $0x18] sm:$0xff]
      %v513 = vld [vmem:[#allocation3 + $0x20] sm:$0xff]
      %v514 = vld [vmem:[#allocation3 + $0x28] sm:$0xff]
      %v515 = vld [vmem:[#allocation3 + $0x30] sm:$0xff]
      %v516 = vld [vmem:[#allocation3 + $0x38] sm:$0xff]
      %v517 = vld [vmem:[#allocation3 + $0x40] sm:$0xff]
      %v518 = vld [vmem:[#allocation3 + $0x48] sm:$0xff]
      %v519 = vld [vmem:[#allocation3 + $0x50] sm:$0xff]
      %v520 = vld [vmem:[#allocation3 + $0x58] sm:$0xff]
      %v521 = vld [vmem:[#allocation3 + $0x60] sm:$0xff]
      %v522 = vld [vmem:[#allocation3 + $0x68] sm:$0xff]
      %v523 = vld [vmem:[#allocation3 + $0x70] sm:$0xff]
      %v524 = vld [vmem:[#allocation3 + $0x78] sm:$0xff]
      %v525 = vld [vmem:[#allocation3 + $0x80] sm:$0xff]
      %v526 = vld [vmem:[#allocation3 + $0x88] sm:$0xff]
      %v527 = vld [vmem:[#allocation3 + $0x90] sm:$0xff]
      %v528 = vld [vmem:[#allocation3 + $0x98] sm:$0xff]
      %v529 = vld [vmem:[#allocation3 + $0xa0] sm:$0xff]
      %v530 = vld [vmem:[#allocation3 + $0xa8] sm:$0xff]
      %v531 = vld [vmem:[#allocation3 + $0xb0] sm:$0xff]
      %v532 = vld [vmem:[#allocation3 + $0xb8] sm:$0xff]
      %v533 = vld [vmem:[#allocation3 + $0xc0] sm:$0xff]
      %v534 = vld [vmem:[#allocation3 + $0xc8] sm:$0xff]
      %v535 = vld [vmem:[#allocation3 + $0xd0] sm:$0xff]
      %v536 = vld [vmem:[#allocation3 + $0xd8] sm:$0xff]
      %v537 = vld [vmem:[#allocation2] sm:$0xf]
      %v538 = vld [vmem:[#allocation2 + $0x4] sm:$0xf]
      %v539 = vld [vmem:[#allocation2 + $0x8] sm:$0xf]
      %v540 = vld [vmem:[#allocation2 + $0xc] sm:$0xf]
      %v541 = vld [vmem:[#allocation2 + $0x10] sm:$0xf]
      %v542 = vld [vmem:[#allocation2 + $0x14] sm:$0xf]
      %v543 = vld [vmem:[#allocation2 + $0x18] sm:$0xf]
      %v544 = vld [vmem:[#allocation2 + $0x1c] sm:$0xf]
      %v545 = vld [vmem:[#allocation2 + $0x20] sm:$0xf]
      %v546 = vld [vmem:[#allocation2 + $0x24] sm:$0xf]
      %v547 = vld [vmem:[#allocation2 + $0x28] sm:$0xf]
      %v548 = vld [vmem:[#allocation2 + $0x2c] sm:$0xf]
      %v549 = vld [vmem:[#allocation2 + $0x30] sm:$0xf]
      %v550 = vld [vmem:[#allocation2 + $0x34] sm:$0xf]
      %v551 = vld [vmem:[#allocation2 + $0x38] sm:$0xf]
      %v552 = vld [vmem:[#allocation2 + $0x3c] sm:$0xf]
      %v553 = vld [vmem:[#allocation2 + $0x40] sm:$0xf]
      %v554 = vld [vmem:[#allocation2 + $0x44] sm:$0xf]
      %v555 = vld [vmem:[#allocation2 + $0x48] sm:$0xf]
      %v556 = vld [vmem:[#allocation2 + $0x4c] sm:$0xf]
      %v557 = vld [vmem:[#allocation2 + $0x50] sm:$0xf]
      %v558 = vld [vmem:[#allocation2 + $0x54] sm:$0xf]
      %v559 = vld [vmem:[#allocation2 + $0x58] sm:$0xf]
      %v560 = vld [vmem:[#allocation2 + $0x5c] sm:$0xf]
      %v561 = vld [vmem:[#allocation2 + $0x60] sm:$0xf]
      %v562 = vld [vmem:[#allocation2 + $0x64] sm:$0xf]
      %v563 = vld [vmem:[#allocation2 + $0x68] sm:$0xf]
      %v564 = vld [vmem:[#allocation2 + $0x6c] sm:$0xf]
      %v565 = vld [vmem:[%s1] sm:$0xf]
      %v566 = vld [vmem:[%s1 + $0x4] sm:$0xf]
      %v567 = vld [vmem:[%s1 + $0x8] sm:$0xf]
      %v568 = vld [vmem:[%s1 + $0xc] sm:$0xf]
      %v569 = vld [vmem:[%s1 + $0x10] sm:$0xf]
      %v570 = vld [vmem:[%s1 + $0x14] sm:$0xf]
      %v571 = vld [vmem:[%s1 + $0x18] sm:$0xf]
      %v572 = vld [vmem:[%s1 + $0x1c] sm:$0xf]
      %v601 = vunpack.c.l.b16 %v537
      %v602 = vunpack.c.l.b16 %v538
      %v603 = vunpack.c.l.b16 %v539
      %v604 = vunpack.c.l.b16 %v540
      %v605 = vunpack.c.l.b16 %v541
      %v606 = vunpack.c.l.b16 %v542
      %v607 = vunpack.c.l.b16 %v543
      %v608 = vunpack.c.l.b16 %v544
      %v609 = vunpack.c.l.b16 %v545
      %v610 = vunpack.c.l.b16 %v546
      %v611 = vunpack.c.l.b16 %v547
      %v612 = vunpack.c.l.b16 %v548
      %v613 = vunpack.c.l.b16 %v549
      %v614 = vunpack.c.l.b16 %v550
      %v615 = vunpack.c.l.b16 %v551
      %v616 = vunpack.c.l.b16 %v552
      %v617 = vunpack.c.l.b16 %v553
      %v618 = vunpack.c.l.b16 %v554
      %v619 = vunpack.c.l.b16 %v555
      %v620 = vunpack.c.l.b16 %v556
      %v621 = vunpack.c.l.b16 %v557
      %v622 = vunpack.c.l.b16 %v558
      %v623 = vunpack.c.l.b16 %v559
      %v624 = vunpack.c.l.b16 %v560
      %v625 = vunpack.c.l.b16 %v561
      %v626 = vunpack.c.l.b16 %v562
      %v627 = vunpack.c.l.b16 %v563
      %v628 = vunpack.c.l.b16 %v564
      %v629 = vpack.c.b16 %v602, %v601
      %v630 = vpack.c.b16 %v604, %v603
      %v631 = vpack.c.b16 %v606, %v605
      %v632 = vpack.c.b16 %v608, %v607
      %v633 = vpack.c.b16 %v610, %v609
      %v634 = vpack.c.b16 %v612, %v611
      %v635 = vpack.c.b16 %v614, %v613
      %v636 = vpack.c.b16 %v616, %v615
      %v637 = vpack.c.b16 %v618, %v617
      %v638 = vpack.c.b16 %v620, %v619
      %v639 = vpack.c.b16 %v622, %v621
      %v640 = vpack.c.b16 %v624, %v623
      %v641 = vpack.c.b16 %v626, %v625
      %v642 = vpack.c.b16 %v628, %v627
      %v651 = vunpack.c.l.b16 %v565
      %v652 = vunpack.c.l.b16 %v566
      %v653 = vunpack.c.l.b16 %v567
      %v654 = vunpack.c.l.b16 %v568
      %v655 = vunpack.c.l.b16 %v569
      %v656 = vunpack.c.l.b16 %v570
      %v657 = vunpack.c.l.b16 %v571
      %v658 = vunpack.c.l.b16 %v572
      %v659 = vpack.c.b16 %v652, %v651
      %v660 = vpack.c.b16 %v654, %v653
      %v661 = vpack.c.b16 %v656, %v655
      %v662 = vpack.c.b16 %v658, %v657
      %vm667 = vcmask 523264
      %v669 = vsel %vm667, %v629, 0
      %v672 = vsel %vm667, %v630, 0
      %v675 = vsel %vm667, %v631, 0
      %v678 = vsel %vm667, %v632, 0
      %v681 = vsel %vm667, %v633, 0
      %v684 = vsel %vm667, %v634, 0
      %v687 = vsel %vm667, %v635, 0
      %v690 = vsel %vm667, %v636, 0
      %v693 = vsel %vm667, %v637, 0
      %v696 = vsel %vm667, %v638, 0
      %v699 = vsel %vm667, %v639, 0
      %v702 = vsel %vm667, %v640, 0
      %v705 = vsel %vm667, %v641, 0
      %v708 = vsel %vm667, %v642, 0
      %710 = vmatprep.subr.bf16.mxu0 0
      %711 = vmatpush1.bf16.msra.mxu0 %v659
      %712 = vmatprep.subr.bf16.mxu0 0
      %713 = vmatpush1.bf16.msra.mxu0 %v660
      %714 = vmatprep.subr.bf16.mxu0 0
      %715 = vmatpush1.bf16.msra.mxu0 %v661
      %716 = vmatprep.subr.bf16.mxu0 0
      %717 = vmatpush1.bf16.msra.mxu0 %v662
      %718 = vmatprep.subr.bf16.mxu0 0
      %719 = vmatpush1.bf16.msra.mxu0 0
      %720 = vmatprep.subr.bf16.mxu0 0
      %721 = vmatpush1.bf16.msra.mxu0 0
      %722 = vmatprep.subr.bf16.mxu0 0
      %723 = vmatpush1.bf16.msra.mxu0 0
      %724 = vmatprep.subr.bf16.mxu0 0
      %725 = vmatpush1.bf16.msra.mxu0 0
      %726 = vmatprep.subr.bf16.mxu0 0
      %727 = vmatpush1.bf16.msra.mxu0 0
      %728 = vmatprep.subr.bf16.mxu0 0
      %729 = vmatpush1.bf16.msra.mxu0 0
      %730 = vmatprep.subr.bf16.mxu0 0
      %731 = vmatpush1.bf16.msra.mxu0 0
      %732 = vmatprep.subr.bf16.mxu0 0
      %733 = vmatpush1.bf16.msra.mxu0 0
      %734 = vmatprep.subr.bf16.mxu0 0
      %735 = vmatpush1.bf16.msra.mxu0 0
      %736 = vmatprep.subr.bf16.mxu0 0
      %737 = vmatpush1.bf16.msra.mxu0 0
      %738 = vmatprep.subr.bf16.mxu0 0
      %739 = vmatpush1.bf16.msra.mxu0 0
      %740 = vmatprep.subr.bf16.mxu0 0
      %741 = vmatpush1.bf16.msra.mxu0 0
      %742 = vmatprep.mubr.bf16.mxu0 0
      %743 = vmatmul.mubr.bf16.gmra.mrb[0].mxu0 %v669
      %v744 = vpop.f32.mrb[0].mxu0
      %v745 = vadd.f32 0.0, %v744
      %v746 = vpop.f32.mrb[0].mxu0
      %v747 = vpop.f32.mrb[0].mxu0
      %v748 = vadd.f32 0.0, %v747
      %v749 = vpop.f32.mrb[0].mxu0
      %750 = vmatprep.mubr.bf16.mxu0 0
      %751 = vmatmul.mubr.bf16.gmra.mrb[0].mxu0 %v672
      %v752 = vpop.f32.mrb[0].mxu0
      %v753 = vadd.f32 0.0, %v752
      %v754 = vpop.f32.mrb[0].mxu0
      %v755 = vpop.f32.mrb[0].mxu0
      %v756 = vadd.f32 0.0, %v755
      %v757 = vpop.f32.mrb[0].mxu0
      %758 = vmatprep.mubr.bf16.mxu0 0
      %759 = vmatmul.mubr.bf16.gmra.mrb[0].mxu0 %v675
      %v760 = vpop.f32.mrb[0].mxu0
      %v761 = vadd.f32 0.0, %v760
      %v762 = vpop.f32.mrb[0].mxu0
      %v763 = vpop.f32.mrb[0].mxu0
      %v764 = vadd.f32 0.0, %v763
      %v765 = vpop.f32.mrb[0].mxu0
      %766 = vmatprep.mubr.bf16.mxu0 0
      %767 = vmatmul.mubr.bf16.gmra.mrb[0].mxu0 %v678
      %v768 = vpop.f32.mrb[0].mxu0
      %v769 = vadd.f32 0.0, %v768
      %v770 = vpop.f32.mrb[0].mxu0
      %v771 = vpop.f32.mrb[0].mxu0
      %v772 = vadd.f32 0.0, %v771
      %v773 = vpop.f32.mrb[0].mxu0
      %774 = vmatprep.mubr.bf16.mxu0 0
      %775 = vmatmul.mubr.bf16.gmra.mrb[0].mxu0 %v681
      %v776 = vpop.f32.mrb[0].mxu0
      %v777 = vadd.f32 0.0, %v776
      %v778 = vpop.f32.mrb[0].mxu0
      %v779 = vpop.f32.mrb[0].mxu0
      %v780 = vadd.f32 0.0, %v779
      %v781 = vpop.f32.mrb[0].mxu0
      %782 = vmatprep.mubr.bf16.mxu0 0
      %783 = vmatmul.mubr.bf16.gmra.mrb[0].mxu0 %v684
      %v784 = vpop.f32.mrb[0].mxu0
      %v785 = vadd.f32 0.0, %v784
      %v786 = vpop.f32.mrb[0].mxu0
      %v787 = vpop.f32.mrb[0].mxu0
      %v788 = vadd.f32 0.0, %v787
      %v789 = vpop.f32.mrb[0].mxu0
      %790 = vmatprep.mubr.bf16.mxu0 0
      %791 = vmatmul.mubr.bf16.gmra.mrb[0].mxu0 %v687
      %v792 = vpop.f32.mrb[0].mxu0
      %v793 = vadd.f32 0.0, %v792
      %v794 = vpop.f32.mrb[0].mxu0
      %v795 = vpop.f32.mrb[0].mxu0
      %v796 = vadd.f32 0.0, %v795
      %v797 = vpop.f32.mrb[0].mxu0
      %798 = vmatprep.mubr.bf16.mxu0 0
      %799 = vmatmul.mubr.bf16.gmra.mrb[0].mxu0 %v690
      %v800 = vpop.f32.mrb[0].mxu0
      %v801 = vadd.f32 0.0, %v800
      %v802 = vpop.f32.mrb[0].mxu0
      %v803 = vpop.f32.mrb[0].mxu0
      %v804 = vadd.f32 0.0, %v803
      %v805 = vpop.f32.mrb[0].mxu0
      %806 = vmatprep.mubr.bf16.mxu0 0
      %807 = vmatmul.mubr.bf16.gmra.mrb[0].mxu0 %v693
      %v808 = vpop.f32.mrb[0].mxu0
      %v809 = vadd.f32 0.0, %v808
      %v810 = vpop.f32.mrb[0].mxu0
      %v811 = vpop.f32.mrb[0].mxu0
      %v812 = vadd.f32 0.0, %v811
      %v813 = vpop.f32.mrb[0].mxu0
      %814 = vmatprep.mubr.bf16.mxu0 0
      %815 = vmatmul.mubr.bf16.gmra.mrb[0].mxu0 %v696
      %v816 = vpop.f32.mrb[0].mxu0
      %v817 = vadd.f32 0.0, %v816
      %v818 = vpop.f32.mrb[0].mxu0
      %v819 = vpop.f32.mrb[0].mxu0
      %v820 = vadd.f32 0.0, %v819
      %v821 = vpop.f32.mrb[0].mxu0
      %822 = vmatprep.mubr.bf16.mxu0 0
      %823 = vmatmul.mubr.bf16.gmra.mrb[0].mxu0 %v699
      %v824 = vpop.f32.mrb[0].mxu0
      %v825 = vadd.f32 0.0, %v824
      %v826 = vpop.f32.mrb[0].mxu0
      %v827 = vpop.f32.mrb[0].mxu0
      %v828 = vadd.f32 0.0, %v827
      %v829 = vpop.f32.mrb[0].mxu0
      %830 = vmatprep.mubr.bf16.mxu0 0
      %831 = vmatmul.mubr.bf16.gmra.mrb[0].mxu0 %v702
      %v832 = vpop.f32.mrb[0].mxu0
      %v833 = vadd.f32 0.0, %v832
      %v834 = vpop.f32.mrb[0].mxu0
      %v835 = vpop.f32.mrb[0].mxu0
      %v836 = vadd.f32 0.0, %v835
      %v837 = vpop.f32.mrb[0].mxu0
      %838 = vmatprep.mubr.bf16.mxu0 0
      %839 = vmatmul.mubr.bf16.gmra.mrb[0].mxu0 %v705
      %v840 = vpop.f32.mrb[0].mxu0
      %v841 = vadd.f32 0.0, %v840
      %v842 = vpop.f32.mrb[0].mxu0
      %v843 = vpop.f32.mrb[0].mxu0
      %v844 = vadd.f32 0.0, %v843
      %v845 = vpop.f32.mrb[0].mxu0
      %846 = vmatprep.mubr.bf16.mxu0 0
      %847 = vmatmul.mubr.bf16.gmra.mrb[0].mxu0 %v708
      %v848 = vpop.f32.mrb[0].mxu0
      %v849 = vadd.f32 0.0, %v848
      %v850 = vpop.f32.mrb[0].mxu0
      %v851 = vpop.f32.mrb[0].mxu0
      %v852 = vadd.f32 0.0, %v851
      %v853 = vpop.f32.mrb[0].mxu0
      %854 = vdwg.mxu0
      %v855 = vadd.f32 %v509, %v745
      %v856 = vadd.f32 %v510, %v748
      %v857 = vadd.f32 %v511, %v753
      %v858 = vadd.f32 %v512, %v756
      %v859 = vadd.f32 %v513, %v761
      %v860 = vadd.f32 %v514, %v764
      %v861 = vadd.f32 %v515, %v769
      %v862 = vadd.f32 %v516, %v772
      %v863 = vadd.f32 %v517, %v777
      %v864 = vadd.f32 %v518, %v780
      %v865 = vadd.f32 %v519, %v785
      %v866 = vadd.f32 %v520, %v788
      %v867 = vadd.f32 %v521, %v793
      %v868 = vadd.f32 %v522, %v796
      %v869 = vadd.f32 %v523, %v801
      %v870 = vadd.f32 %v524, %v804
      %v871 = vadd.f32 %v525, %v809
      %v872 = vadd.f32 %v526, %v812
      %v873 = vadd.f32 %v527, %v817
      %v874 = vadd.f32 %v528, %v820
      %v875 = vadd.f32 %v529, %v825
      %v876 = vadd.f32 %v530, %v828
      %v877 = vadd.f32 %v531, %v833
      %v878 = vadd.f32 %v532, %v836
      %v879 = vadd.f32 %v533, %v841
      %v880 = vadd.f32 %v534, %v844
      %v881 = vadd.f32 %v535, %v849
      %v882 = vadd.f32 %v536, %v852
      %883 = vst [vmem:[#allocation3] sm:$0xff] %v855
      %884 = vst [vmem:[#allocation3 + $0x8] sm:$0xff] %v856
      %885 = vst [vmem:[#allocation3 + $0x10] sm:$0xff] %v857
      %886 = vst [vmem:[#allocation3 + $0x18] sm:$0xff] %v858
      %887 = vst [vmem:[#allocation3 + $0x20] sm:$0xff] %v859
      %888 = vst [vmem:[#allocation3 + $0x28] sm:$0xff] %v860
      %889 = vst [vmem:[#allocation3 + $0x30] sm:$0xff] %v861
      %890 = vst [vmem:[#allocation3 + $0x38] sm:$0xff] %v862
      %891 = vst [vmem:[#allocation3 + $0x40] sm:$0xff] %v863
      %892 = vst [vmem:[#allocation3 + $0x48] sm:$0xff] %v864
      %893 = vst [vmem:[#allocation3 + $0x50] sm:$0xff] %v865
      %894 = vst [vmem:[#allocation3 + $0x58] sm:$0xff] %v866
      %895 = vst [vmem:[#allocation3 + $0x60] sm:$0xff] %v867
      %896 = vst [vmem:[#allocation3 + $0x68] sm:$0xff] %v868
      %897 = vst [vmem:[#allocation3 + $0x70] sm:$0xff] %v869
      %898 = vst [vmem:[#allocation3 + $0x78] sm:$0xff] %v870
      %899 = vst [vmem:[#allocation3 + $0x80] sm:$0xff] %v871
      %900 = vst [vmem:[#allocation3 + $0x88] sm:$0xff] %v872
      %901 = vst [vmem:[#allocation3 + $0x90] sm:$0xff] %v873
      %902 = vst [vmem:[#allocation3 + $0x98] sm:$0xff] %v874
      %903 = vst [vmem:[#allocation3 + $0xa0] sm:$0xff] %v875
      %904 = vst [vmem:[#allocation3 + $0xa8] sm:$0xff] %v876
      %905 = vst [vmem:[#allocation3 + $0xb0] sm:$0xff] %v877
      %906 = vst [vmem:[#allocation3 + $0xb8] sm:$0xff] %v878
      %907 = vst [vmem:[#allocation3 + $0xc0] sm:$0xff] %v879
      %908 = vst [vmem:[#allocation3 + $0xc8] sm:$0xff] %v880
      %909 = vst [vmem:[#allocation3 + $0xd0] sm:$0xff] %v881
      %910 = vst [vmem:[#allocation3 + $0xd8] sm:$0xff] %v882
      %v911 = vld [vmem:[#allocation3] sm:$0xff]
      %v912 = vld [vmem:[#allocation3 + $0x8] sm:$0xff]
      %v913 = vld [vmem:[#allocation3 + $0x10] sm:$0xff]
      %v914 = vld [vmem:[#allocation3 + $0x18] sm:$0xff]
      %v915 = vld [vmem:[#allocation3 + $0x20] sm:$0xff]
      %v916 = vld [vmem:[#allocation3 + $0x28] sm:$0xff]
      %v917 = vld [vmem:[#allocation3 + $0x30] sm:$0xff]
      %v918 = vld [vmem:[#allocation3 + $0x38] sm:$0xff]
      %v919 = vld [vmem:[#allocation3 + $0x40] sm:$0xff]
      %v920 = vld [vmem:[#allocation3 + $0x48] sm:$0xff]
      %v921 = vld [vmem:[#allocation3 + $0x50] sm:$0xff]
      %v922 = vld [vmem:[#allocation3 + $0x58] sm:$0xff]
      %v923 = vld [vmem:[#allocation3 + $0x60] sm:$0xff]
      %v924 = vld [vmem:[#allocation3 + $0x68] sm:$0xff]
      %v925 = vld [vmem:[#allocation3 + $0x70] sm:$0xff]
      %v926 = vld [vmem:[#allocation3 + $0x78] sm:$0xff]
      %v927 = vld [vmem:[#allocation3 + $0x80] sm:$0xff]
      %v928 = vld [vmem:[#allocation3 + $0x88] sm:$0xff]
      %v929 = vld [vmem:[#allocation3 + $0x90] sm:$0xff]
      %v930 = vld [vmem:[#allocation3 + $0x98] sm:$0xff]
      %v931 = vld [vmem:[#allocation3 + $0xa0] sm:$0xff]
      %v932 = vld [vmem:[#allocation3 + $0xa8] sm:$0xff]
      %v933 = vld [vmem:[#allocation3 + $0xb0] sm:$0xff]
      %v934 = vld [vmem:[#allocation3 + $0xb8] sm:$0xff]
      %v935 = vld [vmem:[#allocation3 + $0xc0] sm:$0xff]
      %v936 = vld [vmem:[#allocation3 + $0xc8] sm:$0xff]
      %v937 = vld [vmem:[#allocation3 + $0xd0] sm:$0xff]
      %v938 = vld [vmem:[#allocation3 + $0xd8] sm:$0xff]
      %v939 = vld [vmem:[#allocation2] sm:$0xf]
      %v940 = vld [vmem:[#allocation2 + $0x4] sm:$0xf]
      %v941 = vld [vmem:[#allocation2 + $0x8] sm:$0xf]
      %v942 = vld [vmem:[#allocation2 + $0xc] sm:$0xf]
      %v943 = vld [vmem:[#allocation2 + $0x10] sm:$0xf]
      %v944 = vld [vmem:[#allocation2 + $0x14] sm:$0xf]
      %v945 = vld [vmem:[#allocation2 + $0x18] sm:$0xf]
      %v946 = vld [vmem:[#allocation2 + $0x1c] sm:$0xf]
      %v947 = vld [vmem:[#allocation2 + $0x20] sm:$0xf]
      %v948 = vld [vmem:[#allocation2 + $0x24] sm:$0xf]
      %v949 = vld [vmem:[#allocation2 + $0x28] sm:$0xf]
      %v950 = vld [vmem:[#allocation2 + $0x2c] sm:$0xf]
      %v951 = vld [vmem:[#allocation2 + $0x30] sm:$0xf]
      %v952 = vld [vmem:[#allocation2 + $0x34] sm:$0xf]
      %v953 = vld [vmem:[#allocation2 + $0x38] sm:$0xf]
      %v954 = vld [vmem:[#allocation2 + $0x3c] sm:$0xf]
      %v955 = vld [vmem:[#allocation2 + $0x40] sm:$0xf]
      %v956 = vld [vmem:[#allocation2 + $0x44] sm:$0xf]
      %v957 = vld [vmem:[#allocation2 + $0x48] sm:$0xf]
      %v958 = vld [vmem:[#allocation2 + $0x4c] sm:$0xf]
      %v959 = vld [vmem:[#allocation2 + $0x50] sm:$0xf]
      %v960 = vld [vmem:[#allocation2 + $0x54] sm:$0xf]
      %v961 = vld [vmem:[#allocation2 + $0x58] sm:$0xf]
      %v962 = vld [vmem:[#allocation2 + $0x5c] sm:$0xf]
      %v963 = vld [vmem:[#allocation2 + $0x60] sm:$0xf]
      %v964 = vld [vmem:[#allocation2 + $0x64] sm:$0xf]
      %v965 = vld [vmem:[#allocation2 + $0x68] sm:$0xf]
      %v966 = vld [vmem:[#allocation2 + $0x6c] sm:$0xf]
      %v967 = vld [vmem:[#allocation2 + $0x70] sm:$0x1]
      %s968 = scalar_lea.vmem %s1, 32
      %v969 = vld [vmem:[%s968] sm:$0xf]
      %v970 = vld [vmem:[%s968 + $0x4] sm:$0xf]
      %v971 = vld [vmem:[%s968 + $0x8] sm:$0xf]
      %v972 = vld [vmem:[%s968 + $0xc] sm:$0xf]
      %v973 = vld [vmem:[%s968 + $0x10] sm:$0xf]
      %v974 = vld [vmem:[%s968 + $0x14] sm:$0xf]
      %v975 = vld [vmem:[%s968 + $0x18] sm:$0xf]
      %v976 = vld [vmem:[%s968 + $0x1c] sm:$0xf]
      %v1006 = vunpack.c.l.b16 %v939
      %v1007 = vunpack.c.l.b16 %v940
      %v1008 = vunpack.c.l.b16 %v941
      %v1009 = vunpack.c.l.b16 %v942
      %v1010 = vunpack.c.l.b16 %v943
      %v1011 = vunpack.c.l.b16 %v944
      %v1012 = vunpack.c.l.b16 %v945
      %v1013 = vunpack.c.l.b16 %v946
      %v1014 = vunpack.c.l.b16 %v947
      %v1015 = vunpack.c.l.b16 %v948
      %v1016 = vunpack.c.l.b16 %v949
      %v1017 = vunpack.c.l.b16 %v950
      %v1018 = vunpack.c.l.b16 %v951
      %v1019 = vunpack.c.l.b16 %v952
      %v1020 = vunpack.c.l.b16 %v953
      %v1021 = vunpack.c.l.b16 %v954
      %v1022 = vunpack.c.l.b16 %v955
      %v1023 = vunpack.c.l.b16 %v956
      %v1024 = vunpack.c.l.b16 %v957
      %v1025 = vunpack.c.l.b16 %v958
      %v1026 = vunpack.c.l.b16 %v959
      %v1027 = vunpack.c.l.b16 %v960
      %v1028 = vunpack.c.l.b16 %v961
      %v1029 = vunpack.c.l.b16 %v962
      %v1030 = vunpack.c.l.b16 %v963
      %v1031 = vunpack.c.l.b16 %v964
      %v1032 = vunpack.c.l.b16 %v965
      %v1033 = vunpack.c.l.b16 %v966
      %v1034 = vunpack.c.l.b16 %v967
      %v1035 = vpack.c.b16 %v1007, %v1006
      %v1036 = vpack.c.b16 %v1009, %v1008
      %v1037 = vpack.c.b16 %v1011, %v1010
      %v1038 = vpack.c.b16 %v1013, %v1012
      %v1039 = vpack.c.b16 %v1015, %v1014
      %v1040 = vpack.c.b16 %v1017, %v1016
      %v1041 = vpack.c.b16 %v1019, %v1018
      %v1042 = vpack.c.b16 %v1021, %v1020
      %v1043 = vpack.c.b16 %v1023, %v1022
      %v1044 = vpack.c.b16 %v1025, %v1024
      %v1045 = vpack.c.b16 %v1027, %v1026
      %v1046 = vpack.c.b16 %v1029, %v1028
      %v1047 = vpack.c.b16 %v1031, %v1030
      %v1048 = vpack.c.b16 %v1033, %v1032
      %v1049 = vpack.c.b16 %v1034, %v1034
      %vm1050 = vsmask.f32 7424
      %v1052 = vshrl.u32 %v1035, 16
      %v1054 = vshll.u32 %v1035, 16
      %v1056 = vrot.slane %v1054, 1
      %v1057 = vor.u32 %v1052, %v1056
      %v1059 = vshll.u32 %v1036, 16
      %v1061 = vrot.slane %v1059, 1
      %v1062 = vsel %vm1050, %v1057, %v1061
      %v1063 = vshrl.u32 %v1036, 16
      %v1065 = vor.u32 %v1063, %v1061
      %v1067 = vshll.u32 %v1037, 16
      %v1069 = vrot.slane %v1067, 1
      %v1070 = vsel %vm1050, %v1065, %v1069
      %v1071 = vshrl.u32 %v1037, 16
      %v1073 = vor.u32 %v1071, %v1069
      %v1075 = vshll.u32 %v1038, 16
      %v1077 = vrot.slane %v1075, 1
      %v1078 = vsel %vm1050, %v1073, %v1077
      %v1079 = vshrl.u32 %v1038, 16
      %v1081 = vor.u32 %v1079, %v1077
      %v1083 = vshll.u32 %v1039, 16
      %v1085 = vrot.slane %v1083, 1
      %v1086 = vsel %vm1050, %v1081, %v1085
      %v1087 = vshrl.u32 %v1039, 16
      %v1089 = vor.u32 %v1087, %v1085
      %v1091 = vshll.u32 %v1040, 16
      %v1093 = vrot.slane %v1091, 1
      %v1094 = vsel %vm1050, %v1089, %v1093
      %v1095 = vshrl.u32 %v1040, 16
      %v1097 = vor.u32 %v1095, %v1093
      %v1099 = vshll.u32 %v1041, 16
      %v1101 = vrot.slane %v1099, 1
      %v1102 = vsel %vm1050, %v1097, %v1101
      %v1103 = vshrl.u32 %v1041, 16
      %v1105 = vor.u32 %v1103, %v1101
      %v1107 = vshll.u32 %v1042, 16
      %v1109 = vrot.slane %v1107, 1
      %v1110 = vsel %vm1050, %v1105, %v1109
      %v1111 = vshrl.u32 %v1042, 16
      %v1113 = vor.u32 %v1111, %v1109
      %v1115 = vshll.u32 %v1043, 16
      %v1117 = vrot.slane %v1115, 1
      %v1118 = vsel %vm1050, %v1113, %v1117
      %v1119 = vshrl.u32 %v1043, 16
      %v1121 = vor.u32 %v1119, %v1117
      %v1123 = vshll.u32 %v1044, 16
      %v1125 = vrot.slane %v1123, 1
      %v1126 = vsel %vm1050, %v1121, %v1125
      %v1127 = vshrl.u32 %v1044, 16
      %v1129 = vor.u32 %v1127, %v1125
      %v1131 = vshll.u32 %v1045, 16
      %v1133 = vrot.slane %v1131, 1
      %v1134 = vsel %vm1050, %v1129, %v1133
      %v1135 = vshrl.u32 %v1045, 16
      %v1137 = vor.u32 %v1135, %v1133
      %v1139 = vshll.u32 %v1046, 16
      %v1141 = vrot.slane %v1139, 1
      %v1142 = vsel %vm1050, %v1137, %v1141
      %v1143 = vshrl.u32 %v1046, 16
      %v1145 = vor.u32 %v1143, %v1141
      %v1147 = vshll.u32 %v1047, 16
      %v1149 = vrot.slane %v1147, 1
      %v1150 = vsel %vm1050, %v1145, %v1149
      %v1151 = vshrl.u32 %v1047, 16
      %v1153 = vor.u32 %v1151, %v1149
      %v1155 = vshll.u32 %v1048, 16
      %v1157 = vrot.slane %v1155, 1
      %v1158 = vsel %vm1050, %v1153, %v1157
      %v1159 = vshrl.u32 %v1048, 16
      %v1161 = vor.u32 %v1159, %v1157
      %v1163 = vshll.u32 %v1049, 16
      %v1165 = vrot.slane %v1163, 1
      %v1166 = vsel %vm1050, %v1161, %v1165
      %v1175 = vunpack.c.l.b16 %v969
      %v1176 = vunpack.c.l.b16 %v970
      %v1177 = vunpack.c.l.b16 %v971
      %v1178 = vunpack.c.l.b16 %v972
      %v1179 = vunpack.c.l.b16 %v973
      %v1180 = vunpack.c.l.b16 %v974
      %v1181 = vunpack.c.l.b16 %v975
      %v1182 = vunpack.c.l.b16 %v976
      %v1183 = vpack.c.b16 %v1176, %v1175
      %v1184 = vpack.c.b16 %v1178, %v1177
      %v1185 = vpack.c.b16 %v1180, %v1179
      %v1186 = vpack.c.b16 %v1182, %v1181
      %v1192 = vsel %vm667, %v1062, 0
      %v1195 = vsel %vm667, %v1070, 0
      %v1198 = vsel %vm667, %v1078, 0
      %v1201 = vsel %vm667, %v1086, 0
      %v1204 = vsel %vm667, %v1094, 0
      %v1207 = vsel %vm667, %v1102, 0
      %v1210 = vsel %vm667, %v1110, 0
      %v1213 = vsel %vm667, %v1118, 0
      %v1216 = vsel %vm667, %v1126, 0
      %v1219 = vsel %vm667, %v1134, 0
      %v1222 = vsel %vm667, %v1142, 0
      %v1225 = vsel %vm667, %v1150, 0
      %v1228 = vsel %vm667, %v1158, 0
      %v1231 = vsel %vm667, %v1166, 0
      %1233 = vmatprep.subr.bf16.mxu0 0
      %1234 = vmatpush1.bf16.msra.mxu0 %v1183
      %1235 = vmatprep.subr.bf16.mxu0 0
      %1236 = vmatpush1.bf16.msra.mxu0 %v1184
      %1237 = vmatprep.subr.bf16.mxu0 0
      %1238 = vmatpush1.bf16.msra.mxu0 %v1185
      %1239 = vmatprep.subr.bf16.mxu0 0
      %1240 = vmatpush1.bf16.msra.mxu0 %v1186
      %1241 = vmatprep.subr.bf16.mxu0 0
      %1242 = vmatpush1.bf16.msra.mxu0 0
      %1243 = vmatprep.subr.bf16.mxu0 0
      %1244 = vmatpush1.bf16.msra.mxu0 0
      %1245 = vmatprep.subr.bf16.mxu0 0
      %1246 = vmatpush1.bf16.msra.mxu0 0
      %1247 = vmatprep.subr.bf16.mxu0 0
      %1248 = vmatpush1.bf16.msra.mxu0 0
      %1249 = vmatprep.subr.bf16.mxu0 0
      %1250 = vmatpush1.bf16.msra.mxu0 0
      %1251 = vmatprep.subr.bf16.mxu0 0
      %1252 = vmatpush1.bf16.msra.mxu0 0
      %1253 = vmatprep.subr.bf16.mxu0 0
      %1254 = vmatpush1.bf16.msra.mxu0 0
      %1255 = vmatprep.subr.bf16.mxu0 0
      %1256 = vmatpush1.bf16.msra.mxu0 0
      %1257 = vmatprep.subr.bf16.mxu0 0
      %1258 = vmatpush1.bf16.msra.mxu0 0
      %1259 = vmatprep.subr.bf16.mxu0 0
      %1260 = vmatpush1.bf16.msra.mxu0 0
      %1261 = vmatprep.subr.bf16.mxu0 0
      %1262 = vmatpush1.bf16.msra.mxu0 0
      %1263 = vmatprep.subr.bf16.mxu0 0
      %1264 = vmatpush1.bf16.msra.mxu0 0
      %1265 = vmatprep.mubr.bf16.mxu0 0
      %1266 = vmatmul.mubr.bf16.gmra.mrb[0].mxu0 %v1192
      %v1267 = vpop.f32.mrb[0].mxu0
      %v1268 = vadd.f32 0.0, %v1267
      %v1269 = vpop.f32.mrb[0].mxu0
      %v1270 = vpop.f32.mrb[0].mxu0
      %v1271 = vadd.f32 0.0, %v1270
      %v1272 = vpop.f32.mrb[0].mxu0
      %1273 = vmatprep.mubr.bf16.mxu0 0
      %1274 = vmatmul.mubr.bf16.gmra.mrb[0].mxu0 %v1195
      %v1275 = vpop.f32.mrb[0].mxu0
      %v1276 = vadd.f32 0.0, %v1275
      %v1277 = vpop.f32.mrb[0].mxu0
      %v1278 = vpop.f32.mrb[0].mxu0
      %v1279 = vadd.f32 0.0, %v1278
      %v1280 = vpop.f32.mrb[0].mxu0
      %1281 = vmatprep.mubr.bf16.mxu0 0
      %1282 = vmatmul.mubr.bf16.gmra.mrb[0].mxu0 %v1198
      %v1283 = vpop.f32.mrb[0].mxu0
      %v1284 = vadd.f32 0.0, %v1283
      %v1285 = vpop.f32.mrb[0].mxu0
      %v1286 = vpop.f32.mrb[0].mxu0
      %v1287 = vadd.f32 0.0, %v1286
      %v1288 = vpop.f32.mrb[0].mxu0
      %1289 = vmatprep.mubr.bf16.mxu0 0
      %1290 = vmatmul.mubr.bf16.gmra.mrb[0].mxu0 %v1201
      %v1291 = vpop.f32.mrb[0].mxu0
      %v1292 = vadd.f32 0.0, %v1291
      %v1293 = vpop.f32.mrb[0].mxu0
      %v1294 = vpop.f32.mrb[0].mxu0
      %v1295 = vadd.f32 0.0, %v1294
      %v1296 = vpop.f32.mrb[0].mxu0
      %1297 = vmatprep.mubr.bf16.mxu0 0
      %1298 = vmatmul.mubr.bf16.gmra.mrb[0].mxu0 %v1204
      %v1299 = vpop.f32.mrb[0].mxu0
      %v1300 = vadd.f32 0.0, %v1299
      %v1301 = vpop.f32.mrb[0].mxu0
      %v1302 = vpop.f32.mrb[0].mxu0
      %v1303 = vadd.f32 0.0, %v1302
      %v1304 = vpop.f32.mrb[0].mxu0
      %1305 = vmatprep.mubr.bf16.mxu0 0
      %1306 = vmatmul.mubr.bf16.gmra.mrb[0].mxu0 %v1207
      %v1307 = vpop.f32.mrb[0].mxu0
      %v1308 = vadd.f32 0.0, %v1307
      %v1309 = vpop.f32.mrb[0].mxu0
      %v1310 = vpop.f32.mrb[0].mxu0
      %v1311 = vadd.f32 0.0, %v1310
      %v1312 = vpop.f32.mrb[0].mxu0
      %1313 = vmatprep.mubr.bf16.mxu0 0
      %1314 = vmatmul.mubr.bf16.gmra.mrb[0].mxu0 %v1210
      %v1315 = vpop.f32.mrb[0].mxu0
      %v1316 = vadd.f32 0.0, %v1315
      %v1317 = vpop.f32.mrb[0].mxu0
      %v1318 = vpop.f32.mrb[0].mxu0
      %v1319 = vadd.f32 0.0, %v1318
      %v1320 = vpop.f32.mrb[0].mxu0
      %1321 = vmatprep.mubr.bf16.mxu0 0
      %1322 = vmatmul.mubr.bf16.gmra.mrb[0].mxu0 %v1213
      %v1323 = vpop.f32.mrb[0].mxu0
      %v1324 = vadd.f32 0.0, %v1323
      %v1325 = vpop.f32.mrb[0].mxu0
      %v1326 = vpop.f32.mrb[0].mxu0
      %v1327 = vadd.f32 0.0, %v1326
      %v1328 = vpop.f32.mrb[0].mxu0
      %1329 = vmatprep.mubr.bf16.mxu0 0
      %1330 = vmatmul.mubr.bf16.gmra.mrb[0].mxu0 %v1216
      %v1331 = vpop.f32.mrb[0].mxu0
      %v1332 = vadd.f32 0.0, %v1331
      %v1333 = vpop.f32.mrb[0].mxu0
      %v1334 = vpop.f32.mrb[0].mxu0
      %v1335 = vadd.f32 0.0, %v1334
      %v1336 = vpop.f32.mrb[0].mxu0
      %1337 = vmatprep.mubr.bf16.mxu0 0
      %1338 = vmatmul.mubr.bf16.gmra.mrb[0].mxu0 %v1219
      %v1339 = vpop.f32.mrb[0].mxu0
      %v1340 = vadd.f32 0.0, %v1339
      %v1341 = vpop.f32.mrb[0].mxu0
      %v1342 = vpop.f32.mrb[0].mxu0
      %v1343 = vadd.f32 0.0, %v1342
      %v1344 = vpop.f32.mrb[0].mxu0
      %1345 = vmatprep.mubr.bf16.mxu0 0
      %1346 = vmatmul.mubr.bf16.gmra.mrb[0].mxu0 %v1222
      %v1347 = vpop.f32.mrb[0].mxu0
      %v1348 = vadd.f32 0.0, %v1347
      %v1349 = vpop.f32.mrb[0].mxu0
      %v1350 = vpop.f32.mrb[0].mxu0
      %v1351 = vadd.f32 0.0, %v1350
      %v1352 = vpop.f32.mrb[0].mxu0
      %1353 = vmatprep.mubr.bf16.mxu0 0
      %1354 = vmatmul.mubr.bf16.gmra.mrb[0].mxu0 %v1225
      %v1355 = vpop.f32.mrb[0].mxu0
      %v1356 = vadd.f32 0.0, %v1355
      %v1357 = vpop.f32.mrb[0].mxu0
      %v1358 = vpop.f32.mrb[0].mxu0
      %v1359 = vadd.f32 0.0, %v1358
      %v1360 = vpop.f32.mrb[0].mxu0
      %1361 = vmatprep.mubr.bf16.mxu0 0
      %1362 = vmatmul.mubr.bf16.gmra.mrb[0].mxu0 %v1228
      %v1363 = vpop.f32.mrb[0].mxu0
      %v1364 = vadd.f32 0.0, %v1363
      %v1365 = vpop.f32.mrb[0].mxu0
      %v1366 = vpop.f32.mrb[0].mxu0
      %v1367 = vadd.f32 0.0, %v1366
      %v1368 = vpop.f32.mrb[0].mxu0
      %1369 = vmatprep.mubr.bf16.mxu0 0
      %1370 = vmatmul.mubr.bf16.gmra.mrb[0].mxu0 %v1231
      %v1371 = vpop.f32.mrb[0].mxu0
      %v1372 = vadd.f32 0.0, %v1371
      %v1373 = vpop.f32.mrb[0].mxu0
      %v1374 = vpop.f32.mrb[0].mxu0
      %v1375 = vadd.f32 0.0, %v1374
      %v1376 = vpop.f32.mrb[0].mxu0
      %1377 = vdwg.mxu0
      %v1378 = vadd.f32 %v911, %v1268
      %v1379 = vadd.f32 %v912, %v1271
      %v1380 = vadd.f32 %v913, %v1276
      %v1381 = vadd.f32 %v914, %v1279
      %v1382 = vadd.f32 %v915, %v1284
      %v1383 = vadd.f32 %v916, %v1287
      %v1384 = vadd.f32 %v917, %v1292
      %v1385 = vadd.f32 %v918, %v1295
      %v1386 = vadd.f32 %v919, %v1300
      %v1387 = vadd.f32 %v920, %v1303
      %v1388 = vadd.f32 %v921, %v1308
      %v1389 = vadd.f32 %v922, %v1311
      %v1390 = vadd.f32 %v923, %v1316
      %v1391 = vadd.f32 %v924, %v1319
      %v1392 = vadd.f32 %v925, %v1324
      %v1393 = vadd.f32 %v926, %v1327
      %v1394 = vadd.f32 %v927, %v1332
      %v1395 = vadd.f32 %v928, %v1335
      %v1396 = vadd.f32 %v929, %v1340
      %v1397 = vadd.f32 %v930, %v1343
      %v1398 = vadd.f32 %v931, %v1348
      %v1399 = vadd.f32 %v932, %v1351
      %v1400 = vadd.f32 %v933, %v1356
      %v1401 = vadd.f32 %v934, %v1359
      %v1402 = vadd.f32 %v935, %v1364
      %v1403 = vadd.f32 %v936, %v1367
      %v1404 = vadd.f32 %v937, %v1372
      %v1405 = vadd.f32 %v938, %v1375
      %1406 = vst [vmem:[#allocation3] sm:$0xff] %v1378
      %1407 = vst [vmem:[#allocation3 + $0x8] sm:$0xff] %v1379
      %1408 = vst [vmem:[#allocation3 + $0x10] sm:$0xff] %v1380
      %1409 = vst [vmem:[#allocation3 + $0x18] sm:$0xff] %v1381
      %1410 = vst [vmem:[#allocation3 + $0x20] sm:$0xff] %v1382
      %1411 = vst [vmem:[#allocation3 + $0x28] sm:$0xff] %v1383
      %1412 = vst [vmem:[#allocation3 + $0x30] sm:$0xff] %v1384
      %1413 = vst [vmem:[#allocation3 + $0x38] sm:$0xff] %v1385
      %1414 = vst [vmem:[#allocation3 + $0x40] sm:$0xff] %v1386
      %1415 = vst [vmem:[#allocation3 + $0x48] sm:$0xff] %v1387
      %1416 = vst [vmem:[#allocation3 + $0x50] sm:$0xff] %v1388
      %1417 = vst [vmem:[#allocation3 + $0x58] sm:$0xff] %v1389
      %1418 = vst [vmem:[#allocation3 + $0x60] sm:$0xff] %v1390
      %1419 = vst [vmem:[#allocation3 + $0x68] sm:$0xff] %v1391
      %1420 = vst [vmem:[#allocation3 + $0x70] sm:$0xff] %v1392
      %1421 = vst [vmem:[#allocation3 + $0x78] sm:$0xff] %v1393
      %1422 = vst [vmem:[#allocation3 + $0x80] sm:$0xff] %v1394
      %1423 = vst [vmem:[#allocation3 + $0x88] sm:$0xff] %v1395
      %1424 = vst [vmem:[#allocation3 + $0x90] sm:$0xff] %v1396
      %1425 = vst [vmem:[#allocation3 + $0x98] sm:$0xff] %v1397
      %1426 = vst [vmem:[#allocation3 + $0xa0] sm:$0xff] %v1398
      %1427 = vst [vmem:[#allocation3 + $0xa8] sm:$0xff] %v1399
      %1428 = vst [vmem:[#allocation3 + $0xb0] sm:$0xff] %v1400
      %1429 = vst [vmem:[#allocation3 + $0xb8] sm:$0xff] %v1401
      %1430 = vst [vmem:[#allocation3 + $0xc0] sm:$0xff] %v1402
      %1431 = vst [vmem:[#allocation3 + $0xc8] sm:$0xff] %v1403
      %1432 = vst [vmem:[#allocation3 + $0xd0] sm:$0xff] %v1404
      %1433 = vst [vmem:[#allocation3 + $0xd8] sm:$0xff] %v1405
      %v1434 = vld [vmem:[#allocation3] sm:$0xff]
      %v1435 = vld [vmem:[#allocation3 + $0x8] sm:$0xff]
      %v1436 = vld [vmem:[#allocation3 + $0x10] sm:$0xff]
      %v1437 = vld [vmem:[#allocation3 + $0x18] sm:$0xff]
      %v1438 = vld [vmem:[#allocation3 + $0x20] sm:$0xff]
      %v1439 = vld [vmem:[#allocation3 + $0x28] sm:$0xff]
      %v1440 = vld [vmem:[#allocation3 + $0x30] sm:$0xff]
      %v1441 = vld [vmem:[#allocation3 + $0x38] sm:$0xff]
      %v1442 = vld [vmem:[#allocation3 + $0x40] sm:$0xff]
      %v1443 = vld [vmem:[#allocation3 + $0x48] sm:$0xff]
      %v1444 = vld [vmem:[#allocation3 + $0x50] sm:$0xff]
      %v1445 = vld [vmem:[#allocation3 + $0x58] sm:$0xff]
      %v1446 = vld [vmem:[#allocation3 + $0x60] sm:$0xff]
      %v1447 = vld [vmem:[#allocation3 + $0x68] sm:$0xff]
      %v1448 = vld [vmem:[#allocation3 + $0x70] sm:$0xff]
      %v1449 = vld [vmem:[#allocation3 + $0x78] sm:$0xff]
      %v1450 = vld [vmem:[#allocation3 + $0x80] sm:$0xff]
      %v1451 = vld [vmem:[#allocation3 + $0x88] sm:$0xff]
      %v1452 = vld [vmem:[#allocation3 + $0x90] sm:$0xff]
      %v1453 = vld [vmem:[#allocation3 + $0x98] sm:$0xff]
      %v1454 = vld [vmem:[#allocation3 + $0xa0] sm:$0xff]
      %v1455 = vld [vmem:[#allocation3 + $0xa8] sm:$0xff]
      %v1456 = vld [vmem:[#allocation3 + $0xb0] sm:$0xff]
      %v1457 = vld [vmem:[#allocation3 + $0xb8] sm:$0xff]
      %v1458 = vld [vmem:[#allocation3 + $0xc0] sm:$0xff]
      %v1459 = vld [vmem:[#allocation3 + $0xc8] sm:$0xff]
      %v1460 = vld [vmem:[#allocation3 + $0xd0] sm:$0xff]
      %v1461 = vld [vmem:[#allocation3 + $0xd8] sm:$0xff]
      %v1462 = vld [vmem:[#allocation2] sm:$0xe]
      %v1463 = vld [vmem:[#allocation2 + $0x4] sm:$0xf]
      %v1464 = vld [vmem:[#allocation2 + $0x8] sm:$0xf]
      %v1465 = vld [vmem:[#allocation2 + $0xc] sm:$0xf]
      %v1466 = vld [vmem:[#allocation2 + $0x10] sm:$0xf]
      %v1467 = vld [vmem:[#allocation2 + $0x14] sm:$0xf]
      %v1468 = vld [vmem:[#allocation2 + $0x18] sm:$0xf]
      %v1469 = vld [vmem:[#allocation2 + $0x1c] sm:$0xf]
      %v1470 = vld [vmem:[#allocation2 + $0x20] sm:$0xf]
      %v1471 = vld [vmem:[#allocation2 + $0x24] sm:$0xf]
      %v1472 = vld [vmem:[#allocation2 + $0x28] sm:$0xf]
      %v1473 = vld [vmem:[#allocation2 + $0x2c] sm:$0xf]
      %v1474 = vld [vmem:[#allocation2 + $0x30] sm:$0xf]
      %v1475 = vld [vmem:[#allocation2 + $0x34] sm:$0xf]
      %v1476 = vld [vmem:[#allocation2 + $0x38] sm:$0xf]
      %v1477 = vld [vmem:[#allocation2 + $0x3c] sm:$0xf]
      %v1478 = vld [vmem:[#allocation2 + $0x40] sm:$0xf]
      %v1479 = vld [vmem:[#allocation2 + $0x44] sm:$0xf]
      %v1480 = vld [vmem:[#allocation2 + $0x48] sm:$0xf]
      %v1481 = vld [vmem:[#allocation2 + $0x4c] sm:$0xf]
      %v1482 = vld [vmem:[#allocation2 + $0x50] sm:$0xf]
      %v1483 = vld [vmem:[#allocation2 + $0x54] sm:$0xf]
      %v1484 = vld [vmem:[#allocation2 + $0x58] sm:$0xf]
      %v1485 = vld [vmem:[#allocation2 + $0x5c] sm:$0xf]
      %v1486 = vld [vmem:[#allocation2 + $0x60] sm:$0xf]
      %v1487 = vld [vmem:[#allocation2 + $0x64] sm:$0xf]
      %v1488 = vld [vmem:[#allocation2 + $0x68] sm:$0xf]
      %v1489 = vld [vmem:[#allocation2 + $0x6c] sm:$0xf]
      %v1490 = vld [vmem:[#allocation2 + $0x70] sm:$0x1]
      %s1491 = scalar_lea.vmem %s1, 64
      %v1492 = vld [vmem:[%s1491] sm:$0xf]
      %v1493 = vld [vmem:[%s1491 + $0x4] sm:$0xf]
      %v1494 = vld [vmem:[%s1491 + $0x8] sm:$0xf]
      %v1495 = vld [vmem:[%s1491 + $0xc] sm:$0xf]
      %v1496 = vld [vmem:[%s1491 + $0x10] sm:$0xf]
      %v1497 = vld [vmem:[%s1491 + $0x14] sm:$0xf]
      %v1498 = vld [vmem:[%s1491 + $0x18] sm:$0xf]
      %v1499 = vld [vmem:[%s1491 + $0x1c] sm:$0xf]
      %v1529 = vunpack.c.l.b16 %v1462
      %v1530 = vunpack.c.l.b16 %v1463
      %v1531 = vunpack.c.l.b16 %v1464
      %v1532 = vunpack.c.l.b16 %v1465
      %v1533 = vunpack.c.l.b16 %v1466
      %v1534 = vunpack.c.l.b16 %v1467
      %v1535 = vunpack.c.l.b16 %v1468
      %v1536 = vunpack.c.l.b16 %v1469
      %v1537 = vunpack.c.l.b16 %v1470
      %v1538 = vunpack.c.l.b16 %v1471
      %v1539 = vunpack.c.l.b16 %v1472
      %v1540 = vunpack.c.l.b16 %v1473
      %v1541 = vunpack.c.l.b16 %v1474
      %v1542 = vunpack.c.l.b16 %v1475
      %v1543 = vunpack.c.l.b16 %v1476
      %v1544 = vunpack.c.l.b16 %v1477
      %v1545 = vunpack.c.l.b16 %v1478
      %v1546 = vunpack.c.l.b16 %v1479
      %v1547 = vunpack.c.l.b16 %v1480
      %v1548 = vunpack.c.l.b16 %v1481
      %v1549 = vunpack.c.l.b16 %v1482
      %v1550 = vunpack.c.l.b16 %v1483
      %v1551 = vunpack.c.l.b16 %v1484
      %v1552 = vunpack.c.l.b16 %v1485
      %v1553 = vunpack.c.l.b16 %v1486
      %v1554 = vunpack.c.l.b16 %v1487
      %v1555 = vunpack.c.l.b16 %v1488
      %v1556 = vunpack.c.l.b16 %v1489
      %v1557 = vunpack.c.l.b16 %v1490
      %v1558 = vpack.c.b16 %v1530, %v1529
      %v1559 = vpack.c.b16 %v1532, %v1531
      %v1560 = vpack.c.b16 %v1534, %v1533
      %v1561 = vpack.c.b16 %v1536, %v1535
      %v1562 = vpack.c.b16 %v1538, %v1537
      %v1563 = vpack.c.b16 %v1540, %v1539
      %v1564 = vpack.c.b16 %v1542, %v1541
      %v1565 = vpack.c.b16 %v1544, %v1543
      %v1566 = vpack.c.b16 %v1546, %v1545
      %v1567 = vpack.c.b16 %v1548, %v1547
      %v1568 = vpack.c.b16 %v1550, %v1549
      %v1569 = vpack.c.b16 %v1552, %v1551
      %v1570 = vpack.c.b16 %v1554, %v1553
      %v1571 = vpack.c.b16 %v1556, %v1555
      %v1572 = vpack.c.b16 %v1557, %v1557
      %vm1573 = vcmask 1046528
      %v1574 = vrot.slane %v1558, 1
      %v1575 = vrot.slane %v1559, 1
      %v1576 = vsel %vm1573, %v1574, %v1575
      %v1577 = vrot.slane %v1560, 1
      %v1578 = vsel %vm1573, %v1575, %v1577
      %v1579 = vrot.slane %v1561, 1
      %v1580 = vsel %vm1573, %v1577, %v1579
      %v1581 = vrot.slane %v1562, 1
      %v1582 = vsel %vm1573, %v1579, %v1581
      %v1583 = vrot.slane %v1563, 1
      %v1584 = vsel %vm1573, %v1581, %v1583
      %v1585 = vrot.slane %v1564, 1
      %v1586 = vsel %vm1573, %v1583, %v1585
      %v1587 = vrot.slane %v1565, 1
      %v1588 = vsel %vm1573, %v1585, %v1587
      %v1589 = vrot.slane %v1566, 1
      %v1590 = vsel %vm1573, %v1587, %v1589
      %v1591 = vrot.slane %v1567, 1
      %v1592 = vsel %vm1573, %v1589, %v1591
      %v1593 = vrot.slane %v1568, 1
      %v1594 = vsel %vm1573, %v1591, %v1593
      %v1595 = vrot.slane %v1569, 1
      %v1596 = vsel %vm1573, %v1593, %v1595
      %v1597 = vrot.slane %v1570, 1
      %v1598 = vsel %vm1573, %v1595, %v1597
      %v1599 = vrot.slane %v1571, 1
      %v1600 = vsel %vm1573, %v1597, %v1599
      %v1601 = vrot.slane %v1572, 1
      %v1602 = vsel %vm1573, %v1599, %v1601
      %v1611 = vunpack.c.l.b16 %v1492
      %v1612 = vunpack.c.l.b16 %v1493
      %v1613 = vunpack.c.l.b16 %v1494
      %v1614 = vunpack.c.l.b16 %v1495
      %v1615 = vunpack.c.l.b16 %v1496
      %v1616 = vunpack.c.l.b16 %v1497
      %v1617 = vunpack.c.l.b16 %v1498
      %v1618 = vunpack.c.l.b16 %v1499
      %v1619 = vpack.c.b16 %v1612, %v1611
      %v1620 = vpack.c.b16 %v1614, %v1613
      %v1621 = vpack.c.b16 %v1616, %v1615
      %v1622 = vpack.c.b16 %v1618, %v1617
      %v1628 = vsel %vm667, %v1576, 0
      %v1631 = vsel %vm667, %v1578, 0
      %v1634 = vsel %vm667, %v1580, 0
      %v1637 = vsel %vm667, %v1582, 0
      %v1640 = vsel %vm667, %v1584, 0
      %v1643 = vsel %vm667, %v1586, 0
      %v1646 = vsel %vm667, %v1588, 0
      %v1649 = vsel %vm667, %v1590, 0
      %v1652 = vsel %vm667, %v1592, 0
      %v1655 = vsel %vm667, %v1594, 0
      %v1658 = vsel %vm667, %v1596, 0
      %v1661 = vsel %vm667, %v1598, 0
      %v1664 = vsel %vm667, %v1600, 0
      %v1667 = vsel %vm667, %v1602, 0
      %1669 = vmatprep.subr.bf16.mxu0 0
      %1670 = vmatpush1.bf16.msra.mxu0 %v1619
      %1671 = vmatprep.subr.bf16.mxu0 0
      %1672 = vmatpush1.bf16.msra.mxu0 %v1620
      %1673 = vmatprep.subr.bf16.mxu0 0
      %1674 = vmatpush1.bf16.msra.mxu0 %v1621
      %1675 = vmatprep.subr.bf16.mxu0 0
      %1676 = vmatpush1.bf16.msra.mxu0 %v1622
      %1677 = vmatprep.subr.bf16.mxu0 0
      %1678 = vmatpush1.bf16.msra.mxu0 0
      %1679 = vmatprep.subr.bf16.mxu0 0
      %1680 = vmatpush1.bf16.msra.mxu0 0
      %1681 = vmatprep.subr.bf16.mxu0 0
      %1682 = vmatpush1.bf16.msra.mxu0 0
      %1683 = vmatprep.subr.bf16.mxu0 0
      %1684 = vmatpush1.bf16.msra.mxu0 0
      %1685 = vmatprep.subr.bf16.mxu0 0
      %1686 = vmatpush1.bf16.msra.mxu0 0
      %1687 = vmatprep.subr.bf16.mxu0 0
      %1688 = vmatpush1.bf16.msra.mxu0 0
      %1689 = vmatprep.subr.bf16.mxu0 0
      %1690 = vmatpush1.bf16.msra.mxu0 0
      %1691 = vmatprep.subr.bf16.mxu0 0
      %1692 = vmatpush1.bf16.msra.mxu0 0
      %1693 = vmatprep.subr.bf16.mxu0 0
      %1694 = vmatpush1.bf16.msra.mxu0 0
      %1695 = vmatprep.subr.bf16.mxu0 0
      %1696 = vmatpush1.bf16.msra.mxu0 0
      %1697 = vmatprep.subr.bf16.mxu0 0
      %1698 = vmatpush1.bf16.msra.mxu0 0
      %1699 = vmatprep.subr.bf16.mxu0 0
      %1700 = vmatpush1.bf16.msra.mxu0 0
      %1701 = vmatprep.mubr.bf16.mxu0 0
      %1702 = vmatmul.mubr.bf16.gmra.mrb[0].mxu0 %v1628
      %v1703 = vpop.f32.mrb[0].mxu0
      %v1704 = vadd.f32 0.0, %v1703
      %v1705 = vpop.f32.mrb[0].mxu0
      %v1706 = vpop.f32.mrb[0].mxu0
      %v1707 = vadd.f32 0.0, %v1706
      %v1708 = vpop.f32.mrb[0].mxu0
      %1709 = vmatprep.mubr.bf16.mxu0 0
      %1710 = vmatmul.mubr.bf16.gmra.mrb[0].mxu0 %v1631
      %v1711 = vpop.f32.mrb[0].mxu0
      %v1712 = vadd.f32 0.0, %v1711
      %v1713 = vpop.f32.mrb[0].mxu0
      %v1714 = vpop.f32.mrb[0].mxu0
      %v1715 = vadd.f32 0.0, %v1714
      %v1716 = vpop.f32.mrb[0].mxu0
      %1717 = vmatprep.mubr.bf16.mxu0 0
      %1718 = vmatmul.mubr.bf16.gmra.mrb[0].mxu0 %v1634
      %v1719 = vpop.f32.mrb[0].mxu0
      %v1720 = vadd.f32 0.0, %v1719
      %v1721 = vpop.f32.mrb[0].mxu0
      %v1722 = vpop.f32.mrb[0].mxu0
      %v1723 = vadd.f32 0.0, %v1722
      %v1724 = vpop.f32.mrb[0].mxu0
      %1725 = vmatprep.mubr.bf16.mxu0 0
      %1726 = vmatmul.mubr.bf16.gmra.mrb[0].mxu0 %v1637
      %v1727 = vpop.f32.mrb[0].mxu0
      %v1728 = vadd.f32 0.0, %v1727
      %v1729 = vpop.f32.mrb[0].mxu0
      %v1730 = vpop.f32.mrb[0].mxu0
      %v1731 = vadd.f32 0.0, %v1730
      %v1732 = vpop.f32.mrb[0].mxu0
      %1733 = vmatprep.mubr.bf16.mxu0 0
      %1734 = vmatmul.mubr.bf16.gmra.mrb[0].mxu0 %v1640
      %v1735 = vpop.f32.mrb[0].mxu0
      %v1736 = vadd.f32 0.0, %v1735
      %v1737 = vpop.f32.mrb[0].mxu0
      %v1738 = vpop.f32.mrb[0].mxu0
      %v1739 = vadd.f32 0.0, %v1738
      %v1740 = vpop.f32.mrb[0].mxu0
      %1741 = vmatprep.mubr.bf16.mxu0 0
      %1742 = vmatmul.mubr.bf16.gmra.mrb[0].mxu0 %v1643
      %v1743 = vpop.f32.mrb[0].mxu0
      %v1744 = vadd.f32 0.0, %v1743
      %v1745 = vpop.f32.mrb[0].mxu0
      %v1746 = vpop.f32.mrb[0].mxu0
      %v1747 = vadd.f32 0.0, %v1746
      %v1748 = vpop.f32.mrb[0].mxu0
      %1749 = vmatprep.mubr.bf16.mxu0 0
      %1750 = vmatmul.mubr.bf16.gmra.mrb[0].mxu0 %v1646
      %v1751 = vpop.f32.mrb[0].mxu0
      %v1752 = vadd.f32 0.0, %v1751
      %v1753 = vpop.f32.mrb[0].mxu0
      %v1754 = vpop.f32.mrb[0].mxu0
      %v1755 = vadd.f32 0.0, %v1754
      %v1756 = vpop.f32.mrb[0].mxu0
      %1757 = vmatprep.mubr.bf16.mxu0 0
      %1758 = vmatmul.mubr.bf16.gmra.mrb[0].mxu0 %v1649
      %v1759 = vpop.f32.mrb[0].mxu0
      %v1760 = vadd.f32 0.0, %v1759
      %v1761 = vpop.f32.mrb[0].mxu0
      %v1762 = vpop.f32.mrb[0].mxu0
      %v1763 = vadd.f32 0.0, %v1762
      %v1764 = vpop.f32.mrb[0].mxu0
      %1765 = vmatprep.mubr.bf16.mxu0 0
      %1766 = vmatmul.mubr.bf16.gmra.mrb[0].mxu0 %v1652
      %v1767 = vpop.f32.mrb[0].mxu0
      %v1768 = vadd.f32 0.0, %v1767
      %v1769 = vpop.f32.mrb[0].mxu0
      %v1770 = vpop.f32.mrb[0].mxu0
      %v1771 = vadd.f32 0.0, %v1770
      %v1772 = vpop.f32.mrb[0].mxu0
      %1773 = vmatprep.mubr.bf16.mxu0 0
      %1774 = vmatmul.mubr.bf16.gmra.mrb[0].mxu0 %v1655
      %v1775 = vpop.f32.mrb[0].mxu0
      %v1776 = vadd.f32 0.0, %v1775
      %v1777 = vpop.f32.mrb[0].mxu0
      %v1778 = vpop.f32.mrb[0].mxu0
      %v1779 = vadd.f32 0.0, %v1778
      %v1780 = vpop.f32.mrb[0].mxu0
      %1781 = vmatprep.mubr.bf16.mxu0 0
      %1782 = vmatmul.mubr.bf16.gmra.mrb[0].mxu0 %v1658
      %v1783 = vpop.f32.mrb[0].mxu0
      %v1784 = vadd.f32 0.0, %v1783
      %v1785 = vpop.f32.mrb[0].mxu0
      %v1786 = vpop.f32.mrb[0].mxu0
      %v1787 = vadd.f32 0.0, %v1786
      %v1788 = vpop.f32.mrb[0].mxu0
      %1789 = vmatprep.mubr.bf16.mxu0 0
      %1790 = vmatmul.mubr.bf16.gmra.mrb[0].mxu0 %v1661
      %v1791 = vpop.f32.mrb[0].mxu0
      %v1792 = vadd.f32 0.0, %v1791
      %v1793 = vpop.f32.mrb[0].mxu0
      %v1794 = vpop.f32.mrb[0].mxu0
      %v1795 = vadd.f32 0.0, %v1794
      %v1796 = vpop.f32.mrb[0].mxu0
      %1797 = vmatprep.mubr.bf16.mxu0 0
      %1798 = vmatmul.mubr.bf16.gmra.mrb[0].mxu0 %v1664
      %v1799 = vpop.f32.mrb[0].mxu0
      %v1800 = vadd.f32 0.0, %v1799
      %v1801 = vpop.f32.mrb[0].mxu0
      %v1802 = vpop.f32.mrb[0].mxu0
      %v1803 = vadd.f32 0.0, %v1802
      %v1804 = vpop.f32.mrb[0].mxu0
      %1805 = vmatprep.mubr.bf16.mxu0 0
      %1806 = vmatmul.mubr.bf16.gmra.mrb[0].mxu0 %v1667
      %v1807 = vpop.f32.mrb[0].mxu0
      %v1808 = vadd.f32 0.0, %v1807
      %v1809 = vpop.f32.mrb[0].mxu0
      %v1810 = vpop.f32.mrb[0].mxu0
      %v1811 = vadd.f32 0.0, %v1810
      %v1812 = vpop.f32.mrb[0].mxu0
      %1813 = vdwg.mxu0
      %v1814 = vadd.f32 %v1434, %v1704
      %v1815 = vadd.f32 %v1435, %v1707
      %v1816 = vadd.f32 %v1436, %v1712
      %v1817 = vadd.f32 %v1437, %v1715
      %v1818 = vadd.f32 %v1438, %v1720
      %v1819 = vadd.f32 %v1439, %v1723
      %v1820 = vadd.f32 %v1440, %v1728
      %v1821 = vadd.f32 %v1441, %v1731
      %v1822 = vadd.f32 %v1442, %v1736
      %v1823 = vadd.f32 %v1443, %v1739
      %v1824 = vadd.f32 %v1444, %v1744
      %v1825 = vadd.f32 %v1445, %v1747
      %v1826 = vadd.f32 %v1446, %v1752
      %v1827 = vadd.f32 %v1447, %v1755
      %v1828 = vadd.f32 %v1448, %v1760
      %v1829 = vadd.f32 %v1449, %v1763
      %v1830 = vadd.f32 %v1450, %v1768
      %v1831 = vadd.f32 %v1451, %v1771
      %v1832 = vadd.f32 %v1452, %v1776
      %v1833 = vadd.f32 %v1453, %v1779
      %v1834 = vadd.f32 %v1454, %v1784
      %v1835 = vadd.f32 %v1455, %v1787
      %v1836 = vadd.f32 %v1456, %v1792
      %v1837 = vadd.f32 %v1457, %v1795
      %v1838 = vadd.f32 %v1458, %v1800
      %v1839 = vadd.f32 %v1459, %v1803
      %v1840 = vadd.f32 %v1460, %v1808
      %v1841 = vadd.f32 %v1461, %v1811
      %1842 = vst [vmem:[#allocation3] sm:$0xff] %v1814
      %1843 = vst [vmem:[#allocation3 + $0x8] sm:$0xff] %v1815
      %1844 = vst [vmem:[#allocation3 + $0x10] sm:$0xff] %v1816
      %1845 = vst [vmem:[#allocation3 + $0x18] sm:$0xff] %v1817
      %1846 = vst [vmem:[#allocation3 + $0x20] sm:$0xff] %v1818
      %1847 = vst [vmem:[#allocation3 + $0x28] sm:$0xff] %v1819
      %1848 = vst [vmem:[#allocation3 + $0x30] sm:$0xff] %v1820
      %1849 = vst [vmem:[#allocation3 + $0x38] sm:$0xff] %v1821
      %1850 = vst [vmem:[#allocation3 + $0x40] sm:$0xff] %v1822
      %1851 = vst [vmem:[#allocation3 + $0x48] sm:$0xff] %v1823
      %1852 = vst [vmem:[#allocation3 + $0x50] sm:$0xff] %v1824
      %1853 = vst [vmem:[#allocation3 + $0x58] sm:$0xff] %v1825
      %1854 = vst [vmem:[#allocation3 + $0x60] sm:$0xff] %v1826
      %1855 = vst [vmem:[#allocation3 + $0x68] sm:$0xff] %v1827
      %1856 = vst [vmem:[#allocation3 + $0x70] sm:$0xff] %v1828
      %1857 = vst [vmem:[#allocation3 + $0x78] sm:$0xff] %v1829
      %1858 = vst [vmem:[#allocation3 + $0x80] sm:$0xff] %v1830
      %1859 = vst [vmem:[#allocation3 + $0x88] sm:$0xff] %v1831
      %1860 = vst [vmem:[#allocation3 + $0x90] sm:$0xff] %v1832
      %1861 = vst [vmem:[#allocation3 + $0x98] sm:$0xff] %v1833
      %1862 = vst [vmem:[#allocation3 + $0xa0] sm:$0xff] %v1834
      %1863 = vst [vmem:[#allocation3 + $0xa8] sm:$0xff] %v1835
      %1864 = vst [vmem:[#allocation3 + $0xb0] sm:$0xff] %v1836
      %1865 = vst [vmem:[#allocation3 + $0xb8] sm:$0xff] %v1837
      %1866 = vst [vmem:[#allocation3 + $0xc0] sm:$0xff] %v1838
      %1867 = vst [vmem:[#allocation3 + $0xc8] sm:$0xff] %v1839
      %1868 = vst [vmem:[#allocation3 + $0xd0] sm:$0xff] %v1840
      %1869 = vst [vmem:[#allocation3 + $0xd8] sm:$0xff] %v1841
      %v1870 = vld [vmem:[#allocation3] sm:$0xff]
      %v1871 = vld [vmem:[#allocation3 + $0x8] sm:$0xff]
      %v1872 = vld [vmem:[#allocation3 + $0x10] sm:$0xff]
      %v1873 = vld [vmem:[#allocation3 + $0x18] sm:$0xff]
      %v1874 = vld [vmem:[#allocation3 + $0x20] sm:$0xff]
      %v1875 = vld [vmem:[#allocation3 + $0x28] sm:$0xff]
      %v1876 = vld [vmem:[#allocation3 + $0x30] sm:$0xff]
      %v1877 = vld [vmem:[#allocation3 + $0x38] sm:$0xff]
      %v1878 = vld [vmem:[#allocation3 + $0x40] sm:$0xff]
      %v1879 = vld [vmem:[#allocation3 + $0x48] sm:$0xff]
      %v1880 = vld [vmem:[#allocation3 + $0x50] sm:$0xff]
      %v1881 = vld [vmem:[#allocation3 + $0x58] sm:$0xff]
      %v1882 = vld [vmem:[#allocation3 + $0x60] sm:$0xff]
      %v1883 = vld [vmem:[#allocation3 + $0x68] sm:$0xff]
      %v1884 = vld [vmem:[#allocation3 + $0x70] sm:$0xff]
      %v1885 = vld [vmem:[#allocation3 + $0x78] sm:$0xff]
      %v1886 = vld [vmem:[#allocation3 + $0x80] sm:$0xff]
      %v1887 = vld [vmem:[#allocation3 + $0x88] sm:$0xff]
      %v1888 = vld [vmem:[#allocation3 + $0x90] sm:$0xff]
      %v1889 = vld [vmem:[#allocation3 + $0x98] sm:$0xff]
      %v1890 = vld [vmem:[#allocation3 + $0xa0] sm:$0xff]
      %v1891 = vld [vmem:[#allocation3 + $0xa8] sm:$0xff]
      %v1892 = vld [vmem:[#allocation3 + $0xb0] sm:$0xff]
      %v1893 = vld [vmem:[#allocation3 + $0xb8] sm:$0xff]
      %v1894 = vld [vmem:[#allocation3 + $0xc0] sm:$0xff]
      %v1895 = vld [vmem:[#allocation3 + $0xc8] sm:$0xff]
      %v1896 = vld [vmem:[#allocation3 + $0xd0] sm:$0xff]
      %v1897 = vld [vmem:[#allocation3 + $0xd8] sm:$0xff]
      %v1898 = vld [vmem:[#allocation2 + $0x8] sm:$0xf]
      %v1899 = vld [vmem:[#allocation2 + $0xc] sm:$0xf]
      %v1900 = vld [vmem:[#allocation2 + $0x10] sm:$0xf]
      %v1901 = vld [vmem:[#allocation2 + $0x14] sm:$0xf]
      %v1902 = vld [vmem:[#allocation2 + $0x18] sm:$0xf]
      %v1903 = vld [vmem:[#allocation2 + $0x1c] sm:$0xf]
      %v1904 = vld [vmem:[#allocation2 + $0x20] sm:$0xf]
      %v1905 = vld [vmem:[#allocation2 + $0x24] sm:$0xf]
      %v1906 = vld [vmem:[#allocation2 + $0x28] sm:$0xf]
      %v1907 = vld [vmem:[#allocation2 + $0x2c] sm:$0xf]
      %v1908 = vld [vmem:[#allocation2 + $0x30] sm:$0xf]
      %v1909 = vld [vmem:[#allocation2 + $0x34] sm:$0xf]
      %v1910 = vld [vmem:[#allocation2 + $0x38] sm:$0xf]
      %v1911 = vld [vmem:[#allocation2 + $0x3c] sm:$0xf]
      %v1912 = vld [vmem:[#allocation2 + $0x40] sm:$0xf]
      %v1913 = vld [vmem:[#allocation2 + $0x44] sm:$0xf]
      %v1914 = vld [vmem:[#allocation2 + $0x48] sm:$0xf]
      %v1915 = vld [vmem:[#allocation2 + $0x4c] sm:$0xf]
      %v1916 = vld [vmem:[#allocation2 + $0x50] sm:$0xf]
      %v1917 = vld [vmem:[#allocation2 + $0x54] sm:$0xf]
      %v1918 = vld [vmem:[#allocation2 + $0x58] sm:$0xf]
      %v1919 = vld [vmem:[#allocation2 + $0x5c] sm:$0xf]
      %v1920 = vld [vmem:[#allocation2 + $0x60] sm:$0xf]
      %v1921 = vld [vmem:[#allocation2 + $0x64] sm:$0xf]
      %v1922 = vld [vmem:[#allocation2 + $0x68] sm:$0xf]
      %v1923 = vld [vmem:[#allocation2 + $0x6c] sm:$0xf]
      %v1924 = vld [vmem:[#allocation2 + $0x70] sm:$0xf]
      %v1925 = vld [vmem:[#allocation2 + $0x74] sm:$0xf]
      %s1926 = scalar_lea.vmem %s1, 96
      %v1927 = vld [vmem:[%s1926] sm:$0xf]
      %v1928 = vld [vmem:[%s1926 + $0x4] sm:$0xf]
      %v1929 = vld [vmem:[%s1926 + $0x8] sm:$0xf]
      %v1930 = vld [vmem:[%s1926 + $0xc] sm:$0xf]
      %v1931 = vld [vmem:[%s1926 + $0x10] sm:$0xf]
      %v1932 = vld [vmem:[%s1926 + $0x14] sm:$0xf]
      %v1933 = vld [vmem:[%s1926 + $0x18] sm:$0xf]
      %v1934 = vld [vmem:[%s1926 + $0x1c] sm:$0xf]
      %v1963 = vunpack.c.l.b16 %v1898
      %v1964 = vunpack.c.l.b16 %v1899
      %v1965 = vunpack.c.l.b16 %v1900
      %v1966 = vunpack.c.l.b16 %v1901
      %v1967 = vunpack.c.l.b16 %v1902
      %v1968 = vunpack.c.l.b16 %v1903
      %v1969 = vunpack.c.l.b16 %v1904
      %v1970 = vunpack.c.l.b16 %v1905
      %v1971 = vunpack.c.l.b16 %v1906
      %v1972 = vunpack.c.l.b16 %v1907
      %v1973 = vunpack.c.l.b16 %v1908
      %v1974 = vunpack.c.l.b16 %v1909
      %v1975 = vunpack.c.l.b16 %v1910
      %v1976 = vunpack.c.l.b16 %v1911
      %v1977 = vunpack.c.l.b16 %v1912
      %v1978 = vunpack.c.l.b16 %v1913
      %v1979 = vunpack.c.l.b16 %v1914
      %v1980 = vunpack.c.l.b16 %v1915
      %v1981 = vunpack.c.l.b16 %v1916
      %v1982 = vunpack.c.l.b16 %v1917
      %v1983 = vunpack.c.l.b16 %v1918
      %v1984 = vunpack.c.l.b16 %v1919
      %v1985 = vunpack.c.l.b16 %v1920
      %v1986 = vunpack.c.l.b16 %v1921
      %v1987 = vunpack.c.l.b16 %v1922
      %v1988 = vunpack.c.l.b16 %v1923
      %v1989 = vunpack.c.l.b16 %v1924
      %v1990 = vunpack.c.l.b16 %v1925
      %v1991 = vpack.c.b16 %v1964, %v1963
      %v1992 = vpack.c.b16 %v1966, %v1965
      %v1993 = vpack.c.b16 %v1968, %v1967
      %v1994 = vpack.c.b16 %v1970, %v1969
      %v1995 = vpack.c.b16 %v1972, %v1971
      %v1996 = vpack.c.b16 %v1974, %v1973
      %v1997 = vpack.c.b16 %v1976, %v1975
      %v1998 = vpack.c.b16 %v1978, %v1977
      %v1999 = vpack.c.b16 %v1980, %v1979
      %v2000 = vpack.c.b16 %v1982, %v1981
      %v2001 = vpack.c.b16 %v1984, %v1983
      %v2002 = vpack.c.b16 %v1986, %v1985
      %v2003 = vpack.c.b16 %v1988, %v1987
      %v2004 = vpack.c.b16 %v1990, %v1989
      %v2013 = vunpack.c.l.b16 %v1927
      %v2014 = vunpack.c.l.b16 %v1928
      %v2015 = vunpack.c.l.b16 %v1929
      %v2016 = vunpack.c.l.b16 %v1930
      %v2017 = vunpack.c.l.b16 %v1931
      %v2018 = vunpack.c.l.b16 %v1932
      %v2019 = vunpack.c.l.b16 %v1933
      %v2020 = vunpack.c.l.b16 %v1934
      %v2021 = vpack.c.b16 %v2014, %v2013
      %v2022 = vpack.c.b16 %v2016, %v2015
      %v2023 = vpack.c.b16 %v2018, %v2017
      %v2024 = vpack.c.b16 %v2020, %v2019
      %v2030 = vsel %vm667, %v1991, 0
      %v2033 = vsel %vm667, %v1992, 0
      %v2036 = vsel %vm667, %v1993, 0
      %v2039 = vsel %vm667, %v1994, 0
      %v2042 = vsel %vm667, %v1995, 0
      %v2045 = vsel %vm667, %v1996, 0
      %v2048 = vsel %vm667, %v1997, 0
      %v2051 = vsel %vm667, %v1998, 0
      %v2054 = vsel %vm667, %v1999, 0
      %v2057 = vsel %vm667, %v2000, 0
      %v2060 = vsel %vm667, %v2001, 0
      %v2063 = vsel %vm667, %v2002, 0
      %v2066 = vsel %vm667, %v2003, 0
      %v2069 = vsel %vm667, %v2004, 0
      %2071 = vmatprep.subr.bf16.mxu0 0
      %2072 = vmatpush1.bf16.msra.mxu0 %v2021
      %2073 = vmatprep.subr.bf16.mxu0 0
      %2074 = vmatpush1.bf16.msra.mxu0 %v2022
      %2075 = vmatprep.subr.bf16.mxu0 0
      %2076 = vmatpush1.bf16.msra.mxu0 %v2023
      %2077 = vmatprep.subr.bf16.mxu0 0
      %2078 = vmatpush1.bf16.msra.mxu0 %v2024
      %2079 = vmatprep.subr.bf16.mxu0 0
      %2080 = vmatpush1.bf16.msra.mxu0 0
      %2081 = vmatprep.subr.bf16.mxu0 0
      %2082 = vmatpush1.bf16.msra.mxu0 0
      %2083 = vmatprep.subr.bf16.mxu0 0
      %2084 = vmatpush1.bf16.msra.mxu0 0
      %2085 = vmatprep.subr.bf16.mxu0 0
      %2086 = vmatpush1.bf16.msra.mxu0 0
      %2087 = vmatprep.subr.bf16.mxu0 0
      %2088 = vmatpush1.bf16.msra.mxu0 0
      %2089 = vmatprep.subr.bf16.mxu0 0
      %2090 = vmatpush1.bf16.msra.mxu0 0
      %2091 = vmatprep.subr.bf16.mxu0 0
      %2092 = vmatpush1.bf16.msra.mxu0 0
      %2093 = vmatprep.subr.bf16.mxu0 0
      %2094 = vmatpush1.bf16.msra.mxu0 0
      %2095 = vmatprep.subr.bf16.mxu0 0
      %2096 = vmatpush1.bf16.msra.mxu0 0
      %2097 = vmatprep.subr.bf16.mxu0 0
      %2098 = vmatpush1.bf16.msra.mxu0 0
      %2099 = vmatprep.subr.bf16.mxu0 0
      %2100 = vmatpush1.bf16.msra.mxu0 0
      %2101 = vmatprep.subr.bf16.mxu0 0
      %2102 = vmatpush1.bf16.msra.mxu0 0
      %2103 = vmatprep.mubr.bf16.mxu0 0
      %2104 = vmatmul.mubr.bf16.gmra.mrb[0].mxu0 %v2030
      %v2105 = vpop.f32.mrb[0].mxu0
      %v2106 = vadd.f32 0.0, %v2105
      %v2107 = vpop.f32.mrb[0].mxu0
      %v2108 = vpop.f32.mrb[0].mxu0
      %v2109 = vadd.f32 0.0, %v2108
      %v2110 = vpop.f32.mrb[0].mxu0
      %2111 = vmatprep.mubr.bf16.mxu0 0
      %2112 = vmatmul.mubr.bf16.gmra.mrb[0].mxu0 %v2033
      %v2113 = vpop.f32.mrb[0].mxu0
      %v2114 = vadd.f32 0.0, %v2113
      %v2115 = vpop.f32.mrb[0].mxu0
      %v2116 = vpop.f32.mrb[0].mxu0
      %v2117 = vadd.f32 0.0, %v2116
      %v2118 = vpop.f32.mrb[0].mxu0
      %2119 = vmatprep.mubr.bf16.mxu0 0
      %2120 = vmatmul.mubr.bf16.gmra.mrb[0].mxu0 %v2036
      %v2121 = vpop.f32.mrb[0].mxu0
      %v2122 = vadd.f32 0.0, %v2121
      %v2123 = vpop.f32.mrb[0].mxu0
      %v2124 = vpop.f32.mrb[0].mxu0
      %v2125 = vadd.f32 0.0, %v2124
      %v2126 = vpop.f32.mrb[0].mxu0
      %2127 = vmatprep.mubr.bf16.mxu0 0
      %2128 = vmatmul.mubr.bf16.gmra.mrb[0].mxu0 %v2039
      %v2129 = vpop.f32.mrb[0].mxu0
      %v2130 = vadd.f32 0.0, %v2129
      %v2131 = vpop.f32.mrb[0].mxu0
      %v2132 = vpop.f32.mrb[0].mxu0
      %v2133 = vadd.f32 0.0, %v2132
      %v2134 = vpop.f32.mrb[0].mxu0
      %2135 = vmatprep.mubr.bf16.mxu0 0
      %2136 = vmatmul.mubr.bf16.gmra.mrb[0].mxu0 %v2042
      %v2137 = vpop.f32.mrb[0].mxu0
      %v2138 = vadd.f32 0.0, %v2137
      %v2139 = vpop.f32.mrb[0].mxu0
      %v2140 = vpop.f32.mrb[0].mxu0
      %v2141 = vadd.f32 0.0, %v2140
      %v2142 = vpop.f32.mrb[0].mxu0
      %2143 = vmatprep.mubr.bf16.mxu0 0
      %2144 = vmatmul.mubr.bf16.gmra.mrb[0].mxu0 %v2045
      %v2145 = vpop.f32.mrb[0].mxu0
      %v2146 = vadd.f32 0.0, %v2145
      %v2147 = vpop.f32.mrb[0].mxu0
      %v2148 = vpop.f32.mrb[0].mxu0
      %v2149 = vadd.f32 0.0, %v2148
      %v2150 = vpop.f32.mrb[0].mxu0
      %2151 = vmatprep.mubr.bf16.mxu0 0
      %2152 = vmatmul.mubr.bf16.gmra.mrb[0].mxu0 %v2048
      %v2153 = vpop.f32.mrb[0].mxu0
      %v2154 = vadd.f32 0.0, %v2153
      %v2155 = vpop.f32.mrb[0].mxu0
      %v2156 = vpop.f32.mrb[0].mxu0
      %v2157 = vadd.f32 0.0, %v2156
      %v2158 = vpop.f32.mrb[0].mxu0
      %2159 = vmatprep.mubr.bf16.mxu0 0
      %2160 = vmatmul.mubr.bf16.gmra.mrb[0].mxu0 %v2051
      %v2161 = vpop.f32.mrb[0].mxu0
      %v2162 = vadd.f32 0.0, %v2161
      %v2163 = vpop.f32.mrb[0].mxu0
      %v2164 = vpop.f32.mrb[0].mxu0
      %v2165 = vadd.f32 0.0, %v2164
      %v2166 = vpop.f32.mrb[0].mxu0
      %2167 = vmatprep.mubr.bf16.mxu0 0
      %2168 = vmatmul.mubr.bf16.gmra.mrb[0].mxu0 %v2054
      %v2169 = vpop.f32.mrb[0].mxu0
      %v2170 = vadd.f32 0.0, %v2169
      %v2171 = vpop.f32.mrb[0].mxu0
      %v2172 = vpop.f32.mrb[0].mxu0
      %v2173 = vadd.f32 0.0, %v2172
      %v2174 = vpop.f32.mrb[0].mxu0
      %2175 = vmatprep.mubr.bf16.mxu0 0
      %2176 = vmatmul.mubr.bf16.gmra.mrb[0].mxu0 %v2057
      %v2177 = vpop.f32.mrb[0].mxu0
      %v2178 = vadd.f32 0.0, %v2177
      %v2179 = vpop.f32.mrb[0].mxu0
      %v2180 = vpop.f32.mrb[0].mxu0
      %v2181 = vadd.f32 0.0, %v2180
      %v2182 = vpop.f32.mrb[0].mxu0
      %2183 = vmatprep.mubr.bf16.mxu0 0
      %2184 = vmatmul.mubr.bf16.gmra.mrb[0].mxu0 %v2060
      %v2185 = vpop.f32.mrb[0].mxu0
      %v2186 = vadd.f32 0.0, %v2185
      %v2187 = vpop.f32.mrb[0].mxu0
      %v2188 = vpop.f32.mrb[0].mxu0
      %v2189 = vadd.f32 0.0, %v2188
      %v2190 = vpop.f32.mrb[0].mxu0
      %2191 = vmatprep.mubr.bf16.mxu0 0
      %2192 = vmatmul.mubr.bf16.gmra.mrb[0].mxu0 %v2063
      %v2193 = vpop.f32.mrb[0].mxu0
      %v2194 = vadd.f32 0.0, %v2193
      %v2195 = vpop.f32.mrb[0].mxu0
      %v2196 = vpop.f32.mrb[0].mxu0
      %v2197 = vadd.f32 0.0, %v2196
      %v2198 = vpop.f32.mrb[0].mxu0
      %2199 = vmatprep.mubr.bf16.mxu0 0
      %2200 = vmatmul.mubr.bf16.gmra.mrb[0].mxu0 %v2066
      %v2201 = vpop.f32.mrb[0].mxu0
      %v2202 = vadd.f32 0.0, %v2201
      %v2203 = vpop.f32.mrb[0].mxu0
      %v2204 = vpop.f32.mrb[0].mxu0
      %v2205 = vadd.f32 0.0, %v2204
      %v2206 = vpop.f32.mrb[0].mxu0
      %2207 = vmatprep.mubr.bf16.mxu0 0
      %2208 = vmatmul.mubr.bf16.gmra.mrb[0].mxu0 %v2069
      %v2209 = vpop.f32.mrb[0].mxu0
      %v2210 = vadd.f32 0.0, %v2209
      %v2211 = vpop.f32.mrb[0].mxu0
      %v2212 = vpop.f32.mrb[0].mxu0
      %v2213 = vadd.f32 0.0, %v2212
      %v2214 = vpop.f32.mrb[0].mxu0
      %2215 = vdwg.mxu0
      %v2216 = vadd.f32 %v1870, %v2106
      %v2217 = vadd.f32 %v1871, %v2109
      %v2218 = vadd.f32 %v1872, %v2114
      %v2219 = vadd.f32 %v1873, %v2117
      %v2220 = vadd.f32 %v1874, %v2122
      %v2221 = vadd.f32 %v1875, %v2125
      %v2222 = vadd.f32 %v1876, %v2130
      %v2223 = vadd.f32 %v1877, %v2133
      %v2224 = vadd.f32 %v1878, %v2138
      %v2225 = vadd.f32 %v1879, %v2141
      %v2226 = vadd.f32 %v1880, %v2146
      %v2227 = vadd.f32 %v1881, %v2149
      %v2228 = vadd.f32 %v1882, %v2154
      %v2229 = vadd.f32 %v1883, %v2157
      %v2230 = vadd.f32 %v1884, %v2162
      %v2231 = vadd.f32 %v1885, %v2165
      %v2232 = vadd.f32 %v1886, %v2170
      %v2233 = vadd.f32 %v1887, %v2173
      %v2234 = vadd.f32 %v1888, %v2178
      %v2235 = vadd.f32 %v1889, %v2181
      %v2236 = vadd.f32 %v1890, %v2186
      %v2237 = vadd.f32 %v1891, %v2189
      %v2238 = vadd.f32 %v1892, %v2194
      %v2239 = vadd.f32 %v1893, %v2197
      %v2240 = vadd.f32 %v1894, %v2202
      %v2241 = vadd.f32 %v1895, %v2205
      %v2242 = vadd.f32 %v1896, %v2210
      %v2243 = vadd.f32 %v1897, %v2213
      %2244 = vst [vmem:[#allocation3] sm:$0xff] %v2216
      %2245 = vst [vmem:[#allocation3 + $0x8] sm:$0xff] %v2217
      %2246 = vst [vmem:[#allocation3 + $0x10] sm:$0xff] %v2218
      %2247 = vst [vmem:[#allocation3 + $0x18] sm:$0xff] %v2219
      %2248 = vst [vmem:[#allocation3 + $0x20] sm:$0xff] %v2220
      %2249 = vst [vmem:[#allocation3 + $0x28] sm:$0xff] %v2221
      %2250 = vst [vmem:[#allocation3 + $0x30] sm:$0xff] %v2222
      %2251 = vst [vmem:[#allocation3 + $0x38] sm:$0xff] %v2223
      %2252 = vst [vmem:[#allocation3 + $0x40] sm:$0xff] %v2224
      %2253 = vst [vmem:[#allocation3 + $0x48] sm:$0xff] %v2225
      %2254 = vst [vmem:[#allocation3 + $0x50] sm:$0xff] %v2226
      %2255 = vst [vmem:[#allocation3 + $0x58] sm:$0xff] %v2227
      %2256 = vst [vmem:[#allocation3 + $0x60] sm:$0xff] %v2228
      %2257 = vst [vmem:[#allocation3 + $0x68] sm:$0xff] %v2229
      %2258 = vst [vmem:[#allocation3 + $0x70] sm:$0xff] %v2230
      %2259 = vst [vmem:[#allocation3 + $0x78] sm:$0xff] %v2231
      %2260 = vst [vmem:[#allocation3 + $0x80] sm:$0xff] %v2232
      %2261 = vst [vmem:[#allocation3 + $0x88] sm:$0xff] %v2233
      %2262 = vst [vmem:[#allocation3 + $0x90] sm:$0xff] %v2234
      %2263 = vst [vmem:[#allocation3 + $0x98] sm:$0xff] %v2235
      %2264 = vst [vmem:[#allocation3 + $0xa0] sm:$0xff] %v2236
      %2265 = vst [vmem:[#allocation3 + $0xa8] sm:$0xff] %v2237
      %2266 = vst [vmem:[#allocation3 + $0xb0] sm:$0xff] %v2238
      %2267 = vst [vmem:[#allocation3 + $0xb8] sm:$0xff] %v2239
      %2268 = vst [vmem:[#allocation3 + $0xc0] sm:$0xff] %v2240
      %2269 = vst [vmem:[#allocation3 + $0xc8] sm:$0xff] %v2241
      %2270 = vst [vmem:[#allocation3 + $0xd0] sm:$0xff] %v2242
      %2271 = vst [vmem:[#allocation3 + $0xd8] sm:$0xff] %v2243
      %v2272 = vld [vmem:[#allocation3] sm:$0xff]
      %v2273 = vld [vmem:[#allocation3 + $0x8] sm:$0xff]
      %v2274 = vld [vmem:[#allocation3 + $0x10] sm:$0xff]
      %v2275 = vld [vmem:[#allocation3 + $0x18] sm:$0xff]
      %v2276 = vld [vmem:[#allocation3 + $0x20] sm:$0xff]
      %v2277 = vld [vmem:[#allocation3 + $0x28] sm:$0xff]
      %v2278 = vld [vmem:[#allocation3 + $0x30] sm:$0xff]
      %v2279 = vld [vmem:[#allocation3 + $0x38] sm:$0xff]
      %v2280 = vld [vmem:[#allocation3 + $0x40] sm:$0xff]
      %v2281 = vld [vmem:[#allocation3 + $0x48] sm:$0xff]
      %v2282 = vld [vmem:[#allocation3 + $0x50] sm:$0xff]
      %v2283 = vld [vmem:[#allocation3 + $0x58] sm:$0xff]
      %v2284 = vld [vmem:[#allocation3 + $0x60] sm:$0xff]
      %v2285 = vld [vmem:[#allocation3 + $0x68] sm:$0xff]
      %v2286 = vld [vmem:[#allocation3 + $0x70] sm:$0xff]
      %v2287 = vld [vmem:[#allocation3 + $0x78] sm:$0xff]
      %v2288 = vld [vmem:[#allocation3 + $0x80] sm:$0xff]
      %v2289 = vld [vmem:[#allocation3 + $0x88] sm:$0xff]
      %v2290 = vld [vmem:[#allocation3 + $0x90] sm:$0xff]
      %v2291 = vld [vmem:[#allocation3 + $0x98] sm:$0xff]
      %v2292 = vld [vmem:[#allocation3 + $0xa0] sm:$0xff]
      %v2293 = vld [vmem:[#allocation3 + $0xa8] sm:$0xff]
      %v2294 = vld [vmem:[#allocation3 + $0xb0] sm:$0xff]
      %v2295 = vld [vmem:[#allocation3 + $0xb8] sm:$0xff]
      %v2296 = vld [vmem:[#allocation3 + $0xc0] sm:$0xff]
      %v2297 = vld [vmem:[#allocation3 + $0xc8] sm:$0xff]
      %v2298 = vld [vmem:[#allocation3 + $0xd0] sm:$0xff]
      %v2299 = vld [vmem:[#allocation3 + $0xd8] sm:$0xff]
      %v2300 = vld [vmem:[#allocation2 + $0x8] sm:$0xf]
      %v2301 = vld [vmem:[#allocation2 + $0xc] sm:$0xf]
      %v2302 = vld [vmem:[#allocation2 + $0x10] sm:$0xf]
      %v2303 = vld [vmem:[#allocation2 + $0x14] sm:$0xf]
      %v2304 = vld [vmem:[#allocation2 + $0x18] sm:$0xf]
      %v2305 = vld [vmem:[#allocation2 + $0x1c] sm:$0xf]
      %v2306 = vld [vmem:[#allocation2 + $0x20] sm:$0xf]
      %v2307 = vld [vmem:[#allocation2 + $0x24] sm:$0xf]
      %v2308 = vld [vmem:[#allocation2 + $0x28] sm:$0xf]
      %v2309 = vld [vmem:[#allocation2 + $0x2c] sm:$0xf]
      %v2310 = vld [vmem:[#allocation2 + $0x30] sm:$0xf]
      %v2311 = vld [vmem:[#allocation2 + $0x34] sm:$0xf]
      %v2312 = vld [vmem:[#allocation2 + $0x38] sm:$0xf]
      %v2313 = vld [vmem:[#allocation2 + $0x3c] sm:$0xf]
      %v2314 = vld [vmem:[#allocation2 + $0x40] sm:$0xf]
      %v2315 = vld [vmem:[#allocation2 + $0x44] sm:$0xf]
      %v2316 = vld [vmem:[#allocation2 + $0x48] sm:$0xf]
      %v2317 = vld [vmem:[#allocation2 + $0x4c] sm:$0xf]
      %v2318 = vld [vmem:[#allocation2 + $0x50] sm:$0xf]
      %v2319 = vld [vmem:[#allocation2 + $0x54] sm:$0xf]
      %v2320 = vld [vmem:[#allocation2 + $0x58] sm:$0xf]
      %v2321 = vld [vmem:[#allocation2 + $0x5c] sm:$0xf]
      %v2322 = vld [vmem:[#allocation2 + $0x60] sm:$0xf]
      %v2323 = vld [vmem:[#allocation2 + $0x64] sm:$0xf]
      %v2324 = vld [vmem:[#allocation2 + $0x68] sm:$0xf]
      %v2325 = vld [vmem:[#allocation2 + $0x6c] sm:$0xf]
      %v2326 = vld [vmem:[#allocation2 + $0x70] sm:$0xf]
      %v2327 = vld [vmem:[#allocation2 + $0x74] sm:$0xf]
      %v2328 = vld [vmem:[#allocation2 + $0x78] sm:$0x1]
      %s2329 = scalar_lea.vmem %s1, 128
      %v2330 = vld [vmem:[%s2329] sm:$0xf]
      %v2331 = vld [vmem:[%s2329 + $0x4] sm:$0xf]
      %v2332 = vld [vmem:[%s2329 + $0x8] sm:$0xf]
      %v2333 = vld [vmem:[%s2329 + $0xc] sm:$0xf]
      %v2334 = vld [vmem:[%s2329 + $0x10] sm:$0xf]
      %v2335 = vld [vmem:[%s2329 + $0x14] sm:$0xf]
      %v2336 = vld [vmem:[%s2329 + $0x18] sm:$0xf]
      %v2337 = vld [vmem:[%s2329 + $0x1c] sm:$0xf]
      %v2367 = vunpack.c.l.b16 %v2300
      %v2368 = vunpack.c.l.b16 %v2301
      %v2369 = vunpack.c.l.b16 %v2302
      %v2370 = vunpack.c.l.b16 %v2303
      %v2371 = vunpack.c.l.b16 %v2304
      %v2372 = vunpack.c.l.b16 %v2305
      %v2373 = vunpack.c.l.b16 %v2306
      %v2374 = vunpack.c.l.b16 %v2307
      %v2375 = vunpack.c.l.b16 %v2308
      %v2376 = vunpack.c.l.b16 %v2309
      %v2377 = vunpack.c.l.b16 %v2310
      %v2378 = vunpack.c.l.b16 %v2311
      %v2379 = vunpack.c.l.b16 %v2312
      %v2380 = vunpack.c.l.b16 %v2313
      %v2381 = vunpack.c.l.b16 %v2314
      %v2382 = vunpack.c.l.b16 %v2315
      %v2383 = vunpack.c.l.b16 %v2316
      %v2384 = vunpack.c.l.b16 %v2317
      %v2385 = vunpack.c.l.b16 %v2318
      %v2386 = vunpack.c.l.b16 %v2319
      %v2387 = vunpack.c.l.b16 %v2320
      %v2388 = vunpack.c.l.b16 %v2321
      %v2389 = vunpack.c.l.b16 %v2322
      %v2390 = vunpack.c.l.b16 %v2323
      %v2391 = vunpack.c.l.b16 %v2324
      %v2392 = vunpack.c.l.b16 %v2325
      %v2393 = vunpack.c.l.b16 %v2326
      %v2394 = vunpack.c.l.b16 %v2327
      %v2395 = vunpack.c.l.b16 %v2328
      %v2396 = vpack.c.b16 %v2368, %v2367
      %v2397 = vpack.c.b16 %v2370, %v2369
      %v2398 = vpack.c.b16 %v2372, %v2371
      %v2399 = vpack.c.b16 %v2374, %v2373
      %v2400 = vpack.c.b16 %v2376, %v2375
      %v2401 = vpack.c.b16 %v2378, %v2377
      %v2402 = vpack.c.b16 %v2380, %v2379
      %v2403 = vpack.c.b16 %v2382, %v2381
      %v2404 = vpack.c.b16 %v2384, %v2383
      %v2405 = vpack.c.b16 %v2386, %v2385
      %v2406 = vpack.c.b16 %v2388, %v2387
      %v2407 = vpack.c.b16 %v2390, %v2389
      %v2408 = vpack.c.b16 %v2392, %v2391
      %v2409 = vpack.c.b16 %v2394, %v2393
      %v2410 = vpack.c.b16 %v2395, %v2395
      %v2412 = vshrl.u32 %v2396, 16
      %v2414 = vshll.u32 %v2396, 16
      %v2416 = vrot.slane %v2414, 1
      %v2417 = vor.u32 %v2412, %v2416
      %v2419 = vshll.u32 %v2397, 16
      %v2421 = vrot.slane %v2419, 1
      %v2422 = vsel %vm1050, %v2417, %v2421
      %v2423 = vshrl.u32 %v2397, 16
      %v2425 = vor.u32 %v2423, %v2421
      %v2427 = vshll.u32 %v2398, 16
      %v2429 = vrot.slane %v2427, 1
      %v2430 = vsel %vm1050, %v2425, %v2429
      %v2431 = vshrl.u32 %v2398, 16
      %v2433 = vor.u32 %v2431, %v2429
      %v2435 = vshll.u32 %v2399, 16
      %v2437 = vrot.slane %v2435, 1
      %v2438 = vsel %vm1050, %v2433, %v2437
      %v2439 = vshrl.u32 %v2399, 16
      %v2441 = vor.u32 %v2439, %v2437
      %v2443 = vshll.u32 %v2400, 16
      %v2445 = vrot.slane %v2443, 1
      %v2446 = vsel %vm1050, %v2441, %v2445
      %v2447 = vshrl.u32 %v2400, 16
      %v2449 = vor.u32 %v2447, %v2445
      %v2451 = vshll.u32 %v2401, 16
      %v2453 = vrot.slane %v2451, 1
      %v2454 = vsel %vm1050, %v2449, %v2453
      %v2455 = vshrl.u32 %v2401, 16
      %v2457 = vor.u32 %v2455, %v2453
      %v2459 = vshll.u32 %v2402, 16
      %v2461 = vrot.slane %v2459, 1
      %v2462 = vsel %vm1050, %v2457, %v2461
      %v2463 = vshrl.u32 %v2402, 16
      %v2465 = vor.u32 %v2463, %v2461
      %v2467 = vshll.u32 %v2403, 16
      %v2469 = vrot.slane %v2467, 1
      %v2470 = vsel %vm1050, %v2465, %v2469
      %v2471 = vshrl.u32 %v2403, 16
      %v2473 = vor.u32 %v2471, %v2469
      %v2475 = vshll.u32 %v2404, 16
      %v2477 = vrot.slane %v2475, 1
      %v2478 = vsel %vm1050, %v2473, %v2477
      %v2479 = vshrl.u32 %v2404, 16
      %v2481 = vor.u32 %v2479, %v2477
      %v2483 = vshll.u32 %v2405, 16
      %v2485 = vrot.slane %v2483, 1
      %v2486 = vsel %vm1050, %v2481, %v2485
      %v2487 = vshrl.u32 %v2405, 16
      %v2489 = vor.u32 %v2487, %v2485
      %v2491 = vshll.u32 %v2406, 16
      %v2493 = vrot.slane %v2491, 1
      %v2494 = vsel %vm1050, %v2489, %v2493
      %v2495 = vshrl.u32 %v2406, 16
      %v2497 = vor.u32 %v2495, %v2493
      %v2499 = vshll.u32 %v2407, 16
      %v2501 = vrot.slane %v2499, 1
      %v2502 = vsel %vm1050, %v2497, %v2501
      %v2503 = vshrl.u32 %v2407, 16
      %v2505 = vor.u32 %v2503, %v2501
      %v2507 = vshll.u32 %v2408, 16
      %v2509 = vrot.slane %v2507, 1
      %v2510 = vsel %vm1050, %v2505, %v2509
      %v2511 = vshrl.u32 %v2408, 16
      %v2513 = vor.u32 %v2511, %v2509
      %v2515 = vshll.u32 %v2409, 16
      %v2517 = vrot.slane %v2515, 1
      %v2518 = vsel %vm1050, %v2513, %v2517
      %v2519 = vshrl.u32 %v2409, 16
      %v2521 = vor.u32 %v2519, %v2517
      %v2523 = vshll.u32 %v2410, 16
      %v2525 = vrot.slane %v2523, 1
      %v2526 = vsel %vm1050, %v2521, %v2525
      %v2535 = vunpack.c.l.b16 %v2330
      %v2536 = vunpack.c.l.b16 %v2331
      %v2537 = vunpack.c.l.b16 %v2332
      %v2538 = vunpack.c.l.b16 %v2333
      %v2539 = vunpack.c.l.b16 %v2334
      %v2540 = vunpack.c.l.b16 %v2335
      %v2541 = vunpack.c.l.b16 %v2336
      %v2542 = vunpack.c.l.b16 %v2337
      %v2543 = vpack.c.b16 %v2536, %v2535
      %v2544 = vpack.c.b16 %v2538, %v2537
      %v2545 = vpack.c.b16 %v2540, %v2539
      %v2546 = vpack.c.b16 %v2542, %v2541
      %v2552 = vsel %vm667, %v2422, 0
      %v2555 = vsel %vm667, %v2430, 0
      %v2558 = vsel %vm667, %v2438, 0
      %v2561 = vsel %vm667, %v2446, 0
      %v2564 = vsel %vm667, %v2454, 0
      %v2567 = vsel %vm667, %v2462, 0
      %v2570 = vsel %vm667, %v2470, 0
      %v2573 = vsel %vm667, %v2478, 0
      %v2576 = vsel %vm667, %v2486, 0
      %v2579 = vsel %vm667, %v2494, 0
      %v2582 = vsel %vm667, %v2502, 0
      %v2585 = vsel %vm667, %v2510, 0
      %v2588 = vsel %vm667, %v2518, 0
      %v2591 = vsel %vm667, %v2526, 0
      %2593 = vmatprep.subr.bf16.mxu0 0
      %2594 = vmatpush1.bf16.msra.mxu0 %v2543
      %2595 = vmatprep.subr.bf16.mxu0 0
      %2596 = vmatpush1.bf16.msra.mxu0 %v2544
      %2597 = vmatprep.subr.bf16.mxu0 0
      %2598 = vmatpush1.bf16.msra.mxu0 %v2545
      %2599 = vmatprep.subr.bf16.mxu0 0
      %2600 = vmatpush1.bf16.msra.mxu0 %v2546
      %2601 = vmatprep.subr.bf16.mxu0 0
      %2602 = vmatpush1.bf16.msra.mxu0 0
      %2603 = vmatprep.subr.bf16.mxu0 0
      %2604 = vmatpush1.bf16.msra.mxu0 0
      %2605 = vmatprep.subr.bf16.mxu0 0
      %2606 = vmatpush1.bf16.msra.mxu0 0
      %2607 = vmatprep.subr.bf16.mxu0 0
      %2608 = vmatpush1.bf16.msra.mxu0 0
      %2609 = vmatprep.subr.bf16.mxu0 0
      %2610 = vmatpush1.bf16.msra.mxu0 0
      %2611 = vmatprep.subr.bf16.mxu0 0
      %2612 = vmatpush1.bf16.msra.mxu0 0
      %2613 = vmatprep.subr.bf16.mxu0 0
      %2614 = vmatpush1.bf16.msra.mxu0 0
      %2615 = vmatprep.subr.bf16.mxu0 0
      %2616 = vmatpush1.bf16.msra.mxu0 0
      %2617 = vmatprep.subr.bf16.mxu0 0
      %2618 = vmatpush1.bf16.msra.mxu0 0
      %2619 = vmatprep.subr.bf16.mxu0 0
      %2620 = vmatpush1.bf16.msra.mxu0 0
      %2621 = vmatprep.subr.bf16.mxu0 0
      %2622 = vmatpush1.bf16.msra.mxu0 0
      %2623 = vmatprep.subr.bf16.mxu0 0
      %2624 = vmatpush1.bf16.msra.mxu0 0
      %2625 = vmatprep.mubr.bf16.mxu0 0
      %2626 = vmatmul.mubr.bf16.gmra.mrb[0].mxu0 %v2552
      %v2627 = vpop.f32.mrb[0].mxu0
      %v2628 = vadd.f32 0.0, %v2627
      %v2629 = vpop.f32.mrb[0].mxu0
      %v2630 = vpop.f32.mrb[0].mxu0
      %v2631 = vadd.f32 0.0, %v2630
      %v2632 = vpop.f32.mrb[0].mxu0
      %2633 = vmatprep.mubr.bf16.mxu0 0
      %2634 = vmatmul.mubr.bf16.gmra.mrb[0].mxu0 %v2555
      %v2635 = vpop.f32.mrb[0].mxu0
      %v2636 = vadd.f32 0.0, %v2635
      %v2637 = vpop.f32.mrb[0].mxu0
      %v2638 = vpop.f32.mrb[0].mxu0
      %v2639 = vadd.f32 0.0, %v2638
      %v2640 = vpop.f32.mrb[0].mxu0
      %2641 = vmatprep.mubr.bf16.mxu0 0
      %2642 = vmatmul.mubr.bf16.gmra.mrb[0].mxu0 %v2558
      %v2643 = vpop.f32.mrb[0].mxu0
      %v2644 = vadd.f32 0.0, %v2643
      %v2645 = vpop.f32.mrb[0].mxu0
      %v2646 = vpop.f32.mrb[0].mxu0
      %v2647 = vadd.f32 0.0, %v2646
      %v2648 = vpop.f32.mrb[0].mxu0
      %2649 = vmatprep.mubr.bf16.mxu0 0
      %2650 = vmatmul.mubr.bf16.gmra.mrb[0].mxu0 %v2561
      %v2651 = vpop.f32.mrb[0].mxu0
      %v2652 = vadd.f32 0.0, %v2651
      %v2653 = vpop.f32.mrb[0].mxu0
      %v2654 = vpop.f32.mrb[0].mxu0
      %v2655 = vadd.f32 0.0, %v2654
      %v2656 = vpop.f32.mrb[0].mxu0
      %2657 = vmatprep.mubr.bf16.mxu0 0
      %2658 = vmatmul.mubr.bf16.gmra.mrb[0].mxu0 %v2564
      %v2659 = vpop.f32.mrb[0].mxu0
      %v2660 = vadd.f32 0.0, %v2659
      %v2661 = vpop.f32.mrb[0].mxu0
      %v2662 = vpop.f32.mrb[0].mxu0
      %v2663 = vadd.f32 0.0, %v2662
      %v2664 = vpop.f32.mrb[0].mxu0
      %2665 = vmatprep.mubr.bf16.mxu0 0
      %2666 = vmatmul.mubr.bf16.gmra.mrb[0].mxu0 %v2567
      %v2667 = vpop.f32.mrb[0].mxu0
      %v2668 = vadd.f32 0.0, %v2667
      %v2669 = vpop.f32.mrb[0].mxu0
      %v2670 = vpop.f32.mrb[0].mxu0
      %v2671 = vadd.f32 0.0, %v2670
      %v2672 = vpop.f32.mrb[0].mxu0
      %2673 = vmatprep.mubr.bf16.mxu0 0
      %2674 = vmatmul.mubr.bf16.gmra.mrb[0].mxu0 %v2570
      %v2675 = vpop.f32.mrb[0].mxu0
      %v2676 = vadd.f32 0.0, %v2675
      %v2677 = vpop.f32.mrb[0].mxu0
      %v2678 = vpop.f32.mrb[0].mxu0
      %v2679 = vadd.f32 0.0, %v2678
      %v2680 = vpop.f32.mrb[0].mxu0
      %2681 = vmatprep.mubr.bf16.mxu0 0
      %2682 = vmatmul.mubr.bf16.gmra.mrb[0].mxu0 %v2573
      %v2683 = vpop.f32.mrb[0].mxu0
      %v2684 = vadd.f32 0.0, %v2683
      %v2685 = vpop.f32.mrb[0].mxu0
      %v2686 = vpop.f32.mrb[0].mxu0
      %v2687 = vadd.f32 0.0, %v2686
      %v2688 = vpop.f32.mrb[0].mxu0
      %2689 = vmatprep.mubr.bf16.mxu0 0
      %2690 = vmatmul.mubr.bf16.gmra.mrb[0].mxu0 %v2576
      %v2691 = vpop.f32.mrb[0].mxu0
      %v2692 = vadd.f32 0.0, %v2691
      %v2693 = vpop.f32.mrb[0].mxu0
      %v2694 = vpop.f32.mrb[0].mxu0
      %v2695 = vadd.f32 0.0, %v2694
      %v2696 = vpop.f32.mrb[0].mxu0
      %2697 = vmatprep.mubr.bf16.mxu0 0
      %2698 = vmatmul.mubr.bf16.gmra.mrb[0].mxu0 %v2579
      %v2699 = vpop.f32.mrb[0].mxu0
      %v2700 = vadd.f32 0.0, %v2699
      %v2701 = vpop.f32.mrb[0].mxu0
      %v2702 = vpop.f32.mrb[0].mxu0
      %v2703 = vadd.f32 0.0, %v2702
      %v2704 = vpop.f32.mrb[0].mxu0
      %2705 = vmatprep.mubr.bf16.mxu0 0
      %2706 = vmatmul.mubr.bf16.gmra.mrb[0].mxu0 %v2582
      %v2707 = vpop.f32.mrb[0].mxu0
      %v2708 = vadd.f32 0.0, %v2707
      %v2709 = vpop.f32.mrb[0].mxu0
      %v2710 = vpop.f32.mrb[0].mxu0
      %v2711 = vadd.f32 0.0, %v2710
      %v2712 = vpop.f32.mrb[0].mxu0
      %2713 = vmatprep.mubr.bf16.mxu0 0
      %2714 = vmatmul.mubr.bf16.gmra.mrb[0].mxu0 %v2585
      %v2715 = vpop.f32.mrb[0].mxu0
      %v2716 = vadd.f32 0.0, %v2715
      %v2717 = vpop.f32.mrb[0].mxu0
      %v2718 = vpop.f32.mrb[0].mxu0
      %v2719 = vadd.f32 0.0, %v2718
      %v2720 = vpop.f32.mrb[0].mxu0
      %2721 = vmatprep.mubr.bf16.mxu0 0
      %2722 = vmatmul.mubr.bf16.gmra.mrb[0].mxu0 %v2588
      %v2723 = vpop.f32.mrb[0].mxu0
      %v2724 = vadd.f32 0.0, %v2723
      %v2725 = vpop.f32.mrb[0].mxu0
      %v2726 = vpop.f32.mrb[0].mxu0
      %v2727 = vadd.f32 0.0, %v2726
      %v2728 = vpop.f32.mrb[0].mxu0
      %2729 = vmatprep.mubr.bf16.mxu0 0
      %2730 = vmatmul.mubr.bf16.gmra.mrb[0].mxu0 %v2591
      %v2731 = vpop.f32.mrb[0].mxu0
      %v2732 = vadd.f32 0.0, %v2731
      %v2733 = vpop.f32.mrb[0].mxu0
      %v2734 = vpop.f32.mrb[0].mxu0
      %v2735 = vadd.f32 0.0, %v2734
      %v2736 = vpop.f32.mrb[0].mxu0
      %2737 = vdwg.mxu0
      %v2738 = vadd.f32 %v2272, %v2628
      %v2739 = vadd.f32 %v2273, %v2631
      %v2740 = vadd.f32 %v2274, %v2636
      %v2741 = vadd.f32 %v2275, %v2639
      %v2742 = vadd.f32 %v2276, %v2644
      %v2743 = vadd.f32 %v2277, %v2647
      %v2744 = vadd.f32 %v2278, %v2652
      %v2745 = vadd.f32 %v2279, %v2655
      %v2746 = vadd.f32 %v2280, %v2660
      %v2747 = vadd.f32 %v2281, %v2663
      %v2748 = vadd.f32 %v2282, %v2668
      %v2749 = vadd.f32 %v2283, %v2671
      %v2750 = vadd.f32 %v2284, %v2676
      %v2751 = vadd.f32 %v2285, %v2679
      %v2752 = vadd.f32 %v2286, %v2684
      %v2753 = vadd.f32 %v2287, %v2687
      %v2754 = vadd.f32 %v2288, %v2692
      %v2755 = vadd.f32 %v2289, %v2695
      %v2756 = vadd.f32 %v2290, %v2700
      %v2757 = vadd.f32 %v2291, %v2703
      %v2758 = vadd.f32 %v2292, %v2708
      %v2759 = vadd.f32 %v2293, %v2711
      %v2760 = vadd.f32 %v2294, %v2716
      %v2761 = vadd.f32 %v2295, %v2719
      %v2762 = vadd.f32 %v2296, %v2724
      %v2763 = vadd.f32 %v2297, %v2727
      %v2764 = vadd.f32 %v2298, %v2732
      %v2765 = vadd.f32 %v2299, %v2735
      %2766 = vst [vmem:[#allocation3] sm:$0xff] %v2738
      %2767 = vst [vmem:[#allocation3 + $0x8] sm:$0xff] %v2739
      %2768 = vst [vmem:[#allocation3 + $0x10] sm:$0xff] %v2740
      %2769 = vst [vmem:[#allocation3 + $0x18] sm:$0xff] %v2741
      %2770 = vst [vmem:[#allocation3 + $0x20] sm:$0xff] %v2742
      %2771 = vst [vmem:[#allocation3 + $0x28] sm:$0xff] %v2743
      %2772 = vst [vmem:[#allocation3 + $0x30] sm:$0xff] %v2744
      %2773 = vst [vmem:[#allocation3 + $0x38] sm:$0xff] %v2745
      %2774 = vst [vmem:[#allocation3 + $0x40] sm:$0xff] %v2746
      %2775 = vst [vmem:[#allocation3 + $0x48] sm:$0xff] %v2747
      %2776 = vst [vmem:[#allocation3 + $0x50] sm:$0xff] %v2748
      %2777 = vst [vmem:[#allocation3 + $0x58] sm:$0xff] %v2749
      %2778 = vst [vmem:[#allocation3 + $0x60] sm:$0xff] %v2750
      %2779 = vst [vmem:[#allocation3 + $0x68] sm:$0xff] %v2751
      %2780 = vst [vmem:[#allocation3 + $0x70] sm:$0xff] %v2752
      %2781 = vst [vmem:[#allocation3 + $0x78] sm:$0xff] %v2753
      %2782 = vst [vmem:[#allocation3 + $0x80] sm:$0xff] %v2754
      %2783 = vst [vmem:[#allocation3 + $0x88] sm:$0xff] %v2755
      %2784 = vst [vmem:[#allocation3 + $0x90] sm:$0xff] %v2756
      %2785 = vst [vmem:[#allocation3 + $0x98] sm:$0xff] %v2757
      %2786 = vst [vmem:[#allocation3 + $0xa0] sm:$0xff] %v2758
      %2787 = vst [vmem:[#allocation3 + $0xa8] sm:$0xff] %v2759
      %2788 = vst [vmem:[#allocation3 + $0xb0] sm:$0xff] %v2760
      %2789 = vst [vmem:[#allocation3 + $0xb8] sm:$0xff] %v2761
      %2790 = vst [vmem:[#allocation3 + $0xc0] sm:$0xff] %v2762
      %2791 = vst [vmem:[#allocation3 + $0xc8] sm:$0xff] %v2763
      %2792 = vst [vmem:[#allocation3 + $0xd0] sm:$0xff] %v2764
      %2793 = vst [vmem:[#allocation3 + $0xd8] sm:$0xff] %v2765
      %v2794 = vld [vmem:[#allocation3] sm:$0xff]
      %v2795 = vld [vmem:[#allocation3 + $0x8] sm:$0xff]
      %v2796 = vld [vmem:[#allocation3 + $0x10] sm:$0xff]
      %v2797 = vld [vmem:[#allocation3 + $0x18] sm:$0xff]
      %v2798 = vld [vmem:[#allocation3 + $0x20] sm:$0xff]
      %v2799 = vld [vmem:[#allocation3 + $0x28] sm:$0xff]
      %v2800 = vld [vmem:[#allocation3 + $0x30] sm:$0xff]
      %v2801 = vld [vmem:[#allocation3 + $0x38] sm:$0xff]
      %v2802 = vld [vmem:[#allocation3 + $0x40] sm:$0xff]
      %v2803 = vld [vmem:[#allocation3 + $0x48] sm:$0xff]
      %v2804 = vld [vmem:[#allocation3 + $0x50] sm:$0xff]
      %v2805 = vld [vmem:[#allocation3 + $0x58] sm:$0xff]
      %v2806 = vld [vmem:[#allocation3 + $0x60] sm:$0xff]
      %v2807 = vld [vmem:[#allocation3 + $0x68] sm:$0xff]
      %v2808 = vld [vmem:[#allocation3 + $0x70] sm:$0xff]
      %v2809 = vld [vmem:[#allocation3 + $0x78] sm:$0xff]
      %v2810 = vld [vmem:[#allocation3 + $0x80] sm:$0xff]
      %v2811 = vld [vmem:[#allocation3 + $0x88] sm:$0xff]
      %v2812 = vld [vmem:[#allocation3 + $0x90] sm:$0xff]
      %v2813 = vld [vmem:[#allocation3 + $0x98] sm:$0xff]
      %v2814 = vld [vmem:[#allocation3 + $0xa0] sm:$0xff]
      %v2815 = vld [vmem:[#allocation3 + $0xa8] sm:$0xff]
      %v2816 = vld [vmem:[#allocation3 + $0xb0] sm:$0xff]
      %v2817 = vld [vmem:[#allocation3 + $0xb8] sm:$0xff]
      %v2818 = vld [vmem:[#allocation3 + $0xc0] sm:$0xff]
      %v2819 = vld [vmem:[#allocation3 + $0xc8] sm:$0xff]
      %v2820 = vld [vmem:[#allocation3 + $0xd0] sm:$0xff]
      %v2821 = vld [vmem:[#allocation3 + $0xd8] sm:$0xff]
      %v2822 = vld [vmem:[#allocation2 + $0x8] sm:$0xe]
      %v2823 = vld [vmem:[#allocation2 + $0xc] sm:$0xf]
      %v2824 = vld [vmem:[#allocation2 + $0x10] sm:$0xf]
      %v2825 = vld [vmem:[#allocation2 + $0x14] sm:$0xf]
      %v2826 = vld [vmem:[#allocation2 + $0x18] sm:$0xf]
      %v2827 = vld [vmem:[#allocation2 + $0x1c] sm:$0xf]
      %v2828 = vld [vmem:[#allocation2 + $0x20] sm:$0xf]
      %v2829 = vld [vmem:[#allocation2 + $0x24] sm:$0xf]
      %v2830 = vld [vmem:[#allocation2 + $0x28] sm:$0xf]
      %v2831 = vld [vmem:[#allocation2 + $0x2c] sm:$0xf]
      %v2832 = vld [vmem:[#allocation2 + $0x30] sm:$0xf]
      %v2833 = vld [vmem:[#allocation2 + $0x34] sm:$0xf]
      %v2834 = vld [vmem:[#allocation2 + $0x38] sm:$0xf]
      %v2835 = vld [vmem:[#allocation2 + $0x3c] sm:$0xf]
      %v2836 = vld [vmem:[#allocation2 + $0x40] sm:$0xf]
      %v2837 = vld [vmem:[#allocation2 + $0x44] sm:$0xf]
      %v2838 = vld [vmem:[#allocation2 + $0x48] sm:$0xf]
      %v2839 = vld [vmem:[#allocation2 + $0x4c] sm:$0xf]
      %v2840 = vld [vmem:[#allocation2 + $0x50] sm:$0xf]
      %v2841 = vld [vmem:[#allocation2 + $0x54] sm:$0xf]
      %v2842 = vld [vmem:[#allocation2 + $0x58] sm:$0xf]
      %v2843 = vld [vmem:[#allocation2 + $0x5c] sm:$0xf]
      %v2844 = vld [vmem:[#allocation2 + $0x60] sm:$0xf]
      %v2845 = vld [vmem:[#allocation2 + $0x64] sm:$0xf]
      %v2846 = vld [vmem:[#allocation2 + $0x68] sm:$0xf]
      %v2847 = vld [vmem:[#allocation2 + $0x6c] sm:$0xf]
      %v2848 = vld [vmem:[#allocation2 + $0x70] sm:$0xf]
      %v2849 = vld [vmem:[#allocation2 + $0x74] sm:$0xf]
      %v2850 = vld [vmem:[#allocation2 + $0x78] sm:$0x1]
      %s2851 = scalar_lea.vmem %s1, 160
      %v2852 = vld [vmem:[%s2851] sm:$0xf]
      %v2853 = vld [vmem:[%s2851 + $0x4] sm:$0xf]
      %v2854 = vld [vmem:[%s2851 + $0x8] sm:$0xf]
      %v2855 = vld [vmem:[%s2851 + $0xc] sm:$0xf]
      %v2856 = vld [vmem:[%s2851 + $0x10] sm:$0xf]
      %v2857 = vld [vmem:[%s2851 + $0x14] sm:$0xf]
      %v2858 = vld [vmem:[%s2851 + $0x18] sm:$0xf]
      %v2859 = vld [vmem:[%s2851 + $0x1c] sm:$0xf]
      %v2889 = vunpack.c.l.b16 %v2822
      %v2890 = vunpack.c.l.b16 %v2823
      %v2891 = vunpack.c.l.b16 %v2824
      %v2892 = vunpack.c.l.b16 %v2825
      %v2893 = vunpack.c.l.b16 %v2826
      %v2894 = vunpack.c.l.b16 %v2827
      %v2895 = vunpack.c.l.b16 %v2828
      %v2896 = vunpack.c.l.b16 %v2829
      %v2897 = vunpack.c.l.b16 %v2830
      %v2898 = vunpack.c.l.b16 %v2831
      %v2899 = vunpack.c.l.b16 %v2832
      %v2900 = vunpack.c.l.b16 %v2833
      %v2901 = vunpack.c.l.b16 %v2834
      %v2902 = vunpack.c.l.b16 %v2835
      %v2903 = vunpack.c.l.b16 %v2836
      %v2904 = vunpack.c.l.b16 %v2837
      %v2905 = vunpack.c.l.b16 %v2838
      %v2906 = vunpack.c.l.b16 %v2839
      %v2907 = vunpack.c.l.b16 %v2840
      %v2908 = vunpack.c.l.b16 %v2841
      %v2909 = vunpack.c.l.b16 %v2842
      %v2910 = vunpack.c.l.b16 %v2843
      %v2911 = vunpack.c.l.b16 %v2844
      %v2912 = vunpack.c.l.b16 %v2845
      %v2913 = vunpack.c.l.b16 %v2846
      %v2914 = vunpack.c.l.b16 %v2847
      %v2915 = vunpack.c.l.b16 %v2848
      %v2916 = vunpack.c.l.b16 %v2849
      %v2917 = vunpack.c.l.b16 %v2850
      %v2918 = vpack.c.b16 %v2890, %v2889
      %v2919 = vpack.c.b16 %v2892, %v2891
      %v2920 = vpack.c.b16 %v2894, %v2893
      %v2921 = vpack.c.b16 %v2896, %v2895
      %v2922 = vpack.c.b16 %v2898, %v2897
      %v2923 = vpack.c.b16 %v2900, %v2899
      %v2924 = vpack.c.b16 %v2902, %v2901
      %v2925 = vpack.c.b16 %v2904, %v2903
      %v2926 = vpack.c.b16 %v2906, %v2905
      %v2927 = vpack.c.b16 %v2908, %v2907
      %v2928 = vpack.c.b16 %v2910, %v2909
      %v2929 = vpack.c.b16 %v2912, %v2911
      %v2930 = vpack.c.b16 %v2914, %v2913
      %v2931 = vpack.c.b16 %v2916, %v2915
      %v2932 = vpack.c.b16 %v2917, %v2917
      %v2933 = vrot.slane %v2918, 1
      %v2934 = vrot.slane %v2919, 1
      %v2935 = vsel %vm1573, %v2933, %v2934
      %v2936 = vrot.slane %v2920, 1
      %v2937 = vsel %vm1573, %v2934, %v2936
      %v2938 = vrot.slane %v2921, 1
      %v2939 = vsel %vm1573, %v2936, %v2938
      %v2940 = vrot.slane %v2922, 1
      %v2941 = vsel %vm1573, %v2938, %v2940
      %v2942 = vrot.slane %v2923, 1
      %v2943 = vsel %vm1573, %v2940, %v2942
      %v2944 = vrot.slane %v2924, 1
      %v2945 = vsel %vm1573, %v2942, %v2944
      %v2946 = vrot.slane %v2925, 1
      %v2947 = vsel %vm1573, %v2944, %v2946
      %v2948 = vrot.slane %v2926, 1
      %v2949 = vsel %vm1573, %v2946, %v2948
      %v2950 = vrot.slane %v2927, 1
      %v2951 = vsel %vm1573, %v2948, %v2950
      %v2952 = vrot.slane %v2928, 1
      %v2953 = vsel %vm1573, %v2950, %v2952
      %v2954 = vrot.slane %v2929, 1
      %v2955 = vsel %vm1573, %v2952, %v2954
      %v2956 = vrot.slane %v2930, 1
      %v2957 = vsel %vm1573, %v2954, %v2956
      %v2958 = vrot.slane %v2931, 1
      %v2959 = vsel %vm1573, %v2956, %v2958
      %v2960 = vrot.slane %v2932, 1
      %v2961 = vsel %vm1573, %v2958, %v2960
      %v2970 = vunpack.c.l.b16 %v2852
      %v2971 = vunpack.c.l.b16 %v2853
      %v2972 = vunpack.c.l.b16 %v2854
      %v2973 = vunpack.c.l.b16 %v2855
      %v2974 = vunpack.c.l.b16 %v2856
      %v2975 = vunpack.c.l.b16 %v2857
      %v2976 = vunpack.c.l.b16 %v2858
      %v2977 = vunpack.c.l.b16 %v2859
      %v2978 = vpack.c.b16 %v2971, %v2970
      %v2979 = vpack.c.b16 %v2973, %v2972
      %v2980 = vpack.c.b16 %v2975, %v2974
      %v2981 = vpack.c.b16 %v2977, %v2976
      %v2987 = vsel %vm667, %v2935, 0
      %v2990 = vsel %vm667, %v2937, 0
      %v2993 = vsel %vm667, %v2939, 0
      %v2996 = vsel %vm667, %v2941, 0
      %v2999 = vsel %vm667, %v2943, 0
      %v3002 = vsel %vm667, %v2945, 0
      %v3005 = vsel %vm667, %v2947, 0
      %v3008 = vsel %vm667, %v2949, 0
      %v3011 = vsel %vm667, %v2951, 0
      %v3014 = vsel %vm667, %v2953, 0
      %v3017 = vsel %vm667, %v2955, 0
      %v3020 = vsel %vm667, %v2957, 0
      %v3023 = vsel %vm667, %v2959, 0
      %v3026 = vsel %vm667, %v2961, 0
      %3028 = vmatprep.subr.bf16.mxu0 0
      %3029 = vmatpush1.bf16.msra.mxu0 %v2978
      %3030 = vmatprep.subr.bf16.mxu0 0
      %3031 = vmatpush1.bf16.msra.mxu0 %v2979
      %3032 = vmatprep.subr.bf16.mxu0 0
      %3033 = vmatpush1.bf16.msra.mxu0 %v2980
      %3034 = vmatprep.subr.bf16.mxu0 0
      %3035 = vmatpush1.bf16.msra.mxu0 %v2981
      %3036 = vmatprep.subr.bf16.mxu0 0
      %3037 = vmatpush1.bf16.msra.mxu0 0
      %3038 = vmatprep.subr.bf16.mxu0 0
      %3039 = vmatpush1.bf16.msra.mxu0 0
      %3040 = vmatprep.subr.bf16.mxu0 0
      %3041 = vmatpush1.bf16.msra.mxu0 0
      %3042 = vmatprep.subr.bf16.mxu0 0
      %3043 = vmatpush1.bf16.msra.mxu0 0
      %3044 = vmatprep.subr.bf16.mxu0 0
      %3045 = vmatpush1.bf16.msra.mxu0 0
      %3046 = vmatprep.subr.bf16.mxu0 0
      %3047 = vmatpush1.bf16.msra.mxu0 0
      %3048 = vmatprep.subr.bf16.mxu0 0
      %3049 = vmatpush1.bf16.msra.mxu0 0
      %3050 = vmatprep.subr.bf16.mxu0 0
      %3051 = vmatpush1.bf16.msra.mxu0 0
      %3052 = vmatprep.subr.bf16.mxu0 0
      %3053 = vmatpush1.bf16.msra.mxu0 0
      %3054 = vmatprep.subr.bf16.mxu0 0
      %3055 = vmatpush1.bf16.msra.mxu0 0
      %3056 = vmatprep.subr.bf16.mxu0 0
      %3057 = vmatpush1.bf16.msra.mxu0 0
      %3058 = vmatprep.subr.bf16.mxu0 0
      %3059 = vmatpush1.bf16.msra.mxu0 0
      %3060 = vmatprep.mubr.bf16.mxu0 0
      %3061 = vmatmul.mubr.bf16.gmra.mrb[0].mxu0 %v2987
      %v3062 = vpop.f32.mrb[0].mxu0
      %v3063 = vadd.f32 0.0, %v3062
      %v3064 = vpop.f32.mrb[0].mxu0
      %v3065 = vpop.f32.mrb[0].mxu0
      %v3066 = vadd.f32 0.0, %v3065
      %v3067 = vpop.f32.mrb[0].mxu0
      %3068 = vmatprep.mubr.bf16.mxu0 0
      %3069 = vmatmul.mubr.bf16.gmra.mrb[0].mxu0 %v2990
      %v3070 = vpop.f32.mrb[0].mxu0
      %v3071 = vadd.f32 0.0, %v3070
      %v3072 = vpop.f32.mrb[0].mxu0
      %v3073 = vpop.f32.mrb[0].mxu0
      %v3074 = vadd.f32 0.0, %v3073
      %v3075 = vpop.f32.mrb[0].mxu0
      %3076 = vmatprep.mubr.bf16.mxu0 0
      %3077 = vmatmul.mubr.bf16.gmra.mrb[0].mxu0 %v2993
      %v3078 = vpop.f32.mrb[0].mxu0
      %v3079 = vadd.f32 0.0, %v3078
      %v3080 = vpop.f32.mrb[0].mxu0
      %v3081 = vpop.f32.mrb[0].mxu0
      %v3082 = vadd.f32 0.0, %v3081
      %v3083 = vpop.f32.mrb[0].mxu0
      %3084 = vmatprep.mubr.bf16.mxu0 0
      %3085 = vmatmul.mubr.bf16.gmra.mrb[0].mxu0 %v2996
      %v3086 = vpop.f32.mrb[0].mxu0
      %v3087 = vadd.f32 0.0, %v3086
      %v3088 = vpop.f32.mrb[0].mxu0
      %v3089 = vpop.f32.mrb[0].mxu0
      %v3090 = vadd.f32 0.0, %v3089
      %v3091 = vpop.f32.mrb[0].mxu0
      %3092 = vmatprep.mubr.bf16.mxu0 0
      %3093 = vmatmul.mubr.bf16.gmra.mrb[0].mxu0 %v2999
      %v3094 = vpop.f32.mrb[0].mxu0
      %v3095 = vadd.f32 0.0, %v3094
      %v3096 = vpop.f32.mrb[0].mxu0
      %v3097 = vpop.f32.mrb[0].mxu0
      %v3098 = vadd.f32 0.0, %v3097
      %v3099 = vpop.f32.mrb[0].mxu0
      %3100 = vmatprep.mubr.bf16.mxu0 0
      %3101 = vmatmul.mubr.bf16.gmra.mrb[0].mxu0 %v3002
      %v3102 = vpop.f32.mrb[0].mxu0
      %v3103 = vadd.f32 0.0, %v3102
      %v3104 = vpop.f32.mrb[0].mxu0
      %v3105 = vpop.f32.mrb[0].mxu0
      %v3106 = vadd.f32 0.0, %v3105
      %v3107 = vpop.f32.mrb[0].mxu0
      %3108 = vmatprep.mubr.bf16.mxu0 0
      %3109 = vmatmul.mubr.bf16.gmra.mrb[0].mxu0 %v3005
      %v3110 = vpop.f32.mrb[0].mxu0
      %v3111 = vadd.f32 0.0, %v3110
      %v3112 = vpop.f32.mrb[0].mxu0
      %v3113 = vpop.f32.mrb[0].mxu0
      %v3114 = vadd.f32 0.0, %v3113
      %v3115 = vpop.f32.mrb[0].mxu0
      %3116 = vmatprep.mubr.bf16.mxu0 0
      %3117 = vmatmul.mubr.bf16.gmra.mrb[0].mxu0 %v3008
      %v3118 = vpop.f32.mrb[0].mxu0
      %v3119 = vadd.f32 0.0, %v3118
      %v3120 = vpop.f32.mrb[0].mxu0
      %v3121 = vpop.f32.mrb[0].mxu0
      %v3122 = vadd.f32 0.0, %v3121
      %v3123 = vpop.f32.mrb[0].mxu0
      %3124 = vmatprep.mubr.bf16.mxu0 0
      %3125 = vmatmul.mubr.bf16.gmra.mrb[0].mxu0 %v3011
      %v3126 = vpop.f32.mrb[0].mxu0
      %v3127 = vadd.f32 0.0, %v3126
      %v3128 = vpop.f32.mrb[0].mxu0
      %v3129 = vpop.f32.mrb[0].mxu0
      %v3130 = vadd.f32 0.0, %v3129
      %v3131 = vpop.f32.mrb[0].mxu0
      %3132 = vmatprep.mubr.bf16.mxu0 0
      %3133 = vmatmul.mubr.bf16.gmra.mrb[0].mxu0 %v3014
      %v3134 = vpop.f32.mrb[0].mxu0
      %v3135 = vadd.f32 0.0, %v3134
      %v3136 = vpop.f32.mrb[0].mxu0
      %v3137 = vpop.f32.mrb[0].mxu0
      %v3138 = vadd.f32 0.0, %v3137
      %v3139 = vpop.f32.mrb[0].mxu0
      %3140 = vmatprep.mubr.bf16.mxu0 0
      %3141 = vmatmul.mubr.bf16.gmra.mrb[0].mxu0 %v3017
      %v3142 = vpop.f32.mrb[0].mxu0
      %v3143 = vadd.f32 0.0, %v3142
      %v3144 = vpop.f32.mrb[0].mxu0
      %v3145 = vpop.f32.mrb[0].mxu0
      %v3146 = vadd.f32 0.0, %v3145
      %v3147 = vpop.f32.mrb[0].mxu0
      %3148 = vmatprep.mubr.bf16.mxu0 0
      %3149 = vmatmul.mubr.bf16.gmra.mrb[0].mxu0 %v3020
      %v3150 = vpop.f32.mrb[0].mxu0
      %v3151 = vadd.f32 0.0, %v3150
      %v3152 = vpop.f32.mrb[0].mxu0
      %v3153 = vpop.f32.mrb[0].mxu0
      %v3154 = vadd.f32 0.0, %v3153
      %v3155 = vpop.f32.mrb[0].mxu0
      %3156 = vmatprep.mubr.bf16.mxu0 0
      %3157 = vmatmul.mubr.bf16.gmra.mrb[0].mxu0 %v3023
      %v3158 = vpop.f32.mrb[0].mxu0
      %v3159 = vadd.f32 0.0, %v3158
      %v3160 = vpop.f32.mrb[0].mxu0
      %v3161 = vpop.f32.mrb[0].mxu0
      %v3162 = vadd.f32 0.0, %v3161
      %v3163 = vpop.f32.mrb[0].mxu0
      %3164 = vmatprep.mubr.bf16.mxu0 0
      %3165 = vmatmul.mubr.bf16.gmra.mrb[0].mxu0 %v3026
      %v3166 = vpop.f32.mrb[0].mxu0
      %v3167 = vadd.f32 0.0, %v3166
      %v3168 = vpop.f32.mrb[0].mxu0
      %v3169 = vpop.f32.mrb[0].mxu0
      %v3170 = vadd.f32 0.0, %v3169
      %v3171 = vpop.f32.mrb[0].mxu0
      %3172 = vdwg.mxu0
      %v3173 = vadd.f32 %v2794, %v3063
      %v3174 = vadd.f32 %v2795, %v3066
      %v3175 = vadd.f32 %v2796, %v3071
      %v3176 = vadd.f32 %v2797, %v3074
      %v3177 = vadd.f32 %v2798, %v3079
      %v3178 = vadd.f32 %v2799, %v3082
      %v3179 = vadd.f32 %v2800, %v3087
      %v3180 = vadd.f32 %v2801, %v3090
      %v3181 = vadd.f32 %v2802, %v3095
      %v3182 = vadd.f32 %v2803, %v3098
      %v3183 = vadd.f32 %v2804, %v3103
      %v3184 = vadd.f32 %v2805, %v3106
      %v3185 = vadd.f32 %v2806, %v3111
      %v3186 = vadd.f32 %v2807, %v3114
      %v3187 = vadd.f32 %v2808, %v3119
      %v3188 = vadd.f32 %v2809, %v3122
      %v3189 = vadd.f32 %v2810, %v3127
      %v3190 = vadd.f32 %v2811, %v3130
      %v3191 = vadd.f32 %v2812, %v3135
      %v3192 = vadd.f32 %v2813, %v3138
      %v3193 = vadd.f32 %v2814, %v3143
      %v3194 = vadd.f32 %v2815, %v3146
      %v3195 = vadd.f32 %v2816, %v3151
      %v3196 = vadd.f32 %v2817, %v3154
      %v3197 = vadd.f32 %v2818, %v3159
      %v3198 = vadd.f32 %v2819, %v3162
      %v3199 = vadd.f32 %v2820, %v3167
      %v3200 = vadd.f32 %v2821, %v3170
      %3201 = vst [vmem:[#allocation3] sm:$0xff] %v3173
      %3202 = vst [vmem:[#allocation3 + $0x8] sm:$0xff] %v3174
      %3203 = vst [vmem:[#allocation3 + $0x10] sm:$0xff] %v3175
      %3204 = vst [vmem:[#allocation3 + $0x18] sm:$0xff] %v3176
      %3205 = vst [vmem:[#allocation3 + $0x20] sm:$0xff] %v3177
      %3206 = vst [vmem:[#allocation3 + $0x28] sm:$0xff] %v3178
      %3207 = vst [vmem:[#allocation3 + $0x30] sm:$0xff] %v3179
      %3208 = vst [vmem:[#allocation3 + $0x38] sm:$0xff] %v3180
      %3209 = vst [vmem:[#allocation3 + $0x40] sm:$0xff] %v3181
      %3210 = vst [vmem:[#allocation3 + $0x48] sm:$0xff] %v3182
      %3211 = vst [vmem:[#allocation3 + $0x50] sm:$0xff] %v3183
      %3212 = vst [vmem:[#allocation3 + $0x58] sm:$0xff] %v3184
      %3213 = vst [vmem:[#allocation3 + $0x60] sm:$0xff] %v3185
      %3214 = vst [vmem:[#allocation3 + $0x68] sm:$0xff] %v3186
      %3215 = vst [vmem:[#allocation3 + $0x70] sm:$0xff] %v3187
      %3216 = vst [vmem:[#allocation3 + $0x78] sm:$0xff] %v3188
      %3217 = vst [vmem:[#allocation3 + $0x80] sm:$0xff] %v3189
      %3218 = vst [vmem:[#allocation3 + $0x88] sm:$0xff] %v3190
      %3219 = vst [vmem:[#allocation3 + $0x90] sm:$0xff] %v3191
      %3220 = vst [vmem:[#allocation3 + $0x98] sm:$0xff] %v3192
      %3221 = vst [vmem:[#allocation3 + $0xa0] sm:$0xff] %v3193
      %3222 = vst [vmem:[#allocation3 + $0xa8] sm:$0xff] %v3194
      %3223 = vst [vmem:[#allocation3 + $0xb0] sm:$0xff] %v3195
      %3224 = vst [vmem:[#allocation3 + $0xb8] sm:$0xff] %v3196
      %3225 = vst [vmem:[#allocation3 + $0xc0] sm:$0xff] %v3197
      %3226 = vst [vmem:[#allocation3 + $0xc8] sm:$0xff] %v3198
      %3227 = vst [vmem:[#allocation3 + $0xd0] sm:$0xff] %v3199
      %3228 = vst [vmem:[#allocation3 + $0xd8] sm:$0xff] %v3200
      %v3229 = vld [vmem:[#allocation3] sm:$0xff]
      %v3230 = vld [vmem:[#allocation3 + $0x8] sm:$0xff]
      %v3231 = vld [vmem:[#allocation3 + $0x10] sm:$0xff]
      %v3232 = vld [vmem:[#allocation3 + $0x18] sm:$0xff]
      %v3233 = vld [vmem:[#allocation3 + $0x20] sm:$0xff]
      %v3234 = vld [vmem:[#allocation3 + $0x28] sm:$0xff]
      %v3235 = vld [vmem:[#allocation3 + $0x30] sm:$0xff]
      %v3236 = vld [vmem:[#allocation3 + $0x38] sm:$0xff]
      %v3237 = vld [vmem:[#allocation3 + $0x40] sm:$0xff]
      %v3238 = vld [vmem:[#allocation3 + $0x48] sm:$0xff]
      %v3239 = vld [vmem:[#allocation3 + $0x50] sm:$0xff]
      %v3240 = vld [vmem:[#allocation3 + $0x58] sm:$0xff]
      %v3241 = vld [vmem:[#allocation3 + $0x60] sm:$0xff]
      %v3242 = vld [vmem:[#allocation3 + $0x68] sm:$0xff]
      %v3243 = vld [vmem:[#allocation3 + $0x70] sm:$0xff]
      %v3244 = vld [vmem:[#allocation3 + $0x78] sm:$0xff]
      %v3245 = vld [vmem:[#allocation3 + $0x80] sm:$0xff]
      %v3246 = vld [vmem:[#allocation3 + $0x88] sm:$0xff]
      %v3247 = vld [vmem:[#allocation3 + $0x90] sm:$0xff]
      %v3248 = vld [vmem:[#allocation3 + $0x98] sm:$0xff]
      %v3249 = vld [vmem:[#allocation3 + $0xa0] sm:$0xff]
      %v3250 = vld [vmem:[#allocation3 + $0xa8] sm:$0xff]
      %v3251 = vld [vmem:[#allocation3 + $0xb0] sm:$0xff]
      %v3252 = vld [vmem:[#allocation3 + $0xb8] sm:$0xff]
      %v3253 = vld [vmem:[#allocation3 + $0xc0] sm:$0xff]
      %v3254 = vld [vmem:[#allocation3 + $0xc8] sm:$0xff]
      %v3255 = vld [vmem:[#allocation3 + $0xd0] sm:$0xff]
      %v3256 = vld [vmem:[#allocation3 + $0xd8] sm:$0xff]
      %v3257 = vld [vmem:[#allocation2 + $0x10] sm:$0xf]
      %v3258 = vld [vmem:[#allocation2 + $0x14] sm:$0xf]
      %v3259 = vld [vmem:[#allocation2 + $0x18] sm:$0xf]
      %v3260 = vld [vmem:[#allocation2 + $0x1c] sm:$0xf]
      %v3261 = vld [vmem:[#allocation2 + $0x20] sm:$0xf]
      %v3262 = vld [vmem:[#allocation2 + $0x24] sm:$0xf]
      %v3263 = vld [vmem:[#allocation2 + $0x28] sm:$0xf]
      %v3264 = vld [vmem:[#allocation2 + $0x2c] sm:$0xf]
      %v3265 = vld [vmem:[#allocation2 + $0x30] sm:$0xf]
      %v3266 = vld [vmem:[#allocation2 + $0x34] sm:$0xf]
      %v3267 = vld [vmem:[#allocation2 + $0x38] sm:$0xf]
      %v3268 = vld [vmem:[#allocation2 + $0x3c] sm:$0xf]
      %v3269 = vld [vmem:[#allocation2 + $0x40] sm:$0xf]
      %v3270 = vld [vmem:[#allocation2 + $0x44] sm:$0xf]
      %v3271 = vld [vmem:[#allocation2 + $0x48] sm:$0xf]
      %v3272 = vld [vmem:[#allocation2 + $0x4c] sm:$0xf]
      %v3273 = vld [vmem:[#allocation2 + $0x50] sm:$0xf]
      %v3274 = vld [vmem:[#allocation2 + $0x54] sm:$0xf]
      %v3275 = vld [vmem:[#allocation2 + $0x58] sm:$0xf]
      %v3276 = vld [vmem:[#allocation2 + $0x5c] sm:$0xf]
      %v3277 = vld [vmem:[#allocation2 + $0x60] sm:$0xf]
      %v3278 = vld [vmem:[#allocation2 + $0x64] sm:$0xf]
      %v3279 = vld [vmem:[#allocation2 + $0x68] sm:$0xf]
      %v3280 = vld [vmem:[#allocation2 + $0x6c] sm:$0xf]
      %v3281 = vld [vmem:[#allocation2 + $0x70] sm:$0xf]
      %v3282 = vld [vmem:[#allocation2 + $0x74] sm:$0xf]
      %v3283 = vld [vmem:[#allocation2 + $0x78] sm:$0xf]
      %v3284 = vld [vmem:[#allocation2 + $0x7c] sm:$0xf]
      %s3285 = scalar_lea.vmem %s1, 192
      %v3286 = vld [vmem:[%s3285] sm:$0xf]
      %v3287 = vld [vmem:[%s3285 + $0x4] sm:$0xf]
      %v3288 = vld [vmem:[%s3285 + $0x8] sm:$0xf]
      %v3289 = vld [vmem:[%s3285 + $0xc] sm:$0xf]
      %v3290 = vld [vmem:[%s3285 + $0x10] sm:$0xf]
      %v3291 = vld [vmem:[%s3285 + $0x14] sm:$0xf]
      %v3292 = vld [vmem:[%s3285 + $0x18] sm:$0xf]
      %v3293 = vld [vmem:[%s3285 + $0x1c] sm:$0xf]
      %v3322 = vunpack.c.l.b16 %v3257
      %v3323 = vunpack.c.l.b16 %v3258
      %v3324 = vunpack.c.l.b16 %v3259
      %v3325 = vunpack.c.l.b16 %v3260
      %v3326 = vunpack.c.l.b16 %v3261
      %v3327 = vunpack.c.l.b16 %v3262
      %v3328 = vunpack.c.l.b16 %v3263
      %v3329 = vunpack.c.l.b16 %v3264
      %v3330 = vunpack.c.l.b16 %v3265
      %v3331 = vunpack.c.l.b16 %v3266
      %v3332 = vunpack.c.l.b16 %v3267
      %v3333 = vunpack.c.l.b16 %v3268
      %v3334 = vunpack.c.l.b16 %v3269
      %v3335 = vunpack.c.l.b16 %v3270
      %v3336 = vunpack.c.l.b16 %v3271
      %v3337 = vunpack.c.l.b16 %v3272
      %v3338 = vunpack.c.l.b16 %v3273
      %v3339 = vunpack.c.l.b16 %v3274
      %v3340 = vunpack.c.l.b16 %v3275
      %v3341 = vunpack.c.l.b16 %v3276
      %v3342 = vunpack.c.l.b16 %v3277
      %v3343 = vunpack.c.l.b16 %v3278
      %v3344 = vunpack.c.l.b16 %v3279
      %v3345 = vunpack.c.l.b16 %v3280
      %v3346 = vunpack.c.l.b16 %v3281
      %v3347 = vunpack.c.l.b16 %v3282
      %v3348 = vunpack.c.l.b16 %v3283
      %v3349 = vunpack.c.l.b16 %v3284
      %v3350 = vpack.c.b16 %v3323, %v3322
      %v3351 = vpack.c.b16 %v3325, %v3324
      %v3352 = vpack.c.b16 %v3327, %v3326
      %v3353 = vpack.c.b16 %v3329, %v3328
      %v3354 = vpack.c.b16 %v3331, %v3330
      %v3355 = vpack.c.b16 %v3333, %v3332
      %v3356 = vpack.c.b16 %v3335, %v3334
      %v3357 = vpack.c.b16 %v3337, %v3336
      %v3358 = vpack.c.b16 %v3339, %v3338
      %v3359 = vpack.c.b16 %v3341, %v3340
      %v3360 = vpack.c.b16 %v3343, %v3342
      %v3361 = vpack.c.b16 %v3345, %v3344
      %v3362 = vpack.c.b16 %v3347, %v3346
      %v3363 = vpack.c.b16 %v3349, %v3348
      %v3372 = vunpack.c.l.b16 %v3286
      %v3373 = vunpack.c.l.b16 %v3287
      %v3374 = vunpack.c.l.b16 %v3288
      %v3375 = vunpack.c.l.b16 %v3289
      %v3376 = vunpack.c.l.b16 %v3290
      %v3377 = vunpack.c.l.b16 %v3291
      %v3378 = vunpack.c.l.b16 %v3292
      %v3379 = vunpack.c.l.b16 %v3293
      %v3380 = vpack.c.b16 %v3373, %v3372
      %v3381 = vpack.c.b16 %v3375, %v3374
      %v3382 = vpack.c.b16 %v3377, %v3376
      %v3383 = vpack.c.b16 %v3379, %v3378
      %v3389 = vsel %vm667, %v3350, 0
      %v3392 = vsel %vm667, %v3351, 0
      %v3395 = vsel %vm667, %v3352, 0
      %v3398 = vsel %vm667, %v3353, 0
      %v3401 = vsel %vm667, %v3354, 0
      %v3404 = vsel %vm667, %v3355, 0
      %v3407 = vsel %vm667, %v3356, 0
      %v3410 = vsel %vm667, %v3357, 0
      %v3413 = vsel %vm667, %v3358, 0
      %v3416 = vsel %vm667, %v3359, 0
      %v3419 = vsel %vm667, %v3360, 0
      %v3422 = vsel %vm667, %v3361, 0
      %v3425 = vsel %vm667, %v3362, 0
      %v3428 = vsel %vm667, %v3363, 0
      %3430 = vmatprep.subr.bf16.mxu0 0
      %3431 = vmatpush1.bf16.msra.mxu0 %v3380
      %3432 = vmatprep.subr.bf16.mxu0 0
      %3433 = vmatpush1.bf16.msra.mxu0 %v3381
      %3434 = vmatprep.subr.bf16.mxu0 0
      %3435 = vmatpush1.bf16.msra.mxu0 %v3382
      %3436 = vmatprep.subr.bf16.mxu0 0
      %3437 = vmatpush1.bf16.msra.mxu0 %v3383
      %3438 = vmatprep.subr.bf16.mxu0 0
      %3439 = vmatpush1.bf16.msra.mxu0 0
      %3440 = vmatprep.subr.bf16.mxu0 0
      %3441 = vmatpush1.bf16.msra.mxu0 0
      %3442 = vmatprep.subr.bf16.mxu0 0
      %3443 = vmatpush1.bf16.msra.mxu0 0
      %3444 = vmatprep.subr.bf16.mxu0 0
      %3445 = vmatpush1.bf16.msra.mxu0 0
      %3446 = vmatprep.subr.bf16.mxu0 0
      %3447 = vmatpush1.bf16.msra.mxu0 0
      %3448 = vmatprep.subr.bf16.mxu0 0
      %3449 = vmatpush1.bf16.msra.mxu0 0
      %3450 = vmatprep.subr.bf16.mxu0 0
      %3451 = vmatpush1.bf16.msra.mxu0 0
      %3452 = vmatprep.subr.bf16.mxu0 0
      %3453 = vmatpush1.bf16.msra.mxu0 0
      %3454 = vmatprep.subr.bf16.mxu0 0
      %3455 = vmatpush1.bf16.msra.mxu0 0
      %3456 = vmatprep.subr.bf16.mxu0 0
      %3457 = vmatpush1.bf16.msra.mxu0 0
      %3458 = vmatprep.subr.bf16.mxu0 0
      %3459 = vmatpush1.bf16.msra.mxu0 0
      %3460 = vmatprep.subr.bf16.mxu0 0
      %3461 = vmatpush1.bf16.msra.mxu0 0
      %3462 = vmatprep.mubr.bf16.mxu0 0
      %3463 = vmatmul.mubr.bf16.gmra.mrb[0].mxu0 %v3389
      %v3464 = vpop.f32.mrb[0].mxu0
      %v3465 = vadd.f32 0.0, %v3464
      %v3466 = vpop.f32.mrb[0].mxu0
      %v3467 = vpop.f32.mrb[0].mxu0
      %v3468 = vadd.f32 0.0, %v3467
      %v3469 = vpop.f32.mrb[0].mxu0
      %3470 = vmatprep.mubr.bf16.mxu0 0
      %3471 = vmatmul.mubr.bf16.gmra.mrb[0].mxu0 %v3392
      %v3472 = vpop.f32.mrb[0].mxu0
      %v3473 = vadd.f32 0.0, %v3472
      %v3474 = vpop.f32.mrb[0].mxu0
      %v3475 = vpop.f32.mrb[0].mxu0
      %v3476 = vadd.f32 0.0, %v3475
      %v3477 = vpop.f32.mrb[0].mxu0
      %3478 = vmatprep.mubr.bf16.mxu0 0
      %3479 = vmatmul.mubr.bf16.gmra.mrb[0].mxu0 %v3395
      %v3480 = vpop.f32.mrb[0].mxu0
      %v3481 = vadd.f32 0.0, %v3480
      %v3482 = vpop.f32.mrb[0].mxu0
      %v3483 = vpop.f32.mrb[0].mxu0
      %v3484 = vadd.f32 0.0, %v3483
      %v3485 = vpop.f32.mrb[0].mxu0
      %3486 = vmatprep.mubr.bf16.mxu0 0
      %3487 = vmatmul.mubr.bf16.gmra.mrb[0].mxu0 %v3398
      %v3488 = vpop.f32.mrb[0].mxu0
      %v3489 = vadd.f32 0.0, %v3488
      %v3490 = vpop.f32.mrb[0].mxu0
      %v3491 = vpop.f32.mrb[0].mxu0
      %v3492 = vadd.f32 0.0, %v3491
      %v3493 = vpop.f32.mrb[0].mxu0
      %3494 = vmatprep.mubr.bf16.mxu0 0
      %3495 = vmatmul.mubr.bf16.gmra.mrb[0].mxu0 %v3401
      %v3496 = vpop.f32.mrb[0].mxu0
      %v3497 = vadd.f32 0.0, %v3496
      %v3498 = vpop.f32.mrb[0].mxu0
      %v3499 = vpop.f32.mrb[0].mxu0
      %v3500 = vadd.f32 0.0, %v3499
      %v3501 = vpop.f32.mrb[0].mxu0
      %3502 = vmatprep.mubr.bf16.mxu0 0
      %3503 = vmatmul.mubr.bf16.gmra.mrb[0].mxu0 %v3404
      %v3504 = vpop.f32.mrb[0].mxu0
      %v3505 = vadd.f32 0.0, %v3504
      %v3506 = vpop.f32.mrb[0].mxu0
      %v3507 = vpop.f32.mrb[0].mxu0
      %v3508 = vadd.f32 0.0, %v3507
      %v3509 = vpop.f32.mrb[0].mxu0
      %3510 = vmatprep.mubr.bf16.mxu0 0
      %3511 = vmatmul.mubr.bf16.gmra.mrb[0].mxu0 %v3407
      %v3512 = vpop.f32.mrb[0].mxu0
      %v3513 = vadd.f32 0.0, %v3512
      %v3514 = vpop.f32.mrb[0].mxu0
      %v3515 = vpop.f32.mrb[0].mxu0
      %v3516 = vadd.f32 0.0, %v3515
      %v3517 = vpop.f32.mrb[0].mxu0
      %3518 = vmatprep.mubr.bf16.mxu0 0
      %3519 = vmatmul.mubr.bf16.gmra.mrb[0].mxu0 %v3410
      %v3520 = vpop.f32.mrb[0].mxu0
      %v3521 = vadd.f32 0.0, %v3520
      %v3522 = vpop.f32.mrb[0].mxu0
      %v3523 = vpop.f32.mrb[0].mxu0
      %v3524 = vadd.f32 0.0, %v3523
      %v3525 = vpop.f32.mrb[0].mxu0
      %3526 = vmatprep.mubr.bf16.mxu0 0
      %3527 = vmatmul.mubr.bf16.gmra.mrb[0].mxu0 %v3413
      %v3528 = vpop.f32.mrb[0].mxu0
      %v3529 = vadd.f32 0.0, %v3528
      %v3530 = vpop.f32.mrb[0].mxu0
      %v3531 = vpop.f32.mrb[0].mxu0
      %v3532 = vadd.f32 0.0, %v3531
      %v3533 = vpop.f32.mrb[0].mxu0
      %3534 = vmatprep.mubr.bf16.mxu0 0
      %3535 = vmatmul.mubr.bf16.gmra.mrb[0].mxu0 %v3416
      %v3536 = vpop.f32.mrb[0].mxu0
      %v3537 = vadd.f32 0.0, %v3536
      %v3538 = vpop.f32.mrb[0].mxu0
      %v3539 = vpop.f32.mrb[0].mxu0
      %v3540 = vadd.f32 0.0, %v3539
      %v3541 = vpop.f32.mrb[0].mxu0
      %3542 = vmatprep.mubr.bf16.mxu0 0
      %3543 = vmatmul.mubr.bf16.gmra.mrb[0].mxu0 %v3419
      %v3544 = vpop.f32.mrb[0].mxu0
      %v3545 = vadd.f32 0.0, %v3544
      %v3546 = vpop.f32.mrb[0].mxu0
      %v3547 = vpop.f32.mrb[0].mxu0
      %v3548 = vadd.f32 0.0, %v3547
      %v3549 = vpop.f32.mrb[0].mxu0
      %3550 = vmatprep.mubr.bf16.mxu0 0
      %3551 = vmatmul.mubr.bf16.gmra.mrb[0].mxu0 %v3422
      %v3552 = vpop.f32.mrb[0].mxu0
      %v3553 = vadd.f32 0.0, %v3552
      %v3554 = vpop.f32.mrb[0].mxu0
      %v3555 = vpop.f32.mrb[0].mxu0
      %v3556 = vadd.f32 0.0, %v3555
      %v3557 = vpop.f32.mrb[0].mxu0
      %3558 = vmatprep.mubr.bf16.mxu0 0
      %3559 = vmatmul.mubr.bf16.gmra.mrb[0].mxu0 %v3425
      %v3560 = vpop.f32.mrb[0].mxu0
      %v3561 = vadd.f32 0.0, %v3560
      %v3562 = vpop.f32.mrb[0].mxu0
      %v3563 = vpop.f32.mrb[0].mxu0
      %v3564 = vadd.f32 0.0, %v3563
      %v3565 = vpop.f32.mrb[0].mxu0
      %3566 = vmatprep.mubr.bf16.mxu0 0
      %3567 = vmatmul.mubr.bf16.gmra.mrb[0].mxu0 %v3428
      %v3568 = vpop.f32.mrb[0].mxu0
      %v3569 = vadd.f32 0.0, %v3568
      %v3570 = vpop.f32.mrb[0].mxu0
      %v3571 = vpop.f32.mrb[0].mxu0
      %v3572 = vadd.f32 0.0, %v3571
      %v3573 = vpop.f32.mrb[0].mxu0
      %3574 = vdwg.mxu0
      %v3575 = vadd.f32 %v3229, %v3465
      %v3576 = vadd.f32 %v3230, %v3468
      %v3577 = vadd.f32 %v3231, %v3473
      %v3578 = vadd.f32 %v3232, %v3476
      %v3579 = vadd.f32 %v3233, %v3481
      %v3580 = vadd.f32 %v3234, %v3484
      %v3581 = vadd.f32 %v3235, %v3489
      %v3582 = vadd.f32 %v3236, %v3492
      %v3583 = vadd.f32 %v3237, %v3497
      %v3584 = vadd.f32 %v3238, %v3500
      %v3585 = vadd.f32 %v3239, %v3505
      %v3586 = vadd.f32 %v3240, %v3508
      %v3587 = vadd.f32 %v3241, %v3513
      %v3588 = vadd.f32 %v3242, %v3516
      %v3589 = vadd.f32 %v3243, %v3521
      %v3590 = vadd.f32 %v3244, %v3524
      %v3591 = vadd.f32 %v3245, %v3529
      %v3592 = vadd.f32 %v3246, %v3532
      %v3593 = vadd.f32 %v3247, %v3537
      %v3594 = vadd.f32 %v3248, %v3540
      %v3595 = vadd.f32 %v3249, %v3545
      %v3596 = vadd.f32 %v3250, %v3548
      %v3597 = vadd.f32 %v3251, %v3553
      %v3598 = vadd.f32 %v3252, %v3556
      %v3599 = vadd.f32 %v3253, %v3561
      %v3600 = vadd.f32 %v3254, %v3564
      %v3601 = vadd.f32 %v3255, %v3569
      %v3602 = vadd.f32 %v3256, %v3572
      %3603 = vst [vmem:[#allocation3] sm:$0xff] %v3575
      %3604 = vst [vmem:[#allocation3 + $0x8] sm:$0xff] %v3576
      %3605 = vst [vmem:[#allocation3 + $0x10] sm:$0xff] %v3577
      %3606 = vst [vmem:[#allocation3 + $0x18] sm:$0xff] %v3578
      %3607 = vst [vmem:[#allocation3 + $0x20] sm:$0xff] %v3579
      %3608 = vst [vmem:[#allocation3 + $0x28] sm:$0xff] %v3580
      %3609 = vst [vmem:[#allocation3 + $0x30] sm:$0xff] %v3581
      %3610 = vst [vmem:[#allocation3 + $0x38] sm:$0xff] %v3582
      %3611 = vst [vmem:[#allocation3 + $0x40] sm:$0xff] %v3583
      %3612 = vst [vmem:[#allocation3 + $0x48] sm:$0xff] %v3584
      %3613 = vst [vmem:[#allocation3 + $0x50] sm:$0xff] %v3585
      %3614 = vst [vmem:[#allocation3 + $0x58] sm:$0xff] %v3586
      %3615 = vst [vmem:[#allocation3 + $0x60] sm:$0xff] %v3587
      %3616 = vst [vmem:[#allocation3 + $0x68] sm:$0xff] %v3588
      %3617 = vst [vmem:[#allocation3 + $0x70] sm:$0xff] %v3589
      %3618 = vst [vmem:[#allocation3 + $0x78] sm:$0xff] %v3590
      %3619 = vst [vmem:[#allocation3 + $0x80] sm:$0xff] %v3591
      %3620 = vst [vmem:[#allocation3 + $0x88] sm:$0xff] %v3592
      %3621 = vst [vmem:[#allocation3 + $0x90] sm:$0xff] %v3593
      %3622 = vst [vmem:[#allocation3 + $0x98] sm:$0xff] %v3594
      %3623 = vst [vmem:[#allocation3 + $0xa0] sm:$0xff] %v3595
      %3624 = vst [vmem:[#allocation3 + $0xa8] sm:$0xff] %v3596
      %3625 = vst [vmem:[#allocation3 + $0xb0] sm:$0xff] %v3597
      %3626 = vst [vmem:[#allocation3 + $0xb8] sm:$0xff] %v3598
      %3627 = vst [vmem:[#allocation3 + $0xc0] sm:$0xff] %v3599
      %3628 = vst [vmem:[#allocation3 + $0xc8] sm:$0xff] %v3600
      %3629 = vst [vmem:[#allocation3 + $0xd0] sm:$0xff] %v3601
      %3630 = vst [vmem:[#allocation3 + $0xd8] sm:$0xff] %v3602
      %v3631 = vld [vmem:[#allocation3] sm:$0xff]
      %v3632 = vld [vmem:[#allocation3 + $0x8] sm:$0xff]
      %v3633 = vld [vmem:[#allocation3 + $0x10] sm:$0xff]
      %v3634 = vld [vmem:[#allocation3 + $0x18] sm:$0xff]
      %v3635 = vld [vmem:[#allocation3 + $0x20] sm:$0xff]
      %v3636 = vld [vmem:[#allocation3 + $0x28] sm:$0xff]
      %v3637 = vld [vmem:[#allocation3 + $0x30] sm:$0xff]
      %v3638 = vld [vmem:[#allocation3 + $0x38] sm:$0xff]
      %v3639 = vld [vmem:[#allocation3 + $0x40] sm:$0xff]
      %v3640 = vld [vmem:[#allocation3 + $0x48] sm:$0xff]
      %v3641 = vld [vmem:[#allocation3 + $0x50] sm:$0xff]
      %v3642 = vld [vmem:[#allocation3 + $0x58] sm:$0xff]
      %v3643 = vld [vmem:[#allocation3 + $0x60] sm:$0xff]
      %v3644 = vld [vmem:[#allocation3 + $0x68] sm:$0xff]
      %v3645 = vld [vmem:[#allocation3 + $0x70] sm:$0xff]
      %v3646 = vld [vmem:[#allocation3 + $0x78] sm:$0xff]
      %v3647 = vld [vmem:[#allocation3 + $0x80] sm:$0xff]
      %v3648 = vld [vmem:[#allocation3 + $0x88] sm:$0xff]
      %v3649 = vld [vmem:[#allocation3 + $0x90] sm:$0xff]
      %v3650 = vld [vmem:[#allocation3 + $0x98] sm:$0xff]
      %v3651 = vld [vmem:[#allocation3 + $0xa0] sm:$0xff]
      %v3652 = vld [vmem:[#allocation3 + $0xa8] sm:$0xff]
      %v3653 = vld [vmem:[#allocation3 + $0xb0] sm:$0xff]
      %v3654 = vld [vmem:[#allocation3 + $0xb8] sm:$0xff]
      %v3655 = vld [vmem:[#allocation3 + $0xc0] sm:$0xff]
      %v3656 = vld [vmem:[#allocation3 + $0xc8] sm:$0xff]
      %v3657 = vld [vmem:[#allocation3 + $0xd0] sm:$0xff]
      %v3658 = vld [vmem:[#allocation3 + $0xd8] sm:$0xff]
      %v3659 = vld [vmem:[#allocation2 + $0x10] sm:$0xf]
      %v3660 = vld [vmem:[#allocation2 + $0x14] sm:$0xf]
      %v3661 = vld [vmem:[#allocation2 + $0x18] sm:$0xf]
      %v3662 = vld [vmem:[#allocation2 + $0x1c] sm:$0xf]
      %v3663 = vld [vmem:[#allocation2 + $0x20] sm:$0xf]
      %v3664 = vld [vmem:[#allocation2 + $0x24] sm:$0xf]
      %v3665 = vld [vmem:[#allocation2 + $0x28] sm:$0xf]
      %v3666 = vld [vmem:[#allocation2 + $0x2c] sm:$0xf]
      %v3667 = vld [vmem:[#allocation2 + $0x30] sm:$0xf]
      %v3668 = vld [vmem:[#allocation2 + $0x34] sm:$0xf]
      %v3669 = vld [vmem:[#allocation2 + $0x38] sm:$0xf]
      %v3670 = vld [vmem:[#allocation2 + $0x3c] sm:$0xf]
      %v3671 = vld [vmem:[#allocation2 + $0x40] sm:$0xf]
      %v3672 = vld [vmem:[#allocation2 + $0x44] sm:$0xf]
      %v3673 = vld [vmem:[#allocation2 + $0x48] sm:$0xf]
      %v3674 = vld [vmem:[#allocation2 + $0x4c] sm:$0xf]
      %v3675 = vld [vmem:[#allocation2 + $0x50] sm:$0xf]
      %v3676 = vld [vmem:[#allocation2 + $0x54] sm:$0xf]
      %v3677 = vld [vmem:[#allocation2 + $0x58] sm:$0xf]
      %v3678 = vld [vmem:[#allocation2 + $0x5c] sm:$0xf]
      %v3679 = vld [vmem:[#allocation2 + $0x60] sm:$0xf]
      %v3680 = vld [vmem:[#allocation2 + $0x64] sm:$0xf]
      %v3681 = vld [vmem:[#allocation2 + $0x68] sm:$0xf]
      %v3682 = vld [vmem:[#allocation2 + $0x6c] sm:$0xf]
      %v3683 = vld [vmem:[#allocation2 + $0x70] sm:$0xf]
      %v3684 = vld [vmem:[#allocation2 + $0x74] sm:$0xf]
      %v3685 = vld [vmem:[#allocation2 + $0x78] sm:$0xf]
      %v3686 = vld [vmem:[#allocation2 + $0x7c] sm:$0xf]
      %v3687 = vld [vmem:[#allocation2 + $0x80] sm:$0x1]
      %s3688 = scalar_lea.vmem %s1, 224
      %v3689 = vld [vmem:[%s3688] sm:$0xf]
      %v3690 = vld [vmem:[%s3688 + $0x4] sm:$0xf]
      %v3691 = vld [vmem:[%s3688 + $0x8] sm:$0xf]
      %v3692 = vld [vmem:[%s3688 + $0xc] sm:$0xf]
      %v3693 = vld [vmem:[%s3688 + $0x10] sm:$0xf]
      %v3694 = vld [vmem:[%s3688 + $0x14] sm:$0xf]
      %v3695 = vld [vmem:[%s3688 + $0x18] sm:$0xf]
      %v3696 = vld [vmem:[%s3688 + $0x1c] sm:$0xf]
      %v3726 = vunpack.c.l.b16 %v3659
      %v3727 = vunpack.c.l.b16 %v3660
      %v3728 = vunpack.c.l.b16 %v3661
      %v3729 = vunpack.c.l.b16 %v3662
      %v3730 = vunpack.c.l.b16 %v3663
      %v3731 = vunpack.c.l.b16 %v3664
      %v3732 = vunpack.c.l.b16 %v3665
      %v3733 = vunpack.c.l.b16 %v3666
      %v3734 = vunpack.c.l.b16 %v3667
      %v3735 = vunpack.c.l.b16 %v3668
      %v3736 = vunpack.c.l.b16 %v3669
      %v3737 = vunpack.c.l.b16 %v3670
      %v3738 = vunpack.c.l.b16 %v3671
      %v3739 = vunpack.c.l.b16 %v3672
      %v3740 = vunpack.c.l.b16 %v3673
      %v3741 = vunpack.c.l.b16 %v3674
      %v3742 = vunpack.c.l.b16 %v3675
      %v3743 = vunpack.c.l.b16 %v3676
      %v3744 = vunpack.c.l.b16 %v3677
      %v3745 = vunpack.c.l.b16 %v3678
      %v3746 = vunpack.c.l.b16 %v3679
      %v3747 = vunpack.c.l.b16 %v3680
      %v3748 = vunpack.c.l.b16 %v3681
      %v3749 = vunpack.c.l.b16 %v3682
      %v3750 = vunpack.c.l.b16 %v3683
      %v3751 = vunpack.c.l.b16 %v3684
      %v3752 = vunpack.c.l.b16 %v3685
      %v3753 = vunpack.c.l.b16 %v3686
      %v3754 = vunpack.c.l.b16 %v3687
      %v3755 = vpack.c.b16 %v3727, %v3726
      %v3756 = vpack.c.b16 %v3729, %v3728
      %v3757 = vpack.c.b16 %v3731, %v3730
      %v3758 = vpack.c.b16 %v3733, %v3732
      %v3759 = vpack.c.b16 %v3735, %v3734
      %v3760 = vpack.c.b16 %v3737, %v3736
      %v3761 = vpack.c.b16 %v3739, %v3738
      %v3762 = vpack.c.b16 %v3741, %v3740
      %v3763 = vpack.c.b16 %v3743, %v3742
      %v3764 = vpack.c.b16 %v3745, %v3744
      %v3765 = vpack.c.b16 %v3747, %v3746
      %v3766 = vpack.c.b16 %v3749, %v3748
      %v3767 = vpack.c.b16 %v3751, %v3750
      %v3768 = vpack.c.b16 %v3753, %v3752
      %v3769 = vpack.c.b16 %v3754, %v3754
      %v3771 = vshrl.u32 %v3755, 16
      %v3773 = vshll.u32 %v3755, 16
      %v3775 = vrot.slane %v3773, 1
      %v3776 = vor.u32 %v3771, %v3775
      %v3778 = vshll.u32 %v3756, 16
      %v3780 = vrot.slane %v3778, 1
      %v3781 = vsel %vm1050, %v3776, %v3780
      %v3782 = vshrl.u32 %v3756, 16
      %v3784 = vor.u32 %v3782, %v3780
      %v3786 = vshll.u32 %v3757, 16
      %v3788 = vrot.slane %v3786, 1
      %v3789 = vsel %vm1050, %v3784, %v3788
      %v3790 = vshrl.u32 %v3757, 16
      %v3792 = vor.u32 %v3790, %v3788
      %v3794 = vshll.u32 %v3758, 16
      %v3796 = vrot.slane %v3794, 1
      %v3797 = vsel %vm1050, %v3792, %v3796
      %v3798 = vshrl.u32 %v3758, 16
      %v3800 = vor.u32 %v3798, %v3796
      %v3802 = vshll.u32 %v3759, 16
      %v3804 = vrot.slane %v3802, 1
      %v3805 = vsel %vm1050, %v3800, %v3804
      %v3806 = vshrl.u32 %v3759, 16
      %v3808 = vor.u32 %v3806, %v3804
      %v3810 = vshll.u32 %v3760, 16
      %v3812 = vrot.slane %v3810, 1
      %v3813 = vsel %vm1050, %v3808, %v3812
      %v3814 = vshrl.u32 %v3760, 16
      %v3816 = vor.u32 %v3814, %v3812
      %v3818 = vshll.u32 %v3761, 16
      %v3820 = vrot.slane %v3818, 1
      %v3821 = vsel %vm1050, %v3816, %v3820
      %v3822 = vshrl.u32 %v3761, 16
      %v3824 = vor.u32 %v3822, %v3820
      %v3826 = vshll.u32 %v3762, 16
      %v3828 = vrot.slane %v3826, 1
      %v3829 = vsel %vm1050, %v3824, %v3828
      %v3830 = vshrl.u32 %v3762, 16
      %v3832 = vor.u32 %v3830, %v3828
      %v3834 = vshll.u32 %v3763, 16
      %v3836 = vrot.slane %v3834, 1
      %v3837 = vsel %vm1050, %v3832, %v3836
      %v3838 = vshrl.u32 %v3763, 16
      %v3840 = vor.u32 %v3838, %v3836
      %v3842 = vshll.u32 %v3764, 16
      %v3844 = vrot.slane %v3842, 1
      %v3845 = vsel %vm1050, %v3840, %v3844
      %v3846 = vshrl.u32 %v3764, 16
      %v3848 = vor.u32 %v3846, %v3844
      %v3850 = vshll.u32 %v3765, 16
      %v3852 = vrot.slane %v3850, 1
      %v3853 = vsel %vm1050, %v3848, %v3852
      %v3854 = vshrl.u32 %v3765, 16
      %v3856 = vor.u32 %v3854, %v3852
      %v3858 = vshll.u32 %v3766, 16
      %v3860 = vrot.slane %v3858, 1
      %v3861 = vsel %vm1050, %v3856, %v3860
      %v3862 = vshrl.u32 %v3766, 16
      %v3864 = vor.u32 %v3862, %v3860
      %v3866 = vshll.u32 %v3767, 16
      %v3868 = vrot.slane %v3866, 1
      %v3869 = vsel %vm1050, %v3864, %v3868
      %v3870 = vshrl.u32 %v3767, 16
      %v3872 = vor.u32 %v3870, %v3868
      %v3874 = vshll.u32 %v3768, 16
      %v3876 = vrot.slane %v3874, 1
      %v3877 = vsel %vm1050, %v3872, %v3876
      %v3878 = vshrl.u32 %v3768, 16
      %v3880 = vor.u32 %v3878, %v3876
      %v3882 = vshll.u32 %v3769, 16
      %v3884 = vrot.slane %v3882, 1
      %v3885 = vsel %vm1050, %v3880, %v3884
      %v3894 = vunpack.c.l.b16 %v3689
      %v3895 = vunpack.c.l.b16 %v3690
      %v3896 = vunpack.c.l.b16 %v3691
      %v3897 = vunpack.c.l.b16 %v3692
      %v3898 = vunpack.c.l.b16 %v3693
      %v3899 = vunpack.c.l.b16 %v3694
      %v3900 = vunpack.c.l.b16 %v3695
      %v3901 = vunpack.c.l.b16 %v3696
      %v3902 = vpack.c.b16 %v3895, %v3894
      %v3903 = vpack.c.b16 %v3897, %v3896
      %v3904 = vpack.c.b16 %v3899, %v3898
      %v3905 = vpack.c.b16 %v3901, %v3900
      %v3911 = vsel %vm667, %v3781, 0
      %v3914 = vsel %vm667, %v3789, 0
      %v3917 = vsel %vm667, %v3797, 0
      %v3920 = vsel %vm667, %v3805, 0
      %v3923 = vsel %vm667, %v3813, 0
      %v3926 = vsel %vm667, %v3821, 0
      %v3929 = vsel %vm667, %v3829, 0
      %v3932 = vsel %vm667, %v3837, 0
      %v3935 = vsel %vm667, %v3845, 0
      %v3938 = vsel %vm667, %v3853, 0
      %v3941 = vsel %vm667, %v3861, 0
      %v3944 = vsel %vm667, %v3869, 0
      %v3947 = vsel %vm667, %v3877, 0
      %v3950 = vsel %vm667, %v3885, 0
      %3952 = vmatprep.subr.bf16.mxu0 0
      %3953 = vmatpush1.bf16.msra.mxu0 %v3902
      %3954 = vmatprep.subr.bf16.mxu0 0
      %3955 = vmatpush1.bf16.msra.mxu0 %v3903
      %3956 = vmatprep.subr.bf16.mxu0 0
      %3957 = vmatpush1.bf16.msra.mxu0 %v3904
      %3958 = vmatprep.subr.bf16.mxu0 0
      %3959 = vmatpush1.bf16.msra.mxu0 %v3905
      %3960 = vmatprep.subr.bf16.mxu0 0
      %3961 = vmatpush1.bf16.msra.mxu0 0
      %3962 = vmatprep.subr.bf16.mxu0 0
      %3963 = vmatpush1.bf16.msra.mxu0 0
      %3964 = vmatprep.subr.bf16.mxu0 0
      %3965 = vmatpush1.bf16.msra.mxu0 0
      %3966 = vmatprep.subr.bf16.mxu0 0
      %3967 = vmatpush1.bf16.msra.mxu0 0
      %3968 = vmatprep.subr.bf16.mxu0 0
      %3969 = vmatpush1.bf16.msra.mxu0 0
      %3970 = vmatprep.subr.bf16.mxu0 0
      %3971 = vmatpush1.bf16.msra.mxu0 0
      %3972 = vmatprep.subr.bf16.mxu0 0
      %3973 = vmatpush1.bf16.msra.mxu0 0
      %3974 = vmatprep.subr.bf16.mxu0 0
      %3975 = vmatpush1.bf16.msra.mxu0 0
      %3976 = vmatprep.subr.bf16.mxu0 0
      %3977 = vmatpush1.bf16.msra.mxu0 0
      %3978 = vmatprep.subr.bf16.mxu0 0
      %3979 = vmatpush1.bf16.msra.mxu0 0
      %3980 = vmatprep.subr.bf16.mxu0 0
      %3981 = vmatpush1.bf16.msra.mxu0 0
      %3982 = vmatprep.subr.bf16.mxu0 0
      %3983 = vmatpush1.bf16.msra.mxu0 0
      %3984 = vmatprep.mubr.bf16.mxu0 0
      %3985 = vmatmul.mubr.bf16.gmra.mrb[0].mxu0 %v3911
      %v3986 = vpop.f32.mrb[0].mxu0
      %v3987 = vadd.f32 0.0, %v3986
      %v3988 = vpop.f32.mrb[0].mxu0
      %v3989 = vpop.f32.mrb[0].mxu0
      %v3990 = vadd.f32 0.0, %v3989
      %v3991 = vpop.f32.mrb[0].mxu0
      %3992 = vmatprep.mubr.bf16.mxu0 0
      %3993 = vmatmul.mubr.bf16.gmra.mrb[0].mxu0 %v3914
      %v3994 = vpop.f32.mrb[0].mxu0
      %v3995 = vadd.f32 0.0, %v3994
      %v3996 = vpop.f32.mrb[0].mxu0
      %v3997 = vpop.f32.mrb[0].mxu0
      %v3998 = vadd.f32 0.0, %v3997
      %v3999 = vpop.f32.mrb[0].mxu0
      %4000 = vmatprep.mubr.bf16.mxu0 0
      %4001 = vmatmul.mubr.bf16.gmra.mrb[0].mxu0 %v3917
      %v4002 = vpop.f32.mrb[0].mxu0
      %v4003 = vadd.f32 0.0, %v4002
      %v4004 = vpop.f32.mrb[0].mxu0
      %v4005 = vpop.f32.mrb[0].mxu0
      %v4006 = vadd.f32 0.0, %v4005
      %v4007 = vpop.f32.mrb[0].mxu0
      %4008 = vmatprep.mubr.bf16.mxu0 0
      %4009 = vmatmul.mubr.bf16.gmra.mrb[0].mxu0 %v3920
      %v4010 = vpop.f32.mrb[0].mxu0
      %v4011 = vadd.f32 0.0, %v4010
      %v4012 = vpop.f32.mrb[0].mxu0
      %v4013 = vpop.f32.mrb[0].mxu0
      %v4014 = vadd.f32 0.0, %v4013
      %v4015 = vpop.f32.mrb[0].mxu0
      %4016 = vmatprep.mubr.bf16.mxu0 0
      %4017 = vmatmul.mubr.bf16.gmra.mrb[0].mxu0 %v3923
      %v4018 = vpop.f32.mrb[0].mxu0
      %v4019 = vadd.f32 0.0, %v4018
      %v4020 = vpop.f32.mrb[0].mxu0
      %v4021 = vpop.f32.mrb[0].mxu0
      %v4022 = vadd.f32 0.0, %v4021
      %v4023 = vpop.f32.mrb[0].mxu0
      %4024 = vmatprep.mubr.bf16.mxu0 0
      %4025 = vmatmul.mubr.bf16.gmra.mrb[0].mxu0 %v3926
      %v4026 = vpop.f32.mrb[0].mxu0
      %v4027 = vadd.f32 0.0, %v4026
      %v4028 = vpop.f32.mrb[0].mxu0
      %v4029 = vpop.f32.mrb[0].mxu0
      %v4030 = vadd.f32 0.0, %v4029
      %v4031 = vpop.f32.mrb[0].mxu0
      %4032 = vmatprep.mubr.bf16.mxu0 0
      %4033 = vmatmul.mubr.bf16.gmra.mrb[0].mxu0 %v3929
      %v4034 = vpop.f32.mrb[0].mxu0
      %v4035 = vadd.f32 0.0, %v4034
      %v4036 = vpop.f32.mrb[0].mxu0
      %v4037 = vpop.f32.mrb[0].mxu0
      %v4038 = vadd.f32 0.0, %v4037
      %v4039 = vpop.f32.mrb[0].mxu0
      %4040 = vmatprep.mubr.bf16.mxu0 0
      %4041 = vmatmul.mubr.bf16.gmra.mrb[0].mxu0 %v3932
      %v4042 = vpop.f32.mrb[0].mxu0
      %v4043 = vadd.f32 0.0, %v4042
      %v4044 = vpop.f32.mrb[0].mxu0
      %v4045 = vpop.f32.mrb[0].mxu0
      %v4046 = vadd.f32 0.0, %v4045
      %v4047 = vpop.f32.mrb[0].mxu0
      %4048 = vmatprep.mubr.bf16.mxu0 0
      %4049 = vmatmul.mubr.bf16.gmra.mrb[0].mxu0 %v3935
      %v4050 = vpop.f32.mrb[0].mxu0
      %v4051 = vadd.f32 0.0, %v4050
      %v4052 = vpop.f32.mrb[0].mxu0
      %v4053 = vpop.f32.mrb[0].mxu0
      %v4054 = vadd.f32 0.0, %v4053
      %v4055 = vpop.f32.mrb[0].mxu0
      %4056 = vmatprep.mubr.bf16.mxu0 0
      %4057 = vmatmul.mubr.bf16.gmra.mrb[0].mxu0 %v3938
      %v4058 = vpop.f32.mrb[0].mxu0
      %v4059 = vadd.f32 0.0, %v4058
      %v4060 = vpop.f32.mrb[0].mxu0
      %v4061 = vpop.f32.mrb[0].mxu0
      %v4062 = vadd.f32 0.0, %v4061
      %v4063 = vpop.f32.mrb[0].mxu0
      %4064 = vmatprep.mubr.bf16.mxu0 0
      %4065 = vmatmul.mubr.bf16.gmra.mrb[0].mxu0 %v3941
      %v4066 = vpop.f32.mrb[0].mxu0
      %v4067 = vadd.f32 0.0, %v4066
      %v4068 = vpop.f32.mrb[0].mxu0
      %v4069 = vpop.f32.mrb[0].mxu0
      %v4070 = vadd.f32 0.0, %v4069
      %v4071 = vpop.f32.mrb[0].mxu0
      %4072 = vmatprep.mubr.bf16.mxu0 0
      %4073 = vmatmul.mubr.bf16.gmra.mrb[0].mxu0 %v3944
      %v4074 = vpop.f32.mrb[0].mxu0
      %v4075 = vadd.f32 0.0, %v4074
      %v4076 = vpop.f32.mrb[0].mxu0
      %v4077 = vpop.f32.mrb[0].mxu0
      %v4078 = vadd.f32 0.0, %v4077
      %v4079 = vpop.f32.mrb[0].mxu0
      %4080 = vmatprep.mubr.bf16.mxu0 0
      %4081 = vmatmul.mubr.bf16.gmra.mrb[0].mxu0 %v3947
      %v4082 = vpop.f32.mrb[0].mxu0
      %v4083 = vadd.f32 0.0, %v4082
      %v4084 = vpop.f32.mrb[0].mxu0
      %v4085 = vpop.f32.mrb[0].mxu0
      %v4086 = vadd.f32 0.0, %v4085
      %v4087 = vpop.f32.mrb[0].mxu0
      %4088 = vmatprep.mubr.bf16.mxu0 0
      %4089 = vmatmul.mubr.bf16.gmra.mrb[0].mxu0 %v3950
      %v4090 = vpop.f32.mrb[0].mxu0
      %v4091 = vadd.f32 0.0, %v4090
      %v4092 = vpop.f32.mrb[0].mxu0
      %v4093 = vpop.f32.mrb[0].mxu0
      %v4094 = vadd.f32 0.0, %v4093
      %v4095 = vpop.f32.mrb[0].mxu0
      %4096 = vdwg.mxu0
      %v4097 = vadd.f32 %v3631, %v3987
      %v4098 = vadd.f32 %v3632, %v3990
      %v4099 = vadd.f32 %v3633, %v3995
      %v4100 = vadd.f32 %v3634, %v3998
      %v4101 = vadd.f32 %v3635, %v4003
      %v4102 = vadd.f32 %v3636, %v4006
      %v4103 = vadd.f32 %v3637, %v4011
      %v4104 = vadd.f32 %v3638, %v4014
      %v4105 = vadd.f32 %v3639, %v4019
      %v4106 = vadd.f32 %v3640, %v4022
      %v4107 = vadd.f32 %v3641, %v4027
      %v4108 = vadd.f32 %v3642, %v4030
      %v4109 = vadd.f32 %v3643, %v4035
      %v4110 = vadd.f32 %v3644, %v4038
      %v4111 = vadd.f32 %v3645, %v4043
      %v4112 = vadd.f32 %v3646, %v4046
      %v4113 = vadd.f32 %v3647, %v4051
      %v4114 = vadd.f32 %v3648, %v4054
      %v4115 = vadd.f32 %v3649, %v4059
      %v4116 = vadd.f32 %v3650, %v4062
      %v4117 = vadd.f32 %v3651, %v4067
      %v4118 = vadd.f32 %v3652, %v4070
      %v4119 = vadd.f32 %v3653, %v4075
      %v4120 = vadd.f32 %v3654, %v4078
      %v4121 = vadd.f32 %v3655, %v4083
      %v4122 = vadd.f32 %v3656, %v4086
      %v4123 = vadd.f32 %v3657, %v4091
      %v4124 = vadd.f32 %v3658, %v4094
      %4125 = vst [vmem:[#allocation3] sm:$0xff] %v4097
      %4126 = vst [vmem:[#allocation3 + $0x8] sm:$0xff] %v4098
      %4127 = vst [vmem:[#allocation3 + $0x10] sm:$0xff] %v4099
      %4128 = vst [vmem:[#allocation3 + $0x18] sm:$0xff] %v4100
      %4129 = vst [vmem:[#allocation3 + $0x20] sm:$0xff] %v4101
      %4130 = vst [vmem:[#allocation3 + $0x28] sm:$0xff] %v4102
      %4131 = vst [vmem:[#allocation3 + $0x30] sm:$0xff] %v4103
      %4132 = vst [vmem:[#allocation3 + $0x38] sm:$0xff] %v4104
      %4133 = vst [vmem:[#allocation3 + $0x40] sm:$0xff] %v4105
      %4134 = vst [vmem:[#allocation3 + $0x48] sm:$0xff] %v4106
      %4135 = vst [vmem:[#allocation3 + $0x50] sm:$0xff] %v4107
      %4136 = vst [vmem:[#allocation3 + $0x58] sm:$0xff] %v4108
      %4137 = vst [vmem:[#allocation3 + $0x60] sm:$0xff] %v4109
      %4138 = vst [vmem:[#allocation3 + $0x68] sm:$0xff] %v4110
      %4139 = vst [vmem:[#allocation3 + $0x70] sm:$0xff] %v4111
      %4140 = vst [vmem:[#allocation3 + $0x78] sm:$0xff] %v4112
      %4141 = vst [vmem:[#allocation3 + $0x80] sm:$0xff] %v4113
      %4142 = vst [vmem:[#allocation3 + $0x88] sm:$0xff] %v4114
      %4143 = vst [vmem:[#allocation3 + $0x90] sm:$0xff] %v4115
      %4144 = vst [vmem:[#allocation3 + $0x98] sm:$0xff] %v4116
      %4145 = vst [vmem:[#allocation3 + $0xa0] sm:$0xff] %v4117
      %4146 = vst [vmem:[#allocation3 + $0xa8] sm:$0xff] %v4118
      %4147 = vst [vmem:[#allocation3 + $0xb0] sm:$0xff] %v4119
      %4148 = vst [vmem:[#allocation3 + $0xb8] sm:$0xff] %v4120
      %4149 = vst [vmem:[#allocation3 + $0xc0] sm:$0xff] %v4121
      %4150 = vst [vmem:[#allocation3 + $0xc8] sm:$0xff] %v4122
      %4151 = vst [vmem:[#allocation3 + $0xd0] sm:$0xff] %v4123
      %4152 = vst [vmem:[#allocation3 + $0xd8] sm:$0xff] %v4124
      %v4153 = vld [vmem:[#allocation3] sm:$0xff]
      %v4154 = vld [vmem:[#allocation3 + $0x8] sm:$0xff]
      %v4155 = vld [vmem:[#allocation3 + $0x10] sm:$0xff]
      %v4156 = vld [vmem:[#allocation3 + $0x18] sm:$0xff]
      %v4157 = vld [vmem:[#allocation3 + $0x20] sm:$0xff]
      %v4158 = vld [vmem:[#allocation3 + $0x28] sm:$0xff]
      %v4159 = vld [vmem:[#allocation3 + $0x30] sm:$0xff]
      %v4160 = vld [vmem:[#allocation3 + $0x38] sm:$0xff]
      %v4161 = vld [vmem:[#allocation3 + $0x40] sm:$0xff]
      %v4162 = vld [vmem:[#allocation3 + $0x48] sm:$0xff]
      %v4163 = vld [vmem:[#allocation3 + $0x50] sm:$0xff]
      %v4164 = vld [vmem:[#allocation3 + $0x58] sm:$0xff]
      %v4165 = vld [vmem:[#allocation3 + $0x60] sm:$0xff]
      %v4166 = vld [vmem:[#allocation3 + $0x68] sm:$0xff]
      %v4167 = vld [vmem:[#allocation3 + $0x70] sm:$0xff]
      %v4168 = vld [vmem:[#allocation3 + $0x78] sm:$0xff]
      %v4169 = vld [vmem:[#allocation3 + $0x80] sm:$0xff]
      %v4170 = vld [vmem:[#allocation3 + $0x88] sm:$0xff]
      %v4171 = vld [vmem:[#allocation3 + $0x90] sm:$0xff]
      %v4172 = vld [vmem:[#allocation3 + $0x98] sm:$0xff]
      %v4173 = vld [vmem:[#allocation3 + $0xa0] sm:$0xff]
      %v4174 = vld [vmem:[#allocation3 + $0xa8] sm:$0xff]
      %v4175 = vld [vmem:[#allocation3 + $0xb0] sm:$0xff]
      %v4176 = vld [vmem:[#allocation3 + $0xb8] sm:$0xff]
      %v4177 = vld [vmem:[#allocation3 + $0xc0] sm:$0xff]
      %v4178 = vld [vmem:[#allocation3 + $0xc8] sm:$0xff]
      %v4179 = vld [vmem:[#allocation3 + $0xd0] sm:$0xff]
      %v4180 = vld [vmem:[#allocation3 + $0xd8] sm:$0xff]
      %v4181 = vld [vmem:[#allocation2 + $0x10] sm:$0xe]
      %v4182 = vld [vmem:[#allocation2 + $0x14] sm:$0xf]
      %v4183 = vld [vmem:[#allocation2 + $0x18] sm:$0xf]
      %v4184 = vld [vmem:[#allocation2 + $0x1c] sm:$0xf]
      %v4185 = vld [vmem:[#allocation2 + $0x20] sm:$0xf]
      %v4186 = vld [vmem:[#allocation2 + $0x24] sm:$0xf]
      %v4187 = vld [vmem:[#allocation2 + $0x28] sm:$0xf]
      %v4188 = vld [vmem:[#allocation2 + $0x2c] sm:$0xf]
      %v4189 = vld [vmem:[#allocation2 + $0x30] sm:$0xf]
      %v4190 = vld [vmem:[#allocation2 + $0x34] sm:$0xf]
      %v4191 = vld [vmem:[#allocation2 + $0x38] sm:$0xf]
      %v4192 = vld [vmem:[#allocation2 + $0x3c] sm:$0xf]
      %v4193 = vld [vmem:[#allocation2 + $0x40] sm:$0xf]
      %v4194 = vld [vmem:[#allocation2 + $0x44] sm:$0xf]
      %v4195 = vld [vmem:[#allocation2 + $0x48] sm:$0xf]
      %v4196 = vld [vmem:[#allocation2 + $0x4c] sm:$0xf]
      %v4197 = vld [vmem:[#allocation2 + $0x50] sm:$0xf]
      %v4198 = vld [vmem:[#allocation2 + $0x54] sm:$0xf]
      %v4199 = vld [vmem:[#allocation2 + $0x58] sm:$0xf]
      %v4200 = vld [vmem:[#allocation2 + $0x5c] sm:$0xf]
      %v4201 = vld [vmem:[#allocation2 + $0x60] sm:$0xf]
      %v4202 = vld [vmem:[#allocation2 + $0x64] sm:$0xf]
      %v4203 = vld [vmem:[#allocation2 + $0x68] sm:$0xf]
      %v4204 = vld [vmem:[#allocation2 + $0x6c] sm:$0xf]
      %v4205 = vld [vmem:[#allocation2 + $0x70] sm:$0xf]
      %v4206 = vld [vmem:[#allocation2 + $0x74] sm:$0xf]
      %v4207 = vld [vmem:[#allocation2 + $0x78] sm:$0xf]
      %v4208 = vld [vmem:[#allocation2 + $0x7c] sm:$0xf]
      %v4209 = vld [vmem:[#allocation2 + $0x80] sm:$0x1]
      %s4210 = scalar_lea.vmem %s1, 256
      %v4211 = vld [vmem:[%s4210] sm:$0xf]
      %v4212 = vld [vmem:[%s4210 + $0x4] sm:$0xf]
      %v4213 = vld [vmem:[%s4210 + $0x8] sm:$0xf]
      %v4214 = vld [vmem:[%s4210 + $0xc] sm:$0xf]
      %v4215 = vld [vmem:[%s4210 + $0x10] sm:$0xf]
      %v4216 = vld [vmem:[%s4210 + $0x14] sm:$0xf]
      %v4217 = vld [vmem:[%s4210 + $0x18] sm:$0xf]
      %v4218 = vld [vmem:[%s4210 + $0x1c] sm:$0xf]
      %v4248 = vunpack.c.l.b16 %v4181
      %v4249 = vunpack.c.l.b16 %v4182
      %v4250 = vunpack.c.l.b16 %v4183
      %v4251 = vunpack.c.l.b16 %v4184
      %v4252 = vunpack.c.l.b16 %v4185
      %v4253 = vunpack.c.l.b16 %v4186
      %v4254 = vunpack.c.l.b16 %v4187
      %v4255 = vunpack.c.l.b16 %v4188
      %v4256 = vunpack.c.l.b16 %v4189
      %v4257 = vunpack.c.l.b16 %v4190
      %v4258 = vunpack.c.l.b16 %v4191
      %v4259 = vunpack.c.l.b16 %v4192
      %v4260 = vunpack.c.l.b16 %v4193
      %v4261 = vunpack.c.l.b16 %v4194
      %v4262 = vunpack.c.l.b16 %v4195
      %v4263 = vunpack.c.l.b16 %v4196
      %v4264 = vunpack.c.l.b16 %v4197
      %v4265 = vunpack.c.l.b16 %v4198
      %v4266 = vunpack.c.l.b16 %v4199
      %v4267 = vunpack.c.l.b16 %v4200
      %v4268 = vunpack.c.l.b16 %v4201
      %v4269 = vunpack.c.l.b16 %v4202
      %v4270 = vunpack.c.l.b16 %v4203
      %v4271 = vunpack.c.l.b16 %v4204
      %v4272 = vunpack.c.l.b16 %v4205
      %v4273 = vunpack.c.l.b16 %v4206
      %v4274 = vunpack.c.l.b16 %v4207
      %v4275 = vunpack.c.l.b16 %v4208
      %v4276 = vunpack.c.l.b16 %v4209
      %v4277 = vpack.c.b16 %v4249, %v4248
      %v4278 = vpack.c.b16 %v4251, %v4250
      %v4279 = vpack.c.b16 %v4253, %v4252
      %v4280 = vpack.c.b16 %v4255, %v4254
      %v4281 = vpack.c.b16 %v4257, %v4256
      %v4282 = vpack.c.b16 %v4259, %v4258
      %v4283 = vpack.c.b16 %v4261, %v4260
      %v4284 = vpack.c.b16 %v4263, %v4262
      %v4285 = vpack.c.b16 %v4265, %v4264
      %v4286 = vpack.c.b16 %v4267, %v4266
      %v4287 = vpack.c.b16 %v4269, %v4268
      %v4288 = vpack.c.b16 %v4271, %v4270
      %v4289 = vpack.c.b16 %v4273, %v4272
      %v4290 = vpack.c.b16 %v4275, %v4274
      %v4291 = vpack.c.b16 %v4276, %v4276
      %v4292 = vrot.slane %v4277, 1
      %v4293 = vrot.slane %v4278, 1
      %v4294 = vsel %vm1573, %v4292, %v4293
      %v4295 = vrot.slane %v4279, 1
      %v4296 = vsel %vm1573, %v4293, %v4295
      %v4297 = vrot.slane %v4280, 1
      %v4298 = vsel %vm1573, %v4295, %v4297
      %v4299 = vrot.slane %v4281, 1
      %v4300 = vsel %vm1573, %v4297, %v4299
      %v4301 = vrot.slane %v4282, 1
      %v4302 = vsel %vm1573, %v4299, %v4301
      %v4303 = vrot.slane %v4283, 1
      %v4304 = vsel %vm1573, %v4301, %v4303
      %v4305 = vrot.slane %v4284, 1
      %v4306 = vsel %vm1573, %v4303, %v4305
      %v4307 = vrot.slane %v4285, 1
      %v4308 = vsel %vm1573, %v4305, %v4307
      %v4309 = vrot.slane %v4286, 1
      %v4310 = vsel %vm1573, %v4307, %v4309
      %v4311 = vrot.slane %v4287, 1
      %v4312 = vsel %vm1573, %v4309, %v4311
      %v4313 = vrot.slane %v4288, 1
      %v4314 = vsel %vm1573, %v4311, %v4313
      %v4315 = vrot.slane %v4289, 1
      %v4316 = vsel %vm1573, %v4313, %v4315
      %v4317 = vrot.slane %v4290, 1
      %v4318 = vsel %vm1573, %v4315, %v4317
      %v4319 = vrot.slane %v4291, 1
      %v4320 = vsel %vm1573, %v4317, %v4319
      %v4329 = vunpack.c.l.b16 %v4211
      %v4330 = vunpack.c.l.b16 %v4212
      %v4331 = vunpack.c.l.b16 %v4213
      %v4332 = vunpack.c.l.b16 %v4214
      %v4333 = vunpack.c.l.b16 %v4215
      %v4334 = vunpack.c.l.b16 %v4216
      %v4335 = vunpack.c.l.b16 %v4217
      %v4336 = vunpack.c.l.b16 %v4218
      %v4337 = vpack.c.b16 %v4330, %v4329
      %v4338 = vpack.c.b16 %v4332, %v4331
      %v4339 = vpack.c.b16 %v4334, %v4333
      %v4340 = vpack.c.b16 %v4336, %v4335
      %v4346 = vsel %vm667, %v4294, 0
      %v4349 = vsel %vm667, %v4296, 0
      %v4352 = vsel %vm667, %v4298, 0
      %v4355 = vsel %vm667, %v4300, 0
      %v4358 = vsel %vm667, %v4302, 0
      %v4361 = vsel %vm667, %v4304, 0
      %v4364 = vsel %vm667, %v4306, 0
      %v4367 = vsel %vm667, %v4308, 0
      %v4370 = vsel %vm667, %v4310, 0
      %v4373 = vsel %vm667, %v4312, 0
      %v4376 = vsel %vm667, %v4314, 0
      %v4379 = vsel %vm667, %v4316, 0
      %v4382 = vsel %vm667, %v4318, 0
      %v4385 = vsel %vm667, %v4320, 0
      %4387 = vmatprep.subr.bf16.mxu0 0
      %4388 = vmatpush1.bf16.msra.mxu0 %v4337
      %4389 = vmatprep.subr.bf16.mxu0 0
      %4390 = vmatpush1.bf16.msra.mxu0 %v4338
      %4391 = vmatprep.subr.bf16.mxu0 0
      %4392 = vmatpush1.bf16.msra.mxu0 %v4339
      %4393 = vmatprep.subr.bf16.mxu0 0
      %4394 = vmatpush1.bf16.msra.mxu0 %v4340
      %4395 = vmatprep.subr.bf16.mxu0 0
      %4396 = vmatpush1.bf16.msra.mxu0 0
      %4397 = vmatprep.subr.bf16.mxu0 0
      %4398 = vmatpush1.bf16.msra.mxu0 0
      %4399 = vmatprep.subr.bf16.mxu0 0
      %4400 = vmatpush1.bf16.msra.mxu0 0
      %4401 = vmatprep.subr.bf16.mxu0 0
      %4402 = vmatpush1.bf16.msra.mxu0 0
      %4403 = vmatprep.subr.bf16.mxu0 0
      %4404 = vmatpush1.bf16.msra.mxu0 0
      %4405 = vmatprep.subr.bf16.mxu0 0
      %4406 = vmatpush1.bf16.msra.mxu0 0
      %4407 = vmatprep.subr.bf16.mxu0 0
      %4408 = vmatpush1.bf16.msra.mxu0 0
      %4409 = vmatprep.subr.bf16.mxu0 0
      %4410 = vmatpush1.bf16.msra.mxu0 0
      %4411 = vmatprep.subr.bf16.mxu0 0
      %4412 = vmatpush1.bf16.msra.mxu0 0
      %4413 = vmatprep.subr.bf16.mxu0 0
      %4414 = vmatpush1.bf16.msra.mxu0 0
      %4415 = vmatprep.subr.bf16.mxu0 0
      %4416 = vmatpush1.bf16.msra.mxu0 0
      %4417 = vmatprep.subr.bf16.mxu0 0
      %4418 = vmatpush1.bf16.msra.mxu0 0
      %4419 = vmatprep.mubr.bf16.mxu0 0
      %4420 = vmatmul.mubr.bf16.gmra.mrb[0].mxu0 %v4346
      %v4421 = vpop.f32.mrb[0].mxu0
      %v4422 = vadd.f32 0.0, %v4421
      %v4423 = vpop.f32.mrb[0].mxu0
      %v4424 = vpop.f32.mrb[0].mxu0
      %v4425 = vadd.f32 0.0, %v4424
      %v4426 = vpop.f32.mrb[0].mxu0
      %4427 = vmatprep.mubr.bf16.mxu0 0
      %4428 = vmatmul.mubr.bf16.gmra.mrb[0].mxu0 %v4349
      %v4429 = vpop.f32.mrb[0].mxu0
      %v4430 = vadd.f32 0.0, %v4429
      %v4431 = vpop.f32.mrb[0].mxu0
      %v4432 = vpop.f32.mrb[0].mxu0
      %v4433 = vadd.f32 0.0, %v4432
      %v4434 = vpop.f32.mrb[0].mxu0
      %4435 = vmatprep.mubr.bf16.mxu0 0
      %4436 = vmatmul.mubr.bf16.gmra.mrb[0].mxu0 %v4352
      %v4437 = vpop.f32.mrb[0].mxu0
      %v4438 = vadd.f32 0.0, %v4437
      %v4439 = vpop.f32.mrb[0].mxu0
      %v4440 = vpop.f32.mrb[0].mxu0
      %v4441 = vadd.f32 0.0, %v4440
      %v4442 = vpop.f32.mrb[0].mxu0
      %4443 = vmatprep.mubr.bf16.mxu0 0
      %4444 = vmatmul.mubr.bf16.gmra.mrb[0].mxu0 %v4355
      %v4445 = vpop.f32.mrb[0].mxu0
      %v4446 = vadd.f32 0.0, %v4445
      %v4447 = vpop.f32.mrb[0].mxu0
      %v4448 = vpop.f32.mrb[0].mxu0
      %v4449 = vadd.f32 0.0, %v4448
      %v4450 = vpop.f32.mrb[0].mxu0
      %4451 = vmatprep.mubr.bf16.mxu0 0
      %4452 = vmatmul.mubr.bf16.gmra.mrb[0].mxu0 %v4358
      %v4453 = vpop.f32.mrb[0].mxu0
      %v4454 = vadd.f32 0.0, %v4453
      %v4455 = vpop.f32.mrb[0].mxu0
      %v4456 = vpop.f32.mrb[0].mxu0
      %v4457 = vadd.f32 0.0, %v4456
      %v4458 = vpop.f32.mrb[0].mxu0
      %4459 = vmatprep.mubr.bf16.mxu0 0
      %4460 = vmatmul.mubr.bf16.gmra.mrb[0].mxu0 %v4361
      %v4461 = vpop.f32.mrb[0].mxu0
      %v4462 = vadd.f32 0.0, %v4461
      %v4463 = vpop.f32.mrb[0].mxu0
      %v4464 = vpop.f32.mrb[0].mxu0
      %v4465 = vadd.f32 0.0, %v4464
      %v4466 = vpop.f32.mrb[0].mxu0
      %4467 = vmatprep.mubr.bf16.mxu0 0
      %4468 = vmatmul.mubr.bf16.gmra.mrb[0].mxu0 %v4364
      %v4469 = vpop.f32.mrb[0].mxu0
      %v4470 = vadd.f32 0.0, %v4469
      %v4471 = vpop.f32.mrb[0].mxu0
      %v4472 = vpop.f32.mrb[0].mxu0
      %v4473 = vadd.f32 0.0, %v4472
      %v4474 = vpop.f32.mrb[0].mxu0
      %4475 = vmatprep.mubr.bf16.mxu0 0
      %4476 = vmatmul.mubr.bf16.gmra.mrb[0].mxu0 %v4367
      %v4477 = vpop.f32.mrb[0].mxu0
      %v4478 = vadd.f32 0.0, %v4477
      %v4479 = vpop.f32.mrb[0].mxu0
      %v4480 = vpop.f32.mrb[0].mxu0
      %v4481 = vadd.f32 0.0, %v4480
      %v4482 = vpop.f32.mrb[0].mxu0
      %4483 = vmatprep.mubr.bf16.mxu0 0
      %4484 = vmatmul.mubr.bf16.gmra.mrb[0].mxu0 %v4370
      %v4485 = vpop.f32.mrb[0].mxu0
      %v4486 = vadd.f32 0.0, %v4485
      %v4487 = vpop.f32.mrb[0].mxu0
      %v4488 = vpop.f32.mrb[0].mxu0
      %v4489 = vadd.f32 0.0, %v4488
      %v4490 = vpop.f32.mrb[0].mxu0
      %4491 = vmatprep.mubr.bf16.mxu0 0
      %4492 = vmatmul.mubr.bf16.gmra.mrb[0].mxu0 %v4373
      %v4493 = vpop.f32.mrb[0].mxu0
      %v4494 = vadd.f32 0.0, %v4493
      %v4495 = vpop.f32.mrb[0].mxu0
      %v4496 = vpop.f32.mrb[0].mxu0
      %v4497 = vadd.f32 0.0, %v4496
      %v4498 = vpop.f32.mrb[0].mxu0
      %4499 = vmatprep.mubr.bf16.mxu0 0
      %4500 = vmatmul.mubr.bf16.gmra.mrb[0].mxu0 %v4376
      %v4501 = vpop.f32.mrb[0].mxu0
      %v4502 = vadd.f32 0.0, %v4501
      %v4503 = vpop.f32.mrb[0].mxu0
      %v4504 = vpop.f32.mrb[0].mxu0
      %v4505 = vadd.f32 0.0, %v4504
      %v4506 = vpop.f32.mrb[0].mxu0
      %4507 = vmatprep.mubr.bf16.mxu0 0
      %4508 = vmatmul.mubr.bf16.gmra.mrb[0].mxu0 %v4379
      %v4509 = vpop.f32.mrb[0].mxu0
      %v4510 = vadd.f32 0.0, %v4509
      %v4511 = vpop.f32.mrb[0].mxu0
      %v4512 = vpop.f32.mrb[0].mxu0
      %v4513 = vadd.f32 0.0, %v4512
      %v4514 = vpop.f32.mrb[0].mxu0
      %4515 = vmatprep.mubr.bf16.mxu0 0
      %4516 = vmatmul.mubr.bf16.gmra.mrb[0].mxu0 %v4382
      %v4517 = vpop.f32.mrb[0].mxu0
      %v4518 = vadd.f32 0.0, %v4517
      %v4519 = vpop.f32.mrb[0].mxu0
      %v4520 = vpop.f32.mrb[0].mxu0
      %v4521 = vadd.f32 0.0, %v4520
      %v4522 = vpop.f32.mrb[0].mxu0
      %4523 = vmatprep.mubr.bf16.mxu0 0
      %4524 = vmatmul.mubr.bf16.gmra.mrb[0].mxu0 %v4385
      %v4525 = vpop.f32.mrb[0].mxu0
      %v4526 = vadd.f32 0.0, %v4525
      %v4527 = vpop.f32.mrb[0].mxu0
      %v4528 = vpop.f32.mrb[0].mxu0
      %v4529 = vadd.f32 0.0, %v4528
      %v4530 = vpop.f32.mrb[0].mxu0
      %4531 = vdwg.mxu0
      %v4532 = vadd.f32 %v4153, %v4422
      %v4533 = vadd.f32 %v4154, %v4425
      %v4534 = vadd.f32 %v4155, %v4430
      %v4535 = vadd.f32 %v4156, %v4433
      %v4536 = vadd.f32 %v4157, %v4438
      %v4537 = vadd.f32 %v4158, %v4441
      %v4538 = vadd.f32 %v4159, %v4446
      %v4539 = vadd.f32 %v4160, %v4449
      %v4540 = vadd.f32 %v4161, %v4454
      %v4541 = vadd.f32 %v4162, %v4457
      %v4542 = vadd.f32 %v4163, %v4462
      %v4543 = vadd.f32 %v4164, %v4465
      %v4544 = vadd.f32 %v4165, %v4470
      %v4545 = vadd.f32 %v4166, %v4473
      %v4546 = vadd.f32 %v4167, %v4478
      %v4547 = vadd.f32 %v4168, %v4481
      %v4548 = vadd.f32 %v4169, %v4486
      %v4549 = vadd.f32 %v4170, %v4489
      %v4550 = vadd.f32 %v4171, %v4494
      %v4551 = vadd.f32 %v4172, %v4497
      %v4552 = vadd.f32 %v4173, %v4502
      %v4553 = vadd.f32 %v4174, %v4505
      %v4554 = vadd.f32 %v4175, %v4510
      %v4555 = vadd.f32 %v4176, %v4513
      %v4556 = vadd.f32 %v4177, %v4518
      %v4557 = vadd.f32 %v4178, %v4521
      %v4558 = vadd.f32 %v4179, %v4526
      %v4559 = vadd.f32 %v4180, %v4529
      %4560 = vst [vmem:[#allocation3] sm:$0xff] %v4532
      %4561 = vst [vmem:[#allocation3 + $0x8] sm:$0xff] %v4533
      %4562 = vst [vmem:[#allocation3 + $0x10] sm:$0xff] %v4534
      %4563 = vst [vmem:[#allocation3 + $0x18] sm:$0xff] %v4535
      %4564 = vst [vmem:[#allocation3 + $0x20] sm:$0xff] %v4536
      %4565 = vst [vmem:[#allocation3 + $0x28] sm:$0xff] %v4537
      %4566 = vst [vmem:[#allocation3 + $0x30] sm:$0xff] %v4538
      %4567 = vst [vmem:[#allocation3 + $0x38] sm:$0xff] %v4539
      %4568 = vst [vmem:[#allocation3 + $0x40] sm:$0xff] %v4540
      %4569 = vst [vmem:[#allocation3 + $0x48] sm:$0xff] %v4541
      %4570 = vst [vmem:[#allocation3 + $0x50] sm:$0xff] %v4542
      %4571 = vst [vmem:[#allocation3 + $0x58] sm:$0xff] %v4543
      %4572 = vst [vmem:[#allocation3 + $0x60] sm:$0xff] %v4544
      %4573 = vst [vmem:[#allocation3 + $0x68] sm:$0xff] %v4545
      %4574 = vst [vmem:[#allocation3 + $0x70] sm:$0xff] %v4546
      %4575 = vst [vmem:[#allocation3 + $0x78] sm:$0xff] %v4547
      %4576 = vst [vmem:[#allocation3 + $0x80] sm:$0xff] %v4548
      %4577 = vst [vmem:[#allocation3 + $0x88] sm:$0xff] %v4549
      %4578 = vst [vmem:[#allocation3 + $0x90] sm:$0xff] %v4550
      %4579 = vst [vmem:[#allocation3 + $0x98] sm:$0xff] %v4551
      %4580 = vst [vmem:[#allocation3 + $0xa0] sm:$0xff] %v4552
      %4581 = vst [vmem:[#allocation3 + $0xa8] sm:$0xff] %v4553
      %4582 = vst [vmem:[#allocation3 + $0xb0] sm:$0xff] %v4554
      %4583 = vst [vmem:[#allocation3 + $0xb8] sm:$0xff] %v4555
      %4584 = vst [vmem:[#allocation3 + $0xc0] sm:$0xff] %v4556
      %4585 = vst [vmem:[#allocation3 + $0xc8] sm:$0xff] %v4557
      %4586 = vst [vmem:[#allocation3 + $0xd0] sm:$0xff] %v4558
      %4587 = vst [vmem:[#allocation3 + $0xd8] sm:$0xff] %v4559
      %v4588 = vld [vmem:[#allocation3] sm:$0xff]
      %v4589 = vld [vmem:[#allocation3 + $0x8] sm:$0xff]
      %v4590 = vld [vmem:[#allocation3 + $0x10] sm:$0xff]
      %v4591 = vld [vmem:[#allocation3 + $0x18] sm:$0xff]
      %v4592 = vld [vmem:[#allocation3 + $0x20] sm:$0xff]
      %v4593 = vld [vmem:[#allocation3 + $0x28] sm:$0xff]
      %v4594 = vld [vmem:[#allocation3 + $0x30] sm:$0xff]
      %v4595 = vld [vmem:[#allocation3 + $0x38] sm:$0xff]
      %v4596 = vld [vmem:[#allocation3 + $0x40] sm:$0xff]
      %v4597 = vld [vmem:[#allocation3 + $0x48] sm:$0xff]
      %v4598 = vld [vmem:[#allocation3 + $0x50] sm:$0xff]
      %v4599 = vld [vmem:[#allocation3 + $0x58] sm:$0xff]
      %v4600 = vld [vmem:[#allocation3 + $0x60] sm:$0xff]
      %v4601 = vld [vmem:[#allocation3 + $0x68] sm:$0xff]
      %v4602 = vld [vmem:[#allocation3 + $0x70] sm:$0xff]
      %v4603 = vld [vmem:[#allocation3 + $0x78] sm:$0xff]
      %v4604 = vld [vmem:[#allocation3 + $0x80] sm:$0xff]
      %v4605 = vld [vmem:[#allocation3 + $0x88] sm:$0xff]
      %v4606 = vld [vmem:[#allocation3 + $0x90] sm:$0xff]
      %v4607 = vld [vmem:[#allocation3 + $0x98] sm:$0xff]
      %v4608 = vld [vmem:[#allocation3 + $0xa0] sm:$0xff]
      %v4609 = vld [vmem:[#allocation3 + $0xa8] sm:$0xff]
      %v4610 = vld [vmem:[#allocation3 + $0xb0] sm:$0xff]
      %v4611 = vld [vmem:[#allocation3 + $0xb8] sm:$0xff]
      %v4612 = vld [vmem:[#allocation3 + $0xc0] sm:$0xff]
      %v4613 = vld [vmem:[#allocation3 + $0xc8] sm:$0xff]
      %v4614 = vld [vmem:[#allocation3 + $0xd0] sm:$0xff]
      %v4615 = vld [vmem:[#allocation3 + $0xd8] sm:$0xff]
      %v4616 = vld [vmem:[%s2] sm:$0x1]
      %v4618 = vlaneseq
      %v4619 = vshrl.u32 %v4618, 7
      %v4620 = vsub.s32 0, %v4619
      %v4621 = vrot.slane %v4616, %v4620
      %v4623 = vadd.f32 %v4588, %v4621
      %v4624 = vadd.f32 %v4589, %v4621
      %v4625 = vadd.f32 %v4590, %v4621
      %v4626 = vadd.f32 %v4591, %v4621
      %v4627 = vadd.f32 %v4592, %v4621
      %v4628 = vadd.f32 %v4593, %v4621
      %v4629 = vadd.f32 %v4594, %v4621
      %v4630 = vadd.f32 %v4595, %v4621
      %v4631 = vadd.f32 %v4596, %v4621
      %v4632 = vadd.f32 %v4597, %v4621
      %v4633 = vadd.f32 %v4598, %v4621
      %v4634 = vadd.f32 %v4599, %v4621
      %v4635 = vadd.f32 %v4600, %v4621
      %v4636 = vadd.f32 %v4601, %v4621
      %v4637 = vadd.f32 %v4602, %v4621
      %v4638 = vadd.f32 %v4603, %v4621
      %v4639 = vadd.f32 %v4604, %v4621
      %v4640 = vadd.f32 %v4605, %v4621
      %v4641 = vadd.f32 %v4606, %v4621
      %v4642 = vadd.f32 %v4607, %v4621
      %v4643 = vadd.f32 %v4608, %v4621
      %v4644 = vadd.f32 %v4609, %v4621
      %v4645 = vadd.f32 %v4610, %v4621
      %v4646 = vadd.f32 %v4611, %v4621
      %v4647 = vadd.f32 %v4612, %v4621
      %v4648 = vadd.f32 %v4613, %v4621
      %v4649 = vadd.f32 %v4614, %v4621
      %v4650 = vadd.f32 %v4615, %v4621
      %4651 = vst [vmem:[%s273] sm:$0xff] %v4623
      %4652 = vst [vmem:[%s273 + $0x8] sm:$0xff] %v4624
      %4653 = vst [vmem:[%s273 + $0x10] sm:$0xff] %v4625
      %4654 = vst [vmem:[%s273 + $0x18] sm:$0xff] %v4626
      %4655 = vst [vmem:[%s273 + $0x20] sm:$0xff] %v4627
      %4656 = vst [vmem:[%s273 + $0x28] sm:$0xff] %v4628
      %4657 = vst [vmem:[%s273 + $0x30] sm:$0xff] %v4629
      %4658 = vst [vmem:[%s273 + $0x38] sm:$0xff] %v4630
      %4659 = vst [vmem:[%s273 + $0x40] sm:$0xff] %v4631
      %4660 = vst [vmem:[%s273 + $0x48] sm:$0xff] %v4632
      %4661 = vst [vmem:[%s273 + $0x50] sm:$0xff] %v4633
      %4662 = vst [vmem:[%s273 + $0x58] sm:$0xff] %v4634
      %4663 = vst [vmem:[%s273 + $0x60] sm:$0xff] %v4635
      %4664 = vst [vmem:[%s273 + $0x68] sm:$0xff] %v4636
      %4665 = vst [vmem:[%s273 + $0x70] sm:$0xff] %v4637
      %4666 = vst [vmem:[%s273 + $0x78] sm:$0xff] %v4638
      %4667 = vst [vmem:[%s273 + $0x80] sm:$0xff] %v4639
      %4668 = vst [vmem:[%s273 + $0x88] sm:$0xff] %v4640
      %4669 = vst [vmem:[%s273 + $0x90] sm:$0xff] %v4641
      %4670 = vst [vmem:[%s273 + $0x98] sm:$0xff] %v4642
      %4671 = vst [vmem:[%s273 + $0xa0] sm:$0xff] %v4643
      %4672 = vst [vmem:[%s273 + $0xa8] sm:$0xff] %v4644
      %4673 = vst [vmem:[%s273 + $0xb0] sm:$0xff] %v4645
      %4674 = vst [vmem:[%s273 + $0xb8] sm:$0xff] %v4646
      %4675 = vst [vmem:[%s273 + $0xc0] sm:$0xff] %v4647
      %4676 = vst [vmem:[%s273 + $0xc8] sm:$0xff] %v4648
      %4677 = vst [vmem:[%s273 + $0xd0] sm:$0xff] %v4649
      %4678 = vst [vmem:[%s273 + $0xd8] sm:$0xff] %v4650
      %4679 = vst [vmem:[%s273 + $0xe0] sm:$0xff] 0.0
      %v4680 = vlaneseq
      %v4681 = vshrl.u32 %v4680, 7
      %v4682 = vadd.s32 %v4681, 8
      %v4683 = vadd.s32 %v4681, 16
      %v4684 = vadd.s32 %v4681, 24
      %v4685 = vadd.s32 %v4681, 32
      %v4686 = vadd.s32 %v4681, 40
      %v4687 = vadd.s32 %v4681, 48
      %v4688 = vadd.s32 %v4681, 56
      %v4689 = vadd.s32 %v4681, 64
      %v4690 = vadd.s32 %v4681, 72
      %v4691 = vadd.s32 %v4681, 80
      %v4692 = vadd.s32 %v4681, 88
      %v4693 = vadd.s32 %v4681, 96
      %v4694 = vadd.s32 %v4681, 104
      %v4695 = vadd.s32 %v4681, 112
      %v4696 = vadd.s32 %v4681, 120
      %v4697 = vadd.s32 %v4681, 128
      %v4698 = vadd.s32 %v4681, 136
      %v4699 = vadd.s32 %v4681, 144
      %v4700 = vadd.s32 %v4681, 152
      %v4701 = vadd.s32 %v4681, 160
      %v4702 = vadd.s32 %v4681, 168
      %v4703 = vadd.s32 %v4681, 176
      %v4704 = vadd.s32 %v4681, 184
      %v4705 = vadd.s32 %v4681, 192
      %v4706 = vadd.s32 %v4681, 200
      %v4707 = vadd.s32 %v4681, 208
      %v4708 = vadd.s32 %v4681, 216
      %vm4709 = vcmp.lt.s32.totalorder %v4681, 0
      %v4710 = vsub.s32 0, %v4681
      %v4711 = vsel %vm4709, %v4710, %v4681
      %v4712 = vshrl.u32 %v4711, 4
      %v4713 = vand.u32 %v4711, 15
      %v4714 = vsub.s32 0, %v4713
      %v4715 = vsel %vm4709, %v4714, %v4713
      %vm4716 = vcmp.lt.s32.totalorder %v4682, 0
      %v4717 = vsub.s32 0, %v4682
      %v4718 = vsel %vm4716, %v4717, %v4682
      %v4719 = vshrl.u32 %v4718, 4
      %v4720 = vand.u32 %v4718, 15
      %v4721 = vsub.s32 0, %v4720
      %v4722 = vsel %vm4716, %v4721, %v4720
      %vm4723 = vcmp.lt.s32.totalorder %v4683, 0
      %v4724 = vsub.s32 0, %v4683
      %v4725 = vsel %vm4723, %v4724, %v4683
      %v4726 = vshrl.u32 %v4725, 4
      %v4727 = vand.u32 %v4725, 15
      %v4728 = vsub.s32 0, %v4727
      %v4729 = vsel %vm4723, %v4728, %v4727
      %vm4730 = vcmp.lt.s32.totalorder %v4684, 0
      %v4731 = vsub.s32 0, %v4684
      %v4732 = vsel %vm4730, %v4731, %v4684
      %v4733 = vshrl.u32 %v4732, 4
      %v4734 = vand.u32 %v4732, 15
      %v4735 = vsub.s32 0, %v4734
      %v4736 = vsel %vm4730, %v4735, %v4734
      %vm4737 = vcmp.lt.s32.totalorder %v4685, 0
      %v4738 = vsub.s32 0, %v4685
      %v4739 = vsel %vm4737, %v4738, %v4685
      %v4740 = vshrl.u32 %v4739, 4
      %v4741 = vand.u32 %v4739, 15
      %v4742 = vsub.s32 0, %v4741
      %v4743 = vsel %vm4737, %v4742, %v4741
      %vm4744 = vcmp.lt.s32.totalorder %v4686, 0
      %v4745 = vsub.s32 0, %v4686
      %v4746 = vsel %vm4744, %v4745, %v4686
      %v4747 = vshrl.u32 %v4746, 4
      %v4748 = vand.u32 %v4746, 15
      %v4749 = vsub.s32 0, %v4748
      %v4750 = vsel %vm4744, %v4749, %v4748
      %vm4751 = vcmp.lt.s32.totalorder %v4687, 0
      %v4752 = vsub.s32 0, %v4687
      %v4753 = vsel %vm4751, %v4752, %v4687
      %v4754 = vshrl.u32 %v4753, 4
      %v4755 = vand.u32 %v4753, 15
      %v4756 = vsub.s32 0, %v4755
      %v4757 = vsel %vm4751, %v4756, %v4755
      %vm4758 = vcmp.lt.s32.totalorder %v4688, 0
      %v4759 = vsub.s32 0, %v4688
      %v4760 = vsel %vm4758, %v4759, %v4688
      %v4761 = vshrl.u32 %v4760, 4
      %v4762 = vand.u32 %v4760, 15
      %v4763 = vsub.s32 0, %v4762
      %v4764 = vsel %vm4758, %v4763, %v4762
      %vm4765 = vcmp.lt.s32.totalorder %v4689, 0
      %v4766 = vsub.s32 0, %v4689
      %v4767 = vsel %vm4765, %v4766, %v4689
      %v4768 = vshrl.u32 %v4767, 4
      %v4769 = vand.u32 %v4767, 15
      %v4770 = vsub.s32 0, %v4769
      %v4771 = vsel %vm4765, %v4770, %v4769
      %vm4772 = vcmp.lt.s32.totalorder %v4690, 0
      %v4773 = vsub.s32 0, %v4690
      %v4774 = vsel %vm4772, %v4773, %v4690
      %v4775 = vshrl.u32 %v4774, 4
      %v4776 = vand.u32 %v4774, 15
      %v4777 = vsub.s32 0, %v4776
      %v4778 = vsel %vm4772, %v4777, %v4776
      %vm4779 = vcmp.lt.s32.totalorder %v4691, 0
      %v4780 = vsub.s32 0, %v4691
      %v4781 = vsel %vm4779, %v4780, %v4691
      %v4782 = vshrl.u32 %v4781, 4
      %v4783 = vand.u32 %v4781, 15
      %v4784 = vsub.s32 0, %v4783
      %v4785 = vsel %vm4779, %v4784, %v4783
      %vm4786 = vcmp.lt.s32.totalorder %v4692, 0
      %v4787 = vsub.s32 0, %v4692
      %v4788 = vsel %vm4786, %v4787, %v4692
      %v4789 = vshrl.u32 %v4788, 4
      %v4790 = vand.u32 %v4788, 15
      %v4791 = vsub.s32 0, %v4790
      %v4792 = vsel %vm4786, %v4791, %v4790
      %vm4793 = vcmp.lt.s32.totalorder %v4693, 0
      %v4794 = vsub.s32 0, %v4693
      %v4795 = vsel %vm4793, %v4794, %v4693
      %v4796 = vshrl.u32 %v4795, 4
      %v4797 = vand.u32 %v4795, 15
      %v4798 = vsub.s32 0, %v4797
      %v4799 = vsel %vm4793, %v4798, %v4797
      %vm4800 = vcmp.lt.s32.totalorder %v4694, 0
      %v4801 = vsub.s32 0, %v4694
      %v4802 = vsel %vm4800, %v4801, %v4694
      %v4803 = vshrl.u32 %v4802, 4
      %v4804 = vand.u32 %v4802, 15
      %v4805 = vsub.s32 0, %v4804
      %v4806 = vsel %vm4800, %v4805, %v4804
      %vm4807 = vcmp.lt.s32.totalorder %v4695, 0
      %v4808 = vsub.s32 0, %v4695
      %v4809 = vsel %vm4807, %v4808, %v4695
      %v4810 = vshrl.u32 %v4809, 4
      %v4811 = vand.u32 %v4809, 15
      %v4812 = vsub.s32 0, %v4811
      %v4813 = vsel %vm4807, %v4812, %v4811
      %vm4814 = vcmp.lt.s32.totalorder %v4696, 0
      %v4815 = vsub.s32 0, %v4696
      %v4816 = vsel %vm4814, %v4815, %v4696
      %v4817 = vshrl.u32 %v4816, 4
      %v4818 = vand.u32 %v4816, 15
      %v4819 = vsub.s32 0, %v4818
      %v4820 = vsel %vm4814, %v4819, %v4818
      %vm4821 = vcmp.lt.s32.totalorder %v4697, 0
      %v4822 = vsub.s32 0, %v4697
      %v4823 = vsel %vm4821, %v4822, %v4697
      %v4824 = vshrl.u32 %v4823, 4
      %v4825 = vand.u32 %v4823, 15
      %v4826 = vsub.s32 0, %v4825
      %v4827 = vsel %vm4821, %v4826, %v4825
      %vm4828 = vcmp.lt.s32.totalorder %v4698, 0
      %v4829 = vsub.s32 0, %v4698
      %v4830 = vsel %vm4828, %v4829, %v4698
      %v4831 = vshrl.u32 %v4830, 4
      %v4832 = vand.u32 %v4830, 15
      %v4833 = vsub.s32 0, %v4832
      %v4834 = vsel %vm4828, %v4833, %v4832
      %vm4835 = vcmp.lt.s32.totalorder %v4699, 0
      %v4836 = vsub.s32 0, %v4699
      %v4837 = vsel %vm4835, %v4836, %v4699
      %v4838 = vshrl.u32 %v4837, 4
      %v4839 = vand.u32 %v4837, 15
      %v4840 = vsub.s32 0, %v4839
      %v4841 = vsel %vm4835, %v4840, %v4839
      %vm4842 = vcmp.lt.s32.totalorder %v4700, 0
      %v4843 = vsub.s32 0, %v4700
      %v4844 = vsel %vm4842, %v4843, %v4700
      %v4845 = vshrl.u32 %v4844, 4
      %v4846 = vand.u32 %v4844, 15
      %v4847 = vsub.s32 0, %v4846
      %v4848 = vsel %vm4842, %v4847, %v4846
      %vm4849 = vcmp.lt.s32.totalorder %v4701, 0
      %v4850 = vsub.s32 0, %v4701
      %v4851 = vsel %vm4849, %v4850, %v4701
      %v4852 = vshrl.u32 %v4851, 4
      %v4853 = vand.u32 %v4851, 15
      %v4854 = vsub.s32 0, %v4853
      %v4855 = vsel %vm4849, %v4854, %v4853
      %vm4856 = vcmp.lt.s32.totalorder %v4702, 0
      %v4857 = vsub.s32 0, %v4702
      %v4858 = vsel %vm4856, %v4857, %v4702
      %v4859 = vshrl.u32 %v4858, 4
      %v4860 = vand.u32 %v4858, 15
      %v4861 = vsub.s32 0, %v4860
      %v4862 = vsel %vm4856, %v4861, %v4860
      %vm4863 = vcmp.lt.s32.totalorder %v4703, 0
      %v4864 = vsub.s32 0, %v4703
      %v4865 = vsel %vm4863, %v4864, %v4703
      %v4866 = vshrl.u32 %v4865, 4
      %v4867 = vand.u32 %v4865, 15
      %v4868 = vsub.s32 0, %v4867
      %v4869 = vsel %vm4863, %v4868, %v4867
      %vm4870 = vcmp.lt.s32.totalorder %v4704, 0
      %v4871 = vsub.s32 0, %v4704
      %v4872 = vsel %vm4870, %v4871, %v4704
      %v4873 = vshrl.u32 %v4872, 4
      %v4874 = vand.u32 %v4872, 15
      %v4875 = vsub.s32 0, %v4874
      %v4876 = vsel %vm4870, %v4875, %v4874
      %vm4877 = vcmp.lt.s32.totalorder %v4705, 0
      %v4878 = vsub.s32 0, %v4705
      %v4879 = vsel %vm4877, %v4878, %v4705
      %v4880 = vshrl.u32 %v4879, 4
      %v4881 = vand.u32 %v4879, 15
      %v4882 = vsub.s32 0, %v4881
      %v4883 = vsel %vm4877, %v4882, %v4881
      %vm4884 = vcmp.lt.s32.totalorder %v4706, 0
      %v4885 = vsub.s32 0, %v4706
      %v4886 = vsel %vm4884, %v4885, %v4706
      %v4887 = vshrl.u32 %v4886, 4
      %v4888 = vand.u32 %v4886, 15
      %v4889 = vsub.s32 0, %v4888
      %v4890 = vsel %vm4884, %v4889, %v4888
      %vm4891 = vcmp.lt.s32.totalorder %v4707, 0
      %v4892 = vsub.s32 0, %v4707
      %v4893 = vsel %vm4891, %v4892, %v4707
      %v4894 = vshrl.u32 %v4893, 4
      %v4895 = vand.u32 %v4893, 15
      %v4896 = vsub.s32 0, %v4895
      %v4897 = vsel %vm4891, %v4896, %v4895
      %vm4898 = vcmp.lt.s32.totalorder %v4708, 0
      %v4899 = vsub.s32 0, %v4708
      %v4900 = vsel %vm4898, %v4899, %v4708
      %v4901 = vshrl.u32 %v4900, 4
      %v4902 = vand.u32 %v4900, 15
      %v4903 = vsub.s32 0, %v4902
      %v4904 = vsel %vm4898, %v4903, %v4902
      %vm4905 = vcmp.ne.s32.totalorder %v4715, 0
      %vm4906 = vcmp.ne.s32.totalorder %v4722, 0
      %vm4907 = vcmp.ne.s32.totalorder %v4729, 0
      %vm4908 = vcmp.ne.s32.totalorder %v4736, 0
      %vm4909 = vcmp.ne.s32.totalorder %v4743, 0
      %vm4910 = vcmp.ne.s32.totalorder %v4750, 0
      %vm4911 = vcmp.ne.s32.totalorder %v4757, 0
      %vm4912 = vcmp.ne.s32.totalorder %v4764, 0
      %vm4913 = vcmp.ne.s32.totalorder %v4771, 0
      %vm4914 = vcmp.ne.s32.totalorder %v4778, 0
      %vm4915 = vcmp.ne.s32.totalorder %v4785, 0
      %vm4916 = vcmp.ne.s32.totalorder %v4792, 0
      %vm4917 = vcmp.ne.s32.totalorder %v4799, 0
      %vm4918 = vcmp.ne.s32.totalorder %v4806, 0
      %vm4919 = vcmp.ne.s32.totalorder %v4813, 0
      %vm4920 = vcmp.ne.s32.totalorder %v4820, 0
      %vm4921 = vcmp.ne.s32.totalorder %v4827, 0
      %vm4922 = vcmp.ne.s32.totalorder %v4834, 0
      %vm4923 = vcmp.ne.s32.totalorder %v4841, 0
      %vm4924 = vcmp.ne.s32.totalorder %v4848, 0
      %vm4925 = vcmp.ne.s32.totalorder %v4855, 0
      %vm4926 = vcmp.ne.s32.totalorder %v4862, 0
      %vm4927 = vcmp.ne.s32.totalorder %v4869, 0
      %vm4928 = vcmp.ne.s32.totalorder %v4876, 0
      %vm4929 = vcmp.ne.s32.totalorder %v4883, 0
      %vm4930 = vcmp.ne.s32.totalorder %v4890, 0
      %vm4931 = vcmp.ne.s32.totalorder %v4897, 0
      %vm4932 = vcmp.ne.s32.totalorder %v4904, 0
      %vm4933 = vcmp.lt.s32.totalorder %v4715, 0
      %vm4934 = vcmp.lt.s32.totalorder %v4722, 0
      %vm4935 = vcmp.lt.s32.totalorder %v4729, 0
      %vm4936 = vcmp.lt.s32.totalorder %v4736, 0
      %vm4937 = vcmp.lt.s32.totalorder %v4743, 0
      %vm4938 = vcmp.lt.s32.totalorder %v4750, 0
      %vm4939 = vcmp.lt.s32.totalorder %v4757, 0
      %vm4940 = vcmp.lt.s32.totalorder %v4764, 0
      %vm4941 = vcmp.lt.s32.totalorder %v4771, 0
      %vm4942 = vcmp.lt.s32.totalorder %v4778, 0
      %vm4943 = vcmp.lt.s32.totalorder %v4785, 0
      %vm4944 = vcmp.lt.s32.totalorder %v4792, 0
      %vm4945 = vcmp.lt.s32.totalorder %v4799, 0
      %vm4946 = vcmp.lt.s32.totalorder %v4806, 0
      %vm4947 = vcmp.lt.s32.totalorder %v4813, 0
      %vm4948 = vcmp.lt.s32.totalorder %v4820, 0
      %vm4949 = vcmp.lt.s32.totalorder %v4827, 0
      %vm4950 = vcmp.lt.s32.totalorder %v4834, 0
      %vm4951 = vcmp.lt.s32.totalorder %v4841, 0
      %vm4952 = vcmp.lt.s32.totalorder %v4848, 0
      %vm4953 = vcmp.lt.s32.totalorder %v4855, 0
      %vm4954 = vcmp.lt.s32.totalorder %v4862, 0
      %vm4955 = vcmp.lt.s32.totalorder %v4869, 0
      %vm4956 = vcmp.lt.s32.totalorder %v4876, 0
      %vm4957 = vcmp.lt.s32.totalorder %v4883, 0
      %vm4958 = vcmp.lt.s32.totalorder %v4890, 0
      %vm4959 = vcmp.lt.s32.totalorder %v4897, 0
      %vm4960 = vcmp.lt.s32.totalorder %v4904, 0
      %vm4961 = vmand %vm4933, %vm4905
      %vm4962 = vmand %vm4934, %vm4906
      %vm4963 = vmand %vm4935, %vm4907
      %vm4964 = vmand %vm4936, %vm4908
      %vm4965 = vmand %vm4937, %vm4909
      %vm4966 = vmand %vm4938, %vm4910
      %vm4967 = vmand %vm4939, %vm4911
      %vm4968 = vmand %vm4940, %vm4912
      %vm4969 = vmand %vm4941, %vm4913
      %vm4970 = vmand %vm4942, %vm4914
      %vm4971 = vmand %vm4943, %vm4915
      %vm4972 = vmand %vm4944, %vm4916
      %vm4973 = vmand %vm4945, %vm4917
      %vm4974 = vmand %vm4946, %vm4918
      %vm4975 = vmand %vm4947, %vm4919
      %vm4976 = vmand %vm4948, %vm4920
      %vm4977 = vmand %vm4949, %vm4921
      %vm4978 = vmand %vm4950, %vm4922
      %vm4979 = vmand %vm4951, %vm4923
      %vm4980 = vmand %vm4952, %vm4924
      %vm4981 = vmand %vm4953, %vm4925
      %vm4982 = vmand %vm4954, %vm4926
      %vm4983 = vmand %vm4955, %vm4927
      %vm4984 = vmand %vm4956, %vm4928
      %vm4985 = vmand %vm4957, %vm4929
      %vm4986 = vmand %vm4958, %vm4930
      %vm4987 = vmand %vm4959, %vm4931
      %vm4988 = vmand %vm4960, %vm4932
      %v4989 = vadd.s32 %v4715, 16
      %v4990 = vadd.s32 %v4722, 16
      %v4991 = vadd.s32 %v4729, 16
      %v4992 = vadd.s32 %v4736, 16
      %v4993 = vadd.s32 %v4743, 16
      %v4994 = vadd.s32 %v4750, 16
      %v4995 = vadd.s32 %v4757, 16
      %v4996 = vadd.s32 %v4764, 16
      %v4997 = vadd.s32 %v4771, 16
      %v4998 = vadd.s32 %v4778, 16
      %v4999 = vadd.s32 %v4785, 16
      %v5000 = vadd.s32 %v4792, 16
      %v5001 = vadd.s32 %v4799, 16
      %v5002 = vadd.s32 %v4806, 16
      %v5003 = vadd.s32 %v4813, 16
      %v5004 = vadd.s32 %v4820, 16
      %v5005 = vadd.s32 %v4827, 16
      %v5006 = vadd.s32 %v4834, 16
      %v5007 = vadd.s32 %v4841, 16
      %v5008 = vadd.s32 %v4848, 16
      %v5009 = vadd.s32 %v4855, 16
      %v5010 = vadd.s32 %v4862, 16
      %v5011 = vadd.s32 %v4869, 16
      %v5012 = vadd.s32 %v4876, 16
      %v5013 = vadd.s32 %v4883, 16
      %v5014 = vadd.s32 %v4890, 16
      %v5015 = vadd.s32 %v4897, 16
      %v5016 = vadd.s32 %v4904, 16
      %v5017 = vsel %vm4961, %v4989, %v4715
      %v5018 = vsel %vm4962, %v4990, %v4722
      %v5019 = vsel %vm4963, %v4991, %v4729
      %v5020 = vsel %vm4964, %v4992, %v4736
      %v5021 = vsel %vm4965, %v4993, %v4743
      %v5022 = vsel %vm4966, %v4994, %v4750
      %v5023 = vsel %vm4967, %v4995, %v4757
      %v5024 = vsel %vm4968, %v4996, %v4764
      %v5025 = vsel %vm4969, %v4997, %v4771
      %v5026 = vsel %vm4970, %v4998, %v4778
      %v5027 = vsel %vm4971, %v4999, %v4785
      %v5028 = vsel %vm4972, %v5000, %v4792
      %v5029 = vsel %vm4973, %v5001, %v4799
      %v5030 = vsel %vm4974, %v5002, %v4806
      %v5031 = vsel %vm4975, %v5003, %v4813
      %v5032 = vsel %vm4976, %v5004, %v4820
      %v5033 = vsel %vm4977, %v5005, %v4827
      %v5034 = vsel %vm4978, %v5006, %v4834
      %v5035 = vsel %vm4979, %v5007, %v4841
      %v5036 = vsel %vm4980, %v5008, %v4848
      %v5037 = vsel %vm4981, %v5009, %v4855
      %v5038 = vsel %vm4982, %v5010, %v4862
      %v5039 = vsel %vm4983, %v5011, %v4869
      %v5040 = vsel %vm4984, %v5012, %v4876
      %v5041 = vsel %vm4985, %v5013, %v4883
      %v5042 = vsel %vm4986, %v5014, %v4890
      %v5043 = vsel %vm4987, %v5015, %v4897
      %v5044 = vsel %vm4988, %v5016, %v4904
      %vm5045 = vcmp.lt.s32.totalorder %v5017, 14
      %vm5046 = vcmp.lt.s32.totalorder %v5018, 14
      %vm5047 = vcmp.lt.s32.totalorder %v5019, 14
      %vm5048 = vcmp.lt.s32.totalorder %v5020, 14
      %vm5049 = vcmp.lt.s32.totalorder %v5021, 14
      %vm5050 = vcmp.lt.s32.totalorder %v5022, 14
      %vm5051 = vcmp.lt.s32.totalorder %v5023, 14
      %vm5052 = vcmp.lt.s32.totalorder %v5024, 14
      %vm5053 = vcmp.lt.s32.totalorder %v5025, 14
      %vm5054 = vcmp.lt.s32.totalorder %v5026, 14
      %vm5055 = vcmp.lt.s32.totalorder %v5027, 14
      %vm5056 = vcmp.lt.s32.totalorder %v5028, 14
      %vm5057 = vcmp.lt.s32.totalorder %v5029, 14
      %vm5058 = vcmp.lt.s32.totalorder %v5030, 14
      %vm5059 = vcmp.lt.s32.totalorder %v5031, 14
      %vm5060 = vcmp.lt.s32.totalorder %v5032, 14
      %vm5061 = vcmp.lt.s32.totalorder %v5033, 14
      %vm5062 = vcmp.lt.s32.totalorder %v5034, 14
      %vm5063 = vcmp.lt.s32.totalorder %v5035, 14
      %vm5064 = vcmp.lt.s32.totalorder %v5036, 14
      %vm5065 = vcmp.lt.s32.totalorder %v5037, 14
      %vm5066 = vcmp.lt.s32.totalorder %v5038, 14
      %vm5067 = vcmp.lt.s32.totalorder %v5039, 14
      %vm5068 = vcmp.lt.s32.totalorder %v5040, 14
      %vm5069 = vcmp.lt.s32.totalorder %v5041, 14
      %vm5070 = vcmp.lt.s32.totalorder %v5042, 14
      %vm5071 = vcmp.lt.s32.totalorder %v5043, 14
      %vm5072 = vcmp.lt.s32.totalorder %v5044, 14
      %v5073 = vsel %vm5045, 1, 0
      %v5074 = vsel %vm5046, 1, 0
      %v5075 = vsel %vm5047, 1, 0
      %v5076 = vsel %vm5048, 1, 0
      %v5077 = vsel %vm5049, 1, 0
      %v5078 = vsel %vm5050, 1, 0
      %v5079 = vsel %vm5051, 1, 0
      %v5080 = vsel %vm5052, 1, 0
      %v5081 = vsel %vm5053, 1, 0
      %v5082 = vsel %vm5054, 1, 0
      %v5083 = vsel %vm5055, 1, 0
      %v5084 = vsel %vm5056, 1, 0
      %v5085 = vsel %vm5057, 1, 0
      %v5086 = vsel %vm5058, 1, 0
      %v5087 = vsel %vm5059, 1, 0
      %v5088 = vsel %vm5060, 1, 0
      %v5089 = vsel %vm5061, 1, 0
      %v5090 = vsel %vm5062, 1, 0
      %v5091 = vsel %vm5063, 1, 0
      %v5092 = vsel %vm5064, 1, 0
      %v5093 = vsel %vm5065, 1, 0
      %v5094 = vsel %vm5066, 1, 0
      %v5095 = vsel %vm5067, 1, 0
      %v5096 = vsel %vm5068, 1, 0
      %v5097 = vsel %vm5069, 1, 0
      %v5098 = vsel %vm5070, 1, 0
      %v5099 = vsel %vm5071, 1, 0
      %v5100 = vsel %vm5072, 1, 0
      %vm5101 = vcmp.eq.s32.totalorder %v5073, 1
      %vm5102 = vcmp.eq.s32.totalorder %v5074, 1
      %vm5103 = vcmp.eq.s32.totalorder %v5075, 1
      %vm5104 = vcmp.eq.s32.totalorder %v5076, 1
      %vm5105 = vcmp.eq.s32.totalorder %v5077, 1
      %vm5106 = vcmp.eq.s32.totalorder %v5078, 1
      %vm5107 = vcmp.eq.s32.totalorder %v5079, 1
      %vm5108 = vcmp.eq.s32.totalorder %v5080, 1
      %vm5109 = vcmp.eq.s32.totalorder %v5081, 1
      %vm5110 = vcmp.eq.s32.totalorder %v5082, 1
      %vm5111 = vcmp.eq.s32.totalorder %v5083, 1
      %vm5112 = vcmp.eq.s32.totalorder %v5084, 1
      %vm5113 = vcmp.eq.s32.totalorder %v5085, 1
      %vm5114 = vcmp.eq.s32.totalorder %v5086, 1
      %vm5115 = vcmp.eq.s32.totalorder %v5087, 1
      %vm5116 = vcmp.eq.s32.totalorder %v5088, 1
      %vm5117 = vcmp.eq.s32.totalorder %v5089, 1
      %vm5118 = vcmp.eq.s32.totalorder %v5090, 1
      %vm5119 = vcmp.eq.s32.totalorder %v5091, 1
      %vm5120 = vcmp.eq.s32.totalorder %v5092, 1
      %vm5121 = vcmp.eq.s32.totalorder %v5093, 1
      %vm5122 = vcmp.eq.s32.totalorder %v5094, 1
      %vm5123 = vcmp.eq.s32.totalorder %v5095, 1
      %vm5124 = vcmp.eq.s32.totalorder %v5096, 1
      %vm5125 = vcmp.eq.s32.totalorder %v5097, 1
      %vm5126 = vcmp.eq.s32.totalorder %v5098, 1
      %vm5127 = vcmp.eq.s32.totalorder %v5099, 1
      %vm5128 = vcmp.eq.s32.totalorder %v5100, 1
      %v5129 = vsel %vm5101, %v4623, 0.0
      %v5130 = vsel %vm5102, %v4624, 0.0
      %v5131 = vsel %vm5103, %v4625, 0.0
      %v5132 = vsel %vm5104, %v4626, 0.0
      %v5133 = vsel %vm5105, %v4627, 0.0
      %v5134 = vsel %vm5106, %v4628, 0.0
      %v5135 = vsel %vm5107, %v4629, 0.0
      %v5136 = vsel %vm5108, %v4630, 0.0
      %v5137 = vsel %vm5109, %v4631, 0.0
      %v5138 = vsel %vm5110, %v4632, 0.0
      %v5139 = vsel %vm5111, %v4633, 0.0
      %v5140 = vsel %vm5112, %v4634, 0.0
      %v5141 = vsel %vm5113, %v4635, 0.0
      %v5142 = vsel %vm5114, %v4636, 0.0
      %v5143 = vsel %vm5115, %v4637, 0.0
      %v5144 = vsel %vm5116, %v4638, 0.0
      %v5145 = vsel %vm5117, %v4639, 0.0
      %v5146 = vsel %vm5118, %v4640, 0.0
      %v5147 = vsel %vm5119, %v4641, 0.0
      %v5148 = vsel %vm5120, %v4642, 0.0
      %v5149 = vsel %vm5121, %v4643, 0.0
      %v5150 = vsel %vm5122, %v4644, 0.0
      %v5151 = vsel %vm5123, %v4645, 0.0
      %v5152 = vsel %vm5124, %v4646, 0.0
      %v5153 = vsel %vm5125, %v4647, 0.0
      %v5154 = vsel %vm5126, %v4648, 0.0
      %v5155 = vsel %vm5127, %v4649, 0.0
      %v5156 = vsel %vm5128, %v4650, 0.0
      %v5157 = vld [vmem:[%s6] sm:$0x1]
      %v5158 = vadd.f32 %v5129, %v5130
      %v5159 = vadd.f32 %v5158, %v5131
      %v5160 = vadd.f32 %v5159, %v5132
      %v5161 = vadd.f32 %v5160, %v5133
      %v5162 = vadd.f32 %v5161, %v5134
      %v5163 = vadd.f32 %v5162, %v5135
      %v5164 = vadd.f32 %v5163, %v5136
      %v5165 = vadd.f32 %v5164, %v5137
      %v5166 = vadd.f32 %v5165, %v5138
      %v5167 = vadd.f32 %v5166, %v5139
      %v5168 = vadd.f32 %v5167, %v5140
      %v5169 = vadd.f32 %v5168, %v5141
      %v5170 = vadd.f32 %v5169, %v5142
      %v5171 = vadd.f32 %v5170, %v5143
      %v5172 = vadd.f32 %v5171, %v5144
      %v5173 = vadd.f32 %v5172, %v5145
      %v5174 = vadd.f32 %v5173, %v5146
      %v5175 = vadd.f32 %v5174, %v5147
      %v5176 = vadd.f32 %v5175, %v5148
      %v5177 = vadd.f32 %v5176, %v5149
      %v5178 = vadd.f32 %v5177, %v5150
      %v5179 = vadd.f32 %v5178, %v5151
      %v5180 = vadd.f32 %v5179, %v5152
      %v5181 = vadd.f32 %v5180, %v5153
      %v5182 = vadd.f32 %v5181, %v5154
      %v5183 = vadd.f32 %v5182, %v5155
      %v5184 = vadd.f32 %v5183, %v5156
      %v5185 = vrot.slane %v5184, 4
      %v5186 = vadd.f32 %v5184, %v5185
      %v5187 = vrot.slane %v5186, 2
      %v5188 = vadd.f32 %v5186, %v5187
      %v5189 = vrot.slane %v5188, 1
      %v5190 = vadd.f32 %v5188, %v5189
      %v5191 = vadd.f32 %v5157, %v5190
      %5192 = vst [vmem:[%s6] sm:$0x1] %v5191
      %v5193 = vld [vmem:[%s7] sm:$0x1]
      %v5194 = vmul.f32 %v5129, %v5129
      %v5195 = vmul.f32 %v5130, %v5130
      %v5196 = vmul.f32 %v5131, %v5131
      %v5197 = vmul.f32 %v5132, %v5132
      %v5198 = vmul.f32 %v5133, %v5133
      %v5199 = vmul.f32 %v5134, %v5134
      %v5200 = vmul.f32 %v5135, %v5135
      %v5201 = vmul.f32 %v5136, %v5136
      %v5202 = vmul.f32 %v5137, %v5137
      %v5203 = vmul.f32 %v5138, %v5138
      %v5204 = vmul.f32 %v5139, %v5139
      %v5205 = vmul.f32 %v5140, %v5140
      %v5206 = vmul.f32 %v5141, %v5141
      %v5207 = vmul.f32 %v5142, %v5142
      %v5208 = vmul.f32 %v5143, %v5143
      %v5209 = vmul.f32 %v5144, %v5144
      %v5210 = vmul.f32 %v5145, %v5145
      %v5211 = vmul.f32 %v5146, %v5146
      %v5212 = vmul.f32 %v5147, %v5147
      %v5213 = vmul.f32 %v5148, %v5148
      %v5214 = vmul.f32 %v5149, %v5149
      %v5215 = vmul.f32 %v5150, %v5150
      %v5216 = vmul.f32 %v5151, %v5151
      %v5217 = vmul.f32 %v5152, %v5152
      %v5218 = vmul.f32 %v5153, %v5153
      %v5219 = vmul.f32 %v5154, %v5154
      %v5220 = vmul.f32 %v5155, %v5155
      %v5221 = vmul.f32 %v5156, %v5156
      %v5222 = vadd.f32 %v5194, %v5195
      %v5223 = vadd.f32 %v5222, %v5196
      %v5224 = vadd.f32 %v5223, %v5197
      %v5225 = vadd.f32 %v5224, %v5198
      %v5226 = vadd.f32 %v5225, %v5199
      %v5227 = vadd.f32 %v5226, %v5200
      %v5228 = vadd.f32 %v5227, %v5201
      %v5229 = vadd.f32 %v5228, %v5202
      %v5230 = vadd.f32 %v5229, %v5203
      %v5231 = vadd.f32 %v5230, %v5204
      %v5232 = vadd.f32 %v5231, %v5205
      %v5233 = vadd.f32 %v5232, %v5206
      %v5234 = vadd.f32 %v5233, %v5207
      %v5235 = vadd.f32 %v5234, %v5208
      %v5236 = vadd.f32 %v5235, %v5209
      %v5237 = vadd.f32 %v5236, %v5210
      %v5238 = vadd.f32 %v5237, %v5211
      %v5239 = vadd.f32 %v5238, %v5212
      %v5240 = vadd.f32 %v5239, %v5213
      %v5241 = vadd.f32 %v5240, %v5214
      %v5242 = vadd.f32 %v5241, %v5215
      %v5243 = vadd.f32 %v5242, %v5216
      %v5244 = vadd.f32 %v5243, %v5217
      %v5245 = vadd.f32 %v5244, %v5218
      %v5246 = vadd.f32 %v5245, %v5219
      %v5247 = vadd.f32 %v5246, %v5220
      %v5248 = vadd.f32 %v5247, %v5221
      %v5249 = vrot.slane %v5248, 4
      %v5250 = vadd.f32 %v5248, %v5249
      %v5251 = vrot.slane %v5250, 2
      %v5252 = vadd.f32 %v5250, %v5251
      %v5253 = vrot.slane %v5252, 1
      %v5254 = vadd.f32 %v5252, %v5253
      %v5255 = vadd.f32 %v5193, %v5254
      %5256 = vst [vmem:[%s7] sm:$0x1] %v5255
      %p5257 = scmp.lt.s32.totalorder %s19, 1
      %s5258 = scalar_select %p5257, %s19, 1
      %s5259 = smul.addr %s5258, 29
      %s5260 = smul.addr %s5259, 8
      %s5261 = scalar_lea.vmem %s5, %s5260
      // Predicated region
      $region45: #{decoder_block_forward.3} parent=39 // pred_check
        %p5262 = pneg %p147
      $region46: #{decoder_block_forward.3} parent=39 // pred_check_branch
        %5264 = sbr.rel (%p5262) target = $region48
      $region47: #{decoder_block_forward.3} parent=39 // pred_region
        _
      $region48: #{decoder_block_forward.3} parent=39 // pred_fallthru
        _
      // Predicated region
      $region49: #{decoder_block_forward.3} parent=39 // pred_check
        %p5265 = pneg %p168
      $region50: #{decoder_block_forward.3} parent=39 // pred_check_branch
        %5267 = sbr.rel (%p5265) target = $region52
      $region51: #{decoder_block_forward.3} parent=39 // pred_region
        _
      $region52: #{decoder_block_forward.3} parent=39 // pred_fallthru
        _
      // Predicated region
      $region53: #{decoder_block_forward.3} parent=39 // pred_check
        %p5268 = pneg %p189
      $region54: #{decoder_block_forward.3} parent=39 // pred_check_branch
        %5270 = sbr.rel (%p5268) target = $region56
      $region55: #{decoder_block_forward.3} parent=39 // pred_region
        _
      $region56: #{decoder_block_forward.3} parent=39 // pred_fallthru
        _
      // Predicated region
      $region57: #{decoder_block_forward.3} parent=39 // pred_check
        %p5271 = pneg %p168
      $region58: #{decoder_block_forward.3} parent=39 // pred_check_branch
        %5273 = sbr.rel (%p5271) target = $region60
      $region59: #{decoder_block_forward.3} parent=39 // pred_region
        _
      $region60: #{decoder_block_forward.3} parent=39 // pred_fallthru
        _
      // Predicated region
      $region61: #{decoder_block_forward.3} parent=39 // pred_check
        %p5274 = pneg %p189
      $region62: #{decoder_block_forward.3} parent=39 // pred_check_branch
        %5276 = sbr.rel (%p5274) target = $region64
      $region63: #{decoder_block_forward.3} parent=39 // pred_region
        _
      $region64: #{decoder_block_forward.3} parent=39 // pred_fallthru
        _
    $region40: #{decoder_block_forward.3} parent=5 // pred_fallthru
      _
    %p5277 = scmp.le.s32.totalorder 2, %s14
    // Predicated region
    $region65: #{decoder_block_forward.3} parent=5 // pred_check
      %p5278 = pneg %p5277
    $region66: #{decoder_block_forward.3} parent=5 // pred_check_branch
      %5280 = sbr.rel (%p5278) target = $region68
    $region67: #{decoder_block_forward.3} parent=5 // pred_region
      %s5281 = ssub.s32 %s14, 2
      // Predicated region
      $region69: #{decoder_block_forward.3} parent=67 // pred_check
        %p5282 = pneg %p153
      $region70: #{decoder_block_forward.3} parent=67 // pred_check_branch
        %5284 = sbr.rel (%p5282) target = $region72
      $region71: #{decoder_block_forward.3} parent=67 // pred_region
        %p5285 = scmp.lt.s32.totalorder %s20, 1
        %s5286 = scalar_select %p5285, %s20, 1
        %s5287 = smul.addr %s5286, 29
        %s5288 = smul.addr %s5287, 8
        %s5289 = scalar_lea.vmem %s5, %s5288
      $region72: #{decoder_block_forward.3} parent=67 // pred_fallthru
        _
    $region68: #{decoder_block_forward.3} parent=5 // pred_fallthru
      _
  $region6: #{decoder_block_forward.3} parent=0 // loop_footer
    %s18 = sadd.s32 1, %s14
  $region7: #{decoder_block_forward.3} parent=0 // loop_footer_branch
    %13 = sbr.rel target = $region3
  $region8: #{decoder_block_forward.3} parent=0 // loop_exit
    _

</llo_original>
